<compile_context>
chip_gen: v5e
topology: v5e:2x2
jax: 0.10.0
libtpu: 0.0.40
codegen_flags: <defaults>
</compile_context>

<pallas_src>
import functools

import jax
import jax.numpy as jnp
from jax.experimental import pallas as pl
from jax.experimental.pallas import tpu as pltpu

NEG_SLOPE = 0.01  # nn.LeakyReLU default negative slope ('lrelu' activation)


def _lrelu(x):
    return jnp.where(x >= 0, x, NEG_SLOPE * x)


def _round_up(x, m):
    return (x + m - 1) // m * m


def _const_map(nd):
    return lambda b, n, _nd=nd: (0,) * _nd


# ---------------------------------------------------------------------------
# Kernel 1 (fused): encoder + nc_decoder + nd_decoder
#   target (B,3,N) -> code (B,K) -> flat (B,3P)           (encoder+MLPDeformer)
#   template (1,3,P) -> cage (1,3,P)                      (DeformationSharedMLP)
#   new_cage (B,3,P) = reshape(flat) + cage (residual), written per-coordinate
#   so P stays on the lane axis.  Grid = (B "parallel", N-tiles "arbitrary");
#   the encoder max-pool is carried in a (K,1) VMEM accumulator and the tiny
#   decoder MLPs run once per batch element at the last N-tile.
# ---------------------------------------------------------------------------
def cage_mlp_kernel(x_ref, tmpl_ref,
                    weT_ref, be_ref, wl_ref, bl_ref,
                    ncw1t_ref, ncb1_ref, ncw2t_ref, ncb2_ref, ncw3t_ref, ncb3_ref,
                    ndw1_ref, ndb1_ref, ndw2_ref, ndb2_ref, ndw3_ref, ndb3_ref,
                    cage_ref, newcage_ref, gmax_ref, *, n_valid):
    n = pl.program_id(1)
    tile_n = x_ref.shape[-1]
    P = tmpl_ref.shape[-1]

    @pl.when(n == 0)
    def _():
        gmax_ref[...] = jnp.full_like(gmax_ref, -jnp.inf)

    # ---- encoder point-MLP on this N-tile (N stays lane-dense) ----
    # TODO(synk): PointNetfeat internals are not provided; approximated here by
    #             one shared per-point linear + global max pool (same shapes).
    x = x_ref[0]                                                    # (3, tile_n)
    h = _lrelu(jnp.dot(weT_ref[...], x,
                       preferred_element_type=jnp.float32) + be_ref[...])  # (K, tile_n)
    col = jax.lax.broadcasted_iota(jnp.int32, h.shape, 1) + n * tile_n
    h = jnp.where(col < n_valid, h, -jnp.inf)                       # mask N padding
    gmax_ref[...] = jnp.maximum(gmax_ref[...],
                                jnp.max(h, axis=-1, keepdims=True))  # (K, 1)

    @pl.when(n == pl.num_programs(1) - 1)
    def _():
        # encoder head: Linear(K,K) + tanh ; (K,1)^T @ (K,K) -> (1,K), no transpose
        code = jnp.tanh(
            jax.lax.dot_general(gmax_ref[...], wl_ref[...],
                                (((0,), (0,)), ((), ())),
                                preferred_element_type=jnp.float32)
            + bl_ref[...])                                           # (1, K)

        # ---- nc_decoder (DeformationSharedMLP) on the template cage, (3,P) ----
        t = tmpl_ref[0]                                              # (3, P)
        c = _lrelu(jnp.dot(ncw1t_ref[...], t,
                           preferred_element_type=jnp.float32) + ncb1_ref[...])
        c = _lrelu(jnp.dot(ncw2t_ref[...], c,
                           preferred_element_type=jnp.float32) + ncb2_ref[...])
        cage = jnp.dot(ncw3t_ref[...], c,
                       preferred_element_type=jnp.float32) + ncb3_ref[...] + t
        cage_ref[0] = cage                                           # (3, P)

        # ---- nd_decoder (MLPDeformer) + deformed-template residual ----
        h1 = _lrelu(jnp.dot(code, ndw1_ref[...],
                            preferred_element_type=jnp.float32) + ndb1_ref[...])
        h2 = _lrelu(jnp.dot(h1, ndw2_ref[...],
                            preferred_element_type=jnp.float32) + ndb2_ref[...])
        flat = jnp.dot(h2, ndw3_ref[...],
                       preferred_element_type=jnp.float32) + ndb3_ref[...]  # (1, 3P)
        for d in range(3):                                           # static; P stays on lanes
            row = flat[:, d * P:(d + 1) * P] + cage[d:d + 1, :]      # (1, P)
            newcage_ref[:, d:d + 1, :] = row[:, None, :]


def cage_mlp_forward(target_b3n, template_13p, params, *, tile_n=512):
    B, _, N = target_b3n.shape
    P = template_13p.shape[-1]
    K = params['enc']['weT'].shape[0]

    tile_n = min(tile_n, _round_up(N, 128))
    n_pad = _round_up(N, tile_n)
    if n_pad != N:
        target_b3n = jnp.pad(target_b3n, ((0, 0), (0, 0), (0, n_pad - N)))

    enc, nc, nd = params['enc'], params['nc'], params['nd']
    args = (target_b3n, template_13p,
            enc['weT'], enc['be'], enc['wl'], enc['bl'],
            nc['w1t'], nc['b1'], nc['w2t'], nc['b2'], nc['w3t'], nc['b3'],
            nd['w1'], nd['b1'], nd['w2'], nd['b2'], nd['w3'], nd['b3'])

    in_specs = [pl.BlockSpec((1, 3, tile_n), lambda b, n: (b, 0, n))]
    in_specs += [pl.BlockSpec(a.shape, _const_map(a.ndim)) for a in args[1:]]

    cage_all, newcage = pl.pallas_call(
        functools.partial(cage_mlp_kernel, n_valid=N),
        out_shape=(jax.ShapeDtypeStruct((B, 3, P), jnp.float32),
                   jax.ShapeDtypeStruct((B, 3, P), jnp.float32)),
        grid=(B, n_pad // tile_n),
        in_specs=in_specs,
        out_specs=(pl.BlockSpec((1, 3, P), lambda b, n: (b, 0, 0)),
                   pl.BlockSpec((1, 3, P), lambda b, n: (b, 0, 0))),
        scratch_shapes=[pltpu.VMEM((K, 1), jnp.float32)],
        compiler_params=pltpu.CompilerParams(
            dimension_semantics=("parallel", "arbitrary"),
            vmem_limit_bytes=32 * 1024 * 1024),
    )(*args)
    # cage is batch-independent; every b program wrote the identical block.
    return cage_all[:1], newcage                                     # (1,3,P), (B,3,P)


# ---------------------------------------------------------------------------
# Kernel 2: cage weights + deformation, tiled over (batch, point tiles).
#   scores = |c|^2 - 2 s.c  (the |s|^2 term cancels under the row-min shift),
#   stable softmax over cage vertices, deformed produced directly lane-dense
#   as (3, tile_n) by contracting P.
# ---------------------------------------------------------------------------
def deform_kernel(src_ref, cage_ref, newcage_ref, w_ref, wu_ref, def_ref):
    s = src_ref[0]                                        # (3, TILE_N)  lane-dense
    c = cage_ref[0]                                       # (3, P)       lane-dense
    nc = newcage_ref[0]                                   # (3, P)       lane-dense

    # TODO(synk): mean_value_coordinates_3D is not provided; approximated by a
    #             numerically-stable Gaussian-distance softmax over cage verts.
    c2 = jnp.sum(c * c, axis=0, keepdims=True)            # (1, P)
    sc = jax.lax.dot_general(s, c, (((0,), (0,)), ((), ())),
                             preferred_element_type=jnp.float32)   # (TILE_N, P)
    d2 = c2 - 2.0 * sc                                    # |s|^2 omitted: cancels below

    mn = jnp.min(d2, axis=-1, keepdims=True)
    wu = jnp.exp(mn - d2)                                 # stable: max term == 1
    denom = jnp.sum(wu, axis=-1, keepdims=True)           # >= 1, no div-by-zero
    w = wu * pl.reciprocal(denom, approx=True)

    w_ref[0] = w                                          # (TILE_N, P) lane-dense
    wu_ref[0] = wu
    # deformed (3, TILE_N) = new_cage (3,P) @ w^T (P,TILE_N): no XLU transpose.
    def_ref[0] = jax.lax.dot_general(nc, w, (((1,), (1,)), ((), ())),
                                     preferred_element_type=jnp.float32)


def deform_forward(src_13n, cage_13p, newcage_b3p, *, tile_n=512):
    _, _, N = src_13n.shape
    B, _, P = newcage_b3p.shape

    tile_n = min(tile_n, _round_up(N, 128))
    n_pad = _round_up(N, tile_n)
    if n_pad != N:                                        # pad, never collapse the grid
        src_13n = jnp.pad(src_13n, ((0, 0), (0, 0), (0, n_pad - N)))

    w, wu, d3n = pl.pallas_call(
        deform_kernel,
        out_shape=(
            jax.ShapeDtypeStruct((B, n_pad, P), jnp.float32),   # weight
            jax.ShapeDtypeStruct((B, n_pad, P), jnp.float32),   # weight_unnormed
            jax.ShapeDtypeStruct((B, 3, n_pad), jnp.float32),   # deformed (lane-dense)
        ),
        grid=(B, n_pad // tile_n),
        in_specs=[
            pl.BlockSpec((1, 3, tile_n), lambda b, n: (0, 0, n)),  # shared source
            pl.BlockSpec((1, 3, P),      lambda b, n: (0, 0, 0)),  # cage (constant)
            pl.BlockSpec((1, 3, P),      lambda b, n: (b, 0, 0)),  # new cage / batch
        ],
        out_specs=(
            pl.BlockSpec((1, tile_n, P), lambda b, n: (b, n, 0)),
            pl.BlockSpec((1, tile_n, P), lambda b, n: (b, n, 0)),
            pl.BlockSpec((1, 3, tile_n), lambda b, n: (b, 0, n)),
        ),
        compiler_params=pltpu.CompilerParams(
            dimension_semantics=("parallel", "parallel"),
            vmem_limit_bytes=32 * 1024 * 1024),
    )(src_13n, cage_13p, newcage_b3p)

    if n_pad != N:
        w, wu, d3n = w[:, :N, :], wu[:, :N, :], d3n[:, :, :N]
    return w, wu, d3n


# ---------------------------------------------------------------------------
# Full forward (thin glue in plain JAX; hot paths in the two kernels above).
# Native (·,3,N)/(·,3,P) layouts flow straight into the kernels; the only
# transposes left are the small output-format ones required by the reference.
# ---------------------------------------------------------------------------
def fixed_source_deformer_forward(params, target_shape, source_vertices,
                                  template_vertices, template_faces):
    """target_shape (B,3,N), source_vertices (1,3,N), template_vertices (1,3,P)."""
    B, _, N = target_shape.shape

    # fused encoder + nc_decoder + nd_decoder  (consumes (B,3,N) directly)
    cage_13p, newcage_b3p = cage_mlp_forward(target_shape, template_vertices,
                                             params)                 # (1,3,P),(B,3,P)

    # cage weights + deformed point cloud  (consumes (1,3,N)/(·,3,P) directly)
    weight, weight_unnormed, deformed_b3n = deform_forward(
        source_vertices, cage_13p, newcage_b3p)

    source_bn3 = jnp.broadcast_to(
        jnp.transpose(source_vertices, (0, 2, 1)), (B, N, 3))        # (B,N,3)

    return {
        'source_shape': source_bn3,                                  # (B,N,3)
        'cage': jnp.transpose(cage_13p, (0, 2, 1)),                  # (1,P,3)
        'new_cage': jnp.transpose(newcage_b3p, (0, 2, 1)),           # (B,P,3)
        'deformed': jnp.transpose(deformed_b3n, (0, 2, 1)),          # (B,N,3)
        'cage_face': template_faces,                                 # (1,F,3)
        'weight': weight,                                            # (B,N,P)
        'weight_unnormed': weight_unnormed,                          # (B,N,P)
    }


# ---------------------------------------------------------------------------
# Deterministic synthetic parameters (shapes from module __init__, stored in
# the layouts the kernels consume: encoder / shared-MLP weights pre-transposed
# so activations stay channels-on-sublane, points-on-lane).
# ---------------------------------------------------------------------------
def init_params(key, dim, bottleneck, P):
    ks = jax.random.split(key, 16)

    def w(k, shape, scale=0.1):
        return (scale * jax.random.normal(k, shape)).astype(jnp.float32)

    return {
        'enc': {  # PointNetfeat approx + Linear(bottleneck, bottleneck, tanh)
            'weT': w(ks[0], (bottleneck, dim)),
            'be': w(ks[1], (bottleneck, 1)),
            'wl': w(ks[2], (bottleneck, bottleneck)),
            'bl': w(ks[3], (1, bottleneck)),
        },
        'nc': {  # DeformationSharedMLP: dim->128->128->dim (weights transposed)
            'w1t': w(ks[4], (128, dim)),
            'b1': w(ks[5], (128, 1)),
            'w2t': w(ks[6], (128, 128)),
            'b2': w(ks[7], (128, 1)),
            'w3t': w(ks[8], (dim, 128)),
            'b3': w(ks[9], (dim, 1)),
        },
        'nd': {  # MLPDeformer: bottleneck->512->1024->P*dim
            'w1': w(ks[10], (bottleneck, 512)),
            'b1': w(ks[11], (1, 512)),
            'w2': w(ks[12], (512, 1024)),
            'b2': w(ks[13], (1, 1024)),
            'w3': w(ks[14], (1024, P * dim)),
            'b3': w(ks[15], (1, P * dim)),
        },
    }


if __name__ == "__main__":
    B, dim, N, P, bottleneck, F = 2, 3, 256, 128, 128, 8

    key = jax.random.PRNGKey(0)
    k_t, k_s, k_v, k_f, k_p = jax.random.split(key, 5)

    target_shape = jax.random.normal(k_t, (B, dim, N), jnp.float32)      # (B,3,N)
    source_vertices = jax.random.normal(k_s, (1, dim, N), jnp.float32)   # (1,3,N)
    template_vertices = 0.5 * jax.random.normal(k_v, (1, dim, P), jnp.float32)
    template_faces = jax.random.randint(k_f, (1, F, 3), 0, P, jnp.int32)

    params = init_params(k_p, dim, bottleneck, P)

    fwd = jax.jit(functools.partial(fixed_source_deformer_forward, params))
    out = fwd(target_shape, source_vertices, template_vertices, template_faces)
    jax.block_until_ready(out)

    assert out['deformed'].shape == (B, N, 3)
    assert out['new_cage'].shape == (B, P, 3)
    assert out['cage'].shape == (1, P, 3)
    assert out['weight'].shape == (B, N, P)
    assert out['weight_unnormed'].shape == (B, N, P)
    assert bool(jnp.all(jnp.isfinite(out['deformed'])))
    assert bool(jnp.all(jnp.isfinite(out['weight'])))
    # softmax rows sum to ~1 (approx reciprocal => loose tolerance)
    assert bool(jnp.all(jnp.abs(jnp.sum(out['weight'], axis=-1) - 1.0) < 5e-2))
    print("KERNEL_OK")
</pallas_src>

<mosaic_0001>
module attributes {stable_mosaic.version = 11 : i64} {
  func.func @cage_mlp_kernel(%arg0: i32, %arg1: i32, %arg2: memref<1x3x256xf32, #tpu.memory_space<vmem>>, %arg3: memref<1x3x128xf32, #tpu.memory_space<vmem>>, %arg4: memref<128x3xf32, #tpu.memory_space<vmem>>, %arg5: memref<128x1xf32, #tpu.memory_space<vmem>>, %arg6: memref<128x128xf32, #tpu.memory_space<vmem>>, %arg7: memref<1x128xf32, #tpu.memory_space<vmem>>, %arg8: memref<128x3xf32, #tpu.memory_space<vmem>>, %arg9: memref<128x1xf32, #tpu.memory_space<vmem>>, %arg10: memref<128x128xf32, #tpu.memory_space<vmem>>, %arg11: memref<128x1xf32, #tpu.memory_space<vmem>>, %arg12: memref<3x128xf32, #tpu.memory_space<vmem>>, %arg13: memref<3x1xf32, #tpu.memory_space<vmem>>, %arg14: memref<128x512xf32, #tpu.memory_space<vmem>>, %arg15: memref<1x512xf32, #tpu.memory_space<vmem>>, %arg16: memref<512x1024xf32, #tpu.memory_space<vmem>>, %arg17: memref<1x1024xf32, #tpu.memory_space<vmem>>, %arg18: memref<1024x384xf32, #tpu.memory_space<vmem>>, %arg19: memref<1x384xf32, #tpu.memory_space<vmem>>, %arg20: memref<1x3x128xf32, #tpu.memory_space<vmem>>, %arg21: memref<1x3x128xf32, #tpu.memory_space<vmem>>, %arg22: memref<128x1xf32, #tpu.memory_space<vmem>>) attributes {dimension_semantics = [#tpu.dimension_semantics<parallel>, #tpu.dimension_semantics<arbitrary>], iteration_bounds = array<i64: 2, 1>, scalar_prefetch = 0 : i64, scratch_operands = 1 : i64, tpu.core_type = #tpu.core_type<tc>, window_params = [{transform_indices = @transform_0, window_bounds = array<i64: 1, 3, 256>}, {pipeline_mode = #tpu.pipeline_mode<synchronous>, transform_indices = @transform_1, window_bounds = array<i64: 1, 3, 128>}, {pipeline_mode = #tpu.pipeline_mode<synchronous>, transform_indices = @transform_2, window_bounds = array<i64: 128, 3>}, {pipeline_mode = #tpu.pipeline_mode<synchronous>, transform_indices = @transform_3, window_bounds = array<i64: 128, 1>}, {pipeline_mode = #tpu.pipeline_mode<synchronous>, transform_indices = @transform_4, window_bounds = array<i64: 128, 128>}, {pipeline_mode = #tpu.pipeline_mode<synchronous>, transform_indices = @transform_5, window_bounds = array<i64: 1, 128>}, {pipeline_mode = #tpu.pipeline_mode<synchronous>, transform_indices = @transform_6, window_bounds = array<i64: 128, 3>}, {pipeline_mode = #tpu.pipeline_mode<synchronous>, transform_indices = @transform_7, window_bounds = array<i64: 128, 1>}, {pipeline_mode = #tpu.pipeline_mode<synchronous>, transform_indices = @transform_8, window_bounds = array<i64: 128, 128>}, {pipeline_mode = #tpu.pipeline_mode<synchronous>, transform_indices = @transform_9, window_bounds = array<i64: 128, 1>}, {pipeline_mode = #tpu.pipeline_mode<synchronous>, transform_indices = @transform_10, window_bounds = array<i64: 3, 128>}, {pipeline_mode = #tpu.pipeline_mode<synchronous>, transform_indices = @transform_11, window_bounds = array<i64: 3, 1>}, {pipeline_mode = #tpu.pipeline_mode<synchronous>, transform_indices = @transform_12, window_bounds = array<i64: 128, 512>}, {pipeline_mode = #tpu.pipeline_mode<synchronous>, transform_indices = @transform_13, window_bounds = array<i64: 1, 512>}, {pipeline_mode = #tpu.pipeline_mode<synchronous>, transform_indices = @transform_14, window_bounds = array<i64: 512, 1024>}, {pipeline_mode = #tpu.pipeline_mode<synchronous>, transform_indices = @transform_15, window_bounds = array<i64: 1, 1024>}, {pipeline_mode = #tpu.pipeline_mode<synchronous>, transform_indices = @transform_16, window_bounds = array<i64: 1024, 384>}, {pipeline_mode = #tpu.pipeline_mode<synchronous>, transform_indices = @transform_17, window_bounds = array<i64: 1, 384>}, {transform_indices = @transform_18, window_bounds = array<i64: 1, 3, 128>}, {transform_indices = @transform_19, window_bounds = array<i64: 1, 3, 128>}]} {
    %c0_i32 = arith.constant 0 : i32
    %0 = arith.cmpi eq, %arg1, %c0_i32 : i32
    %1 = arith.extui %0 : i1 to i32
    %c0_i32_0 = arith.constant 0 : i32
    %2 = arith.cmpi ne, %1, %c0_i32_0 : i32
    scf.if %2 {
      %cst_18 = arith.constant 0xFF800000 : f32
      %31 = vector.broadcast %cst_18 : f32 to vector<128x1xf32>
      %c0_19 = arith.constant 0 : index
      %c0_20 = arith.constant 0 : index
      %32 = vector.load %arg22[%c0_19, %c0_20] : memref<128x1xf32, #tpu.memory_space<vmem>>, vector<128x1xf32>
      tpu.vector_store %arg22[%c0_19, %c0_20], %31 {strides = array<i32>} : memref<128x1xf32, #tpu.memory_space<vmem>>, vector<128x1xf32>,
    } else {
    }
    %c0 = arith.constant 0 : index
    %c0_1 = arith.constant 0 : index
    %c0_2 = arith.constant 0 : index
    %3 = vector.load %arg2[%c0, %c0_1, %c0_2] : memref<1x3x256xf32, #tpu.memory_space<vmem>>, vector<1x3x256xf32>
    %4 = vector.shape_cast %3 : vector<1x3x256xf32> to vector<3x256xf32>
    %c0_3 = arith.constant 0 : index
    %c0_4 = arith.constant 0 : index
    %5 = vector.load %arg4[%c0_3, %c0_4] : memref<128x3xf32, #tpu.memory_space<vmem>>, vector<128x3xf32>
    %cst = arith.constant dense<0.000000e+00> : vector<128x256xf32>
    %6 = tpu.matmul %5, %4, %cst {dimension_numbers = #tpu.dot_dimension_numbers<[1], [0], [0], [1], [0, 0, 1, 1], [], []>} : vector<128x3xf32>, vector<3x256xf32>, vector<128x256xf32> -> vector<128x256xf32>
    %c0_5 = arith.constant 0 : index
    %c0_6 = arith.constant 0 : index
    %7 = vector.load %arg5[%c0_5, %c0_6] : memref<128x1xf32, #tpu.memory_space<vmem>>, vector<128x1xf32>
    %8 = vector.broadcast %7 : vector<128x1xf32> to vector<128x256xf32>
    %9 = arith.addf %6, %8 : vector<128x256xf32>
    %cst_7 = arith.constant 0.000000e+00 : f32
    %10 = vector.broadcast %cst_7 : f32 to vector<128x256xf32>
    %11 = arith.cmpf oge, %9, %10 : vector<128x256xf32>
    %cst_8 = arith.constant 0.00999999977 : f32
    %12 = vector.broadcast %cst_8 : f32 to vector<128x256xf32>
    %13 = arith.mulf %12, %9 : vector<128x256xf32>
    %14 = arith.select %11, %9, %13 : vector<128x256xi1>, vector<128x256xf32>
    %15 = tpu.iota {dimensions = array<i32: 1>} : vector<128x256xi32>
    %c256_i32 = arith.constant 256 : i32
    %16 = arith.muli %arg1, %c256_i32 : i32
    %17 = vector.broadcast %16 : i32 to vector<128x256xi32>
    %18 = arith.addi %15, %17 : vector<128x256xi32>
    %c256_i32_9 = arith.constant 256 : i32
    %19 = vector.broadcast %c256_i32_9 : i32 to vector<128x256xi32>
    %20 = arith.cmpi slt, %18, %19 : vector<128x256xi32>
    %cst_10 = arith.constant 0xFF800000 : f32
    %21 = vector.broadcast %cst_10 : f32 to vector<128x256xf32>
    %22 = arith.select %20, %14, %21 : vector<128x256xi1>, vector<128x256xf32>
    %c0_11 = arith.constant 0 : index
    %c0_12 = arith.constant 0 : index
    %23 = vector.load %arg22[%c0_11, %c0_12] : memref<128x1xf32, #tpu.memory_space<vmem>>, vector<128x1xf32>
    %cst_13 = arith.constant dense<0xFF800000> : vector<128xf32>
    %24 = vector.multi_reduction <maximumf>, %22, %cst_13 [1] : vector<128x256xf32> to vector<128xf32>
    %25 = vector.shape_cast %24 : vector<128xf32> to vector<128x1xf32>
    %26 = arith.maximumf %23, %25 : vector<128x1xf32>
    %c0_14 = arith.constant 0 : index
    %c0_15 = arith.constant 0 : index
    %27 = vector.load %arg22[%c0_14, %c0_15] : memref<128x1xf32, #tpu.memory_space<vmem>>, vector<128x1xf32>
    tpu.vector_store %arg22[%c0_14, %c0_15], %26 {strides = array<i32>} : memref<128x1xf32, #tpu.memory_space<vmem>>, vector<128x1xf32>,
    %c0_i32_16 = arith.constant 0 : i32
    %28 = arith.cmpi eq, %arg1, %c0_i32_16 : i32
    %29 = arith.extui %28 : i1 to i32
    %c0_i32_17 = arith.constant 0 : i32
    %30 = arith.cmpi ne, %29, %c0_i32_17 : i32
    scf.if %30 {
      %c0_18 = arith.constant 0 : index
      %c0_19 = arith.constant 0 : index
      %31 = vector.load %arg22[%c0_18, %c0_19] : memref<128x1xf32, #tpu.memory_space<vmem>>, vector<128x1xf32>
      %c0_20 = arith.constant 0 : index
      %c0_21 = arith.constant 0 : index
      %32 = vector.load %arg6[%c0_20, %c0_21] : memref<128x128xf32, #tpu.memory_space<vmem>>, vector<128x128xf32>
      %cst_22 = arith.constant dense<0.000000e+00> : vector<1x128xf32>
      %33 = tpu.matmul %31, %32, %cst_22 {dimension_numbers = #tpu.dot_dimension_numbers<[0], [0], [1], [1], [0, 1, 1, 1], [], []>} : vector<128x1xf32>, vector<128x128xf32>, vector<1x128xf32> -> vector<1x128xf32>
      %c0_23 = arith.constant 0 : index
      %c0_24 = arith.constant 0 : index
      %34 = vector.load %arg7[%c0_23, %c0_24] : memref<1x128xf32, #tpu.memory_space<vmem>>, vector<1x128xf32>
      %35 = arith.addf %33, %34 : vector<1x128xf32>
      %36 = math.tanh %35 : vector<1x128xf32>
      %c0_25 = arith.constant 0 : index
      %c0_26 = arith.constant 0 : index
      %c0_27 = arith.constant 0 : index
      %37 = vector.load %arg3[%c0_25, %c0_26, %c0_27] : memref<1x3x128xf32, #tpu.memory_space<vmem>>, vector<1x3x128xf32>
      %38 = vector.shape_cast %37 : vector<1x3x128xf32> to vector<3x128xf32>
      %c0_28 = arith.constant 0 : index
      %c0_29 = arith.constant 0 : index
      %39 = vector.load %arg8[%c0_28, %c0_29] : memref<128x3xf32, #tpu.memory_space<vmem>>, vector<128x3xf32>
      %cst_30 = arith.constant dense<0.000000e+00> : vector<128x128xf32>
      %40 = tpu.matmul %39, %38, %cst_30 {dimension_numbers = #tpu.dot_dimension_numbers<[1], [0], [0], [1], [0, 0, 1, 1], [], []>} : vector<128x3xf32>, vector<3x128xf32>, vector<128x128xf32> -> vector<128x128xf32>
      %c0_31 = arith.constant 0 : index
      %c0_32 = arith.constant 0 : index
      %41 = vector.load %arg9[%c0_31, %c0_32] : memref<128x1xf32, #tpu.memory_space<vmem>>, vector<128x1xf32>
      %42 = vector.broadcast %41 : vector<128x1xf32> to vector<128x128xf32>
      %43 = arith.addf %40, %42 : vector<128x128xf32>
      %cst_33 = arith.constant 0.000000e+00 : f32
      %44 = vector.broadcast %cst_33 : f32 to vector<128x128xf32>
      %45 = arith.cmpf oge, %43, %44 : vector<128x128xf32>
      %cst_34 = arith.constant 0.00999999977 : f32
      %46 = vector.broadcast %cst_34 : f32 to vector<128x128xf32>
      %47 = arith.mulf %46, %43 : vector<128x128xf32>
      %48 = arith.select %45, %43, %47 : vector<128x128xi1>, vector<128x128xf32>
      %c0_35 = arith.constant 0 : index
      %c0_36 = arith.constant 0 : index
      %49 = vector.load %arg10[%c0_35, %c0_36] : memref<128x128xf32, #tpu.memory_space<vmem>>, vector<128x128xf32>
      %cst_37 = arith.constant dense<0.000000e+00> : vector<128x128xf32>
      %50 = tpu.matmul %49, %48, %cst_37 {dimension_numbers = #tpu.dot_dimension_numbers<[1], [0], [0], [1], [0, 0, 1, 1], [], []>} : vector<128x128xf32>, vector<128x128xf32>, vector<128x128xf32> -> vector<128x128xf32>
      %c0_38 = arith.constant 0 : index
      %c0_39 = arith.constant 0 : index
      %51 = vector.load %arg11[%c0_38, %c0_39] : memref<128x1xf32, #tpu.memory_space<vmem>>, vector<128x1xf32>
      %52 = vector.broadcast %51 : vector<128x1xf32> to vector<128x128xf32>
      %53 = arith.addf %50, %52 : vector<128x128xf32>
      %cst_40 = arith.constant 0.000000e+00 : f32
      %54 = vector.broadcast %cst_40 : f32 to vector<128x128xf32>
      %55 = arith.cmpf oge, %53, %54 : vector<128x128xf32>
      %cst_41 = arith.constant 0.00999999977 : f32
      %56 = vector.broadcast %cst_41 : f32 to vector<128x128xf32>
      %57 = arith.mulf %56, %53 : vector<128x128xf32>
      %58 = arith.select %55, %53, %57 : vector<128x128xi1>, vector<128x128xf32>
      %c0_42 = arith.constant 0 : index
      %c0_43 = arith.constant 0 : index
      %59 = vector.load %arg12[%c0_42, %c0_43] : memref<3x128xf32, #tpu.memory_space<vmem>>, vector<3x128xf32>
      %cst_44 = arith.constant dense<0.000000e+00> : vector<3x128xf32>
      %60 = tpu.matmul %59, %58, %cst_44 {dimension_numbers = #tpu.dot_dimension_numbers<[1], [0], [0], [1], [0, 0, 1, 1], [], []>} : vector<3x128xf32>, vector<128x128xf32>, vector<3x128xf32> -> vector<3x128xf32>
      %c0_45 = arith.constant 0 : index
      %c0_46 = arith.constant 0 : index
      %61 = vector.load %arg13[%c0_45, %c0_46] : memref<3x1xf32, #tpu.memory_space<vmem>>, vector<3x1xf32>
      %62 = vector.broadcast %61 : vector<3x1xf32> to vector<3x128xf32>
      %63 = arith.addf %60, %62 : vector<3x128xf32>
      %64 = arith.addf %63, %38 : vector<3x128xf32>
      %c0_47 = arith.constant 0 : index
      %c0_48 = arith.constant 0 : index
      %c0_49 = arith.constant 0 : index
      %65 = vector.load %arg20[%c0_47, %c0_48, %c0_49] : memref<1x3x128xf32, #tpu.memory_space<vmem>>, vector<1x3x128xf32>
      %66 = vector.shape_cast %65 : vector<1x3x128xf32> to vector<3x128xf32>
      %67 = vector.shape_cast %64 : vector<3x128xf32> to vector<1x3x128xf32>
      tpu.vector_store %arg20[%c0_47, %c0_48, %c0_49], %67 {strides = array<i32>} : memref<1x3x128xf32, #tpu.memory_space<vmem>>, vector<1x3x128xf32>,
      %c0_50 = arith.constant 0 : index
      %c0_51 = arith.constant 0 : index
      %68 = vector.load %arg14[%c0_50, %c0_51] : memref<128x512xf32, #tpu.memory_space<vmem>>, vector<128x512xf32>
      %cst_52 = arith.constant dense<0.000000e+00> : vector<1x512xf32>
      %69 = tpu.matmul %36, %68, %cst_52 {dimension_numbers = #tpu.dot_dimension_numbers<[1], [0], [0], [1], [0, 0, 1, 1], [], []>} : vector<1x128xf32>, vector<128x512xf32>, vector<1x512xf32> -> vector<1x512xf32>
      %c0_53 = arith.constant 0 : index
      %c0_54 = arith.constant 0 : index
      %70 = vector.load %arg15[%c0_53, %c0_54] : memref<1x512xf32, #tpu.memory_space<vmem>>, vector<1x512xf32>
      %71 = arith.addf %69, %70 : vector<1x512xf32>
      %cst_55 = arith.constant 0.000000e+00 : f32
      %72 = vector.broadcast %cst_55 : f32 to vector<1x512xf32>
      %73 = arith.cmpf oge, %71, %72 : vector<1x512xf32>
      %cst_56 = arith.constant 0.00999999977 : f32
      %74 = vector.broadcast %cst_56 : f32 to vector<1x512xf32>
      %75 = arith.mulf %74, %71 : vector<1x512xf32>
      %76 = arith.select %73, %71, %75 : vector<1x512xi1>, vector<1x512xf32>
      %c0_57 = arith.constant 0 : index
      %c0_58 = arith.constant 0 : index
      %77 = vector.load %arg16[%c0_57, %c0_58] : memref<512x1024xf32, #tpu.memory_space<vmem>>, vector<512x1024xf32>
      %cst_59 = arith.constant dense<0.000000e+00> : vector<1x1024xf32>
      %78 = tpu.matmul %76, %77, %cst_59 {dimension_numbers = #tpu.dot_dimension_numbers<[1], [0], [0], [1], [0, 0, 1, 1], [], []>} : vector<1x512xf32>, vector<512x1024xf32>, vector<1x1024xf32> -> vector<1x1024xf32>
      %c0_60 = arith.constant 0 : index
      %c0_61 = arith.constant 0 : index
      %79 = vector.load %arg17[%c0_60, %c0_61] : memref<1x1024xf32, #tpu.memory_space<vmem>>, vector<1x1024xf32>
      %80 = arith.addf %78, %79 : vector<1x1024xf32>
      %cst_62 = arith.constant 0.000000e+00 : f32
      %81 = vector.broadcast %cst_62 : f32 to vector<1x1024xf32>
      %82 = arith.cmpf oge, %80, %81 : vector<1x1024xf32>
      %cst_63 = arith.constant 0.00999999977 : f32
      %83 = vector.broadcast %cst_63 : f32 to vector<1x1024xf32>
      %84 = arith.mulf %83, %80 : vector<1x1024xf32>
      %85 = arith.select %82, %80, %84 : vector<1x1024xi1>, vector<1x1024xf32>
      %c0_64 = arith.constant 0 : index
      %c0_65 = arith.constant 0 : index
      %86 = vector.load %arg18[%c0_64, %c0_65] : memref<1024x384xf32, #tpu.memory_space<vmem>>, vector<1024x384xf32>
      %cst_66 = arith.constant dense<0.000000e+00> : vector<1x384xf32>
      %87 = tpu.matmul %85, %86, %cst_66 {dimension_numbers = #tpu.dot_dimension_numbers<[1], [0], [0], [1], [0, 0, 1, 1], [], []>} : vector<1x1024xf32>, vector<1024x384xf32>, vector<1x384xf32> -> vector<1x384xf32>
      %c0_67 = arith.constant 0 : index
      %c0_68 = arith.constant 0 : index
      %88 = vector.load %arg19[%c0_67, %c0_68] : memref<1x384xf32, #tpu.memory_space<vmem>>, vector<1x384xf32>
      %89 = arith.addf %87, %88 : vector<1x384xf32>
      %90 = vector.extract_strided_slice %89 {offsets = [0, 0], sizes = [1, 128], strides = [1, 1]} : vector<1x384xf32> to vector<1x128xf32>
      %91 = vector.extract_strided_slice %64 {offsets = [0, 0], sizes = [1, 128], strides = [1, 1]} : vector<3x128xf32> to vector<1x128xf32>
      %92 = arith.addf %90, %91 : vector<1x128xf32>
      %93 = vector.shape_cast %92 : vector<1x128xf32> to vector<1x1x128xf32>
      %c0_69 = arith.constant 0 : index
      %c0_70 = arith.constant 0 : index
      %c0_71 = arith.constant 0 : index
      %94 = vector.load %arg21[%c0_69, %c0_70, %c0_71] : memref<1x3x128xf32, #tpu.memory_space<vmem>>, vector<1x1x128xf32>
      tpu.vector_store %arg21[%c0_69, %c0_70, %c0_71], %93 {strides = array<i32>} : memref<1x3x128xf32, #tpu.memory_space<vmem>>, vector<1x1x128xf32>,
      %95 = vector.extract_strided_slice %89 {offsets = [0, 128], sizes = [1, 128], strides = [1, 1]} : vector<1x384xf32> to vector<1x128xf32>
      %96 = vector.extract_strided_slice %64 {offsets = [1, 0], sizes = [1, 128], strides = [1, 1]} : vector<3x128xf32> to vector<1x128xf32>
      %97 = arith.addf %95, %96 : vector<1x128xf32>
      %98 = vector.shape_cast %97 : vector<1x128xf32> to vector<1x1x128xf32>
      %c0_72 = arith.constant 0 : index
      %c1 = arith.constant 1 : index
      %c0_73 = arith.constant 0 : index
      %99 = vector.load %arg21[%c0_72, %c1, %c0_73] : memref<1x3x128xf32, #tpu.memory_space<vmem>>, vector<1x1x128xf32>
      tpu.vector_store %arg21[%c0_72, %c1, %c0_73], %98 {strides = array<i32>} : memref<1x3x128xf32, #tpu.memory_space<vmem>>, vector<1x1x128xf32>,
      %100 = vector.extract_strided_slice %89 {offsets = [0, 256], sizes = [1, 128], strides = [1, 1]} : vector<1x384xf32> to vector<1x128xf32>
      %101 = vector.extract_strided_slice %64 {offsets = [2, 0], sizes = [1, 128], strides = [1, 1]} : vector<3x128xf32> to vector<1x128xf32>
      %102 = arith.addf %100, %101 : vector<1x128xf32>
      %103 = vector.shape_cast %102 : vector<1x128xf32> to vector<1x1x128xf32>
      %c0_74 = arith.constant 0 : index
      %c2 = arith.constant 2 : index
      %c0_75 = arith.constant 0 : index
      %104 = vector.load %arg21[%c0_74, %c2, %c0_75] : memref<1x3x128xf32, #tpu.memory_space<vmem>>, vector<1x1x128xf32>
      tpu.vector_store %arg21[%c0_74, %c2, %c0_75], %103 {strides = array<i32>} : memref<1x3x128xf32, #tpu.memory_space<vmem>>, vector<1x1x128xf32>,
    } else {
    }
    return
  }
  func.func @transform_0(%arg0: i32, %arg1: i32) -> (i32, i32, i32) {
    %c0_i32 = arith.constant 0 : i32
    %c0_i32_0 = arith.constant 0 : i32
    return %arg0, %c0_i32, %arg1 : i32, i32, i32
  }
  func.func @transform_1(%arg0: i32, %arg1: i32) -> (i32, i32, i32) {
    %c0_i32 = arith.constant 0 : i32
    %c0_i32_0 = arith.constant 0 : i32
    %c0_i32_1 = arith.constant 0 : i32
    %c0_i32_2 = arith.constant 0 : i32
    return %c0_i32, %c0_i32_0, %c0_i32_1 : i32, i32, i32
  }
  func.func @transform_2(%arg0: i32, %arg1: i32) -> (i32, i32) {
    %c0_i32 = arith.constant 0 : i32
    %c0_i32_0 = arith.constant 0 : i32
    %c0_i32_1 = arith.constant 0 : i32
    return %c0_i32, %c0_i32_0 : i32, i32
  }
  func.func @transform_3(%arg0: i32, %arg1: i32) -> (i32, i32) {
    %c0_i32 = arith.constant 0 : i32
    %c0_i32_0 = arith.constant 0 : i32
    %c0_i32_1 = arith.constant 0 : i32
    return %c0_i32, %c0_i32_0 : i32, i32
  }
  func.func @transform_4(%arg0: i32, %arg1: i32) -> (i32, i32) {
    %c0_i32 = arith.constant 0 : i32
    %c0_i32_0 = arith.constant 0 : i32
    %c0_i32_1 = arith.constant 0 : i32
    return %c0_i32, %c0_i32_0 : i32, i32
  }
  func.func @transform_5(%arg0: i32, %arg1: i32) -> (i32, i32) {
    %c0_i32 = arith.constant 0 : i32
    %c0_i32_0 = arith.constant 0 : i32
    %c0_i32_1 = arith.constant 0 : i32
    return %c0_i32, %c0_i32_0 : i32, i32
  }
  func.func @transform_6(%arg0: i32, %arg1: i32) -> (i32, i32) {
    %c0_i32 = arith.constant 0 : i32
    %c0_i32_0 = arith.constant 0 : i32
    %c0_i32_1 = arith.constant 0 : i32
    return %c0_i32, %c0_i32_0 : i32, i32
  }
  func.func @transform_7(%arg0: i32, %arg1: i32) -> (i32, i32) {
    %c0_i32 = arith.constant 0 : i32
    %c0_i32_0 = arith.constant 0 : i32
    %c0_i32_1 = arith.constant 0 : i32
    return %c0_i32, %c0_i32_0 : i32, i32
  }
  func.func @transform_8(%arg0: i32, %arg1: i32) -> (i32, i32) {
    %c0_i32 = arith.constant 0 : i32
    %c0_i32_0 = arith.constant 0 : i32
    %c0_i32_1 = arith.constant 0 : i32
    return %c0_i32, %c0_i32_0 : i32, i32
  }
  func.func @transform_9(%arg0: i32, %arg1: i32) -> (i32, i32) {
    %c0_i32 = arith.constant 0 : i32
    %c0_i32_0 = arith.constant 0 : i32
    %c0_i32_1 = arith.constant 0 : i32
    return %c0_i32, %c0_i32_0 : i32, i32
  }
  func.func @transform_10(%arg0: i32, %arg1: i32) -> (i32, i32) {
    %c0_i32 = arith.constant 0 : i32
    %c0_i32_0 = arith.constant 0 : i32
    %c0_i32_1 = arith.constant 0 : i32
    return %c0_i32, %c0_i32_0 : i32, i32
  }
  func.func @transform_11(%arg0: i32, %arg1: i32) -> (i32, i32) {
    %c0_i32 = arith.constant 0 : i32
    %c0_i32_0 = arith.constant 0 : i32
    %c0_i32_1 = arith.constant 0 : i32
    return %c0_i32, %c0_i32_0 : i32, i32
  }
  func.func @transform_12(%arg0: i32, %arg1: i32) -> (i32, i32) {
    %c0_i32 = arith.constant 0 : i32
    %c0_i32_0 = arith.constant 0 : i32
    %c0_i32_1 = arith.constant 0 : i32
    return %c0_i32, %c0_i32_0 : i32, i32
  }
  func.func @transform_13(%arg0: i32, %arg1: i32) -> (i32, i32) {
    %c0_i32 = arith.constant 0 : i32
    %c0_i32_0 = arith.constant 0 : i32
    %c0_i32_1 = arith.constant 0 : i32
    return %c0_i32, %c0_i32_0 : i32, i32
  }
  func.func @transform_14(%arg0: i32, %arg1: i32) -> (i32, i32) {
    %c0_i32 = arith.constant 0 : i32
    %c0_i32_0 = arith.constant 0 : i32
    %c0_i32_1 = arith.constant 0 : i32
    return %c0_i32, %c0_i32_0 : i32, i32
  }
  func.func @transform_15(%arg0: i32, %arg1: i32) -> (i32, i32) {
    %c0_i32 = arith.constant 0 : i32
    %c0_i32_0 = arith.constant 0 : i32
    %c0_i32_1 = arith.constant 0 : i32
    return %c0_i32, %c0_i32_0 : i32, i32
  }
  func.func @transform_16(%arg0: i32, %arg1: i32) -> (i32, i32) {
    %c0_i32 = arith.constant 0 : i32
    %c0_i32_0 = arith.constant 0 : i32
    %c0_i32_1 = arith.constant 0 : i32
    return %c0_i32, %c0_i32_0 : i32, i32
  }
  func.func @transform_17(%arg0: i32, %arg1: i32) -> (i32, i32) {
    %c0_i32 = arith.constant 0 : i32
    %c0_i32_0 = arith.constant 0 : i32
    %c0_i32_1 = arith.constant 0 : i32
    return %c0_i32, %c0_i32_0 : i32, i32
  }
  func.func @transform_18(%arg0: i32, %arg1: i32) -> (i32, i32, i32) {
    %c0_i32 = arith.constant 0 : i32
    %c0_i32_0 = arith.constant 0 : i32
    %c0_i32_1 = arith.constant 0 : i32
    return %arg0, %c0_i32, %c0_i32_0 : i32, i32, i32
  }
  func.func @transform_19(%arg0: i32, %arg1: i32) -> (i32, i32, i32) {
    %c0_i32 = arith.constant 0 : i32
    %c0_i32_0 = arith.constant 0 : i32
    %c0_i32_1 = arith.constant 0 : i32
    return %arg0, %c0_i32, %c0_i32_0 : i32, i32, i32
  }
}

module attributes {stable_mosaic.version = 11 : i64} {
  func.func @deform_kernel(%arg0: i32, %arg1: i32, %arg2: memref<1x3x256xf32, #tpu.memory_space<vmem>>, %arg3: memref<1x3x128xf32, #tpu.memory_space<vmem>>, %arg4: memref<1x3x128xf32, #tpu.memory_space<vmem>>, %arg5: memref<1x256x128xf32, #tpu.memory_space<vmem>>, %arg6: memref<1x256x128xf32, #tpu.memory_space<vmem>>, %arg7: memref<1x3x256xf32, #tpu.memory_space<vmem>>) attributes {dimension_semantics = [#tpu.dimension_semantics<parallel>, #tpu.dimension_semantics<parallel>], iteration_bounds = array<i64: 2, 1>, scalar_prefetch = 0 : i64, scratch_operands = 0 : i64, tpu.core_type = #tpu.core_type<tc>, window_params = [{transform_indices = @transform_0, window_bounds = array<i64: 1, 3, 256>}, {pipeline_mode = #tpu.pipeline_mode<synchronous>, transform_indices = @transform_1, window_bounds = array<i64: 1, 3, 128>}, {transform_indices = @transform_2, window_bounds = array<i64: 1, 3, 128>}, {transform_indices = @transform_3, window_bounds = array<i64: 1, 256, 128>}, {transform_indices = @transform_4, window_bounds = array<i64: 1, 256, 128>}, {transform_indices = @transform_5, window_bounds = array<i64: 1, 3, 256>}]} {
    %c0 = arith.constant 0 : index
    %c0_0 = arith.constant 0 : index
    %c0_1 = arith.constant 0 : index
    %0 = vector.load %arg2[%c0, %c0_0, %c0_1] : memref<1x3x256xf32, #tpu.memory_space<vmem>>, vector<1x3x256xf32>
    %1 = vector.shape_cast %0 : vector<1x3x256xf32> to vector<3x256xf32>
    %c0_2 = arith.constant 0 : index
    %c0_3 = arith.constant 0 : index
    %c0_4 = arith.constant 0 : index
    %2 = vector.load %arg3[%c0_2, %c0_3, %c0_4] : memref<1x3x128xf32, #tpu.memory_space<vmem>>, vector<1x3x128xf32>
    %3 = vector.shape_cast %2 : vector<1x3x128xf32> to vector<3x128xf32>
    %c0_5 = arith.constant 0 : index
    %c0_6 = arith.constant 0 : index
    %c0_7 = arith.constant 0 : index
    %4 = vector.load %arg4[%c0_5, %c0_6, %c0_7] : memref<1x3x128xf32, #tpu.memory_space<vmem>>, vector<1x3x128xf32>
    %5 = vector.shape_cast %4 : vector<1x3x128xf32> to vector<3x128xf32>
    %6 = arith.mulf %3, %3 : vector<3x128xf32>
    %cst = arith.constant dense<0.000000e+00> : vector<128xf32>
    %7 = vector.multi_reduction <add>, %6, %cst [0] : vector<3x128xf32> to vector<128xf32>
    %8 = vector.shape_cast %7 : vector<128xf32> to vector<1x128xf32>
    %cst_8 = arith.constant dense<0.000000e+00> : vector<256x128xf32>
    %9 = tpu.matmul %1, %3, %cst_8 {dimension_numbers = #tpu.dot_dimension_numbers<[0], [0], [1], [1], [0, 1, 1, 1], [], []>} : vector<3x256xf32>, vector<3x128xf32>, vector<256x128xf32> -> vector<256x128xf32>
    %cst_9 = arith.constant 2.000000e+00 : f32
    %10 = vector.broadcast %cst_9 : f32 to vector<256x128xf32>
    %11 = arith.mulf %10, %9 : vector<256x128xf32>
    %12 = vector.broadcast %8 : vector<1x128xf32> to vector<256x128xf32>
    %13 = arith.subf %12, %11 : vector<256x128xf32>
    %cst_10 = arith.constant dense<0x7F800000> : vector<256xf32>
    %14 = vector.multi_reduction <minimumf>, %13, %cst_10 [1] : vector<256x128xf32> to vector<256xf32>
    %15 = vector.shape_cast %14 : vector<256xf32> to vector<256x1xf32>
    %16 = vector.broadcast %15 : vector<256x1xf32> to vector<256x128xf32>
    %17 = arith.subf %16, %13 : vector<256x128xf32>
    %18 = math.exp %17 : vector<256x128xf32>
    %cst_11 = arith.constant dense<0.000000e+00> : vector<256xf32>
    %19 = vector.multi_reduction <add>, %18, %cst_11 [1] : vector<256x128xf32> to vector<256xf32>
    %20 = vector.shape_cast %19 : vector<256xf32> to vector<256x1xf32>
    %21 = tpu.reciprocal %20 {approx = true} : vector<256x1xf32> -> vector<256x1xf32>
    %22 = vector.broadcast %21 : vector<256x1xf32> to vector<256x128xf32>
    %23 = arith.mulf %18, %22 : vector<256x128xf32>
    %c0_12 = arith.constant 0 : index
    %c0_13 = arith.constant 0 : index
    %c0_14 = arith.constant 0 : index
    %24 = vector.load %arg5[%c0_12, %c0_13, %c0_14] : memref<1x256x128xf32, #tpu.memory_space<vmem>>, vector<1x256x128xf32>
    %25 = vector.shape_cast %24 : vector<1x256x128xf32> to vector<256x128xf32>
    %26 = vector.shape_cast %23 : vector<256x128xf32> to vector<1x256x128xf32>
    tpu.vector_store %arg5[%c0_12, %c0_13, %c0_14], %26 {strides = array<i32>} : memref<1x256x128xf32, #tpu.memory_space<vmem>>, vector<1x256x128xf32>,
    %c0_15 = arith.constant 0 : index
    %c0_16 = arith.constant 0 : index
    %c0_17 = arith.constant 0 : index
    %27 = vector.load %arg6[%c0_15, %c0_16, %c0_17] : memref<1x256x128xf32, #tpu.memory_space<vmem>>, vector<1x256x128xf32>
    %28 = vector.shape_cast %27 : vector<1x256x128xf32> to vector<256x128xf32>
    %29 = vector.shape_cast %18 : vector<256x128xf32> to vector<1x256x128xf32>
    tpu.vector_store %arg6[%c0_15, %c0_16, %c0_17], %29 {strides = array<i32>} : memref<1x256x128xf32, #tpu.memory_space<vmem>>, vector<1x256x128xf32>,
    %cst_18 = arith.constant dense<0.000000e+00> : vector<3x256xf32>
    %30 = tpu.matmul %5, %23, %cst_18 {dimension_numbers = #tpu.dot_dimension_numbers<[1], [1], [0], [0], [0, 0, 1, 0], [], []>} : vector<3x128xf32>, vector<256x128xf32>, vector<3x256xf32> -> vector<3x256xf32>
    %c0_19 = arith.constant 0 : index
    %c0_20 = arith.constant 0 : index
    %c0_21 = arith.constant 0 : index
    %31 = vector.load %arg7[%c0_19, %c0_20, %c0_21] : memref<1x3x256xf32, #tpu.memory_space<vmem>>, vector<1x3x256xf32>
    %32 = vector.shape_cast %31 : vector<1x3x256xf32> to vector<3x256xf32>
    %33 = vector.shape_cast %30 : vector<3x256xf32> to vector<1x3x256xf32>
    tpu.vector_store %arg7[%c0_19, %c0_20, %c0_21], %33 {strides = array<i32>} : memref<1x3x256xf32, #tpu.memory_space<vmem>>, vector<1x3x256xf32>,
    return
  }
  func.func @transform_0(%arg0: i32, %arg1: i32) -> (i32, i32, i32) {
    %c0_i32 = arith.constant 0 : i32
    %c0_i32_0 = arith.constant 0 : i32
    %c0_i32_1 = arith.constant 0 : i32
    return %c0_i32, %c0_i32_0, %arg1 : i32, i32, i32
  }
  func.func @transform_1(%arg0: i32, %arg1: i32) -> (i32, i32, i32) {
    %c0_i32 = arith.constant 0 : i32
    %c0_i32_0 = arith.constant 0 : i32
    %c0_i32_1 = arith.constant 0 : i32
    %c0_i32_2 = arith.constant 0 : i32
    return %c0_i32, %c0_i32_0, %c0_i32_1 : i32, i32, i32
  }
  func.func @transform_2(%arg0: i32, %arg1: i32) -> (i32, i32, i32) {
    %c0_i32 = arith.constant 0 : i32
    %c0_i32_0 = arith.constant 0 : i32
    %c0_i32_1 = arith.constant 0 : i32
    return %arg0, %c0_i32, %c0_i32_0 : i32, i32, i32
  }
  func.func @transform_3(%arg0: i32, %arg1: i32) -> (i32, i32, i32) {
    %c0_i32 = arith.constant 0 : i32
    %c0_i32_0 = arith.constant 0 : i32
    return %arg0, %arg1, %c0_i32 : i32, i32, i32
  }
  func.func @transform_4(%arg0: i32, %arg1: i32) -> (i32, i32, i32) {
    %c0_i32 = arith.constant 0 : i32
    %c0_i32_0 = arith.constant 0 : i32
    return %arg0, %arg1, %c0_i32 : i32, i32, i32
  }
  func.func @transform_5(%arg0: i32, %arg1: i32) -> (i32, i32, i32) {
    %c0_i32 = arith.constant 0 : i32
    %c0_i32_0 = arith.constant 0 : i32
    return %arg0, %c0_i32, %arg1 : i32, i32, i32
  }
}

</mosaic_0001>

<llo_original>
// kernel: fixed_source_deformer_forward.3
$region0: #{fixed_source_deformer_forward.3}
  #allocation0 [shape = 'u32[]', space=smem, size = 0x4, offset = 0x4, fixed_abs, tag = 'smem constant byte address 0x4 - core index']
  #allocation1 [shape = 'u32[72,128]{1,0:T(1,128)}', space=vmem, size = 0x9000, scoped, tag = 'internal scratch']
  %s0 = inlined_call_operand.vmem [shape: f32[1,3,256], index: 0, kind: input, shape index: {}]
  %s1 = inlined_call_operand.vmem [shape: f32[1,3,128], index: 1, kind: input, shape index: {}]
  %s2 = inlined_call_operand.vmem [shape: f32[2,3,128], index: 2, kind: input, shape index: {}]
  %s3 = inlined_call_operand.hbm [shape: f32[2,256,128], index: 3, kind: output, shape index: {0}]
  %s4 = inlined_call_operand.hbm [shape: f32[2,256,128], index: 4, kind: output, shape index: {1}]
  %s5 = inlined_call_operand.vmem [shape: f32[2,3,256], index: 5, kind: output, shape index: {2}]
  %6 = xla_tuple %s3, %s4, %s5
  %s7 = sld [smem:[#allocation0]]
  $region61: #{fixed_source_deformer_forward.3} parent=0
    _
  %s9 = ssub.s32 1, %s7
  %s10 = scalar_select 0, %s9, %s7
  $region1: #{fixed_source_deformer_forward.3} parent=0
    #allocation2 [shape = 'u8[262144]{0}', space=vmem, size = 0x40000, scoped, tag = 'output window, operand 0']
    #allocation3 [shape = 's32[2]{0}', space=sflag, size = 0x8, scoped, tag = 'scoped memory for fixed_source_deformer_forward.3']
    #allocation4 [shape = 'u8[262144]{0}', space=vmem, size = 0x40000, scoped, tag = 'output window, operand 1']
    #allocation5 [shape = 's32[2]{0}', space=sflag, size = 0x8, scoped, tag = 'scoped memory for fixed_source_deformer_forward.3']
    %11 = vsyncpa [#allocation3], 0
    %s12 = scalar_lea.sflag [#allocation3], 1
    %13 = vsyncpa %s12, 0
    %14 = vsyncpa [#allocation5], 0
    %s15 = scalar_lea.sflag [#allocation5], 1
    %16 = vsyncpa %s15, 0
    loop: start=0, step=1, limit=4
    $region2: #{fixed_source_deformer_forward.3} parent=1 // loop_pre_header
      _
    $region3: #{fixed_source_deformer_forward.3} parent=1 // loop_header
      %s18 = sphi 0, %s22
      %p19 = scmp.ge.s32.totalorder %s18, 4
      %s25 = sphi 0, %s37
      %s26 = sphi 0, %s33
      %s27 = sphi 0, %s25
      %s28 = sphi 0, %s26
      %s29 = sphi 0, %s27
      %s30 = sphi 0, %s28
      %s40 = sphi 0, %s42
      %s43 = sphi 0, %s40
      %s44 = sphi 0, %s43
      %s60 = sphi 0, %s44
      %s64 = sphi 0, %s64
      %s66 = sphi 0, %s64
      %s67 = sphi 0, %s66
      %s81 = sphi 0, %s67
      %s87 = sphi 0, %s89
      %s90 = sphi 0, %s87
      %s91 = sphi 0, %s90
      %s107 = sphi 0, %s91
      %s115 = sphi 0, %s117
      %s118 = sphi 0, %s115
      %s119 = sphi 0, %s118
      %s135 = sphi 0, %s119
      %s143 = sphi 0, %s145
      %s146 = sphi 0, %s143
      %s147 = sphi 0, %s146
      %s163 = sphi 0, %s147
      %s171 = sphi 0, %s173
      %s174 = sphi 0, %s171
      %s175 = sphi 0, %s174
      %s191 = sphi 0, %s175
    $region4: #{fixed_source_deformer_forward.3} parent=1 // loop_header_branch
      %21 = sbr.rel (%p19) target = $region8
    $region5: #{fixed_source_deformer_forward.3} parent=1 // loop_body
      %s23 = ssub.s32 %s18, 1
      %s24 = ssub.s32 %s18, 2
      %s31 = sadd.s32 1, %s26
      %p32 = scmp.ge.s32.totalorder %s31, 1
      %s33 = scalar_select %p32, 0, %s31
      %s34 = sadd.s32 1, %s25
      %s35 = scalar_select %p32, %s34, %s25
      %p36 = scmp.ge.s32.totalorder %s35, 2
      %s37 = scalar_select %p36, 0, %s35
      %s38 = ssub.s32 %s26, %s33
      %p39 = scmp.eq.s32.totalorder %s38, 0
      %s41 = sadd.s32 %s40, 1
      %s42 = scalar_select %p39, %s40, %s41
      %p45 = pneg %p39
      %p46 = scmp.eq.s32.totalorder %s18, 1
      %p47 = por %p45, %p46
      %p48 = scmp.ne.s32.totalorder %s40, %s43
      %p49 = scmp.eq.s32.totalorder %s18, 0
      %p50 = por %p48, %p49
      %p51 = scmp.ne.s32.totalorder %s40, %s43
      %p52 = scmp.eq.s32.totalorder %s23, 1
      %p53 = por %p51, %p52
      %p54 = scmp.ne.s32.totalorder %s43, %s44
      %p55 = scmp.eq.s32.totalorder %s23, 0
      %p56 = por %p54, %p55
      %p57 = scmp.ne.s32.totalorder %s43, %s44
      %p58 = scmp.eq.s32.totalorder %s24, 1
      %p59 = por %p57, %p58
      %p61 = scmp.ne.s32.totalorder %s44, %s60
      %p62 = scmp.eq.s32.totalorder %s24, 0
      %p63 = por %p61, %p62
      %s65 = sadd.s32 %s64, 1
      %p68 = scmp.eq.s32.totalorder %s18, 1
      %p69 = scmp.ne.s32.totalorder %s64, %s66
      %p70 = scmp.eq.s32.totalorder %s18, 0
      %p71 = por %p69, %p70
      %p72 = scmp.ne.s32.totalorder %s64, %s66
      %p73 = scmp.eq.s32.totalorder %s23, 1
      %p74 = por %p72, %p73
      %p75 = scmp.ne.s32.totalorder %s66, %s67
      %p76 = scmp.eq.s32.totalorder %s23, 0
      %p77 = por %p75, %p76
      %p78 = scmp.ne.s32.totalorder %s66, %s67
      %p79 = scmp.eq.s32.totalorder %s24, 1
      %p80 = por %p78, %p79
      %p82 = scmp.ne.s32.totalorder %s67, %s81
      %p83 = scmp.eq.s32.totalorder %s24, 0
      %p84 = por %p82, %p83
      %s85 = ssub.s32 %s25, %s37
      %p86 = scmp.eq.s32.totalorder %s85, 0
      %s88 = sadd.s32 %s87, 1
      %s89 = scalar_select %p86, %s87, %s88
      %p92 = pneg %p86
      %p93 = scmp.eq.s32.totalorder %s18, 1
      %p94 = por %p92, %p93
      %p95 = scmp.ne.s32.totalorder %s87, %s90
      %p96 = scmp.eq.s32.totalorder %s18, 0
      %p97 = por %p95, %p96
      %p98 = scmp.ne.s32.totalorder %s87, %s90
      %p99 = scmp.eq.s32.totalorder %s23, 1
      %p100 = por %p98, %p99
      %p101 = scmp.ne.s32.totalorder %s90, %s91
      %p102 = scmp.eq.s32.totalorder %s23, 0
      %p103 = por %p101, %p102
      %p104 = scmp.ne.s32.totalorder %s90, %s91
      %p105 = scmp.eq.s32.totalorder %s24, 1
      %p106 = por %p104, %p105
      %p108 = scmp.ne.s32.totalorder %s91, %s107
      %p109 = scmp.eq.s32.totalorder %s24, 0
      %p110 = por %p108, %p109
      %s111 = ssub.s32 %s25, %s37
      %s112 = ssub.s32 %s26, %s33
      %s113 = sor.u32 %s111, %s112
      %p114 = scmp.eq.s32.totalorder %s113, 0
      %s116 = sadd.s32 %s115, 1
      %s117 = scalar_select %p114, %s115, %s116
      %p120 = pneg %p114
      %p121 = scmp.eq.s32.totalorder %s18, 1
      %p122 = por %p120, %p121
      %p123 = scmp.ne.s32.totalorder %s115, %s118
      %p124 = scmp.eq.s32.totalorder %s18, 0
      %p125 = por %p123, %p124
      %p126 = scmp.ne.s32.totalorder %s115, %s118
      %p127 = scmp.eq.s32.totalorder %s23, 1
      %p128 = por %p126, %p127
      %p129 = scmp.ne.s32.totalorder %s118, %s119
      %p130 = scmp.eq.s32.totalorder %s23, 0
      %p131 = por %p129, %p130
      %p132 = scmp.ne.s32.totalorder %s118, %s119
      %p133 = scmp.eq.s32.totalorder %s24, 1
      %p134 = por %p132, %p133
      %p136 = scmp.ne.s32.totalorder %s119, %s135
      %p137 = scmp.eq.s32.totalorder %s24, 0
      %p138 = por %p136, %p137
      %s139 = ssub.s32 %s25, %s37
      %s140 = ssub.s32 %s26, %s33
      %s141 = sor.u32 %s139, %s140
      %p142 = scmp.eq.s32.totalorder %s141, 0
      %s144 = sadd.s32 %s143, 1
      %s145 = scalar_select %p142, %s143, %s144
      %p148 = pneg %p142
      %p149 = scmp.eq.s32.totalorder %s18, 1
      %p150 = por %p148, %p149
      %p151 = scmp.ne.s32.totalorder %s143, %s146
      %p152 = scmp.eq.s32.totalorder %s18, 0
      %p153 = por %p151, %p152
      %p154 = scmp.ne.s32.totalorder %s143, %s146
      %p155 = scmp.eq.s32.totalorder %s23, 1
      %p156 = por %p154, %p155
      %p157 = scmp.ne.s32.totalorder %s146, %s147
      %p158 = scmp.eq.s32.totalorder %s23, 0
      %p159 = por %p157, %p158
      %p160 = scmp.ne.s32.totalorder %s146, %s147
      %p161 = scmp.eq.s32.totalorder %s24, 1
      %p162 = por %p160, %p161
      %p164 = scmp.ne.s32.totalorder %s147, %s163
      %p165 = scmp.eq.s32.totalorder %s24, 0
      %p166 = por %p164, %p165
      %s167 = ssub.s32 %s25, %s37
      %s168 = ssub.s32 %s26, %s33
      %s169 = sor.u32 %s167, %s168
      %p170 = scmp.eq.s32.totalorder %s169, 0
      %s172 = sadd.s32 %s171, 1
      %s173 = scalar_select %p170, %s171, %s172
      %p176 = pneg %p170
      %p177 = scmp.eq.s32.totalorder %s18, 1
      %p178 = por %p176, %p177
      %p179 = scmp.ne.s32.totalorder %s171, %s174
      %p180 = scmp.eq.s32.totalorder %s18, 0
      %p181 = por %p179, %p180
      %p182 = scmp.ne.s32.totalorder %s171, %s174
      %p183 = scmp.eq.s32.totalorder %s23, 1
      %p184 = por %p182, %p183
      %p185 = scmp.ne.s32.totalorder %s174, %s175
      %p186 = scmp.eq.s32.totalorder %s23, 0
      %p187 = por %p185, %p186
      %p188 = scmp.ne.s32.totalorder %s174, %s175
      %p189 = scmp.eq.s32.totalorder %s24, 1
      %p190 = por %p188, %p189
      %p192 = scmp.ne.s32.totalorder %s175, %s191
      %p193 = scmp.eq.s32.totalorder %s24, 0
      %p194 = por %p192, %p193
      %p195 = scmp.le.s32.totalorder 1, %s18
      %p196 = scmp.lt.s32.totalorder %s18, 3
      %p197 = pnand %p195, %p196
      %p198 = pneg %p197
      // Predicated region
      $region9: #{fixed_source_deformer_forward.3} parent=5 // pred_check
        _
      $region10: #{fixed_source_deformer_forward.3} parent=5 // pred_check_branch
        %200 = sbr.rel (%p197) target = $region12
      $region11: #{fixed_source_deformer_forward.3} parent=5 // pred_region
        %s201 = ssub.s32 %s18, 1
        // Predicated region
        $region13: #{fixed_source_deformer_forward.3} parent=11 // pred_check
          %p202 = pneg %p56
        $region14: #{fixed_source_deformer_forward.3} parent=11 // pred_check_branch
          %204 = sbr.rel (%p202) target = $region16
        $region15: #{fixed_source_deformer_forward.3} parent=11 // pred_region
          %s205 = smul.u32 2, %s28
          %p206 = scmp.lt.s32.totalorder %s205, 1
          %s207 = scalar_select %p206, %s205, 1
          %s208 = smul.addr %s207, 4
          %s209 = scalar_lea.vmem %s0, %s208
          %s210 = smul.u32 2, %s28
        $region16: #{fixed_source_deformer_forward.3} parent=11 // pred_fallthru
          _
        // Predicated region
        $region17: #{fixed_source_deformer_forward.3} parent=11 // pred_check
          %p211 = pneg %p77
        $region18: #{fixed_source_deformer_forward.3} parent=11 // pred_check_branch
          %213 = sbr.rel (%p211) target = $region20
        $region19: #{fixed_source_deformer_forward.3} parent=11 // pred_region
          _
        $region20: #{fixed_source_deformer_forward.3} parent=11 // pred_fallthru
          _
      $region12: #{fixed_source_deformer_forward.3} parent=5 // pred_fallthru
        _
      %p214 = scmp.lt.s32.totalorder %s18, 2
      // Predicated region
      $region21: #{fixed_source_deformer_forward.3} parent=5 // pred_check
        %p215 = pneg %p214
      $region22: #{fixed_source_deformer_forward.3} parent=5 // pred_check_branch
        %217 = sbr.rel (%p215) target = $region24
      $region23: #{fixed_source_deformer_forward.3} parent=5 // pred_region
        // Predicated region
        $region25: #{fixed_source_deformer_forward.3} parent=23 // pred_check
          %p218 = pneg %p97
        $region26: #{fixed_source_deformer_forward.3} parent=23 // pred_check_branch
          %220 = sbr.rel (%p218) target = $region28
        $region27: #{fixed_source_deformer_forward.3} parent=23 // pred_region
          %p221 = scmp.lt.s32.totalorder %s25, 1
          %s222 = scalar_select %p221, %s25, 1
          %s223 = smul.addr %s222, 4
          %s224 = scalar_lea.vmem %s2, %s223
        $region28: #{fixed_source_deformer_forward.3} parent=23 // pred_fallthru
          _
      $region24: #{fixed_source_deformer_forward.3} parent=5 // pred_fallthru
        _
      %p225 = scmp.le.s32.totalorder 1, %s18
      %p226 = scmp.lt.s32.totalorder %s18, 3
      %p227 = pnand %p225, %p226
      %p228 = pneg %p227
      // Predicated region
      $region29: #{fixed_source_deformer_forward.3} parent=5 // pred_check
        _
      $region30: #{fixed_source_deformer_forward.3} parent=5 // pred_check_branch
        %230 = sbr.rel (%p227) target = $region32
      $region31: #{fixed_source_deformer_forward.3} parent=5 // pred_region
        %s231 = ssub.s32 %s18, 1
        %s232 = smul.u32 2, %s28
        %p233 = scmp.lt.s32.totalorder %s232, 1
        %s234 = scalar_select %p233, %s232, 1
        %s235 = smul.addr %s234, 4
        %s236 = scalar_lea.vmem %s0, %s235
        %p237 = pneg %p56
        %p238 = pneg %p53
        %p239 = pneg %p77
        %p240 = pneg %p74
        %p241 = scmp.lt.s32.totalorder %s27, 1
        %s242 = scalar_select %p241, %s27, 1
        %s243 = smul.addr %s242, 4
        %s244 = scalar_lea.vmem %s2, %s243
        %p245 = pneg %p103
        %p246 = pneg %p100
        %p247 = pneg %p131
        %p248 = pneg %p128
        %s249 = sand.u32 %s118, 1
        %s250 = scalar_lea.sflag [#allocation3], %s249
        %s251 = sand.u32 %s118, 1
        %s252 = smul.addr %s251, 256
        %s253 = scalar_lea.vmem [#allocation2], %s252
        %p254 = pneg %p159
        %p255 = pneg %p156
        %s256 = sand.u32 %s146, 1
        %s257 = scalar_lea.sflag [#allocation5], %s256
        %s258 = sand.u32 %s146, 1
        %s259 = smul.addr %s258, 256
        %s260 = scalar_lea.vmem [#allocation4], %s259
        %p261 = pneg %p187
        %p262 = pneg %p184
        %s263 = smul.u32 2, %s28
        %p264 = scmp.lt.s32.totalorder %s27, 1
        %s265 = scalar_select %p264, %s27, 1
        %p266 = scmp.lt.s32.totalorder %s263, 1
        %s267 = scalar_select %p266, %s263, 1
        %s268 = smul.addr %s265, 2
        %s269 = sadd.s32 %s267, %s268
        %s270 = smul.addr %s269, 4
        %s271 = scalar_lea.vmem %s5, %s270
        %s272 = smul.u32 2, %s28
        %p273 = scmp.lt.s32.totalorder %s272, 1
        %s274 = scalar_select %p273, %s272, 1
        %s275 = smul.addr %s274, 4
        %s276 = scalar_lea.vmem %s0, %s275
        %s277 = smul.u32 2, %s28
        %p278 = scmp.lt.s32.totalorder %s27, 1
        %s279 = scalar_select %p278, %s27, 1
        %s280 = smul.addr %s279, 4
        %s281 = scalar_lea.vmem %s2, %s280
        %s282 = smul.u32 32, %s28
        %s283 = smul.u32 32, %s28
        %s284 = smul.u32 2, %s28
        %p285 = scmp.lt.s32.totalorder %s27, 1
        %s286 = scalar_select %p285, %s27, 1
        %p287 = scmp.lt.s32.totalorder %s284, 1
        %s288 = scalar_select %p287, %s284, 1
        %s289 = smul.addr %s286, 2
        %s290 = sadd.s32 %s288, %s289
        %s291 = smul.addr %s290, 4
        %s292 = scalar_lea.vmem %s5, %s291
        %s293 = smul.u32 2, %s28
        %v294 = vld [vmem:[%s276] sm:$0x77]
        %v295 = vld [vmem:[%s1] sm:$0x7]
        %v296 = vld [vmem:[%s281] sm:$0x7]
        %v297 = vmul.f32 %v295, %v295
        %vm298 = vcmask 1042432
        %v299 = vsel %vm298, %v297, 0.0
        %v300 = vrot.slane %v299, 4
        %v301 = vadd.f32 %v299, %v300
        %v302 = vrot.slane %v301, 2
        %v303 = vadd.f32 %v301, %v302
        %v304 = vrot.slane %v303, 1
        %v305 = vadd.f32 %v303, %v304
        %307 = vst [vmem:[#allocation1] ss:$2 sm:$0xff] %v294
        %v308 = vld.sshfl [vmem:[#allocation1] sm:$0xff pattern:$0x75316420]
        %v309 = vld.sshfl [vmem:[#allocation1 + $0x8] sm:$0xff pattern:$0x75316420]
        %312 = vxpose.xlu0.b32.start [1/16] %v308, 128
        %313 = vxpose.xlu0.b32.cont [2/16] 0.0, 128
        %314 = vxpose.xlu0.b32.cont [3/16] 0.0, 128
        %315 = vxpose.xlu0.b32.cont [4/16] 0.0, 128
        %316 = vxpose.xlu0.b32.cont [5/16] 0.0, 128
        %317 = vxpose.xlu0.b32.cont [6/16] 0.0, 128
        %318 = vxpose.xlu0.b32.cont [7/16] 0.0, 128
        %319 = vxpose.xlu0.b32.cont [8/16] 0.0, 128
        %320 = vxpose.xlu0.b32.cont [9/16] 0.0, 128
        %321 = vxpose.xlu0.b32.cont [10/16] 0.0, 128
        %322 = vxpose.xlu0.b32.cont [11/16] 0.0, 128
        %323 = vxpose.xlu0.b32.cont [12/16] 0.0, 128
        %324 = vxpose.xlu0.b32.cont [13/16] 0.0, 128
        %325 = vxpose.xlu0.b32.cont [14/16] 0.0, 128
        %326 = vxpose.xlu0.b32.cont [15/16] 0.0, 128
        %327 = vxpose.xlu0.b32.end [16/16] 0.0, 128
        %v328 = vpop.trf.xlu0
        %v329 = vpop.trf.xlu0
        %v330 = vpop.trf.xlu0
        %v331 = vpop.trf.xlu0
        %v332 = vpop.trf.xlu0
        %v333 = vpop.trf.xlu0
        %v334 = vpop.trf.xlu0
        %v335 = vpop.trf.xlu0
        %v336 = vpop.trf.xlu0
        %v337 = vpop.trf.xlu0
        %v338 = vpop.trf.xlu0
        %v339 = vpop.trf.xlu0
        %v340 = vpop.trf.xlu0
        %v341 = vpop.trf.xlu0
        %v342 = vpop.trf.xlu0
        %v343 = vpop.trf.xlu0
        %344 = vxpose.xlu0.b32.start [1/16] %v309, 128
        %345 = vxpose.xlu0.b32.cont [2/16] 0.0, 128
        %346 = vxpose.xlu0.b32.cont [3/16] 0.0, 128
        %347 = vxpose.xlu0.b32.cont [4/16] 0.0, 128
        %348 = vxpose.xlu0.b32.cont [5/16] 0.0, 128
        %349 = vxpose.xlu0.b32.cont [6/16] 0.0, 128
        %350 = vxpose.xlu0.b32.cont [7/16] 0.0, 128
        %351 = vxpose.xlu0.b32.cont [8/16] 0.0, 128
        %352 = vxpose.xlu0.b32.cont [9/16] 0.0, 128
        %353 = vxpose.xlu0.b32.cont [10/16] 0.0, 128
        %354 = vxpose.xlu0.b32.cont [11/16] 0.0, 128
        %355 = vxpose.xlu0.b32.cont [12/16] 0.0, 128
        %356 = vxpose.xlu0.b32.cont [13/16] 0.0, 128
        %357 = vxpose.xlu0.b32.cont [14/16] 0.0, 128
        %358 = vxpose.xlu0.b32.cont [15/16] 0.0, 128
        %359 = vxpose.xlu0.b32.end [16/16] 0.0, 128
        %v360 = vpop.trf.xlu0
        %v361 = vpop.trf.xlu0
        %v362 = vpop.trf.xlu0
        %v363 = vpop.trf.xlu0
        %v364 = vpop.trf.xlu0
        %v365 = vpop.trf.xlu0
        %v366 = vpop.trf.xlu0
        %v367 = vpop.trf.xlu0
        %v368 = vpop.trf.xlu0
        %v369 = vpop.trf.xlu0
        %v370 = vpop.trf.xlu0
        %v371 = vpop.trf.xlu0
        %v372 = vpop.trf.xlu0
        %v373 = vpop.trf.xlu0
        %v374 = vpop.trf.xlu0
        %v375 = vpop.trf.xlu0
        %vm376 = vcmask 23552
        %v378 = vsel %vm376, %v328, 0
        %v381 = vsel %vm376, %v329, 0
        %v384 = vsel %vm376, %v330, 0
        %v387 = vsel %vm376, %v331, 0
        %v390 = vsel %vm376, %v332, 0
        %v393 = vsel %vm376, %v333, 0
        %v396 = vsel %vm376, %v334, 0
        %v399 = vsel %vm376, %v335, 0
        %v402 = vsel %vm376, %v336, 0
        %v405 = vsel %vm376, %v337, 0
        %v408 = vsel %vm376, %v338, 0
        %v411 = vsel %vm376, %v339, 0
        %v414 = vsel %vm376, %v340, 0
        %v417 = vsel %vm376, %v341, 0
        %v420 = vsel %vm376, %v342, 0
        %v423 = vsel %vm376, %v343, 0
        %v426 = vsel %vm376, %v360, 0
        %v429 = vsel %vm376, %v361, 0
        %v432 = vsel %vm376, %v362, 0
        %v435 = vsel %vm376, %v363, 0
        %v438 = vsel %vm376, %v364, 0
        %v441 = vsel %vm376, %v365, 0
        %v444 = vsel %vm376, %v366, 0
        %v447 = vsel %vm376, %v367, 0
        %v450 = vsel %vm376, %v368, 0
        %v453 = vsel %vm376, %v369, 0
        %v456 = vsel %vm376, %v370, 0
        %v459 = vsel %vm376, %v371, 0
        %v462 = vsel %vm376, %v372, 0
        %v465 = vsel %vm376, %v373, 0
        %v468 = vsel %vm376, %v374, 0
        %v471 = vsel %vm376, %v375, 0
        %v474 = vsel %vm298, %v295, 0
        %476 = vmatpush.msra.mxu0 0.0
        %477 = vmatpush.msra.mxu0 0.0
        %478 = vmatpush.msra.mxu0 0.0
        %479 = vmatpush.msra.mxu0 0.0
        %480 = vmatpush.msra.mxu0 0.0
        %481 = vmatpush.msra.mxu0 0.0
        %482 = vmatpush.msra.mxu0 0.0
        %483 = vmatpush.msra.mxu0 0.0
        %484 = vmatpush.msra.mxu0 0.0
        %485 = vmatpush.msra.mxu0 0.0
        %486 = vmatpush.msra.mxu0 0.0
        %487 = vmatpush.msra.mxu0 0.0
        %488 = vmatpush.msra.mxu0 0.0
        %489 = vmatpush.msra.mxu0 0.0
        %490 = vmatpush.msra.mxu0 0.0
        %491 = vmatpush.msra.mxu0 %v474
        %492 = vmatmul.f32.gmra.mxu0 %v378
        %v493 = vpop.f32.mrf.mxu0
        %v494 = vadd.f32 0.0, %v493
        %495 = vmatmul.f32.gmra.mxu0 %v381
        %v496 = vpop.f32.mrf.mxu0
        %v497 = vadd.f32 0.0, %v496
        %498 = vmatmul.f32.gmra.mxu0 %v384
        %v499 = vpop.f32.mrf.mxu0
        %v500 = vadd.f32 0.0, %v499
        %501 = vmatmul.f32.gmra.mxu0 %v387
        %v502 = vpop.f32.mrf.mxu0
        %v503 = vadd.f32 0.0, %v502
        %504 = vmatmul.f32.gmra.mxu0 %v390
        %v505 = vpop.f32.mrf.mxu0
        %v506 = vadd.f32 0.0, %v505
        %507 = vmatmul.f32.gmra.mxu0 %v393
        %v508 = vpop.f32.mrf.mxu0
        %v509 = vadd.f32 0.0, %v508
        %510 = vmatmul.f32.gmra.mxu0 %v396
        %v511 = vpop.f32.mrf.mxu0
        %v512 = vadd.f32 0.0, %v511
        %513 = vmatmul.f32.gmra.mxu0 %v399
        %v514 = vpop.f32.mrf.mxu0
        %v515 = vadd.f32 0.0, %v514
        %516 = vmatmul.f32.gmra.mxu0 %v402
        %v517 = vpop.f32.mrf.mxu0
        %v518 = vadd.f32 0.0, %v517
        %519 = vmatmul.f32.gmra.mxu0 %v405
        %v520 = vpop.f32.mrf.mxu0
        %v521 = vadd.f32 0.0, %v520
        %522 = vmatmul.f32.gmra.mxu0 %v408
        %v523 = vpop.f32.mrf.mxu0
        %v524 = vadd.f32 0.0, %v523
        %525 = vmatmul.f32.gmra.mxu0 %v411
        %v526 = vpop.f32.mrf.mxu0
        %v527 = vadd.f32 0.0, %v526
        %528 = vmatmul.f32.gmra.mxu0 %v414
        %v529 = vpop.f32.mrf.mxu0
        %v530 = vadd.f32 0.0, %v529
        %531 = vmatmul.f32.gmra.mxu0 %v417
        %v532 = vpop.f32.mrf.mxu0
        %v533 = vadd.f32 0.0, %v532
        %534 = vmatmul.f32.gmra.mxu0 %v420
        %v535 = vpop.f32.mrf.mxu0
        %v536 = vadd.f32 0.0, %v535
        %537 = vmatmul.f32.gmra.mxu0 %v423
        %v538 = vpop.f32.mrf.mxu0
        %v539 = vadd.f32 0.0, %v538
        %540 = vmatmul.f32.gmra.mxu0 %v426
        %v541 = vpop.f32.mrf.mxu0
        %v542 = vadd.f32 0.0, %v541
        %543 = vmatmul.f32.gmra.mxu0 %v429
        %v544 = vpop.f32.mrf.mxu0
        %v545 = vadd.f32 0.0, %v544
        %546 = vmatmul.f32.gmra.mxu0 %v432
        %v547 = vpop.f32.mrf.mxu0
        %v548 = vadd.f32 0.0, %v547
        %549 = vmatmul.f32.gmra.mxu0 %v435
        %v550 = vpop.f32.mrf.mxu0
        %v551 = vadd.f32 0.0, %v550
        %552 = vmatmul.f32.gmra.mxu0 %v438
        %v553 = vpop.f32.mrf.mxu0
        %v554 = vadd.f32 0.0, %v553
        %555 = vmatmul.f32.gmra.mxu0 %v441
        %v556 = vpop.f32.mrf.mxu0
        %v557 = vadd.f32 0.0, %v556
        %558 = vmatmul.f32.gmra.mxu0 %v444
        %v559 = vpop.f32.mrf.mxu0
        %v560 = vadd.f32 0.0, %v559
        %561 = vmatmul.f32.gmra.mxu0 %v447
        %v562 = vpop.f32.mrf.mxu0
        %v563 = vadd.f32 0.0, %v562
        %564 = vmatmul.f32.gmra.mxu0 %v450
        %v565 = vpop.f32.mrf.mxu0
        %v566 = vadd.f32 0.0, %v565
        %567 = vmatmul.f32.gmra.mxu0 %v453
        %v568 = vpop.f32.mrf.mxu0
        %v569 = vadd.f32 0.0, %v568
        %570 = vmatmul.f32.gmra.mxu0 %v456
        %v571 = vpop.f32.mrf.mxu0
        %v572 = vadd.f32 0.0, %v571
        %573 = vmatmul.f32.gmra.mxu0 %v459
        %v574 = vpop.f32.mrf.mxu0
        %v575 = vadd.f32 0.0, %v574
        %576 = vmatmul.f32.gmra.mxu0 %v462
        %v577 = vpop.f32.mrf.mxu0
        %v578 = vadd.f32 0.0, %v577
        %579 = vmatmul.f32.gmra.mxu0 %v465
        %v580 = vpop.f32.mrf.mxu0
        %v581 = vadd.f32 0.0, %v580
        %582 = vmatmul.f32.gmra.mxu0 %v468
        %v583 = vpop.f32.mrf.mxu0
        %v584 = vadd.f32 0.0, %v583
        %585 = vmatmul.f32.gmra.mxu0 %v471
        %v586 = vpop.f32.mrf.mxu0
        %v587 = vadd.f32 0.0, %v586
        %588 = vdwg.mxu0
        %v589 = vmul.f32 %v494, 2.0
        %v590 = vmul.f32 %v497, 2.0
        %v591 = vmul.f32 %v500, 2.0
        %v592 = vmul.f32 %v503, 2.0
        %v593 = vmul.f32 %v506, 2.0
        %v594 = vmul.f32 %v509, 2.0
        %v595 = vmul.f32 %v512, 2.0
        %v596 = vmul.f32 %v515, 2.0
        %v597 = vmul.f32 %v518, 2.0
        %v598 = vmul.f32 %v521, 2.0
        %v599 = vmul.f32 %v524, 2.0
        %v600 = vmul.f32 %v527, 2.0
        %v601 = vmul.f32 %v530, 2.0
        %v602 = vmul.f32 %v533, 2.0
        %v603 = vmul.f32 %v536, 2.0
        %v604 = vmul.f32 %v539, 2.0
        %v605 = vmul.f32 %v542, 2.0
        %v606 = vmul.f32 %v545, 2.0
        %v607 = vmul.f32 %v548, 2.0
        %v608 = vmul.f32 %v551, 2.0
        %v609 = vmul.f32 %v554, 2.0
        %v610 = vmul.f32 %v557, 2.0
        %v611 = vmul.f32 %v560, 2.0
        %v612 = vmul.f32 %v563, 2.0
        %v613 = vmul.f32 %v566, 2.0
        %v614 = vmul.f32 %v569, 2.0
        %v615 = vmul.f32 %v572, 2.0
        %v616 = vmul.f32 %v575, 2.0
        %v617 = vmul.f32 %v578, 2.0
        %v618 = vmul.f32 %v581, 2.0
        %v619 = vmul.f32 %v584, 2.0
        %v620 = vmul.f32 %v587, 2.0
        %v621 = vsub.f32 %v305, %v589
        %v622 = vsub.f32 %v305, %v590
        %v623 = vsub.f32 %v305, %v591
        %v624 = vsub.f32 %v305, %v592
        %v625 = vsub.f32 %v305, %v593
        %v626 = vsub.f32 %v305, %v594
        %v627 = vsub.f32 %v305, %v595
        %v628 = vsub.f32 %v305, %v596
        %v629 = vsub.f32 %v305, %v597
        %v630 = vsub.f32 %v305, %v598
        %v631 = vsub.f32 %v305, %v599
        %v632 = vsub.f32 %v305, %v600
        %v633 = vsub.f32 %v305, %v601
        %v634 = vsub.f32 %v305, %v602
        %v635 = vsub.f32 %v305, %v603
        %v636 = vsub.f32 %v305, %v604
        %v637 = vsub.f32 %v305, %v605
        %v638 = vsub.f32 %v305, %v606
        %v639 = vsub.f32 %v305, %v607
        %v640 = vsub.f32 %v305, %v608
        %v641 = vsub.f32 %v305, %v609
        %v642 = vsub.f32 %v305, %v610
        %v643 = vsub.f32 %v305, %v611
        %v644 = vsub.f32 %v305, %v612
        %v645 = vsub.f32 %v305, %v613
        %v646 = vsub.f32 %v305, %v614
        %v647 = vsub.f32 %v305, %v615
        %v648 = vsub.f32 %v305, %v616
        %v649 = vsub.f32 %v305, %v617
        %v650 = vsub.f32 %v305, %v618
        %v651 = vsub.f32 %v305, %v619
        %v652 = vsub.f32 %v305, %v620
        %653 = vmin.xlane.f32.xlu0 %v621
        %v654 = vpop.xlane.xlu0 %653
        %655 = vmin.xlane.f32.xlu0 %v622
        %v656 = vpop.xlane.xlu0 %655
        %657 = vmin.xlane.f32.xlu0 %v623
        %v658 = vpop.xlane.xlu0 %657
        %659 = vmin.xlane.f32.xlu0 %v624
        %v660 = vpop.xlane.xlu0 %659
        %661 = vmin.xlane.f32.xlu0 %v625
        %v662 = vpop.xlane.xlu0 %661
        %663 = vmin.xlane.f32.xlu0 %v626
        %v664 = vpop.xlane.xlu0 %663
        %665 = vmin.xlane.f32.xlu0 %v627
        %v666 = vpop.xlane.xlu0 %665
        %667 = vmin.xlane.f32.xlu0 %v628
        %v668 = vpop.xlane.xlu0 %667
        %669 = vmin.xlane.f32.xlu0 %v629
        %v670 = vpop.xlane.xlu0 %669
        %671 = vmin.xlane.f32.xlu0 %v630
        %v672 = vpop.xlane.xlu0 %671
        %673 = vmin.xlane.f32.xlu0 %v631
        %v674 = vpop.xlane.xlu0 %673
        %675 = vmin.xlane.f32.xlu0 %v632
        %v676 = vpop.xlane.xlu0 %675
        %677 = vmin.xlane.f32.xlu0 %v633
        %v678 = vpop.xlane.xlu0 %677
        %679 = vmin.xlane.f32.xlu0 %v634
        %v680 = vpop.xlane.xlu0 %679
        %681 = vmin.xlane.f32.xlu0 %v635
        %v682 = vpop.xlane.xlu0 %681
        %683 = vmin.xlane.f32.xlu0 %v636
        %v684 = vpop.xlane.xlu0 %683
        %685 = vmin.xlane.f32.xlu0 %v637
        %v686 = vpop.xlane.xlu0 %685
        %687 = vmin.xlane.f32.xlu0 %v638
        %v688 = vpop.xlane.xlu0 %687
        %689 = vmin.xlane.f32.xlu0 %v639
        %v690 = vpop.xlane.xlu0 %689
        %691 = vmin.xlane.f32.xlu0 %v640
        %v692 = vpop.xlane.xlu0 %691
        %693 = vmin.xlane.f32.xlu0 %v641
        %v694 = vpop.xlane.xlu0 %693
        %695 = vmin.xlane.f32.xlu0 %v642
        %v696 = vpop.xlane.xlu0 %695
        %697 = vmin.xlane.f32.xlu0 %v643
        %v698 = vpop.xlane.xlu0 %697
        %699 = vmin.xlane.f32.xlu0 %v644
        %v700 = vpop.xlane.xlu0 %699
        %701 = vmin.xlane.f32.xlu0 %v645
        %v702 = vpop.xlane.xlu0 %701
        %703 = vmin.xlane.f32.xlu0 %v646
        %v704 = vpop.xlane.xlu0 %703
        %705 = vmin.xlane.f32.xlu0 %v647
        %v706 = vpop.xlane.xlu0 %705
        %707 = vmin.xlane.f32.xlu0 %v648
        %v708 = vpop.xlane.xlu0 %707
        %709 = vmin.xlane.f32.xlu0 %v649
        %v710 = vpop.xlane.xlu0 %709
        %711 = vmin.xlane.f32.xlu0 %v650
        %v712 = vpop.xlane.xlu0 %711
        %713 = vmin.xlane.f32.xlu0 %v651
        %v714 = vpop.xlane.xlu0 %713
        %715 = vmin.xlane.f32.xlu0 %v652
        %v716 = vpop.xlane.xlu0 %715
        %v717 = vsub.f32 %v654, %v621
        %v718 = vsub.f32 %v656, %v622
        %v719 = vsub.f32 %v658, %v623
        %v720 = vsub.f32 %v660, %v624
        %v721 = vsub.f32 %v662, %v625
        %v722 = vsub.f32 %v664, %v626
        %v723 = vsub.f32 %v666, %v627
        %v724 = vsub.f32 %v668, %v628
        %v725 = vsub.f32 %v670, %v629
        %v726 = vsub.f32 %v672, %v630
        %v727 = vsub.f32 %v674, %v631
        %v728 = vsub.f32 %v676, %v632
        %v729 = vsub.f32 %v678, %v633
        %v730 = vsub.f32 %v680, %v634
        %v731 = vsub.f32 %v682, %v635
        %v732 = vsub.f32 %v684, %v636
        %v733 = vsub.f32 %v686, %v637
        %v734 = vsub.f32 %v688, %v638
        %v735 = vsub.f32 %v690, %v639
        %v736 = vsub.f32 %v692, %v640
        %v737 = vsub.f32 %v694, %v641
        %v738 = vsub.f32 %v696, %v642
        %v739 = vsub.f32 %v698, %v643
        %v740 = vsub.f32 %v700, %v644
        %v741 = vsub.f32 %v702, %v645
        %v742 = vsub.f32 %v704, %v646
        %v743 = vsub.f32 %v706, %v647
        %v744 = vsub.f32 %v708, %v648
        %v745 = vsub.f32 %v710, %v649
        %v746 = vsub.f32 %v712, %v650
        %v747 = vsub.f32 %v714, %v651
        %v748 = vsub.f32 %v716, %v652
        %v749 = vmul.f32 %v717, 1.442695
        %v750 = vpow.pop %v749
        %v751 = vmul.f32 %v718, 1.442695
        %v752 = vpow.pop %v751
        %v753 = vmul.f32 %v719, 1.442695
        %v754 = vpow.pop %v753
        %v755 = vmul.f32 %v720, 1.442695
        %v756 = vpow.pop %v755
        %v757 = vmul.f32 %v721, 1.442695
        %v758 = vpow.pop %v757
        %v759 = vmul.f32 %v722, 1.442695
        %v760 = vpow.pop %v759
        %v761 = vmul.f32 %v723, 1.442695
        %v762 = vpow.pop %v761
        %v763 = vmul.f32 %v724, 1.442695
        %v764 = vpow.pop %v763
        %v765 = vmul.f32 %v725, 1.442695
        %v766 = vpow.pop %v765
        %v767 = vmul.f32 %v726, 1.442695
        %v768 = vpow.pop %v767
        %v769 = vmul.f32 %v727, 1.442695
        %v770 = vpow.pop %v769
        %v771 = vmul.f32 %v728, 1.442695
        %v772 = vpow.pop %v771
        %v773 = vmul.f32 %v729, 1.442695
        %v774 = vpow.pop %v773
        %v775 = vmul.f32 %v730, 1.442695
        %v776 = vpow.pop %v775
        %v777 = vmul.f32 %v731, 1.442695
        %v778 = vpow.pop %v777
        %v779 = vmul.f32 %v732, 1.442695
        %v780 = vpow.pop %v779
        %v781 = vmul.f32 %v733, 1.442695
        %v782 = vpow.pop %v781
        %v783 = vmul.f32 %v734, 1.442695
        %v784 = vpow.pop %v783
        %v785 = vmul.f32 %v735, 1.442695
        %v786 = vpow.pop %v785
        %v787 = vmul.f32 %v736, 1.442695
        %v788 = vpow.pop %v787
        %v789 = vmul.f32 %v737, 1.442695
        %v790 = vpow.pop %v789
        %v791 = vmul.f32 %v738, 1.442695
        %v792 = vpow.pop %v791
        %v793 = vmul.f32 %v739, 1.442695
        %v794 = vpow.pop %v793
        %v795 = vmul.f32 %v740, 1.442695
        %v796 = vpow.pop %v795
        %v797 = vmul.f32 %v741, 1.442695
        %v798 = vpow.pop %v797
        %v799 = vmul.f32 %v742, 1.442695
        %v800 = vpow.pop %v799
        %v801 = vmul.f32 %v743, 1.442695
        %v802 = vpow.pop %v801
        %v803 = vmul.f32 %v744, 1.442695
        %v804 = vpow.pop %v803
        %v805 = vmul.f32 %v745, 1.442695
        %v806 = vpow.pop %v805
        %v807 = vmul.f32 %v746, 1.442695
        %v808 = vpow.pop %v807
        %v809 = vmul.f32 %v747, 1.442695
        %v810 = vpow.pop %v809
        %v811 = vmul.f32 %v748, 1.442695
        %v812 = vpow.pop %v811
        %813 = vadd.xlane.f32.xlu0 %v750
        %v814 = vpop.xlane.xlu0 %813
        %815 = vadd.xlane.f32.xlu0 %v752
        %v816 = vpop.xlane.xlu0 %815
        %817 = vadd.xlane.f32.xlu0 %v754
        %v818 = vpop.xlane.xlu0 %817
        %819 = vadd.xlane.f32.xlu0 %v756
        %v820 = vpop.xlane.xlu0 %819
        %821 = vadd.xlane.f32.xlu0 %v758
        %v822 = vpop.xlane.xlu0 %821
        %823 = vadd.xlane.f32.xlu0 %v760
        %v824 = vpop.xlane.xlu0 %823
        %825 = vadd.xlane.f32.xlu0 %v762
        %v826 = vpop.xlane.xlu0 %825
        %827 = vadd.xlane.f32.xlu0 %v764
        %v828 = vpop.xlane.xlu0 %827
        %829 = vadd.xlane.f32.xlu0 %v766
        %v830 = vpop.xlane.xlu0 %829
        %831 = vadd.xlane.f32.xlu0 %v768
        %v832 = vpop.xlane.xlu0 %831
        %833 = vadd.xlane.f32.xlu0 %v770
        %v834 = vpop.xlane.xlu0 %833
        %835 = vadd.xlane.f32.xlu0 %v772
        %v836 = vpop.xlane.xlu0 %835
        %837 = vadd.xlane.f32.xlu0 %v774
        %v838 = vpop.xlane.xlu0 %837
        %839 = vadd.xlane.f32.xlu0 %v776
        %v840 = vpop.xlane.xlu0 %839
        %841 = vadd.xlane.f32.xlu0 %v778
        %v842 = vpop.xlane.xlu0 %841
        %843 = vadd.xlane.f32.xlu0 %v780
        %v844 = vpop.xlane.xlu0 %843
        %845 = vadd.xlane.f32.xlu0 %v782
        %v846 = vpop.xlane.xlu0 %845
        %847 = vadd.xlane.f32.xlu0 %v784
        %v848 = vpop.xlane.xlu0 %847
        %849 = vadd.xlane.f32.xlu0 %v786
        %v850 = vpop.xlane.xlu0 %849
        %851 = vadd.xlane.f32.xlu0 %v788
        %v852 = vpop.xlane.xlu0 %851
        %853 = vadd.xlane.f32.xlu0 %v790
        %v854 = vpop.xlane.xlu0 %853
        %855 = vadd.xlane.f32.xlu0 %v792
        %v856 = vpop.xlane.xlu0 %855
        %857 = vadd.xlane.f32.xlu0 %v794
        %v858 = vpop.xlane.xlu0 %857
        %859 = vadd.xlane.f32.xlu0 %v796
        %v860 = vpop.xlane.xlu0 %859
        %861 = vadd.xlane.f32.xlu0 %v798
        %v862 = vpop.xlane.xlu0 %861
        %863 = vadd.xlane.f32.xlu0 %v800
        %v864 = vpop.xlane.xlu0 %863
        %865 = vadd.xlane.f32.xlu0 %v802
        %v866 = vpop.xlane.xlu0 %865
        %867 = vadd.xlane.f32.xlu0 %v804
        %v868 = vpop.xlane.xlu0 %867
        %869 = vadd.xlane.f32.xlu0 %v806
        %v870 = vpop.xlane.xlu0 %869
        %871 = vadd.xlane.f32.xlu0 %v808
        %v872 = vpop.xlane.xlu0 %871
        %873 = vadd.xlane.f32.xlu0 %v810
        %v874 = vpop.xlane.xlu0 %873
        %875 = vadd.xlane.f32.xlu0 %v812
        %v876 = vpop.xlane.xlu0 %875
        %v877 = vrcp.pop %v814
        %v878 = vrcp.pop %v816
        %v879 = vrcp.pop %v818
        %v880 = vrcp.pop %v820
        %v881 = vrcp.pop %v822
        %v882 = vrcp.pop %v824
        %v883 = vrcp.pop %v826
        %v884 = vrcp.pop %v828
        %v885 = vrcp.pop %v830
        %v886 = vrcp.pop %v832
        %v887 = vrcp.pop %v834
        %v888 = vrcp.pop %v836
        %v889 = vrcp.pop %v838
        %v890 = vrcp.pop %v840
        %v891 = vrcp.pop %v842
        %v892 = vrcp.pop %v844
        %v893 = vrcp.pop %v846
        %v894 = vrcp.pop %v848
        %v895 = vrcp.pop %v850
        %v896 = vrcp.pop %v852
        %v897 = vrcp.pop %v854
        %v898 = vrcp.pop %v856
        %v899 = vrcp.pop %v858
        %v900 = vrcp.pop %v860
        %v901 = vrcp.pop %v862
        %v902 = vrcp.pop %v864
        %v903 = vrcp.pop %v866
        %v904 = vrcp.pop %v868
        %v905 = vrcp.pop %v870
        %v906 = vrcp.pop %v872
        %v907 = vrcp.pop %v874
        %v908 = vrcp.pop %v876
        %v909 = vmul.f32 %v750, %v877
        %v910 = vmul.f32 %v752, %v878
        %v911 = vmul.f32 %v754, %v879
        %v912 = vmul.f32 %v756, %v880
        %v913 = vmul.f32 %v758, %v881
        %v914 = vmul.f32 %v760, %v882
        %v915 = vmul.f32 %v762, %v883
        %v916 = vmul.f32 %v764, %v884
        %v917 = vmul.f32 %v766, %v885
        %v918 = vmul.f32 %v768, %v886
        %v919 = vmul.f32 %v770, %v887
        %v920 = vmul.f32 %v772, %v888
        %v921 = vmul.f32 %v774, %v889
        %v922 = vmul.f32 %v776, %v890
        %v923 = vmul.f32 %v778, %v891
        %v924 = vmul.f32 %v780, %v892
        %v925 = vmul.f32 %v782, %v893
        %v926 = vmul.f32 %v784, %v894
        %v927 = vmul.f32 %v786, %v895
        %v928 = vmul.f32 %v788, %v896
        %v929 = vmul.f32 %v790, %v897
        %v930 = vmul.f32 %v792, %v898
        %v931 = vmul.f32 %v794, %v899
        %v932 = vmul.f32 %v796, %v900
        %v933 = vmul.f32 %v798, %v901
        %v934 = vmul.f32 %v800, %v902
        %v935 = vmul.f32 %v802, %v903
        %v936 = vmul.f32 %v804, %v904
        %v937 = vmul.f32 %v806, %v905
        %v938 = vmul.f32 %v808, %v906
        %v939 = vmul.f32 %v810, %v907
        %v940 = vmul.f32 %v812, %v908
        %941 = vst [vmem:[%s253] sm:$0xff] %v909
        %942 = vst [vmem:[%s253 + $0x8] sm:$0xff] %v910
        %943 = vst [vmem:[%s253 + $0x10] sm:$0xff] %v911
        %944 = vst [vmem:[%s253 + $0x18] sm:$0xff] %v912
        %945 = vst [vmem:[%s253 + $0x20] sm:$0xff] %v913
        %946 = vst [vmem:[%s253 + $0x28] sm:$0xff] %v914
        %947 = vst [vmem:[%s253 + $0x30] sm:$0xff] %v915
        %948 = vst [vmem:[%s253 + $0x38] sm:$0xff] %v916
        %949 = vst [vmem:[%s253 + $0x40] sm:$0xff] %v917
        %950 = vst [vmem:[%s253 + $0x48] sm:$0xff] %v918
        %951 = vst [vmem:[%s253 + $0x50] sm:$0xff] %v919
        %952 = vst [vmem:[%s253 + $0x58] sm:$0xff] %v920
        %953 = vst [vmem:[%s253 + $0x60] sm:$0xff] %v921
        %954 = vst [vmem:[%s253 + $0x68] sm:$0xff] %v922
        %955 = vst [vmem:[%s253 + $0x70] sm:$0xff] %v923
        %956 = vst [vmem:[%s253 + $0x78] sm:$0xff] %v924
        %957 = vst [vmem:[%s253 + $0x80] sm:$0xff] %v925
        %958 = vst [vmem:[%s253 + $0x88] sm:$0xff] %v926
        %959 = vst [vmem:[%s253 + $0x90] sm:$0xff] %v927
        %960 = vst [vmem:[%s253 + $0x98] sm:$0xff] %v928
        %961 = vst [vmem:[%s253 + $0xa0] sm:$0xff] %v929
        %962 = vst [vmem:[%s253 + $0xa8] sm:$0xff] %v930
        %963 = vst [vmem:[%s253 + $0xb0] sm:$0xff] %v931
        %964 = vst [vmem:[%s253 + $0xb8] sm:$0xff] %v932
        %965 = vst [vmem:[%s253 + $0xc0] sm:$0xff] %v933
        %966 = vst [vmem:[%s253 + $0xc8] sm:$0xff] %v934
        %967 = vst [vmem:[%s253 + $0xd0] sm:$0xff] %v935
        %968 = vst [vmem:[%s253 + $0xd8] sm:$0xff] %v936
        %969 = vst [vmem:[%s253 + $0xe0] sm:$0xff] %v937
        %970 = vst [vmem:[%s253 + $0xe8] sm:$0xff] %v938
        %971 = vst [vmem:[%s253 + $0xf0] sm:$0xff] %v939
        %972 = vst [vmem:[%s253 + $0xf8] sm:$0xff] %v940
        %973 = vst [vmem:[%s260] sm:$0xff] %v750
        %974 = vst [vmem:[%s260 + $0x8] sm:$0xff] %v752
        %975 = vst [vmem:[%s260 + $0x10] sm:$0xff] %v754
        %976 = vst [vmem:[%s260 + $0x18] sm:$0xff] %v756
        %977 = vst [vmem:[%s260 + $0x20] sm:$0xff] %v758
        %978 = vst [vmem:[%s260 + $0x28] sm:$0xff] %v760
        %979 = vst [vmem:[%s260 + $0x30] sm:$0xff] %v762
        %980 = vst [vmem:[%s260 + $0x38] sm:$0xff] %v764
        %981 = vst [vmem:[%s260 + $0x40] sm:$0xff] %v766
        %982 = vst [vmem:[%s260 + $0x48] sm:$0xff] %v768
        %983 = vst [vmem:[%s260 + $0x50] sm:$0xff] %v770
        %984 = vst [vmem:[%s260 + $0x58] sm:$0xff] %v772
        %985 = vst [vmem:[%s260 + $0x60] sm:$0xff] %v774
        %986 = vst [vmem:[%s260 + $0x68] sm:$0xff] %v776
        %987 = vst [vmem:[%s260 + $0x70] sm:$0xff] %v778
        %988 = vst [vmem:[%s260 + $0x78] sm:$0xff] %v780
        %989 = vst [vmem:[%s260 + $0x80] sm:$0xff] %v782
        %990 = vst [vmem:[%s260 + $0x88] sm:$0xff] %v784
        %991 = vst [vmem:[%s260 + $0x90] sm:$0xff] %v786
        %992 = vst [vmem:[%s260 + $0x98] sm:$0xff] %v788
        %993 = vst [vmem:[%s260 + $0xa0] sm:$0xff] %v790
        %994 = vst [vmem:[%s260 + $0xa8] sm:$0xff] %v792
        %995 = vst [vmem:[%s260 + $0xb0] sm:$0xff] %v794
        %996 = vst [vmem:[%s260 + $0xb8] sm:$0xff] %v796
        %997 = vst [vmem:[%s260 + $0xc0] sm:$0xff] %v798
        %998 = vst [vmem:[%s260 + $0xc8] sm:$0xff] %v800
        %999 = vst [vmem:[%s260 + $0xd0] sm:$0xff] %v802
        %1000 = vst [vmem:[%s260 + $0xd8] sm:$0xff] %v804
        %1001 = vst [vmem:[%s260 + $0xe0] sm:$0xff] %v806
        %1002 = vst [vmem:[%s260 + $0xe8] sm:$0xff] %v808
        %1003 = vst [vmem:[%s260 + $0xf0] sm:$0xff] %v810
        %1004 = vst [vmem:[%s260 + $0xf8] sm:$0xff] %v812
        %1005 = vmatpush.xpose.msra.mxu0 %v924
        %1006 = vmatpush.xpose.msra.mxu0 %v923
        %1007 = vmatpush.xpose.msra.mxu0 %v922
        %1008 = vmatpush.xpose.msra.mxu0 %v921
        %1009 = vmatpush.xpose.msra.mxu0 %v920
        %1010 = vmatpush.xpose.msra.mxu0 %v919
        %1011 = vmatpush.xpose.msra.mxu0 %v918
        %1012 = vmatpush.xpose.msra.mxu0 %v917
        %1013 = vmatpush.xpose.msra.mxu0 %v916
        %1014 = vmatpush.xpose.msra.mxu0 %v915
        %1015 = vmatpush.xpose.msra.mxu0 %v914
        %1016 = vmatpush.xpose.msra.mxu0 %v913
        %1017 = vmatpush.xpose.msra.mxu0 %v912
        %1018 = vmatpush.xpose.msra.mxu0 %v911
        %1019 = vmatpush.xpose.msra.mxu0 %v910
        %1020 = vmatpush.xpose.msra.mxu0 %v909
        %1021 = vmatmul.f32.gmra.mxu0 %v296
        %v1022 = vpop.f32.mrf.mxu0
        %v1023 = vadd.f32 0.0, %v1022
        %1024 = vdwg.mxu0
        %1025 = vmatpush.xpose.msra.mxu0 %v940
        %1026 = vmatpush.xpose.msra.mxu0 %v939
        %1027 = vmatpush.xpose.msra.mxu0 %v938
        %1028 = vmatpush.xpose.msra.mxu0 %v937
        %1029 = vmatpush.xpose.msra.mxu0 %v936
        %1030 = vmatpush.xpose.msra.mxu0 %v935
        %1031 = vmatpush.xpose.msra.mxu0 %v934
        %1032 = vmatpush.xpose.msra.mxu0 %v933
        %1033 = vmatpush.xpose.msra.mxu0 %v932
        %1034 = vmatpush.xpose.msra.mxu0 %v931
        %1035 = vmatpush.xpose.msra.mxu0 %v930
        %1036 = vmatpush.xpose.msra.mxu0 %v929
        %1037 = vmatpush.xpose.msra.mxu0 %v928
        %1038 = vmatpush.xpose.msra.mxu0 %v927
        %1039 = vmatpush.xpose.msra.mxu0 %v926
        %1040 = vmatpush.xpose.msra.mxu0 %v925
        %1041 = vmatmul.f32.gmra.mxu0 %v296
        %v1042 = vpop.f32.mrf.mxu0
        %v1043 = vadd.f32 0.0, %v1042
        %1044 = vdwg.mxu0
        %v1047 = vrot.slane %v1043, 4
        %vm1048 = vcmask 1043456
        %v1049 = vsel %vm1048, %v1023, %v1047
        %1051 = vst [vmem:[%s292] sm:$0x77] %v1049
        %s1052 = sand.u32 %s118, 1
        %s1053 = scalar_lea.sflag [#allocation3], %s1052
        %s1054 = sand.u32 %s118, 1
        %s1055 = smul.addr %s1054, 256
        %s1056 = scalar_lea.vmem [#allocation2], %s1055
        %s1057 = sand.u32 %s146, 1
        %s1058 = scalar_lea.sflag [#allocation5], %s1057
        %s1059 = sand.u32 %s146, 1
        %s1060 = smul.addr %s1059, 256
        %s1061 = scalar_lea.vmem [#allocation4], %s1060
        %s1062 = smul.u32 2, %s28
        %p1063 = scmp.lt.s32.totalorder %s27, 1
        %s1064 = scalar_select %p1063, %s27, 1
        %p1065 = scmp.lt.s32.totalorder %s1062, 1
        %s1066 = scalar_select %p1065, %s1062, 1
        %s1067 = smul.addr %s1064, 2
        %s1068 = sadd.s32 %s1066, %s1067
        %s1069 = smul.addr %s1068, 4
        %s1070 = scalar_lea.vmem %s5, %s1069
        // Predicated region
        $region33: #{fixed_source_deformer_forward.3} parent=31 // pred_check
          %p1071 = pneg %p128
        $region34: #{fixed_source_deformer_forward.3} parent=31 // pred_check_branch
          %1073 = sbr.rel (%p1071) target = $region36
        $region35: #{fixed_source_deformer_forward.3} parent=31 // pred_region
          %s1074 = smul.u32 32, %s28
          %1076 = vsyncadd %s1053, 0
          %s1077 = smul.addr %s27, 32
          %s1078 = sadd.s32 %s1074, %s1077
          %s1079 = smul.addr %s1078, 8
          %s1080 = scalar_lea.hbm %s3, %s1079
          %s1081 = sshll.u32 %s1056, 4
          %s1082 = int_to_ptr.vmem [resolvable:$true] %s1081
          %s1083 = sshll.u32 %s1080, 4
          %s1084 = int_to_ptr.hbm [resolvable:$true] %s1083
          %1089 = dma.vmem_to_hbm [thread:$0]  %s1082, 4096, %s1084, %s1053, 128, 128, 8
        $region36: #{fixed_source_deformer_forward.3} parent=31 // pred_fallthru
          _
        // Predicated region
        $region37: #{fixed_source_deformer_forward.3} parent=31 // pred_check
          %p1090 = pneg %p156
        $region38: #{fixed_source_deformer_forward.3} parent=31 // pred_check_branch
          %1092 = sbr.rel (%p1090) target = $region40
        $region39: #{fixed_source_deformer_forward.3} parent=31 // pred_region
          %s1093 = smul.u32 32, %s28
          %1095 = vsyncadd %s1058, 0
          %s1096 = smul.addr %s27, 32
          %s1097 = sadd.s32 %s1093, %s1096
          %s1098 = smul.addr %s1097, 8
          %s1099 = scalar_lea.hbm %s4, %s1098
          %s1100 = sshll.u32 %s1061, 4
          %s1101 = int_to_ptr.vmem [resolvable:$true] %s1100
          %s1102 = sshll.u32 %s1099, 4
          %s1103 = int_to_ptr.hbm [resolvable:$true] %s1102
          %1108 = dma.vmem_to_hbm [thread:$0]  %s1101, 4096, %s1103, %s1058, 128, 128, 8
        $region40: #{fixed_source_deformer_forward.3} parent=31 // pred_fallthru
          _
        // Predicated region
        $region41: #{fixed_source_deformer_forward.3} parent=31 // pred_check
          %p1109 = pneg %p184
        $region42: #{fixed_source_deformer_forward.3} parent=31 // pred_check_branch
          %1111 = sbr.rel (%p1109) target = $region44
        $region43: #{fixed_source_deformer_forward.3} parent=31 // pred_region
          %s1112 = smul.u32 2, %s28
        $region44: #{fixed_source_deformer_forward.3} parent=31 // pred_fallthru
          _
      $region32: #{fixed_source_deformer_forward.3} parent=5 // pred_fallthru
        _
      %p1113 = scmp.le.s32.totalorder 2, %s18
      // Predicated region
      $region45: #{fixed_source_deformer_forward.3} parent=5 // pred_check
        %p1114 = pneg %p1113
      $region46: #{fixed_source_deformer_forward.3} parent=5 // pred_check_branch
        %1116 = sbr.rel (%p1114) target = $region48
      $region47: #{fixed_source_deformer_forward.3} parent=5 // pred_region
        %s1117 = ssub.s32 %s18, 2
        // Predicated region
        $region49: #{fixed_source_deformer_forward.3} parent=47 // pred_check
          %p1118 = pneg %p134
        $region50: #{fixed_source_deformer_forward.3} parent=47 // pred_check_branch
          %1120 = sbr.rel (%p1118) target = $region52
        $region51: #{fixed_source_deformer_forward.3} parent=47 // pred_region
          %s1121 = sand.u32 %s119, 1
          %s1122 = scalar_lea.sflag [#allocation3], %s1121
          %s1123 = sand.u32 %s119, 1
          %s1124 = smul.addr %s1123, 256
          %s1125 = scalar_lea.vmem [#allocation2], %s1124
          %1127 = dma.done %s1122, 4096
        $region52: #{fixed_source_deformer_forward.3} parent=47 // pred_fallthru
          _
        // Predicated region
        $region53: #{fixed_source_deformer_forward.3} parent=47 // pred_check
          %p1128 = pneg %p162
        $region54: #{fixed_source_deformer_forward.3} parent=47 // pred_check_branch
          %1130 = sbr.rel (%p1128) target = $region56
        $region55: #{fixed_source_deformer_forward.3} parent=47 // pred_region
          %s1131 = sand.u32 %s147, 1
          %s1132 = scalar_lea.sflag [#allocation5], %s1131
          %s1133 = sand.u32 %s147, 1
          %s1134 = smul.addr %s1133, 256
          %s1135 = scalar_lea.vmem [#allocation4], %s1134
          %1137 = dma.done %s1132, 4096
        $region56: #{fixed_source_deformer_forward.3} parent=47 // pred_fallthru
          _
        // Predicated region
        $region57: #{fixed_source_deformer_forward.3} parent=47 // pred_check
          %p1138 = pneg %p190
        $region58: #{fixed_source_deformer_forward.3} parent=47 // pred_check_branch
          %1140 = sbr.rel (%p1138) target = $region60
        $region59: #{fixed_source_deformer_forward.3} parent=47 // pred_region
          %s1141 = smul.u32 2, %s30
          %p1142 = scmp.lt.s32.totalorder %s29, 1
          %s1143 = scalar_select %p1142, %s29, 1
          %p1144 = scmp.lt.s32.totalorder %s1141, 1
          %s1145 = scalar_select %p1144, %s1141, 1
          %s1146 = smul.addr %s1143, 2
          %s1147 = sadd.s32 %s1145, %s1146
          %s1148 = smul.addr %s1147, 4
          %s1149 = scalar_lea.vmem %s5, %s1148
        $region60: #{fixed_source_deformer_forward.3} parent=47 // pred_fallthru
          _
      $region48: #{fixed_source_deformer_forward.3} parent=5 // pred_fallthru
        _
    $region6: #{fixed_source_deformer_forward.3} parent=1 // loop_footer
      %s22 = sadd.s32 1, %s18
    $region7: #{fixed_source_deformer_forward.3} parent=1 // loop_footer_branch
      %17 = sbr.rel target = $region3
    $region8: #{fixed_source_deformer_forward.3} parent=1 // loop_exit
      _
    %1150 = vsyncpa [#allocation3], 1
    %s1151 = scalar_lea.sflag [#allocation3], 1
    %1152 = vsyncpa %s1151, 1
    %1153 = vsyncpa [#allocation5], 1
    %s1154 = scalar_lea.sflag [#allocation5], 1
    %1155 = vsyncpa %s1154, 1

// kernel: fixed_source_deformer_forward.2
$region0: #{fixed_source_deformer_forward.2}
  #allocation0 [shape = 'u32[]', space=smem, size = 0x4, offset = 0x4, fixed_abs, tag = 'smem constant byte address 0x4 - core index']
  #allocation1 [shape = 'u32[72,128]{1,0:T(1,128)}', space=vmem, size = 0x9000, scoped, tag = 'internal scratch']
  #allocation2 [shape = 'f32[128,1]{1,0:T(8,128)}', space=vmem, size = 0x10000, scoped, tag = 'scratch operand']
  %s0 = inlined_call_operand.vmem [shape: f32[2,3,256], index: 0, kind: input, shape index: {}]
  %s1 = inlined_call_operand.vmem [shape: f32[1,3,128], index: 1, kind: input, shape index: {}]
  %s2 = inlined_call_operand.hbm [shape: f32[128,3], index: 2, kind: input, shape index: {}]
  %s3 = inlined_call_operand.hbm [shape: f32[128,1], index: 3, kind: input, shape index: {}]
  %s4 = inlined_call_operand.hbm [shape: f32[128,128], index: 4, kind: input, shape index: {}]
  %s5 = inlined_call_operand.hbm [shape: f32[1,128], index: 5, kind: input, shape index: {}]
  %s6 = inlined_call_operand.hbm [shape: f32[128,3], index: 6, kind: input, shape index: {}]
  %s7 = inlined_call_operand.hbm [shape: f32[128,1], index: 7, kind: input, shape index: {}]
  %s8 = inlined_call_operand.hbm [shape: f32[128,128], index: 8, kind: input, shape index: {}]
  %s9 = inlined_call_operand.hbm [shape: f32[128,1], index: 9, kind: input, shape index: {}]
  %s10 = inlined_call_operand.hbm [shape: f32[3,128], index: 10, kind: input, shape index: {}]
  %s11 = inlined_call_operand.hbm [shape: f32[3,1], index: 11, kind: input, shape index: {}]
  %s12 = inlined_call_operand.hbm [shape: f32[128,512], index: 12, kind: input, shape index: {}]
  %s13 = inlined_call_operand.hbm [shape: f32[1,512], index: 13, kind: input, shape index: {}]
  %s14 = inlined_call_operand.hbm [shape: f32[512,1024], index: 14, kind: input, shape index: {}]
  %s15 = inlined_call_operand.hbm [shape: f32[1,1024], index: 15, kind: input, shape index: {}]
  %s16 = inlined_call_operand.hbm [shape: f32[1024,384], index: 16, kind: input, shape index: {}]
  %s17 = inlined_call_operand.hbm [shape: f32[1,384], index: 17, kind: input, shape index: {}]
  %s18 = inlined_call_operand.vmem [shape: f32[2,3,128], index: 18, kind: output, shape index: {0}]
  %s19 = inlined_call_operand.vmem [shape: f32[2,3,128], index: 19, kind: output, shape index: {1}]
  %20 = xla_tuple %s18, %s19
  %s21 = sld [smem:[#allocation0]]
  $region185: #{fixed_source_deformer_forward.2} parent=0
    _
  %s23 = ssub.s32 1, %s21
  %s24 = scalar_select 0, %s23, %s21
  $region1: #{fixed_source_deformer_forward.2} parent=0
    #allocation3 [shape = 'u8[65536]{0}', space=vmem, size = 0x10000, scoped, tag = 'input window, operand 2, single buffered']
    #allocation4 [shape = 's32[2]{0}', space=sflag, size = 0x8, scoped, tag = 'scoped memory for fixed_source_deformer_forward.2']
    #allocation5 [shape = 'u8[65536]{0}', space=vmem, size = 0x10000, scoped, tag = 'input window, operand 3, single buffered']
    #allocation6 [shape = 's32[1]{0}', space=sflag, size = 0x4, scoped, tag = 'scoped memory for fixed_source_deformer_forward.2']
    #allocation7 [shape = 'u8[65536]{0}', space=vmem, size = 0x10000, scoped, tag = 'input window, operand 4, single buffered']
    #allocation8 [shape = 'u8[512]{0}', space=vmem, size = 0x400, scoped, tag = 'input window, operand 5, single buffered']
    #allocation9 [shape = 's32[1]{0}', space=sflag, size = 0x4, scoped, tag = 'scoped memory for fixed_source_deformer_forward.2']
    #allocation10 [shape = 'u8[65536]{0}', space=vmem, size = 0x10000, scoped, tag = 'input window, operand 6, single buffered']
    #allocation11 [shape = 'u8[65536]{0}', space=vmem, size = 0x10000, scoped, tag = 'input window, operand 7, single buffered']
    #allocation12 [shape = 's32[1]{0}', space=sflag, size = 0x4, scoped, tag = 'scoped memory for fixed_source_deformer_forward.2']
    #allocation13 [shape = 'u8[65536]{0}', space=vmem, size = 0x10000, scoped, tag = 'input window, operand 8, single buffered']
    #allocation14 [shape = 'u8[65536]{0}', space=vmem, size = 0x10000, scoped, tag = 'input window, operand 9, single buffered']
    #allocation15 [shape = 's32[1]{0}', space=sflag, size = 0x4, scoped, tag = 'scoped memory for fixed_source_deformer_forward.2']
    #allocation16 [shape = 'u8[2048]{0}', space=vmem, size = 0x800, scoped, tag = 'input window, operand 10, single buffered']
    #allocation17 [shape = 'u8[2048]{0}', space=vmem, size = 0x800, scoped, tag = 'input window, operand 11, single buffered']
    #allocation18 [shape = 's32[1]{0}', space=sflag, size = 0x4, scoped, tag = 'scoped memory for fixed_source_deformer_forward.2']
    #allocation19 [shape = 'u8[262144]{0}', space=vmem, size = 0x40000, scoped, tag = 'input window, operand 12, single buffered']
    #allocation20 [shape = 'u8[2048]{0}', space=vmem, size = 0x800, scoped, tag = 'input window, operand 13, single buffered']
    #allocation21 [shape = 's32[1]{0}', space=sflag, size = 0x4, scoped, tag = 'scoped memory for fixed_source_deformer_forward.2']
    #allocation22 [shape = 'u8[2097152]{0}', space=vmem, size = 0x200000, scoped, tag = 'input window, operand 14, single buffered']
    #allocation23 [shape = 'u8[4096]{0}', space=vmem, size = 0x1000, scoped, tag = 'input window, operand 15, single buffered']
    #allocation24 [shape = 's32[1]{0}', space=sflag, size = 0x4, scoped, tag = 'scoped memory for fixed_source_deformer_forward.2']
    #allocation25 [shape = 'u8[1572864]{0}', space=vmem, size = 0x180000, scoped, tag = 'input window, operand 16, single buffered']
    #allocation26 [shape = 'u8[1536]{0}', space=vmem, size = 0x800, scoped, tag = 'input window, operand 17, single buffered']
    #allocation27 [shape = 's32[1]{0}', space=sflag, size = 0x4, scoped, tag = 'scoped memory for fixed_source_deformer_forward.2']
    %25 = vsyncpa [#allocation4], 0
    %26 = vsyncpa [#allocation6], 0
    %27 = vsyncpa [#allocation9], 0
    %28 = vsyncpa [#allocation12], 0
    %29 = vsyncpa [#allocation15], 0
    %30 = vsyncpa [#allocation18], 0
    %31 = vsyncpa [#allocation21], 0
    %32 = vsyncpa [#allocation24], 0
    %33 = vsyncpa [#allocation27], 0
    loop: start=0, step=1, limit=4
    $region2: #{fixed_source_deformer_forward.2} parent=1 // loop_pre_header
      _
    $region3: #{fixed_source_deformer_forward.2} parent=1 // loop_header
      %s35 = sphi 0, %s39
      %p36 = scmp.ge.s32.totalorder %s35, 4
      %s42 = sphi 0, %s54
      %s43 = sphi 0, %s50
      %s44 = sphi 0, %s42
      %s45 = sphi 0, %s43
      %s46 = sphi 0, %s44
      %s47 = sphi 0, %s45
      %s59 = sphi 0, %s61
      %s62 = sphi 0, %s59
      %s63 = sphi 0, %s62
      %s79 = sphi 0, %s63
      %s83 = sphi 0, %s83
      %s85 = sphi 0, %s83
      %s86 = sphi 0, %s85
      %s100 = sphi 0, %s86
      %s104 = sphi 0, %s104
      %s106 = sphi 0, %s104
      %s107 = sphi 0, %s106
      %s121 = sphi 0, %s107
      %s125 = sphi 0, %s125
      %s127 = sphi 0, %s125
      %s128 = sphi 0, %s127
      %s142 = sphi 0, %s128
      %s146 = sphi 0, %s146
      %s148 = sphi 0, %s146
      %s149 = sphi 0, %s148
      %s163 = sphi 0, %s149
      %s167 = sphi 0, %s167
      %s169 = sphi 0, %s167
      %s170 = sphi 0, %s169
      %s184 = sphi 0, %s170
      %s188 = sphi 0, %s188
      %s190 = sphi 0, %s188
      %s191 = sphi 0, %s190
      %s205 = sphi 0, %s191
      %s209 = sphi 0, %s209
      %s211 = sphi 0, %s209
      %s212 = sphi 0, %s211
      %s226 = sphi 0, %s212
      %s230 = sphi 0, %s230
      %s232 = sphi 0, %s230
      %s233 = sphi 0, %s232
      %s247 = sphi 0, %s233
      %s251 = sphi 0, %s251
      %s253 = sphi 0, %s251
      %s254 = sphi 0, %s253
      %s268 = sphi 0, %s254
      %s272 = sphi 0, %s272
      %s274 = sphi 0, %s272
      %s275 = sphi 0, %s274
      %s289 = sphi 0, %s275
      %s293 = sphi 0, %s293
      %s295 = sphi 0, %s293
      %s296 = sphi 0, %s295
      %s310 = sphi 0, %s296
      %s314 = sphi 0, %s314
      %s316 = sphi 0, %s314
      %s317 = sphi 0, %s316
      %s331 = sphi 0, %s317
      %s335 = sphi 0, %s335
      %s337 = sphi 0, %s335
      %s338 = sphi 0, %s337
      %s352 = sphi 0, %s338
      %s356 = sphi 0, %s356
      %s358 = sphi 0, %s356
      %s359 = sphi 0, %s358
      %s373 = sphi 0, %s359
      %s377 = sphi 0, %s377
      %s379 = sphi 0, %s377
      %s380 = sphi 0, %s379
      %s394 = sphi 0, %s380
      %s398 = sphi 0, %s398
      %s400 = sphi 0, %s398
      %s401 = sphi 0, %s400
      %s415 = sphi 0, %s401
      %s419 = sphi 0, %s419
      %s421 = sphi 0, %s419
      %s422 = sphi 0, %s421
      %s436 = sphi 0, %s422
      %s442 = sphi 0, %s444
      %s445 = sphi 0, %s442
      %s446 = sphi 0, %s445
      %s462 = sphi 0, %s446
      %s468 = sphi 0, %s470
      %s471 = sphi 0, %s468
      %s472 = sphi 0, %s471
      %s488 = sphi 0, %s472
    $region4: #{fixed_source_deformer_forward.2} parent=1 // loop_header_branch
      %38 = sbr.rel (%p36) target = $region8
    $region5: #{fixed_source_deformer_forward.2} parent=1 // loop_body
      %s40 = ssub.s32 %s35, 1
      %s41 = ssub.s32 %s35, 2
      %s48 = sadd.s32 1, %s43
      %p49 = scmp.ge.s32.totalorder %s48, 1
      %s50 = scalar_select %p49, 0, %s48
      %s51 = sadd.s32 1, %s42
      %s52 = scalar_select %p49, %s51, %s42
      %p53 = scmp.ge.s32.totalorder %s52, 2
      %s54 = scalar_select %p53, 0, %s52
      %s55 = ssub.s32 %s42, %s54
      %s56 = ssub.s32 %s43, %s50
      %s57 = sor.u32 %s55, %s56
      %p58 = scmp.eq.s32.totalorder %s57, 0
      %s60 = sadd.s32 %s59, 1
      %s61 = scalar_select %p58, %s59, %s60
      %p64 = pneg %p58
      %p65 = scmp.eq.s32.totalorder %s35, 1
      %p66 = por %p64, %p65
      %p67 = scmp.ne.s32.totalorder %s59, %s62
      %p68 = scmp.eq.s32.totalorder %s35, 0
      %p69 = por %p67, %p68
      %p70 = scmp.ne.s32.totalorder %s59, %s62
      %p71 = scmp.eq.s32.totalorder %s40, 1
      %p72 = por %p70, %p71
      %p73 = scmp.ne.s32.totalorder %s62, %s63
      %p74 = scmp.eq.s32.totalorder %s40, 0
      %p75 = por %p73, %p74
      %p76 = scmp.ne.s32.totalorder %s62, %s63
      %p77 = scmp.eq.s32.totalorder %s41, 1
      %p78 = por %p76, %p77
      %p80 = scmp.ne.s32.totalorder %s63, %s79
      %p81 = scmp.eq.s32.totalorder %s41, 0
      %p82 = por %p80, %p81
      %s84 = sadd.s32 %s83, 1
      %p87 = scmp.eq.s32.totalorder %s35, 1
      %p88 = scmp.ne.s32.totalorder %s83, %s85
      %p89 = scmp.eq.s32.totalorder %s35, 0
      %p90 = por %p88, %p89
      %p91 = scmp.ne.s32.totalorder %s83, %s85
      %p92 = scmp.eq.s32.totalorder %s40, 1
      %p93 = por %p91, %p92
      %p94 = scmp.ne.s32.totalorder %s85, %s86
      %p95 = scmp.eq.s32.totalorder %s40, 0
      %p96 = por %p94, %p95
      %p97 = scmp.ne.s32.totalorder %s85, %s86
      %p98 = scmp.eq.s32.totalorder %s41, 1
      %p99 = por %p97, %p98
      %p101 = scmp.ne.s32.totalorder %s86, %s100
      %p102 = scmp.eq.s32.totalorder %s41, 0
      %p103 = por %p101, %p102
      %s105 = sadd.s32 %s104, 1
      %p108 = scmp.eq.s32.totalorder %s35, 1
      %p109 = scmp.ne.s32.totalorder %s104, %s106
      %p110 = scmp.eq.s32.totalorder %s35, 0
      %p111 = por %p109, %p110
      %p112 = scmp.ne.s32.totalorder %s104, %s106
      %p113 = scmp.eq.s32.totalorder %s40, 1
      %p114 = por %p112, %p113
      %p115 = scmp.ne.s32.totalorder %s106, %s107
      %p116 = scmp.eq.s32.totalorder %s40, 0
      %p117 = por %p115, %p116
      %p118 = scmp.ne.s32.totalorder %s106, %s107
      %p119 = scmp.eq.s32.totalorder %s41, 1
      %p120 = por %p118, %p119
      %p122 = scmp.ne.s32.totalorder %s107, %s121
      %p123 = scmp.eq.s32.totalorder %s41, 0
      %p124 = por %p122, %p123
      %s126 = sadd.s32 %s125, 1
      %p129 = scmp.eq.s32.totalorder %s35, 1
      %p130 = scmp.ne.s32.totalorder %s125, %s127
      %p131 = scmp.eq.s32.totalorder %s35, 0
      %p132 = por %p130, %p131
      %p133 = scmp.ne.s32.totalorder %s125, %s127
      %p134 = scmp.eq.s32.totalorder %s40, 1
      %p135 = por %p133, %p134
      %p136 = scmp.ne.s32.totalorder %s127, %s128
      %p137 = scmp.eq.s32.totalorder %s40, 0
      %p138 = por %p136, %p137
      %p139 = scmp.ne.s32.totalorder %s127, %s128
      %p140 = scmp.eq.s32.totalorder %s41, 1
      %p141 = por %p139, %p140
      %p143 = scmp.ne.s32.totalorder %s128, %s142
      %p144 = scmp.eq.s32.totalorder %s41, 0
      %p145 = por %p143, %p144
      %s147 = sadd.s32 %s146, 1
      %p150 = scmp.eq.s32.totalorder %s35, 1
      %p151 = scmp.ne.s32.totalorder %s146, %s148
      %p152 = scmp.eq.s32.totalorder %s35, 0
      %p153 = por %p151, %p152
      %p154 = scmp.ne.s32.totalorder %s146, %s148
      %p155 = scmp.eq.s32.totalorder %s40, 1
      %p156 = por %p154, %p155
      %p157 = scmp.ne.s32.totalorder %s148, %s149
      %p158 = scmp.eq.s32.totalorder %s40, 0
      %p159 = por %p157, %p158
      %p160 = scmp.ne.s32.totalorder %s148, %s149
      %p161 = scmp.eq.s32.totalorder %s41, 1
      %p162 = por %p160, %p161
      %p164 = scmp.ne.s32.totalorder %s149, %s163
      %p165 = scmp.eq.s32.totalorder %s41, 0
      %p166 = por %p164, %p165
      %s168 = sadd.s32 %s167, 1
      %p171 = scmp.eq.s32.totalorder %s35, 1
      %p172 = scmp.ne.s32.totalorder %s167, %s169
      %p173 = scmp.eq.s32.totalorder %s35, 0
      %p174 = por %p172, %p173
      %p175 = scmp.ne.s32.totalorder %s167, %s169
      %p176 = scmp.eq.s32.totalorder %s40, 1
      %p177 = por %p175, %p176
      %p178 = scmp.ne.s32.totalorder %s169, %s170
      %p179 = scmp.eq.s32.totalorder %s40, 0
      %p180 = por %p178, %p179
      %p181 = scmp.ne.s32.totalorder %s169, %s170
      %p182 = scmp.eq.s32.totalorder %s41, 1
      %p183 = por %p181, %p182
      %p185 = scmp.ne.s32.totalorder %s170, %s184
      %p186 = scmp.eq.s32.totalorder %s41, 0
      %p187 = por %p185, %p186
      %s189 = sadd.s32 %s188, 1
      %p192 = scmp.eq.s32.totalorder %s35, 1
      %p193 = scmp.ne.s32.totalorder %s188, %s190
      %p194 = scmp.eq.s32.totalorder %s35, 0
      %p195 = por %p193, %p194
      %p196 = scmp.ne.s32.totalorder %s188, %s190
      %p197 = scmp.eq.s32.totalorder %s40, 1
      %p198 = por %p196, %p197
      %p199 = scmp.ne.s32.totalorder %s190, %s191
      %p200 = scmp.eq.s32.totalorder %s40, 0
      %p201 = por %p199, %p200
      %p202 = scmp.ne.s32.totalorder %s190, %s191
      %p203 = scmp.eq.s32.totalorder %s41, 1
      %p204 = por %p202, %p203
      %p206 = scmp.ne.s32.totalorder %s191, %s205
      %p207 = scmp.eq.s32.totalorder %s41, 0
      %p208 = por %p206, %p207
      %s210 = sadd.s32 %s209, 1
      %p213 = scmp.eq.s32.totalorder %s35, 1
      %p214 = scmp.ne.s32.totalorder %s209, %s211
      %p215 = scmp.eq.s32.totalorder %s35, 0
      %p216 = por %p214, %p215
      %p217 = scmp.ne.s32.totalorder %s209, %s211
      %p218 = scmp.eq.s32.totalorder %s40, 1
      %p219 = por %p217, %p218
      %p220 = scmp.ne.s32.totalorder %s211, %s212
      %p221 = scmp.eq.s32.totalorder %s40, 0
      %p222 = por %p220, %p221
      %p223 = scmp.ne.s32.totalorder %s211, %s212
      %p224 = scmp.eq.s32.totalorder %s41, 1
      %p225 = por %p223, %p224
      %p227 = scmp.ne.s32.totalorder %s212, %s226
      %p228 = scmp.eq.s32.totalorder %s41, 0
      %p229 = por %p227, %p228
      %s231 = sadd.s32 %s230, 1
      %p234 = scmp.eq.s32.totalorder %s35, 1
      %p235 = scmp.ne.s32.totalorder %s230, %s232
      %p236 = scmp.eq.s32.totalorder %s35, 0
      %p237 = por %p235, %p236
      %p238 = scmp.ne.s32.totalorder %s230, %s232
      %p239 = scmp.eq.s32.totalorder %s40, 1
      %p240 = por %p238, %p239
      %p241 = scmp.ne.s32.totalorder %s232, %s233
      %p242 = scmp.eq.s32.totalorder %s40, 0
      %p243 = por %p241, %p242
      %p244 = scmp.ne.s32.totalorder %s232, %s233
      %p245 = scmp.eq.s32.totalorder %s41, 1
      %p246 = por %p244, %p245
      %p248 = scmp.ne.s32.totalorder %s233, %s247
      %p249 = scmp.eq.s32.totalorder %s41, 0
      %p250 = por %p248, %p249
      %s252 = sadd.s32 %s251, 1
      %p255 = scmp.eq.s32.totalorder %s35, 1
      %p256 = scmp.ne.s32.totalorder %s251, %s253
      %p257 = scmp.eq.s32.totalorder %s35, 0
      %p258 = por %p256, %p257
      %p259 = scmp.ne.s32.totalorder %s251, %s253
      %p260 = scmp.eq.s32.totalorder %s40, 1
      %p261 = por %p259, %p260
      %p262 = scmp.ne.s32.totalorder %s253, %s254
      %p263 = scmp.eq.s32.totalorder %s40, 0
      %p264 = por %p262, %p263
      %p265 = scmp.ne.s32.totalorder %s253, %s254
      %p266 = scmp.eq.s32.totalorder %s41, 1
      %p267 = por %p265, %p266
      %p269 = scmp.ne.s32.totalorder %s254, %s268
      %p270 = scmp.eq.s32.totalorder %s41, 0
      %p271 = por %p269, %p270
      %s273 = sadd.s32 %s272, 1
      %p276 = scmp.eq.s32.totalorder %s35, 1
      %p277 = scmp.ne.s32.totalorder %s272, %s274
      %p278 = scmp.eq.s32.totalorder %s35, 0
      %p279 = por %p277, %p278
      %p280 = scmp.ne.s32.totalorder %s272, %s274
      %p281 = scmp.eq.s32.totalorder %s40, 1
      %p282 = por %p280, %p281
      %p283 = scmp.ne.s32.totalorder %s274, %s275
      %p284 = scmp.eq.s32.totalorder %s40, 0
      %p285 = por %p283, %p284
      %p286 = scmp.ne.s32.totalorder %s274, %s275
      %p287 = scmp.eq.s32.totalorder %s41, 1
      %p288 = por %p286, %p287
      %p290 = scmp.ne.s32.totalorder %s275, %s289
      %p291 = scmp.eq.s32.totalorder %s41, 0
      %p292 = por %p290, %p291
      %s294 = sadd.s32 %s293, 1
      %p297 = scmp.eq.s32.totalorder %s35, 1
      %p298 = scmp.ne.s32.totalorder %s293, %s295
      %p299 = scmp.eq.s32.totalorder %s35, 0
      %p300 = por %p298, %p299
      %p301 = scmp.ne.s32.totalorder %s293, %s295
      %p302 = scmp.eq.s32.totalorder %s40, 1
      %p303 = por %p301, %p302
      %p304 = scmp.ne.s32.totalorder %s295, %s296
      %p305 = scmp.eq.s32.totalorder %s40, 0
      %p306 = por %p304, %p305
      %p307 = scmp.ne.s32.totalorder %s295, %s296
      %p308 = scmp.eq.s32.totalorder %s41, 1
      %p309 = por %p307, %p308
      %p311 = scmp.ne.s32.totalorder %s296, %s310
      %p312 = scmp.eq.s32.totalorder %s41, 0
      %p313 = por %p311, %p312
      %s315 = sadd.s32 %s314, 1
      %p318 = scmp.eq.s32.totalorder %s35, 1
      %p319 = scmp.ne.s32.totalorder %s314, %s316
      %p320 = scmp.eq.s32.totalorder %s35, 0
      %p321 = por %p319, %p320
      %p322 = scmp.ne.s32.totalorder %s314, %s316
      %p323 = scmp.eq.s32.totalorder %s40, 1
      %p324 = por %p322, %p323
      %p325 = scmp.ne.s32.totalorder %s316, %s317
      %p326 = scmp.eq.s32.totalorder %s40, 0
      %p327 = por %p325, %p326
      %p328 = scmp.ne.s32.totalorder %s316, %s317
      %p329 = scmp.eq.s32.totalorder %s41, 1
      %p330 = por %p328, %p329
      %p332 = scmp.ne.s32.totalorder %s317, %s331
      %p333 = scmp.eq.s32.totalorder %s41, 0
      %p334 = por %p332, %p333
      %s336 = sadd.s32 %s335, 1
      %p339 = scmp.eq.s32.totalorder %s35, 1
      %p340 = scmp.ne.s32.totalorder %s335, %s337
      %p341 = scmp.eq.s32.totalorder %s35, 0
      %p342 = por %p340, %p341
      %p343 = scmp.ne.s32.totalorder %s335, %s337
      %p344 = scmp.eq.s32.totalorder %s40, 1
      %p345 = por %p343, %p344
      %p346 = scmp.ne.s32.totalorder %s337, %s338
      %p347 = scmp.eq.s32.totalorder %s40, 0
      %p348 = por %p346, %p347
      %p349 = scmp.ne.s32.totalorder %s337, %s338
      %p350 = scmp.eq.s32.totalorder %s41, 1
      %p351 = por %p349, %p350
      %p353 = scmp.ne.s32.totalorder %s338, %s352
      %p354 = scmp.eq.s32.totalorder %s41, 0
      %p355 = por %p353, %p354
      %s357 = sadd.s32 %s356, 1
      %p360 = scmp.eq.s32.totalorder %s35, 1
      %p361 = scmp.ne.s32.totalorder %s356, %s358
      %p362 = scmp.eq.s32.totalorder %s35, 0
      %p363 = por %p361, %p362
      %p364 = scmp.ne.s32.totalorder %s356, %s358
      %p365 = scmp.eq.s32.totalorder %s40, 1
      %p366 = por %p364, %p365
      %p367 = scmp.ne.s32.totalorder %s358, %s359
      %p368 = scmp.eq.s32.totalorder %s40, 0
      %p369 = por %p367, %p368
      %p370 = scmp.ne.s32.totalorder %s358, %s359
      %p371 = scmp.eq.s32.totalorder %s41, 1
      %p372 = por %p370, %p371
      %p374 = scmp.ne.s32.totalorder %s359, %s373
      %p375 = scmp.eq.s32.totalorder %s41, 0
      %p376 = por %p374, %p375
      %s378 = sadd.s32 %s377, 1
      %p381 = scmp.eq.s32.totalorder %s35, 1
      %p382 = scmp.ne.s32.totalorder %s377, %s379
      %p383 = scmp.eq.s32.totalorder %s35, 0
      %p384 = por %p382, %p383
      %p385 = scmp.ne.s32.totalorder %s377, %s379
      %p386 = scmp.eq.s32.totalorder %s40, 1
      %p387 = por %p385, %p386
      %p388 = scmp.ne.s32.totalorder %s379, %s380
      %p389 = scmp.eq.s32.totalorder %s40, 0
      %p390 = por %p388, %p389
      %p391 = scmp.ne.s32.totalorder %s379, %s380
      %p392 = scmp.eq.s32.totalorder %s41, 1
      %p393 = por %p391, %p392
      %p395 = scmp.ne.s32.totalorder %s380, %s394
      %p396 = scmp.eq.s32.totalorder %s41, 0
      %p397 = por %p395, %p396
      %s399 = sadd.s32 %s398, 1
      %p402 = scmp.eq.s32.totalorder %s35, 1
      %p403 = scmp.ne.s32.totalorder %s398, %s400
      %p404 = scmp.eq.s32.totalorder %s35, 0
      %p405 = por %p403, %p404
      %p406 = scmp.ne.s32.totalorder %s398, %s400
      %p407 = scmp.eq.s32.totalorder %s40, 1
      %p408 = por %p406, %p407
      %p409 = scmp.ne.s32.totalorder %s400, %s401
      %p410 = scmp.eq.s32.totalorder %s40, 0
      %p411 = por %p409, %p410
      %p412 = scmp.ne.s32.totalorder %s400, %s401
      %p413 = scmp.eq.s32.totalorder %s41, 1
      %p414 = por %p412, %p413
      %p416 = scmp.ne.s32.totalorder %s401, %s415
      %p417 = scmp.eq.s32.totalorder %s41, 0
      %p418 = por %p416, %p417
      %s420 = sadd.s32 %s419, 1
      %p423 = scmp.eq.s32.totalorder %s35, 1
      %p424 = scmp.ne.s32.totalorder %s419, %s421
      %p425 = scmp.eq.s32.totalorder %s35, 0
      %p426 = por %p424, %p425
      %p427 = scmp.ne.s32.totalorder %s419, %s421
      %p428 = scmp.eq.s32.totalorder %s40, 1
      %p429 = por %p427, %p428
      %p430 = scmp.ne.s32.totalorder %s421, %s422
      %p431 = scmp.eq.s32.totalorder %s40, 0
      %p432 = por %p430, %p431
      %p433 = scmp.ne.s32.totalorder %s421, %s422
      %p434 = scmp.eq.s32.totalorder %s41, 1
      %p435 = por %p433, %p434
      %p437 = scmp.ne.s32.totalorder %s422, %s436
      %p438 = scmp.eq.s32.totalorder %s41, 0
      %p439 = por %p437, %p438
      %s440 = ssub.s32 %s42, %s54
      %p441 = scmp.eq.s32.totalorder %s440, 0
      %s443 = sadd.s32 %s442, 1
      %s444 = scalar_select %p441, %s442, %s443
      %p447 = pneg %p441
      %p448 = scmp.eq.s32.totalorder %s35, 1
      %p449 = por %p447, %p448
      %p450 = scmp.ne.s32.totalorder %s442, %s445
      %p451 = scmp.eq.s32.totalorder %s35, 0
      %p452 = por %p450, %p451
      %p453 = scmp.ne.s32.totalorder %s442, %s445
      %p454 = scmp.eq.s32.totalorder %s40, 1
      %p455 = por %p453, %p454
      %p456 = scmp.ne.s32.totalorder %s445, %s446
      %p457 = scmp.eq.s32.totalorder %s40, 0
      %p458 = por %p456, %p457
      %p459 = scmp.ne.s32.totalorder %s445, %s446
      %p460 = scmp.eq.s32.totalorder %s41, 1
      %p461 = por %p459, %p460
      %p463 = scmp.ne.s32.totalorder %s446, %s462
      %p464 = scmp.eq.s32.totalorder %s41, 0
      %p465 = por %p463, %p464
      %s466 = ssub.s32 %s42, %s54
      %p467 = scmp.eq.s32.totalorder %s466, 0
      %s469 = sadd.s32 %s468, 1
      %s470 = scalar_select %p467, %s468, %s469
      %p473 = pneg %p467
      %p474 = scmp.eq.s32.totalorder %s35, 1
      %p475 = por %p473, %p474
      %p476 = scmp.ne.s32.totalorder %s468, %s471
      %p477 = scmp.eq.s32.totalorder %s35, 0
      %p478 = por %p476, %p477
      %p479 = scmp.ne.s32.totalorder %s468, %s471
      %p480 = scmp.eq.s32.totalorder %s40, 1
      %p481 = por %p479, %p480
      %p482 = scmp.ne.s32.totalorder %s471, %s472
      %p483 = scmp.eq.s32.totalorder %s40, 0
      %p484 = por %p482, %p483
      %p485 = scmp.ne.s32.totalorder %s471, %s472
      %p486 = scmp.eq.s32.totalorder %s41, 1
      %p487 = por %p485, %p486
      %p489 = scmp.ne.s32.totalorder %s472, %s488
      %p490 = scmp.eq.s32.totalorder %s41, 0
      %p491 = por %p489, %p490
      %p492 = scmp.le.s32.totalorder 1, %s35
      %p493 = scmp.lt.s32.totalorder %s35, 3
      %p494 = pnand %p492, %p493
      %p495 = pneg %p494
      // Predicated region
      $region9: #{fixed_source_deformer_forward.2} parent=5 // pred_check
        _
      $region10: #{fixed_source_deformer_forward.2} parent=5 // pred_check_branch
        %497 = sbr.rel (%p494) target = $region12
      $region11: #{fixed_source_deformer_forward.2} parent=5 // pred_region
        %s498 = ssub.s32 %s35, 1
        // Predicated region
        $region13: #{fixed_source_deformer_forward.2} parent=11 // pred_check
          %p499 = pneg %p96
        $region14: #{fixed_source_deformer_forward.2} parent=11 // pred_check_branch
          %501 = sbr.rel (%p499) target = $region16
        $region15: #{fixed_source_deformer_forward.2} parent=11 // pred_region
          _
        $region16: #{fixed_source_deformer_forward.2} parent=11 // pred_fallthru
          _
        // Predicated region
        $region17: #{fixed_source_deformer_forward.2} parent=11 // pred_check
          %p502 = pneg %p117
        $region18: #{fixed_source_deformer_forward.2} parent=11 // pred_check_branch
          %504 = sbr.rel (%p502) target = $region20
        $region19: #{fixed_source_deformer_forward.2} parent=11 // pred_region
          %506 = vsyncadd [#allocation4], 0
          %s507 = sshll.u32 %s2, 4
          %s508 = int_to_ptr.hbm [resolvable:$true] %s507
          %s509 = sshll.u32 [#allocation3], 4
          %s510 = int_to_ptr.vmem [resolvable:$true] %s509
          %515 = dma.hbm_to_vmem [thread:$0]  %s508, 2048, %s510, [#allocation4], 128, 128, 8
        $region20: #{fixed_source_deformer_forward.2} parent=11 // pred_fallthru
          _
        // Predicated region
        $region21: #{fixed_source_deformer_forward.2} parent=11 // pred_check
          %p516 = pneg %p138
        $region22: #{fixed_source_deformer_forward.2} parent=11 // pred_check_branch
          %518 = sbr.rel (%p516) target = $region24
        $region23: #{fixed_source_deformer_forward.2} parent=11 // pred_region
          %520 = vsyncadd [#allocation6], 0
          %s521 = sshll.u32 %s3, 4
          %s522 = int_to_ptr.hbm [resolvable:$true] %s521
          %s523 = sshll.u32 [#allocation5], 4
          %s524 = int_to_ptr.vmem [resolvable:$true] %s523
          %529 = dma.hbm_to_vmem [thread:$0]  %s522, 2048, %s524, [#allocation6], 128, 128, 8
        $region24: #{fixed_source_deformer_forward.2} parent=11 // pred_fallthru
          _
        // Predicated region
        $region25: #{fixed_source_deformer_forward.2} parent=11 // pred_check
          %p530 = pneg %p159
        $region26: #{fixed_source_deformer_forward.2} parent=11 // pred_check_branch
          %532 = sbr.rel (%p530) target = $region28
        $region27: #{fixed_source_deformer_forward.2} parent=11 // pred_region
          %534 = vsyncadd [#allocation6], 0
          %s535 = sshll.u32 %s4, 4
          %s536 = int_to_ptr.hbm [resolvable:$true] %s535
          %s537 = sshll.u32 [#allocation7], 4
          %s538 = int_to_ptr.vmem [resolvable:$true] %s537
          %543 = dma.hbm_to_vmem [thread:$0]  %s536, 2048, %s538, [#allocation6], 128, 128, 8
        $region28: #{fixed_source_deformer_forward.2} parent=11 // pred_fallthru
          _
        // Predicated region
        $region29: #{fixed_source_deformer_forward.2} parent=11 // pred_check
          %p544 = pneg %p180
        $region30: #{fixed_source_deformer_forward.2} parent=11 // pred_check_branch
          %546 = sbr.rel (%p544) target = $region32
        $region31: #{fixed_source_deformer_forward.2} parent=11 // pred_region
          %548 = vsyncadd [#allocation9], 0
          %s550 = sshll.u32 %s5, 4
          %s551 = int_to_ptr.hbm [resolvable:$true] %s550
          %s552 = sshll.u32 [#allocation8], 4
          %s553 = int_to_ptr.vmem [resolvable:$true] %s552
          %555 = dma.hbm_to_vmem [thread:$0]  %s551, 16, %s553, [#allocation9]
        $region32: #{fixed_source_deformer_forward.2} parent=11 // pred_fallthru
          _
        // Predicated region
        $region33: #{fixed_source_deformer_forward.2} parent=11 // pred_check
          %p556 = pneg %p201
        $region34: #{fixed_source_deformer_forward.2} parent=11 // pred_check_branch
          %558 = sbr.rel (%p556) target = $region36
        $region35: #{fixed_source_deformer_forward.2} parent=11 // pred_region
          %560 = vsyncadd [#allocation9], 0
          %s561 = sshll.u32 %s6, 4
          %s562 = int_to_ptr.hbm [resolvable:$true] %s561
          %s563 = sshll.u32 [#allocation10], 4
          %s564 = int_to_ptr.vmem [resolvable:$true] %s563
          %569 = dma.hbm_to_vmem [thread:$0]  %s562, 2048, %s564, [#allocation9], 128, 128, 8
        $region36: #{fixed_source_deformer_forward.2} parent=11 // pred_fallthru
          _
        // Predicated region
        $region37: #{fixed_source_deformer_forward.2} parent=11 // pred_check
          %p570 = pneg %p222
        $region38: #{fixed_source_deformer_forward.2} parent=11 // pred_check_branch
          %572 = sbr.rel (%p570) target = $region40
        $region39: #{fixed_source_deformer_forward.2} parent=11 // pred_region
          %574 = vsyncadd [#allocation12], 0
          %s575 = sshll.u32 %s7, 4
          %s576 = int_to_ptr.hbm [resolvable:$true] %s575
          %s577 = sshll.u32 [#allocation11], 4
          %s578 = int_to_ptr.vmem [resolvable:$true] %s577
          %583 = dma.hbm_to_vmem [thread:$0]  %s576, 2048, %s578, [#allocation12], 128, 128, 8
        $region40: #{fixed_source_deformer_forward.2} parent=11 // pred_fallthru
          _
        // Predicated region
        $region41: #{fixed_source_deformer_forward.2} parent=11 // pred_check
          %p584 = pneg %p243
        $region42: #{fixed_source_deformer_forward.2} parent=11 // pred_check_branch
          %586 = sbr.rel (%p584) target = $region44
        $region43: #{fixed_source_deformer_forward.2} parent=11 // pred_region
          %588 = vsyncadd [#allocation12], 0
          %s589 = sshll.u32 %s8, 4
          %s590 = int_to_ptr.hbm [resolvable:$true] %s589
          %s591 = sshll.u32 [#allocation13], 4
          %s592 = int_to_ptr.vmem [resolvable:$true] %s591
          %597 = dma.hbm_to_vmem [thread:$0]  %s590, 2048, %s592, [#allocation12], 128, 128, 8
        $region44: #{fixed_source_deformer_forward.2} parent=11 // pred_fallthru
          _
        // Predicated region
        $region45: #{fixed_source_deformer_forward.2} parent=11 // pred_check
          %p598 = pneg %p264
        $region46: #{fixed_source_deformer_forward.2} parent=11 // pred_check_branch
          %600 = sbr.rel (%p598) target = $region48
        $region47: #{fixed_source_deformer_forward.2} parent=11 // pred_region
          %602 = vsyncadd [#allocation15], 0
          %s603 = sshll.u32 %s9, 4
          %s604 = int_to_ptr.hbm [resolvable:$true] %s603
          %s605 = sshll.u32 [#allocation14], 4
          %s606 = int_to_ptr.vmem [resolvable:$true] %s605
          %611 = dma.hbm_to_vmem [thread:$0]  %s604, 2048, %s606, [#allocation15], 128, 128, 8
        $region48: #{fixed_source_deformer_forward.2} parent=11 // pred_fallthru
          _
        // Predicated region
        $region49: #{fixed_source_deformer_forward.2} parent=11 // pred_check
          %p612 = pneg %p285
        $region50: #{fixed_source_deformer_forward.2} parent=11 // pred_check_branch
          %614 = sbr.rel (%p612) target = $region52
        $region51: #{fixed_source_deformer_forward.2} parent=11 // pred_region
          %616 = vsyncadd [#allocation15], 0
          %s618 = sshll.u32 %s10, 4
          %s619 = int_to_ptr.hbm [resolvable:$true] %s618
          %s620 = sshll.u32 [#allocation16], 4
          %s621 = int_to_ptr.vmem [resolvable:$true] %s620
          %623 = dma.hbm_to_vmem [thread:$0]  %s619, 64, %s621, [#allocation15]
        $region52: #{fixed_source_deformer_forward.2} parent=11 // pred_fallthru
          _
        // Predicated region
        $region53: #{fixed_source_deformer_forward.2} parent=11 // pred_check
          %p624 = pneg %p306
        $region54: #{fixed_source_deformer_forward.2} parent=11 // pred_check_branch
          %626 = sbr.rel (%p624) target = $region56
        $region55: #{fixed_source_deformer_forward.2} parent=11 // pred_region
          %628 = vsyncadd [#allocation18], 0
          %s630 = sshll.u32 %s11, 4
          %s631 = int_to_ptr.hbm [resolvable:$true] %s630
          %s632 = sshll.u32 [#allocation17], 4
          %s633 = int_to_ptr.vmem [resolvable:$true] %s632
          %635 = dma.hbm_to_vmem [thread:$0]  %s631, 64, %s633, [#allocation18]
        $region56: #{fixed_source_deformer_forward.2} parent=11 // pred_fallthru
          _
        // Predicated region
        $region57: #{fixed_source_deformer_forward.2} parent=11 // pred_check
          %p636 = pneg %p327
        $region58: #{fixed_source_deformer_forward.2} parent=11 // pred_check_branch
          %638 = sbr.rel (%p636) target = $region60
        $region59: #{fixed_source_deformer_forward.2} parent=11 // pred_region
          %640 = vsyncadd [#allocation18], 0
          %s641 = sshll.u32 %s12, 4
          %s642 = int_to_ptr.hbm [resolvable:$true] %s641
          %s643 = sshll.u32 [#allocation19], 4
          %s644 = int_to_ptr.vmem [resolvable:$true] %s643
          %649 = dma.hbm_to_vmem [thread:$0]  %s642, 8192, %s644, [#allocation18], 512, 512, 32
        $region60: #{fixed_source_deformer_forward.2} parent=11 // pred_fallthru
          _
        // Predicated region
        $region61: #{fixed_source_deformer_forward.2} parent=11 // pred_check
          %p650 = pneg %p348
        $region62: #{fixed_source_deformer_forward.2} parent=11 // pred_check_branch
          %652 = sbr.rel (%p650) target = $region64
        $region63: #{fixed_source_deformer_forward.2} parent=11 // pred_region
          %654 = vsyncadd [#allocation21], 0
          %s656 = sshll.u32 %s13, 4
          %s657 = int_to_ptr.hbm [resolvable:$true] %s656
          %s658 = sshll.u32 [#allocation20], 4
          %s659 = int_to_ptr.vmem [resolvable:$true] %s658
          %661 = dma.hbm_to_vmem [thread:$0]  %s657, 64, %s659, [#allocation21]
        $region64: #{fixed_source_deformer_forward.2} parent=11 // pred_fallthru
          _
        // Predicated region
        $region65: #{fixed_source_deformer_forward.2} parent=11 // pred_check
          %p662 = pneg %p369
        $region66: #{fixed_source_deformer_forward.2} parent=11 // pred_check_branch
          %664 = sbr.rel (%p662) target = $region68
        $region67: #{fixed_source_deformer_forward.2} parent=11 // pred_region
          %666 = vsyncadd [#allocation21], 0
          %s667 = sshll.u32 %s14, 4
          %s668 = int_to_ptr.hbm [resolvable:$true] %s667
          %s669 = sshll.u32 [#allocation22], 4
          %s670 = int_to_ptr.vmem [resolvable:$true] %s669
          %675 = dma.hbm_to_vmem [thread:$0]  %s668, 65536, %s670, [#allocation21], 1024, 1024, 64
        $region68: #{fixed_source_deformer_forward.2} parent=11 // pred_fallthru
          _
        // Predicated region
        $region69: #{fixed_source_deformer_forward.2} parent=11 // pred_check
          %p676 = pneg %p390
        $region70: #{fixed_source_deformer_forward.2} parent=11 // pred_check_branch
          %678 = sbr.rel (%p676) target = $region72
        $region71: #{fixed_source_deformer_forward.2} parent=11 // pred_region
          %680 = vsyncadd [#allocation24], 0
          %s682 = sshll.u32 %s15, 4
          %s683 = int_to_ptr.hbm [resolvable:$true] %s682
          %s684 = sshll.u32 [#allocation23], 4
          %s685 = int_to_ptr.vmem [resolvable:$true] %s684
          %687 = dma.hbm_to_vmem [thread:$0]  %s683, 128, %s685, [#allocation24]
        $region72: #{fixed_source_deformer_forward.2} parent=11 // pred_fallthru
          _
        // Predicated region
        $region73: #{fixed_source_deformer_forward.2} parent=11 // pred_check
          %p688 = pneg %p411
        $region74: #{fixed_source_deformer_forward.2} parent=11 // pred_check_branch
          %690 = sbr.rel (%p688) target = $region76
        $region75: #{fixed_source_deformer_forward.2} parent=11 // pred_region
          %692 = vsyncadd [#allocation24], 0
          %s693 = sshll.u32 %s16, 4
          %s694 = int_to_ptr.hbm [resolvable:$true] %s693
          %s695 = sshll.u32 [#allocation25], 4
          %s696 = int_to_ptr.vmem [resolvable:$true] %s695
          %701 = dma.hbm_to_vmem [thread:$0]  %s694, 49152, %s696, [#allocation24], 384, 384, 24
        $region76: #{fixed_source_deformer_forward.2} parent=11 // pred_fallthru
          _
        // Predicated region
        $region77: #{fixed_source_deformer_forward.2} parent=11 // pred_check
          %p702 = pneg %p432
        $region78: #{fixed_source_deformer_forward.2} parent=11 // pred_check_branch
          %704 = sbr.rel (%p702) target = $region80
        $region79: #{fixed_source_deformer_forward.2} parent=11 // pred_region
          %706 = vsyncadd [#allocation27], 0
          %s708 = sshll.u32 %s17, 4
          %s709 = int_to_ptr.hbm [resolvable:$true] %s708
          %s710 = sshll.u32 [#allocation26], 4
          %s711 = int_to_ptr.vmem [resolvable:$true] %s710
          %713 = dma.hbm_to_vmem [thread:$0]  %s709, 48, %s711, [#allocation27]
        $region80: #{fixed_source_deformer_forward.2} parent=11 // pred_fallthru
          _
      $region12: #{fixed_source_deformer_forward.2} parent=5 // pred_fallthru
        _
      %p714 = scmp.lt.s32.totalorder %s35, 2
      // Predicated region
      $region81: #{fixed_source_deformer_forward.2} parent=5 // pred_check
        %p715 = pneg %p714
      $region82: #{fixed_source_deformer_forward.2} parent=5 // pred_check_branch
        %717 = sbr.rel (%p715) target = $region84
      $region83: #{fixed_source_deformer_forward.2} parent=5 // pred_region
        // Predicated region
        $region85: #{fixed_source_deformer_forward.2} parent=83 // pred_check
          %p718 = pneg %p69
        $region86: #{fixed_source_deformer_forward.2} parent=83 // pred_check_branch
          %720 = sbr.rel (%p718) target = $region88
        $region87: #{fixed_source_deformer_forward.2} parent=83 // pred_region
          %s721 = smul.u32 2, %s43
          %p722 = scmp.lt.s32.totalorder %s42, 1
          %s723 = scalar_select %p722, %s42, 1
          %p724 = scmp.lt.s32.totalorder %s721, 1
          %s725 = scalar_select %p724, %s721, 1
          %s726 = smul.addr %s723, 2
          %s727 = sadd.s32 %s725, %s726
          %s728 = smul.addr %s727, 4
          %s729 = scalar_lea.vmem %s0, %s728
          %s730 = smul.u32 2, %s43
        $region88: #{fixed_source_deformer_forward.2} parent=83 // pred_fallthru
          _
      $region84: #{fixed_source_deformer_forward.2} parent=5 // pred_fallthru
        _
      %p731 = scmp.le.s32.totalorder 1, %s35
      %p732 = scmp.lt.s32.totalorder %s35, 3
      %p733 = pnand %p731, %p732
      %p734 = pneg %p733
      // Predicated region
      $region89: #{fixed_source_deformer_forward.2} parent=5 // pred_check
        _
      $region90: #{fixed_source_deformer_forward.2} parent=5 // pred_check_branch
        %736 = sbr.rel (%p733) target = $region92
      $region91: #{fixed_source_deformer_forward.2} parent=5 // pred_region
        %s737 = ssub.s32 %s35, 1
        // Predicated region
        $region93: #{fixed_source_deformer_forward.2} parent=91 // pred_check
          %p738 = pneg %p117
        $region94: #{fixed_source_deformer_forward.2} parent=91 // pred_check_branch
          %740 = sbr.rel (%p738) target = $region96
        $region95: #{fixed_source_deformer_forward.2} parent=91 // pred_region
          %742 = dma.done [#allocation4], 2048
        $region96: #{fixed_source_deformer_forward.2} parent=91 // pred_fallthru
          _
        // Predicated region
        $region97: #{fixed_source_deformer_forward.2} parent=91 // pred_check
          %p743 = pneg %p138
        $region98: #{fixed_source_deformer_forward.2} parent=91 // pred_check_branch
          %745 = sbr.rel (%p743) target = $region100
        $region99: #{fixed_source_deformer_forward.2} parent=91 // pred_region
          %747 = dma.done [#allocation6], 2048
        $region100: #{fixed_source_deformer_forward.2} parent=91 // pred_fallthru
          _
        // Predicated region
        $region101: #{fixed_source_deformer_forward.2} parent=91 // pred_check
          %p748 = pneg %p159
        $region102: #{fixed_source_deformer_forward.2} parent=91 // pred_check_branch
          %750 = sbr.rel (%p748) target = $region104
        $region103: #{fixed_source_deformer_forward.2} parent=91 // pred_region
          %752 = dma.done [#allocation6], 2048
        $region104: #{fixed_source_deformer_forward.2} parent=91 // pred_fallthru
          _
        // Predicated region
        $region105: #{fixed_source_deformer_forward.2} parent=91 // pred_check
          %p753 = pneg %p180
        $region106: #{fixed_source_deformer_forward.2} parent=91 // pred_check_branch
          %755 = sbr.rel (%p753) target = $region108
        $region107: #{fixed_source_deformer_forward.2} parent=91 // pred_region
          %757 = dma.done [#allocation9], 16
        $region108: #{fixed_source_deformer_forward.2} parent=91 // pred_fallthru
          _
        // Predicated region
        $region109: #{fixed_source_deformer_forward.2} parent=91 // pred_check
          %p758 = pneg %p201
        $region110: #{fixed_source_deformer_forward.2} parent=91 // pred_check_branch
          %760 = sbr.rel (%p758) target = $region112
        $region111: #{fixed_source_deformer_forward.2} parent=91 // pred_region
          %762 = dma.done [#allocation9], 2048
        $region112: #{fixed_source_deformer_forward.2} parent=91 // pred_fallthru
          _
        // Predicated region
        $region113: #{fixed_source_deformer_forward.2} parent=91 // pred_check
          %p763 = pneg %p222
        $region114: #{fixed_source_deformer_forward.2} parent=91 // pred_check_branch
          %765 = sbr.rel (%p763) target = $region116
        $region115: #{fixed_source_deformer_forward.2} parent=91 // pred_region
          %767 = dma.done [#allocation12], 2048
        $region116: #{fixed_source_deformer_forward.2} parent=91 // pred_fallthru
          _
        // Predicated region
        $region117: #{fixed_source_deformer_forward.2} parent=91 // pred_check
          %p768 = pneg %p243
        $region118: #{fixed_source_deformer_forward.2} parent=91 // pred_check_branch
          %770 = sbr.rel (%p768) target = $region120
        $region119: #{fixed_source_deformer_forward.2} parent=91 // pred_region
          %772 = dma.done [#allocation12], 2048
        $region120: #{fixed_source_deformer_forward.2} parent=91 // pred_fallthru
          _
        // Predicated region
        $region121: #{fixed_source_deformer_forward.2} parent=91 // pred_check
          %p773 = pneg %p264
        $region122: #{fixed_source_deformer_forward.2} parent=91 // pred_check_branch
          %775 = sbr.rel (%p773) target = $region124
        $region123: #{fixed_source_deformer_forward.2} parent=91 // pred_region
          %777 = dma.done [#allocation15], 2048
        $region124: #{fixed_source_deformer_forward.2} parent=91 // pred_fallthru
          _
        // Predicated region
        $region125: #{fixed_source_deformer_forward.2} parent=91 // pred_check
          %p778 = pneg %p285
        $region126: #{fixed_source_deformer_forward.2} parent=91 // pred_check_branch
          %780 = sbr.rel (%p778) target = $region128
        $region127: #{fixed_source_deformer_forward.2} parent=91 // pred_region
          %782 = dma.done [#allocation15], 64
        $region128: #{fixed_source_deformer_forward.2} parent=91 // pred_fallthru
          _
        // Predicated region
        $region129: #{fixed_source_deformer_forward.2} parent=91 // pred_check
          %p783 = pneg %p306
        $region130: #{fixed_source_deformer_forward.2} parent=91 // pred_check_branch
          %785 = sbr.rel (%p783) target = $region132
        $region131: #{fixed_source_deformer_forward.2} parent=91 // pred_region
          %787 = dma.done [#allocation18], 64
        $region132: #{fixed_source_deformer_forward.2} parent=91 // pred_fallthru
          _
        // Predicated region
        $region133: #{fixed_source_deformer_forward.2} parent=91 // pred_check
          %p788 = pneg %p327
        $region134: #{fixed_source_deformer_forward.2} parent=91 // pred_check_branch
          %790 = sbr.rel (%p788) target = $region136
        $region135: #{fixed_source_deformer_forward.2} parent=91 // pred_region
          %792 = dma.done [#allocation18], 8192
        $region136: #{fixed_source_deformer_forward.2} parent=91 // pred_fallthru
          _
        // Predicated region
        $region137: #{fixed_source_deformer_forward.2} parent=91 // pred_check
          %p793 = pneg %p348
        $region138: #{fixed_source_deformer_forward.2} parent=91 // pred_check_branch
          %795 = sbr.rel (%p793) target = $region140
        $region139: #{fixed_source_deformer_forward.2} parent=91 // pred_region
          %797 = dma.done [#allocation21], 64
        $region140: #{fixed_source_deformer_forward.2} parent=91 // pred_fallthru
          _
        // Predicated region
        $region141: #{fixed_source_deformer_forward.2} parent=91 // pred_check
          %p798 = pneg %p369
        $region142: #{fixed_source_deformer_forward.2} parent=91 // pred_check_branch
          %800 = sbr.rel (%p798) target = $region144
        $region143: #{fixed_source_deformer_forward.2} parent=91 // pred_region
          %802 = dma.done [#allocation21], 65536
        $region144: #{fixed_source_deformer_forward.2} parent=91 // pred_fallthru
          _
        // Predicated region
        $region145: #{fixed_source_deformer_forward.2} parent=91 // pred_check
          %p803 = pneg %p390
        $region146: #{fixed_source_deformer_forward.2} parent=91 // pred_check_branch
          %805 = sbr.rel (%p803) target = $region148
        $region147: #{fixed_source_deformer_forward.2} parent=91 // pred_region
          %807 = dma.done [#allocation24], 128
        $region148: #{fixed_source_deformer_forward.2} parent=91 // pred_fallthru
          _
        // Predicated region
        $region149: #{fixed_source_deformer_forward.2} parent=91 // pred_check
          %p808 = pneg %p411
        $region150: #{fixed_source_deformer_forward.2} parent=91 // pred_check_branch
          %810 = sbr.rel (%p808) target = $region152
        $region151: #{fixed_source_deformer_forward.2} parent=91 // pred_region
          %812 = dma.done [#allocation24], 49152
        $region152: #{fixed_source_deformer_forward.2} parent=91 // pred_fallthru
          _
        // Predicated region
        $region153: #{fixed_source_deformer_forward.2} parent=91 // pred_check
          %p813 = pneg %p432
        $region154: #{fixed_source_deformer_forward.2} parent=91 // pred_check_branch
          %815 = sbr.rel (%p813) target = $region156
        $region155: #{fixed_source_deformer_forward.2} parent=91 // pred_region
          %817 = dma.done [#allocation27], 48
        $region156: #{fixed_source_deformer_forward.2} parent=91 // pred_fallthru
          _
        %s818 = smul.u32 2, %s45
        %p819 = scmp.lt.s32.totalorder %s44, 1
        %s820 = scalar_select %p819, %s44, 1
        %p821 = scmp.lt.s32.totalorder %s818, 1
        %s822 = scalar_select %p821, %s818, 1
        %s823 = smul.addr %s820, 2
        %s824 = sadd.s32 %s822, %s823
        %s825 = smul.addr %s824, 4
        %s826 = scalar_lea.vmem %s0, %s825
        %p827 = pneg %p75
        %p828 = pneg %p72
        %p829 = pneg %p96
        %p830 = pneg %p93
        %p831 = pneg %p117
        %p832 = pneg %p114
        %p833 = pneg %p138
        %p834 = pneg %p135
        %p835 = pneg %p159
        %p836 = pneg %p156
        %p837 = pneg %p180
        %p838 = pneg %p177
        %p839 = pneg %p201
        %p840 = pneg %p198
        %p841 = pneg %p222
        %p842 = pneg %p219
        %p843 = pneg %p243
        %p844 = pneg %p240
        %p845 = pneg %p264
        %p846 = pneg %p261
        %p847 = pneg %p285
        %p848 = pneg %p282
        %p849 = pneg %p306
        %p850 = pneg %p303
        %p851 = pneg %p327
        %p852 = pneg %p324
        %p853 = pneg %p348
        %p854 = pneg %p345
        %p855 = pneg %p369
        %p856 = pneg %p366
        %p857 = pneg %p390
        %p858 = pneg %p387
        %p859 = pneg %p411
        %p860 = pneg %p408
        %p861 = pneg %p432
        %p862 = pneg %p429
        %p863 = pneg %p458
        %p864 = pneg %p455
        %p865 = scmp.lt.s32.totalorder %s44, 1
        %s866 = scalar_select %p865, %s44, 1
        %s867 = smul.addr %s866, 4
        %s868 = scalar_lea.vmem %s18, %s867
        %p869 = pneg %p484
        %p870 = pneg %p481
        %p871 = scmp.lt.s32.totalorder %s44, 1
        %s872 = scalar_select %p871, %s44, 1
        %s873 = smul.addr %s872, 4
        %s874 = scalar_lea.vmem %s19, %s873
        %s875 = smul.u32 2, %s45
        %p876 = scmp.lt.s32.totalorder %s44, 1
        %s877 = scalar_select %p876, %s44, 1
        %p878 = scmp.lt.s32.totalorder %s875, 1
        %s879 = scalar_select %p878, %s875, 1
        %s880 = smul.addr %s877, 2
        %s881 = sadd.s32 %s879, %s880
        %s882 = smul.addr %s881, 4
        %s883 = scalar_lea.vmem %s0, %s882
        %s884 = smul.u32 2, %s45
        %p885 = scmp.lt.s32.totalorder %s44, 1
        %s886 = scalar_select %p885, %s44, 1
        %s887 = smul.addr %s886, 4
        %s888 = scalar_lea.vmem %s18, %s887
        %p889 = scmp.lt.s32.totalorder %s44, 1
        %s890 = scalar_select %p889, %s44, 1
        %s891 = smul.addr %s890, 4
        %s892 = scalar_lea.vmem %s19, %s891
        %p893 = scmp.eq.s32.totalorder %s45, 0
        // Predicated region
        $region157: #{fixed_source_deformer_forward.2} parent=91 // pred_check
          %p894 = pneg %p893
        $region158: #{fixed_source_deformer_forward.2} parent=91 // pred_check_branch
          %896 = sbr.rel (%p894) target = $region160
        $region159: #{fixed_source_deformer_forward.2} parent=91 // pred_region
          %vm897 = vcmask 7168
          %898 = vst.msk [vmem:[#allocation2] sm:$0xff] %vm897, -inf
          %899 = vst.msk [vmem:[#allocation2 + $0x8] sm:$0xff] %vm897, -inf
          %900 = vst.msk [vmem:[#allocation2 + $0x10] sm:$0xff] %vm897, -inf
          %901 = vst.msk [vmem:[#allocation2 + $0x18] sm:$0xff] %vm897, -inf
          %902 = vst.msk [vmem:[#allocation2 + $0x20] sm:$0xff] %vm897, -inf
          %903 = vst.msk [vmem:[#allocation2 + $0x28] sm:$0xff] %vm897, -inf
          %904 = vst.msk [vmem:[#allocation2 + $0x30] sm:$0xff] %vm897, -inf
          %905 = vst.msk [vmem:[#allocation2 + $0x38] sm:$0xff] %vm897, -inf
          %906 = vst.msk [vmem:[#allocation2 + $0x40] sm:$0xff] %vm897, -inf
          %907 = vst.msk [vmem:[#allocation2 + $0x48] sm:$0xff] %vm897, -inf
          %908 = vst.msk [vmem:[#allocation2 + $0x50] sm:$0xff] %vm897, -inf
          %909 = vst.msk [vmem:[#allocation2 + $0x58] sm:$0xff] %vm897, -inf
          %910 = vst.msk [vmem:[#allocation2 + $0x60] sm:$0xff] %vm897, -inf
          %911 = vst.msk [vmem:[#allocation2 + $0x68] sm:$0xff] %vm897, -inf
          %912 = vst.msk [vmem:[#allocation2 + $0x70] sm:$0xff] %vm897, -inf
          %913 = vst.msk [vmem:[#allocation2 + $0x78] sm:$0xff] %vm897, -inf
        $region160: #{fixed_source_deformer_forward.2} parent=91 // pred_fallthru
          _
        %v914 = vld [vmem:[%s883] sm:$0x77]
        %v915 = vld [vmem:[#allocation3] sm:$0xff]
        %v916 = vld [vmem:[#allocation3 + $0x8] sm:$0xff]
        %v917 = vld [vmem:[#allocation3 + $0x10] sm:$0xff]
        %v918 = vld [vmem:[#allocation3 + $0x18] sm:$0xff]
        %v919 = vld [vmem:[#allocation3 + $0x20] sm:$0xff]
        %v920 = vld [vmem:[#allocation3 + $0x28] sm:$0xff]
        %v921 = vld [vmem:[#allocation3 + $0x30] sm:$0xff]
        %v922 = vld [vmem:[#allocation3 + $0x38] sm:$0xff]
        %v923 = vld [vmem:[#allocation3 + $0x40] sm:$0xff]
        %v924 = vld [vmem:[#allocation3 + $0x48] sm:$0xff]
        %v925 = vld [vmem:[#allocation3 + $0x50] sm:$0xff]
        %v926 = vld [vmem:[#allocation3 + $0x58] sm:$0xff]
        %v927 = vld [vmem:[#allocation3 + $0x60] sm:$0xff]
        %v928 = vld [vmem:[#allocation3 + $0x68] sm:$0xff]
        %v929 = vld [vmem:[#allocation3 + $0x70] sm:$0xff]
        %v930 = vld [vmem:[#allocation3 + $0x78] sm:$0xff]
        %v931 = vld [vmem:[#allocation5] sm:$0xff]
        %v932 = vld [vmem:[#allocation5 + $0x8] sm:$0xff]
        %v933 = vld [vmem:[#allocation5 + $0x10] sm:$0xff]
        %v934 = vld [vmem:[#allocation5 + $0x18] sm:$0xff]
        %v935 = vld [vmem:[#allocation5 + $0x20] sm:$0xff]
        %v936 = vld [vmem:[#allocation5 + $0x28] sm:$0xff]
        %v937 = vld [vmem:[#allocation5 + $0x30] sm:$0xff]
        %v938 = vld [vmem:[#allocation5 + $0x38] sm:$0xff]
        %v939 = vld [vmem:[#allocation5 + $0x40] sm:$0xff]
        %v940 = vld [vmem:[#allocation5 + $0x48] sm:$0xff]
        %v941 = vld [vmem:[#allocation5 + $0x50] sm:$0xff]
        %v942 = vld [vmem:[#allocation5 + $0x58] sm:$0xff]
        %v943 = vld [vmem:[#allocation5 + $0x60] sm:$0xff]
        %v944 = vld [vmem:[#allocation5 + $0x68] sm:$0xff]
        %v945 = vld [vmem:[#allocation5 + $0x70] sm:$0xff]
        %v946 = vld [vmem:[#allocation5 + $0x78] sm:$0xff]
        %948 = vset.pattern.permute.xlu0 0
        %949 = vperm.xlu0 %948, %v931
        %v950 = vpop.permute.xlu0 %949
        %953 = vset.pattern.permute.xlu0 0
        %954 = vperm.xlu0 %953, %v932
        %v955 = vpop.permute.xlu0 %954
        %958 = vset.pattern.permute.xlu0 0
        %959 = vperm.xlu0 %958, %v933
        %v960 = vpop.permute.xlu0 %959
        %963 = vset.pattern.permute.xlu0 0
        %964 = vperm.xlu0 %963, %v934
        %v965 = vpop.permute.xlu0 %964
        %968 = vset.pattern.permute.xlu0 0
        %969 = vperm.xlu0 %968, %v935
        %v970 = vpop.permute.xlu0 %969
        %973 = vset.pattern.permute.xlu0 0
        %974 = vperm.xlu0 %973, %v936
        %v975 = vpop.permute.xlu0 %974
        %978 = vset.pattern.permute.xlu0 0
        %979 = vperm.xlu0 %978, %v937
        %v980 = vpop.permute.xlu0 %979
        %983 = vset.pattern.permute.xlu0 0
        %984 = vperm.xlu0 %983, %v938
        %v985 = vpop.permute.xlu0 %984
        %988 = vset.pattern.permute.xlu0 0
        %989 = vperm.xlu0 %988, %v939
        %v990 = vpop.permute.xlu0 %989
        %993 = vset.pattern.permute.xlu0 0
        %994 = vperm.xlu0 %993, %v940
        %v995 = vpop.permute.xlu0 %994
        %998 = vset.pattern.permute.xlu0 0
        %999 = vperm.xlu0 %998, %v941
        %v1000 = vpop.permute.xlu0 %999
        %1003 = vset.pattern.permute.xlu0 0
        %1004 = vperm.xlu0 %1003, %v942
        %v1005 = vpop.permute.xlu0 %1004
        %1008 = vset.pattern.permute.xlu0 0
        %1009 = vperm.xlu0 %1008, %v943
        %v1010 = vpop.permute.xlu0 %1009
        %1013 = vset.pattern.permute.xlu0 0
        %1014 = vperm.xlu0 %1013, %v944
        %v1015 = vpop.permute.xlu0 %1014
        %1018 = vset.pattern.permute.xlu0 0
        %1019 = vperm.xlu0 %1018, %v945
        %v1020 = vpop.permute.xlu0 %1019
        %1023 = vset.pattern.permute.xlu0 0
        %1024 = vperm.xlu0 %1023, %v946
        %v1025 = vpop.permute.xlu0 %1024
        %1028 = vst [vmem:[#allocation1] ss:$2 sm:$0xff] %v914
        %v1029 = vld.sshfl [vmem:[#allocation1] sm:$0xff pattern:$0x75316420]
        %v1030 = vld.sshfl [vmem:[#allocation1 + $0x8] sm:$0xff pattern:$0x75316420]
        %vm1031 = vcmask 23552
        %v1033 = vsel %vm1031, %v915, 0
        %v1036 = vsel %vm1031, %v916, 0
        %v1039 = vsel %vm1031, %v917, 0
        %v1042 = vsel %vm1031, %v918, 0
        %v1045 = vsel %vm1031, %v919, 0
        %v1048 = vsel %vm1031, %v920, 0
        %v1051 = vsel %vm1031, %v921, 0
        %v1054 = vsel %vm1031, %v922, 0
        %v1057 = vsel %vm1031, %v923, 0
        %v1060 = vsel %vm1031, %v924, 0
        %v1063 = vsel %vm1031, %v925, 0
        %v1066 = vsel %vm1031, %v926, 0
        %v1069 = vsel %vm1031, %v927, 0
        %v1072 = vsel %vm1031, %v928, 0
        %v1075 = vsel %vm1031, %v929, 0
        %v1078 = vsel %vm1031, %v930, 0
        %vm1080 = vcmask 1042432
        %v1081 = vsel %vm1080, %v1029, 0
        %v1083 = vsel %vm1080, %v1030, 0
        %1085 = vmatpush.msra.mxu0 0.0
        %1086 = vmatpush.msra.mxu0 0.0
        %1087 = vmatpush.msra.mxu0 0.0
        %1088 = vmatpush.msra.mxu0 0.0
        %1089 = vmatpush.msra.mxu0 0.0
        %1090 = vmatpush.msra.mxu0 0.0
        %1091 = vmatpush.msra.mxu0 0.0
        %1092 = vmatpush.msra.mxu0 0.0
        %1093 = vmatpush.msra.mxu0 0.0
        %1094 = vmatpush.msra.mxu0 0.0
        %1095 = vmatpush.msra.mxu0 0.0
        %1096 = vmatpush.msra.mxu0 0.0
        %1097 = vmatpush.msra.mxu0 0.0
        %1098 = vmatpush.msra.mxu0 0.0
        %1099 = vmatpush.msra.mxu0 0.0
        %1100 = vmatpush.msra.mxu0 %v1081
        %1101 = vmatmul.f32.gmra.mxu0 %v1033
        %v1102 = vpop.f32.mrf.mxu0
        %v1103 = vadd.f32 %v950, %v1102
        %1104 = vmatmul.f32.gmra.mxu0 %v1036
        %v1105 = vpop.f32.mrf.mxu0
        %v1106 = vadd.f32 %v955, %v1105
        %1107 = vmatmul.f32.gmra.mxu0 %v1039
        %v1108 = vpop.f32.mrf.mxu0
        %v1109 = vadd.f32 %v960, %v1108
        %1110 = vmatmul.f32.gmra.mxu0 %v1042
        %v1111 = vpop.f32.mrf.mxu0
        %v1112 = vadd.f32 %v965, %v1111
        %1113 = vmatmul.f32.gmra.mxu0 %v1045
        %v1114 = vpop.f32.mrf.mxu0
        %v1115 = vadd.f32 %v970, %v1114
        %1116 = vmatmul.f32.gmra.mxu0 %v1048
        %v1117 = vpop.f32.mrf.mxu0
        %v1118 = vadd.f32 %v975, %v1117
        %1119 = vmatmul.f32.gmra.mxu0 %v1051
        %v1120 = vpop.f32.mrf.mxu0
        %v1121 = vadd.f32 %v980, %v1120
        %1122 = vmatmul.f32.gmra.mxu0 %v1054
        %v1123 = vpop.f32.mrf.mxu0
        %v1124 = vadd.f32 %v985, %v1123
        %1125 = vmatmul.f32.gmra.mxu0 %v1057
        %v1126 = vpop.f32.mrf.mxu0
        %v1127 = vadd.f32 %v990, %v1126
        %1128 = vmatmul.f32.gmra.mxu0 %v1060
        %v1129 = vpop.f32.mrf.mxu0
        %v1130 = vadd.f32 %v995, %v1129
        %1131 = vmatmul.f32.gmra.mxu0 %v1063
        %v1132 = vpop.f32.mrf.mxu0
        %v1133 = vadd.f32 %v1000, %v1132
        %1134 = vmatmul.f32.gmra.mxu0 %v1066
        %v1135 = vpop.f32.mrf.mxu0
        %v1136 = vadd.f32 %v1005, %v1135
        %1137 = vmatmul.f32.gmra.mxu0 %v1069
        %v1138 = vpop.f32.mrf.mxu0
        %v1139 = vadd.f32 %v1010, %v1138
        %1140 = vmatmul.f32.gmra.mxu0 %v1072
        %v1141 = vpop.f32.mrf.mxu0
        %v1142 = vadd.f32 %v1015, %v1141
        %1143 = vmatmul.f32.gmra.mxu0 %v1075
        %v1144 = vpop.f32.mrf.mxu0
        %v1145 = vadd.f32 %v1020, %v1144
        %1146 = vmatmul.f32.gmra.mxu0 %v1078
        %v1147 = vpop.f32.mrf.mxu0
        %v1148 = vadd.f32 %v1025, %v1147
        %1149 = vdwg.mxu0
        %1150 = vmatpush.msra.mxu0 0.0
        %1151 = vmatpush.msra.mxu0 0.0
        %1152 = vmatpush.msra.mxu0 0.0
        %1153 = vmatpush.msra.mxu0 0.0
        %1154 = vmatpush.msra.mxu0 0.0
        %1155 = vmatpush.msra.mxu0 0.0
        %1156 = vmatpush.msra.mxu0 0.0
        %1157 = vmatpush.msra.mxu0 0.0
        %1158 = vmatpush.msra.mxu0 0.0
        %1159 = vmatpush.msra.mxu0 0.0
        %1160 = vmatpush.msra.mxu0 0.0
        %1161 = vmatpush.msra.mxu0 0.0
        %1162 = vmatpush.msra.mxu0 0.0
        %1163 = vmatpush.msra.mxu0 0.0
        %1164 = vmatpush.msra.mxu0 0.0
        %1165 = vmatpush.msra.mxu0 %v1083
        %1166 = vmatmul.f32.gmra.mxu0 %v1033
        %v1167 = vpop.f32.mrf.mxu0
        %v1168 = vadd.f32 %v950, %v1167
        %1169 = vmatmul.f32.gmra.mxu0 %v1036
        %v1170 = vpop.f32.mrf.mxu0
        %v1171 = vadd.f32 %v955, %v1170
        %1172 = vmatmul.f32.gmra.mxu0 %v1039
        %v1173 = vpop.f32.mrf.mxu0
        %v1174 = vadd.f32 %v960, %v1173
        %1175 = vmatmul.f32.gmra.mxu0 %v1042
        %v1176 = vpop.f32.mrf.mxu0
        %v1177 = vadd.f32 %v965, %v1176
        %1178 = vmatmul.f32.gmra.mxu0 %v1045
        %v1179 = vpop.f32.mrf.mxu0
        %v1180 = vadd.f32 %v970, %v1179
        %1181 = vmatmul.f32.gmra.mxu0 %v1048
        %v1182 = vpop.f32.mrf.mxu0
        %v1183 = vadd.f32 %v975, %v1182
        %1184 = vmatmul.f32.gmra.mxu0 %v1051
        %v1185 = vpop.f32.mrf.mxu0
        %v1186 = vadd.f32 %v980, %v1185
        %1187 = vmatmul.f32.gmra.mxu0 %v1054
        %v1188 = vpop.f32.mrf.mxu0
        %v1189 = vadd.f32 %v985, %v1188
        %1190 = vmatmul.f32.gmra.mxu0 %v1057
        %v1191 = vpop.f32.mrf.mxu0
        %v1192 = vadd.f32 %v990, %v1191
        %1193 = vmatmul.f32.gmra.mxu0 %v1060
        %v1194 = vpop.f32.mrf.mxu0
        %v1195 = vadd.f32 %v995, %v1194
        %1196 = vmatmul.f32.gmra.mxu0 %v1063
        %v1197 = vpop.f32.mrf.mxu0
        %v1198 = vadd.f32 %v1000, %v1197
        %1199 = vmatmul.f32.gmra.mxu0 %v1066
        %v1200 = vpop.f32.mrf.mxu0
        %v1201 = vadd.f32 %v1005, %v1200
        %1202 = vmatmul.f32.gmra.mxu0 %v1069
        %v1203 = vpop.f32.mrf.mxu0
        %v1204 = vadd.f32 %v1010, %v1203
        %1205 = vmatmul.f32.gmra.mxu0 %v1072
        %v1206 = vpop.f32.mrf.mxu0
        %v1207 = vadd.f32 %v1015, %v1206
        %1208 = vmatmul.f32.gmra.mxu0 %v1075
        %v1209 = vpop.f32.mrf.mxu0
        %v1210 = vadd.f32 %v1020, %v1209
        %1211 = vmatmul.f32.gmra.mxu0 %v1078
        %v1212 = vpop.f32.mrf.mxu0
        %v1213 = vadd.f32 %v1025, %v1212
        %1214 = vdwg.mxu0
        %vm1215 = vcmp.ge.f32.partialorder %v1103, 0.0
        %vm1216 = vcmp.ge.f32.partialorder %v1168, 0.0
        %vm1217 = vcmp.ge.f32.partialorder %v1106, 0.0
        %vm1218 = vcmp.ge.f32.partialorder %v1171, 0.0
        %vm1219 = vcmp.ge.f32.partialorder %v1109, 0.0
        %vm1220 = vcmp.ge.f32.partialorder %v1174, 0.0
        %vm1221 = vcmp.ge.f32.partialorder %v1112, 0.0
        %vm1222 = vcmp.ge.f32.partialorder %v1177, 0.0
        %vm1223 = vcmp.ge.f32.partialorder %v1115, 0.0
        %vm1224 = vcmp.ge.f32.partialorder %v1180, 0.0
        %vm1225 = vcmp.ge.f32.partialorder %v1118, 0.0
        %vm1226 = vcmp.ge.f32.partialorder %v1183, 0.0
        %vm1227 = vcmp.ge.f32.partialorder %v1121, 0.0
        %vm1228 = vcmp.ge.f32.partialorder %v1186, 0.0
        %vm1229 = vcmp.ge.f32.partialorder %v1124, 0.0
        %vm1230 = vcmp.ge.f32.partialorder %v1189, 0.0
        %vm1231 = vcmp.ge.f32.partialorder %v1127, 0.0
        %vm1232 = vcmp.ge.f32.partialorder %v1192, 0.0
        %vm1233 = vcmp.ge.f32.partialorder %v1130, 0.0
        %vm1234 = vcmp.ge.f32.partialorder %v1195, 0.0
        %vm1235 = vcmp.ge.f32.partialorder %v1133, 0.0
        %vm1236 = vcmp.ge.f32.partialorder %v1198, 0.0
        %vm1237 = vcmp.ge.f32.partialorder %v1136, 0.0
        %vm1238 = vcmp.ge.f32.partialorder %v1201, 0.0
        %vm1239 = vcmp.ge.f32.partialorder %v1139, 0.0
        %vm1240 = vcmp.ge.f32.partialorder %v1204, 0.0
        %vm1241 = vcmp.ge.f32.partialorder %v1142, 0.0
        %vm1242 = vcmp.ge.f32.partialorder %v1207, 0.0
        %vm1243 = vcmp.ge.f32.partialorder %v1145, 0.0
        %vm1244 = vcmp.ge.f32.partialorder %v1210, 0.0
        %vm1245 = vcmp.ge.f32.partialorder %v1148, 0.0
        %vm1246 = vcmp.ge.f32.partialorder %v1213, 0.0
        %v1247 = vmul.f32 %v1103, 0.01
        %v1248 = vmul.f32 %v1168, 0.01
        %v1249 = vmul.f32 %v1106, 0.01
        %v1250 = vmul.f32 %v1171, 0.01
        %v1251 = vmul.f32 %v1109, 0.01
        %v1252 = vmul.f32 %v1174, 0.01
        %v1253 = vmul.f32 %v1112, 0.01
        %v1254 = vmul.f32 %v1177, 0.01
        %v1255 = vmul.f32 %v1115, 0.01
        %v1256 = vmul.f32 %v1180, 0.01
        %v1257 = vmul.f32 %v1118, 0.01
        %v1258 = vmul.f32 %v1183, 0.01
        %v1259 = vmul.f32 %v1121, 0.01
        %v1260 = vmul.f32 %v1186, 0.01
        %v1261 = vmul.f32 %v1124, 0.01
        %v1262 = vmul.f32 %v1189, 0.01
        %v1263 = vmul.f32 %v1127, 0.01
        %v1264 = vmul.f32 %v1192, 0.01
        %v1265 = vmul.f32 %v1130, 0.01
        %v1266 = vmul.f32 %v1195, 0.01
        %v1267 = vmul.f32 %v1133, 0.01
        %v1268 = vmul.f32 %v1198, 0.01
        %v1269 = vmul.f32 %v1136, 0.01
        %v1270 = vmul.f32 %v1201, 0.01
        %v1271 = vmul.f32 %v1139, 0.01
        %v1272 = vmul.f32 %v1204, 0.01
        %v1273 = vmul.f32 %v1142, 0.01
        %v1274 = vmul.f32 %v1207, 0.01
        %v1275 = vmul.f32 %v1145, 0.01
        %v1276 = vmul.f32 %v1210, 0.01
        %v1277 = vmul.f32 %v1148, 0.01
        %v1278 = vmul.f32 %v1213, 0.01
        %v1279 = vsel %vm1215, %v1103, %v1247
        %v1280 = vsel %vm1216, %v1168, %v1248
        %v1281 = vsel %vm1217, %v1106, %v1249
        %v1282 = vsel %vm1218, %v1171, %v1250
        %v1283 = vsel %vm1219, %v1109, %v1251
        %v1284 = vsel %vm1220, %v1174, %v1252
        %v1285 = vsel %vm1221, %v1112, %v1253
        %v1286 = vsel %vm1222, %v1177, %v1254
        %v1287 = vsel %vm1223, %v1115, %v1255
        %v1288 = vsel %vm1224, %v1180, %v1256
        %v1289 = vsel %vm1225, %v1118, %v1257
        %v1290 = vsel %vm1226, %v1183, %v1258
        %v1291 = vsel %vm1227, %v1121, %v1259
        %v1292 = vsel %vm1228, %v1186, %v1260
        %v1293 = vsel %vm1229, %v1124, %v1261
        %v1294 = vsel %vm1230, %v1189, %v1262
        %v1295 = vsel %vm1231, %v1127, %v1263
        %v1296 = vsel %vm1232, %v1192, %v1264
        %v1297 = vsel %vm1233, %v1130, %v1265
        %v1298 = vsel %vm1234, %v1195, %v1266
        %v1299 = vsel %vm1235, %v1133, %v1267
        %v1300 = vsel %vm1236, %v1198, %v1268
        %v1301 = vsel %vm1237, %v1136, %v1269
        %v1302 = vsel %vm1238, %v1201, %v1270
        %v1303 = vsel %vm1239, %v1139, %v1271
        %v1304 = vsel %vm1240, %v1204, %v1272
        %v1305 = vsel %vm1241, %v1142, %v1273
        %v1306 = vsel %vm1242, %v1207, %v1274
        %v1307 = vsel %vm1243, %v1145, %v1275
        %v1308 = vsel %vm1244, %v1210, %v1276
        %v1309 = vsel %vm1245, %v1148, %v1277
        %v1310 = vsel %vm1246, %v1213, %v1278
        %v1311 = vlaneseq
        %v1312 = vand.u32 %v1311, 127
        %v1313 = vadd.s32 %v1312, 128
        %s1314 = smul.u32 %s45, 256
        %v1315 = vstv %s1314
        %v1316 = vadd.s32 %v1312, %v1315
        %v1317 = vadd.s32 %v1313, %v1315
        %vm1318 = vcmp.lt.s32.totalorder %v1316, 256
        %vm1319 = vcmp.lt.s32.totalorder %v1317, 256
        %v1320 = vsel %vm1318, %v1279, -inf
        %v1321 = vsel %vm1319, %v1280, -inf
        %v1322 = vsel %vm1318, %v1281, -inf
        %v1323 = vsel %vm1319, %v1282, -inf
        %v1324 = vsel %vm1318, %v1283, -inf
        %v1325 = vsel %vm1319, %v1284, -inf
        %v1326 = vsel %vm1318, %v1285, -inf
        %v1327 = vsel %vm1319, %v1286, -inf
        %v1328 = vsel %vm1318, %v1287, -inf
        %v1329 = vsel %vm1319, %v1288, -inf
        %v1330 = vsel %vm1318, %v1289, -inf
        %v1331 = vsel %vm1319, %v1290, -inf
        %v1332 = vsel %vm1318, %v1291, -inf
        %v1333 = vsel %vm1319, %v1292, -inf
        %v1334 = vsel %vm1318, %v1293, -inf
        %v1335 = vsel %vm1319, %v1294, -inf
        %v1336 = vsel %vm1318, %v1295, -inf
        %v1337 = vsel %vm1319, %v1296, -inf
        %v1338 = vsel %vm1318, %v1297, -inf
        %v1339 = vsel %vm1319, %v1298, -inf
        %v1340 = vsel %vm1318, %v1299, -inf
        %v1341 = vsel %vm1319, %v1300, -inf
        %v1342 = vsel %vm1318, %v1301, -inf
        %v1343 = vsel %vm1319, %v1302, -inf
        %v1344 = vsel %vm1318, %v1303, -inf
        %v1345 = vsel %vm1319, %v1304, -inf
        %v1346 = vsel %vm1318, %v1305, -inf
        %v1347 = vsel %vm1319, %v1306, -inf
        %v1348 = vsel %vm1318, %v1307, -inf
        %v1349 = vsel %vm1319, %v1308, -inf
        %v1350 = vsel %vm1318, %v1309, -inf
        %v1351 = vsel %vm1319, %v1310, -inf
        %v1352 = vld [vmem:[#allocation2] sm:$0xff]
        %v1353 = vld [vmem:[#allocation2 + $0x8] sm:$0xff]
        %v1354 = vld [vmem:[#allocation2 + $0x10] sm:$0xff]
        %v1355 = vld [vmem:[#allocation2 + $0x18] sm:$0xff]
        %v1356 = vld [vmem:[#allocation2 + $0x20] sm:$0xff]
        %v1357 = vld [vmem:[#allocation2 + $0x28] sm:$0xff]
        %v1358 = vld [vmem:[#allocation2 + $0x30] sm:$0xff]
        %v1359 = vld [vmem:[#allocation2 + $0x38] sm:$0xff]
        %v1360 = vld [vmem:[#allocation2 + $0x40] sm:$0xff]
        %v1361 = vld [vmem:[#allocation2 + $0x48] sm:$0xff]
        %v1362 = vld [vmem:[#allocation2 + $0x50] sm:$0xff]
        %v1363 = vld [vmem:[#allocation2 + $0x58] sm:$0xff]
        %v1364 = vld [vmem:[#allocation2 + $0x60] sm:$0xff]
        %v1365 = vld [vmem:[#allocation2 + $0x68] sm:$0xff]
        %v1366 = vld [vmem:[#allocation2 + $0x70] sm:$0xff]
        %v1367 = vld [vmem:[#allocation2 + $0x78] sm:$0xff]
        %v1368 = vmax.f32 %v1320, %v1321
        %1369 = vmax.xlane.f32.xlu0 %v1368
        %v1370 = vpop.xlane.xlu0 %1369
        %v1371 = vmax.f32 %v1322, %v1323
        %1372 = vmax.xlane.f32.xlu0 %v1371
        %v1373 = vpop.xlane.xlu0 %1372
        %v1374 = vmax.f32 %v1324, %v1325
        %1375 = vmax.xlane.f32.xlu0 %v1374
        %v1376 = vpop.xlane.xlu0 %1375
        %v1377 = vmax.f32 %v1326, %v1327
        %1378 = vmax.xlane.f32.xlu0 %v1377
        %v1379 = vpop.xlane.xlu0 %1378
        %v1380 = vmax.f32 %v1328, %v1329
        %1381 = vmax.xlane.f32.xlu0 %v1380
        %v1382 = vpop.xlane.xlu0 %1381
        %v1383 = vmax.f32 %v1330, %v1331
        %1384 = vmax.xlane.f32.xlu0 %v1383
        %v1385 = vpop.xlane.xlu0 %1384
        %v1386 = vmax.f32 %v1332, %v1333
        %1387 = vmax.xlane.f32.xlu0 %v1386
        %v1388 = vpop.xlane.xlu0 %1387
        %v1389 = vmax.f32 %v1334, %v1335
        %1390 = vmax.xlane.f32.xlu0 %v1389
        %v1391 = vpop.xlane.xlu0 %1390
        %v1392 = vmax.f32 %v1336, %v1337
        %1393 = vmax.xlane.f32.xlu0 %v1392
        %v1394 = vpop.xlane.xlu0 %1393
        %v1395 = vmax.f32 %v1338, %v1339
        %1396 = vmax.xlane.f32.xlu0 %v1395
        %v1397 = vpop.xlane.xlu0 %1396
        %v1398 = vmax.f32 %v1340, %v1341
        %1399 = vmax.xlane.f32.xlu0 %v1398
        %v1400 = vpop.xlane.xlu0 %1399
        %v1401 = vmax.f32 %v1342, %v1343
        %1402 = vmax.xlane.f32.xlu0 %v1401
        %v1403 = vpop.xlane.xlu0 %1402
        %v1404 = vmax.f32 %v1344, %v1345
        %1405 = vmax.xlane.f32.xlu0 %v1404
        %v1406 = vpop.xlane.xlu0 %1405
        %v1407 = vmax.f32 %v1346, %v1347
        %1408 = vmax.xlane.f32.xlu0 %v1407
        %v1409 = vpop.xlane.xlu0 %1408
        %v1410 = vmax.f32 %v1348, %v1349
        %1411 = vmax.xlane.f32.xlu0 %v1410
        %v1412 = vpop.xlane.xlu0 %1411
        %v1413 = vmax.f32 %v1350, %v1351
        %1414 = vmax.xlane.f32.xlu0 %v1413
        %v1415 = vpop.xlane.xlu0 %1414
        %v1416 = vmax.f32 %v1352, %v1370
        %v1417 = vmax.f32 %v1353, %v1373
        %v1418 = vmax.f32 %v1354, %v1376
        %v1419 = vmax.f32 %v1355, %v1379
        %v1420 = vmax.f32 %v1356, %v1382
        %v1421 = vmax.f32 %v1357, %v1385
        %v1422 = vmax.f32 %v1358, %v1388
        %v1423 = vmax.f32 %v1359, %v1391
        %v1424 = vmax.f32 %v1360, %v1394
        %v1425 = vmax.f32 %v1361, %v1397
        %v1426 = vmax.f32 %v1362, %v1400
        %v1427 = vmax.f32 %v1363, %v1403
        %v1428 = vmax.f32 %v1364, %v1406
        %v1429 = vmax.f32 %v1365, %v1409
        %v1430 = vmax.f32 %v1366, %v1412
        %v1431 = vmax.f32 %v1367, %v1415
        %vm1432 = vcmask 7168
        %1433 = vst.msk [vmem:[#allocation2] sm:$0xff] %vm1432, %v1416
        %1434 = vst.msk [vmem:[#allocation2 + $0x8] sm:$0xff] %vm1432, %v1417
        %1435 = vst.msk [vmem:[#allocation2 + $0x10] sm:$0xff] %vm1432, %v1418
        %1436 = vst.msk [vmem:[#allocation2 + $0x18] sm:$0xff] %vm1432, %v1419
        %1437 = vst.msk [vmem:[#allocation2 + $0x20] sm:$0xff] %vm1432, %v1420
        %1438 = vst.msk [vmem:[#allocation2 + $0x28] sm:$0xff] %vm1432, %v1421
        %1439 = vst.msk [vmem:[#allocation2 + $0x30] sm:$0xff] %vm1432, %v1422
        %1440 = vst.msk [vmem:[#allocation2 + $0x38] sm:$0xff] %vm1432, %v1423
        %1441 = vst.msk [vmem:[#allocation2 + $0x40] sm:$0xff] %vm1432, %v1424
        %1442 = vst.msk [vmem:[#allocation2 + $0x48] sm:$0xff] %vm1432, %v1425
        %1443 = vst.msk [vmem:[#allocation2 + $0x50] sm:$0xff] %vm1432, %v1426
        %1444 = vst.msk [vmem:[#allocation2 + $0x58] sm:$0xff] %vm1432, %v1427
        %1445 = vst.msk [vmem:[#allocation2 + $0x60] sm:$0xff] %vm1432, %v1428
        %1446 = vst.msk [vmem:[#allocation2 + $0x68] sm:$0xff] %vm1432, %v1429
        %1447 = vst.msk [vmem:[#allocation2 + $0x70] sm:$0xff] %vm1432, %v1430
        %1448 = vst.msk [vmem:[#allocation2 + $0x78] sm:$0xff] %vm1432, %v1431
        // Predicated region
        $region161: #{fixed_source_deformer_forward.2} parent=91 // pred_check
          %p1449 = pneg %p893
        $region162: #{fixed_source_deformer_forward.2} parent=91 // pred_check_branch
          %1451 = sbr.rel (%p1449) target = $region164
        $region163: #{fixed_source_deformer_forward.2} parent=91 // pred_region
          %v1452 = vld [vmem:[#allocation2] sm:$0xff]
          %v1453 = vld [vmem:[#allocation2 + $0x8] sm:$0xff]
          %v1454 = vld [vmem:[#allocation2 + $0x10] sm:$0xff]
          %v1455 = vld [vmem:[#allocation2 + $0x18] sm:$0xff]
          %v1456 = vld [vmem:[#allocation2 + $0x20] sm:$0xff]
          %v1457 = vld [vmem:[#allocation2 + $0x28] sm:$0xff]
          %v1458 = vld [vmem:[#allocation2 + $0x30] sm:$0xff]
          %v1459 = vld [vmem:[#allocation2 + $0x38] sm:$0xff]
          %v1460 = vld [vmem:[#allocation2 + $0x40] sm:$0xff]
          %v1461 = vld [vmem:[#allocation2 + $0x48] sm:$0xff]
          %v1462 = vld [vmem:[#allocation2 + $0x50] sm:$0xff]
          %v1463 = vld [vmem:[#allocation2 + $0x58] sm:$0xff]
          %v1464 = vld [vmem:[#allocation2 + $0x60] sm:$0xff]
          %v1465 = vld [vmem:[#allocation2 + $0x68] sm:$0xff]
          %v1466 = vld [vmem:[#allocation2 + $0x70] sm:$0xff]
          %v1467 = vld [vmem:[#allocation2 + $0x78] sm:$0xff]
          %v1468 = vld [vmem:[#allocation7] sm:$0xff]
          %v1469 = vld [vmem:[#allocation7 + $0x8] sm:$0xff]
          %v1470 = vld [vmem:[#allocation7 + $0x10] sm:$0xff]
          %v1471 = vld [vmem:[#allocation7 + $0x18] sm:$0xff]
          %v1472 = vld [vmem:[#allocation7 + $0x20] sm:$0xff]
          %v1473 = vld [vmem:[#allocation7 + $0x28] sm:$0xff]
          %v1474 = vld [vmem:[#allocation7 + $0x30] sm:$0xff]
          %v1475 = vld [vmem:[#allocation7 + $0x38] sm:$0xff]
          %v1476 = vld [vmem:[#allocation7 + $0x40] sm:$0xff]
          %v1477 = vld [vmem:[#allocation7 + $0x48] sm:$0xff]
          %v1478 = vld [vmem:[#allocation7 + $0x50] sm:$0xff]
          %v1479 = vld [vmem:[#allocation7 + $0x58] sm:$0xff]
          %v1480 = vld [vmem:[#allocation7 + $0x60] sm:$0xff]
          %v1481 = vld [vmem:[#allocation7 + $0x68] sm:$0xff]
          %v1482 = vld [vmem:[#allocation7 + $0x70] sm:$0xff]
          %v1483 = vld [vmem:[#allocation7 + $0x78] sm:$0xff]
          %v1484 = vld [vmem:[#allocation8] sm:$0x1]
          %1485 = vxpose.xlu0.b32.start [1/16] %v1452, 128
          %1486 = vxpose.xlu0.b32.cont [2/16] %v1453, 128
          %1487 = vxpose.xlu0.b32.cont [3/16] %v1454, 128
          %1488 = vxpose.xlu0.b32.cont [4/16] %v1455, 128
          %1489 = vxpose.xlu0.b32.cont [5/16] %v1456, 128
          %1490 = vxpose.xlu0.b32.cont [6/16] %v1457, 128
          %1491 = vxpose.xlu0.b32.cont [7/16] %v1458, 128
          %1492 = vxpose.xlu0.b32.cont [8/16] %v1459, 128
          %1493 = vxpose.xlu0.b32.cont [9/16] %v1460, 128
          %1494 = vxpose.xlu0.b32.cont [10/16] %v1461, 128
          %1495 = vxpose.xlu0.b32.cont [11/16] %v1462, 128
          %1496 = vxpose.xlu0.b32.cont [12/16] %v1463, 128
          %1497 = vxpose.xlu0.b32.cont [13/16] %v1464, 128
          %1498 = vxpose.xlu0.b32.cont [14/16] %v1465, 128
          %1499 = vxpose.xlu0.b32.cont [15/16] %v1466, 128
          %1500 = vxpose.xlu0.b32.end [16/16] %v1467, 128
          %v1501 = vpop.trf.xlu0
          %v1502 = vpop.trf.xlu0
          %v1503 = vpop.trf.xlu0
          %v1504 = vpop.trf.xlu0
          %v1505 = vpop.trf.xlu0
          %v1506 = vpop.trf.xlu0
          %v1507 = vpop.trf.xlu0
          %v1508 = vpop.trf.xlu0
          %v1509 = vpop.trf.xlu0
          %v1510 = vpop.trf.xlu0
          %v1511 = vpop.trf.xlu0
          %v1512 = vpop.trf.xlu0
          %v1513 = vpop.trf.xlu0
          %v1514 = vpop.trf.xlu0
          %v1515 = vpop.trf.xlu0
          %v1516 = vpop.trf.xlu0
          %1517 = vmatpush.msra.mxu0 %v1483
          %1518 = vmatpush.msra.mxu0 %v1482
          %1519 = vmatpush.msra.mxu0 %v1481
          %1520 = vmatpush.msra.mxu0 %v1480
          %1521 = vmatpush.msra.mxu0 %v1479
          %1522 = vmatpush.msra.mxu0 %v1478
          %1523 = vmatpush.msra.mxu0 %v1477
          %1524 = vmatpush.msra.mxu0 %v1476
          %1525 = vmatpush.msra.mxu0 %v1475
          %1526 = vmatpush.msra.mxu0 %v1474
          %1527 = vmatpush.msra.mxu0 %v1473
          %1528 = vmatpush.msra.mxu0 %v1472
          %1529 = vmatpush.msra.mxu0 %v1471
          %1530 = vmatpush.msra.mxu0 %v1470
          %1531 = vmatpush.msra.mxu0 %v1469
          %1532 = vmatpush.msra.mxu0 %v1468
          %1533 = vmatmul.f32.gmra.mxu0 %v1501
          %v1534 = vpop.f32.mrf.mxu0
          %v1535 = vadd.f32 %v1484, %v1534
          %1536 = vdwg.mxu0
          %v1537 = vtanh.pop %v1535
          %v1538 = vld [vmem:[%s1] sm:$0x7]
          %v1539 = vld [vmem:[#allocation10] sm:$0xff]
          %v1540 = vld [vmem:[#allocation10 + $0x8] sm:$0xff]
          %v1541 = vld [vmem:[#allocation10 + $0x10] sm:$0xff]
          %v1542 = vld [vmem:[#allocation10 + $0x18] sm:$0xff]
          %v1543 = vld [vmem:[#allocation10 + $0x20] sm:$0xff]
          %v1544 = vld [vmem:[#allocation10 + $0x28] sm:$0xff]
          %v1545 = vld [vmem:[#allocation10 + $0x30] sm:$0xff]
          %v1546 = vld [vmem:[#allocation10 + $0x38] sm:$0xff]
          %v1547 = vld [vmem:[#allocation10 + $0x40] sm:$0xff]
          %v1548 = vld [vmem:[#allocation10 + $0x48] sm:$0xff]
          %v1549 = vld [vmem:[#allocation10 + $0x50] sm:$0xff]
          %v1550 = vld [vmem:[#allocation10 + $0x58] sm:$0xff]
          %v1551 = vld [vmem:[#allocation10 + $0x60] sm:$0xff]
          %v1552 = vld [vmem:[#allocation10 + $0x68] sm:$0xff]
          %v1553 = vld [vmem:[#allocation10 + $0x70] sm:$0xff]
          %v1554 = vld [vmem:[#allocation10 + $0x78] sm:$0xff]
          %v1555 = vld [vmem:[#allocation11] sm:$0xff]
          %v1556 = vld [vmem:[#allocation11 + $0x8] sm:$0xff]
          %v1557 = vld [vmem:[#allocation11 + $0x10] sm:$0xff]
          %v1558 = vld [vmem:[#allocation11 + $0x18] sm:$0xff]
          %v1559 = vld [vmem:[#allocation11 + $0x20] sm:$0xff]
          %v1560 = vld [vmem:[#allocation11 + $0x28] sm:$0xff]
          %v1561 = vld [vmem:[#allocation11 + $0x30] sm:$0xff]
          %v1562 = vld [vmem:[#allocation11 + $0x38] sm:$0xff]
          %v1563 = vld [vmem:[#allocation11 + $0x40] sm:$0xff]
          %v1564 = vld [vmem:[#allocation11 + $0x48] sm:$0xff]
          %v1565 = vld [vmem:[#allocation11 + $0x50] sm:$0xff]
          %v1566 = vld [vmem:[#allocation11 + $0x58] sm:$0xff]
          %v1567 = vld [vmem:[#allocation11 + $0x60] sm:$0xff]
          %v1568 = vld [vmem:[#allocation11 + $0x68] sm:$0xff]
          %v1569 = vld [vmem:[#allocation11 + $0x70] sm:$0xff]
          %v1570 = vld [vmem:[#allocation11 + $0x78] sm:$0xff]
          %1572 = vset.pattern.permute.xlu0 0
          %1573 = vperm.xlu0 %1572, %v1555
          %v1574 = vpop.permute.xlu0 %1573
          %1577 = vset.pattern.permute.xlu0 0
          %1578 = vperm.xlu0 %1577, %v1556
          %v1579 = vpop.permute.xlu0 %1578
          %1582 = vset.pattern.permute.xlu0 0
          %1583 = vperm.xlu0 %1582, %v1557
          %v1584 = vpop.permute.xlu0 %1583
          %1587 = vset.pattern.permute.xlu0 0
          %1588 = vperm.xlu0 %1587, %v1558
          %v1589 = vpop.permute.xlu0 %1588
          %1592 = vset.pattern.permute.xlu0 0
          %1593 = vperm.xlu0 %1592, %v1559
          %v1594 = vpop.permute.xlu0 %1593
          %1597 = vset.pattern.permute.xlu0 0
          %1598 = vperm.xlu0 %1597, %v1560
          %v1599 = vpop.permute.xlu0 %1598
          %1602 = vset.pattern.permute.xlu0 0
          %1603 = vperm.xlu0 %1602, %v1561
          %v1604 = vpop.permute.xlu0 %1603
          %1607 = vset.pattern.permute.xlu0 0
          %1608 = vperm.xlu0 %1607, %v1562
          %v1609 = vpop.permute.xlu0 %1608
          %1612 = vset.pattern.permute.xlu0 0
          %1613 = vperm.xlu0 %1612, %v1563
          %v1614 = vpop.permute.xlu0 %1613
          %1617 = vset.pattern.permute.xlu0 0
          %1618 = vperm.xlu0 %1617, %v1564
          %v1619 = vpop.permute.xlu0 %1618
          %1622 = vset.pattern.permute.xlu0 0
          %1623 = vperm.xlu0 %1622, %v1565
          %v1624 = vpop.permute.xlu0 %1623
          %1627 = vset.pattern.permute.xlu0 0
          %1628 = vperm.xlu0 %1627, %v1566
          %v1629 = vpop.permute.xlu0 %1628
          %1632 = vset.pattern.permute.xlu0 0
          %1633 = vperm.xlu0 %1632, %v1567
          %v1634 = vpop.permute.xlu0 %1633
          %1637 = vset.pattern.permute.xlu0 0
          %1638 = vperm.xlu0 %1637, %v1568
          %v1639 = vpop.permute.xlu0 %1638
          %1642 = vset.pattern.permute.xlu0 0
          %1643 = vperm.xlu0 %1642, %v1569
          %v1644 = vpop.permute.xlu0 %1643
          %1647 = vset.pattern.permute.xlu0 0
          %1648 = vperm.xlu0 %1647, %v1570
          %v1649 = vpop.permute.xlu0 %1648
          %v1652 = vsel %vm1031, %v1539, 0
          %v1655 = vsel %vm1031, %v1540, 0
          %v1658 = vsel %vm1031, %v1541, 0
          %v1661 = vsel %vm1031, %v1542, 0
          %v1664 = vsel %vm1031, %v1543, 0
          %v1667 = vsel %vm1031, %v1544, 0
          %v1670 = vsel %vm1031, %v1545, 0
          %v1673 = vsel %vm1031, %v1546, 0
          %v1676 = vsel %vm1031, %v1547, 0
          %v1679 = vsel %vm1031, %v1548, 0
          %v1682 = vsel %vm1031, %v1549, 0
          %v1685 = vsel %vm1031, %v1550, 0
          %v1688 = vsel %vm1031, %v1551, 0
          %v1691 = vsel %vm1031, %v1552, 0
          %v1694 = vsel %vm1031, %v1553, 0
          %v1697 = vsel %vm1031, %v1554, 0
          %v1700 = vsel %vm1080, %v1538, 0
          %1702 = vmatpush.msra.mxu0 0.0
          %1703 = vmatpush.msra.mxu0 0.0
          %1704 = vmatpush.msra.mxu0 0.0
          %1705 = vmatpush.msra.mxu0 0.0
          %1706 = vmatpush.msra.mxu0 0.0
          %1707 = vmatpush.msra.mxu0 0.0
          %1708 = vmatpush.msra.mxu0 0.0
          %1709 = vmatpush.msra.mxu0 0.0
          %1710 = vmatpush.msra.mxu0 0.0
          %1711 = vmatpush.msra.mxu0 0.0
          %1712 = vmatpush.msra.mxu0 0.0
          %1713 = vmatpush.msra.mxu0 0.0
          %1714 = vmatpush.msra.mxu0 0.0
          %1715 = vmatpush.msra.mxu0 0.0
          %1716 = vmatpush.msra.mxu0 0.0
          %1717 = vmatpush.msra.mxu0 %v1700
          %1718 = vmatmul.f32.gmra.mxu0 %v1652
          %v1719 = vpop.f32.mrf.mxu0
          %v1720 = vadd.f32 %v1574, %v1719
          %1721 = vmatmul.f32.gmra.mxu0 %v1655
          %v1722 = vpop.f32.mrf.mxu0
          %v1723 = vadd.f32 %v1579, %v1722
          %1724 = vmatmul.f32.gmra.mxu0 %v1658
          %v1725 = vpop.f32.mrf.mxu0
          %v1726 = vadd.f32 %v1584, %v1725
          %1727 = vmatmul.f32.gmra.mxu0 %v1661
          %v1728 = vpop.f32.mrf.mxu0
          %v1729 = vadd.f32 %v1589, %v1728
          %1730 = vmatmul.f32.gmra.mxu0 %v1664
          %v1731 = vpop.f32.mrf.mxu0
          %v1732 = vadd.f32 %v1594, %v1731
          %1733 = vmatmul.f32.gmra.mxu0 %v1667
          %v1734 = vpop.f32.mrf.mxu0
          %v1735 = vadd.f32 %v1599, %v1734
          %1736 = vmatmul.f32.gmra.mxu0 %v1670
          %v1737 = vpop.f32.mrf.mxu0
          %v1738 = vadd.f32 %v1604, %v1737
          %1739 = vmatmul.f32.gmra.mxu0 %v1673
          %v1740 = vpop.f32.mrf.mxu0
          %v1741 = vadd.f32 %v1609, %v1740
          %1742 = vmatmul.f32.gmra.mxu0 %v1676
          %v1743 = vpop.f32.mrf.mxu0
          %v1744 = vadd.f32 %v1614, %v1743
          %1745 = vmatmul.f32.gmra.mxu0 %v1679
          %v1746 = vpop.f32.mrf.mxu0
          %v1747 = vadd.f32 %v1619, %v1746
          %1748 = vmatmul.f32.gmra.mxu0 %v1682
          %v1749 = vpop.f32.mrf.mxu0
          %v1750 = vadd.f32 %v1624, %v1749
          %1751 = vmatmul.f32.gmra.mxu0 %v1685
          %v1752 = vpop.f32.mrf.mxu0
          %v1753 = vadd.f32 %v1629, %v1752
          %1754 = vmatmul.f32.gmra.mxu0 %v1688
          %v1755 = vpop.f32.mrf.mxu0
          %v1756 = vadd.f32 %v1634, %v1755
          %1757 = vmatmul.f32.gmra.mxu0 %v1691
          %v1758 = vpop.f32.mrf.mxu0
          %v1759 = vadd.f32 %v1639, %v1758
          %1760 = vmatmul.f32.gmra.mxu0 %v1694
          %v1761 = vpop.f32.mrf.mxu0
          %v1762 = vadd.f32 %v1644, %v1761
          %1763 = vmatmul.f32.gmra.mxu0 %v1697
          %v1764 = vpop.f32.mrf.mxu0
          %v1765 = vadd.f32 %v1649, %v1764
          %1766 = vdwg.mxu0
          %vm1767 = vcmp.ge.f32.partialorder %v1720, 0.0
          %vm1768 = vcmp.ge.f32.partialorder %v1723, 0.0
          %vm1769 = vcmp.ge.f32.partialorder %v1726, 0.0
          %vm1770 = vcmp.ge.f32.partialorder %v1729, 0.0
          %vm1771 = vcmp.ge.f32.partialorder %v1732, 0.0
          %vm1772 = vcmp.ge.f32.partialorder %v1735, 0.0
          %vm1773 = vcmp.ge.f32.partialorder %v1738, 0.0
          %vm1774 = vcmp.ge.f32.partialorder %v1741, 0.0
          %vm1775 = vcmp.ge.f32.partialorder %v1744, 0.0
          %vm1776 = vcmp.ge.f32.partialorder %v1747, 0.0
          %vm1777 = vcmp.ge.f32.partialorder %v1750, 0.0
          %vm1778 = vcmp.ge.f32.partialorder %v1753, 0.0
          %vm1779 = vcmp.ge.f32.partialorder %v1756, 0.0
          %vm1780 = vcmp.ge.f32.partialorder %v1759, 0.0
          %vm1781 = vcmp.ge.f32.partialorder %v1762, 0.0
          %vm1782 = vcmp.ge.f32.partialorder %v1765, 0.0
          %v1783 = vmul.f32 %v1720, 0.01
          %v1784 = vmul.f32 %v1723, 0.01
          %v1785 = vmul.f32 %v1726, 0.01
          %v1786 = vmul.f32 %v1729, 0.01
          %v1787 = vmul.f32 %v1732, 0.01
          %v1788 = vmul.f32 %v1735, 0.01
          %v1789 = vmul.f32 %v1738, 0.01
          %v1790 = vmul.f32 %v1741, 0.01
          %v1791 = vmul.f32 %v1744, 0.01
          %v1792 = vmul.f32 %v1747, 0.01
          %v1793 = vmul.f32 %v1750, 0.01
          %v1794 = vmul.f32 %v1753, 0.01
          %v1795 = vmul.f32 %v1756, 0.01
          %v1796 = vmul.f32 %v1759, 0.01
          %v1797 = vmul.f32 %v1762, 0.01
          %v1798 = vmul.f32 %v1765, 0.01
          %v1799 = vsel %vm1767, %v1720, %v1783
          %v1800 = vsel %vm1768, %v1723, %v1784
          %v1801 = vsel %vm1769, %v1726, %v1785
          %v1802 = vsel %vm1770, %v1729, %v1786
          %v1803 = vsel %vm1771, %v1732, %v1787
          %v1804 = vsel %vm1772, %v1735, %v1788
          %v1805 = vsel %vm1773, %v1738, %v1789
          %v1806 = vsel %vm1774, %v1741, %v1790
          %v1807 = vsel %vm1775, %v1744, %v1791
          %v1808 = vsel %vm1776, %v1747, %v1792
          %v1809 = vsel %vm1777, %v1750, %v1793
          %v1810 = vsel %vm1778, %v1753, %v1794
          %v1811 = vsel %vm1779, %v1756, %v1795
          %v1812 = vsel %vm1780, %v1759, %v1796
          %v1813 = vsel %vm1781, %v1762, %v1797
          %v1814 = vsel %vm1782, %v1765, %v1798
          %v1815 = vld [vmem:[#allocation13] sm:$0xff]
          %v1816 = vld [vmem:[#allocation13 + $0x8] sm:$0xff]
          %v1817 = vld [vmem:[#allocation13 + $0x10] sm:$0xff]
          %v1818 = vld [vmem:[#allocation13 + $0x18] sm:$0xff]
          %v1819 = vld [vmem:[#allocation13 + $0x20] sm:$0xff]
          %v1820 = vld [vmem:[#allocation13 + $0x28] sm:$0xff]
          %v1821 = vld [vmem:[#allocation13 + $0x30] sm:$0xff]
          %v1822 = vld [vmem:[#allocation13 + $0x38] sm:$0xff]
          %v1823 = vld [vmem:[#allocation13 + $0x40] sm:$0xff]
          %v1824 = vld [vmem:[#allocation13 + $0x48] sm:$0xff]
          %v1825 = vld [vmem:[#allocation13 + $0x50] sm:$0xff]
          %v1826 = vld [vmem:[#allocation13 + $0x58] sm:$0xff]
          %v1827 = vld [vmem:[#allocation13 + $0x60] sm:$0xff]
          %v1828 = vld [vmem:[#allocation13 + $0x68] sm:$0xff]
          %v1829 = vld [vmem:[#allocation13 + $0x70] sm:$0xff]
          %v1830 = vld [vmem:[#allocation13 + $0x78] sm:$0xff]
          %v1831 = vld [vmem:[#allocation14] sm:$0xff]
          %v1832 = vld [vmem:[#allocation14 + $0x8] sm:$0xff]
          %v1833 = vld [vmem:[#allocation14 + $0x10] sm:$0xff]
          %v1834 = vld [vmem:[#allocation14 + $0x18] sm:$0xff]
          %v1835 = vld [vmem:[#allocation14 + $0x20] sm:$0xff]
          %v1836 = vld [vmem:[#allocation14 + $0x28] sm:$0xff]
          %v1837 = vld [vmem:[#allocation14 + $0x30] sm:$0xff]
          %v1838 = vld [vmem:[#allocation14 + $0x38] sm:$0xff]
          %v1839 = vld [vmem:[#allocation14 + $0x40] sm:$0xff]
          %v1840 = vld [vmem:[#allocation14 + $0x48] sm:$0xff]
          %v1841 = vld [vmem:[#allocation14 + $0x50] sm:$0xff]
          %v1842 = vld [vmem:[#allocation14 + $0x58] sm:$0xff]
          %v1843 = vld [vmem:[#allocation14 + $0x60] sm:$0xff]
          %v1844 = vld [vmem:[#allocation14 + $0x68] sm:$0xff]
          %v1845 = vld [vmem:[#allocation14 + $0x70] sm:$0xff]
          %v1846 = vld [vmem:[#allocation14 + $0x78] sm:$0xff]
          %1848 = vset.pattern.permute.xlu0 0
          %1849 = vperm.xlu0 %1848, %v1831
          %v1850 = vpop.permute.xlu0 %1849
          %1853 = vset.pattern.permute.xlu0 0
          %1854 = vperm.xlu0 %1853, %v1832
          %v1855 = vpop.permute.xlu0 %1854
          %1858 = vset.pattern.permute.xlu0 0
          %1859 = vperm.xlu0 %1858, %v1833
          %v1860 = vpop.permute.xlu0 %1859
          %1863 = vset.pattern.permute.xlu0 0
          %1864 = vperm.xlu0 %1863, %v1834
          %v1865 = vpop.permute.xlu0 %1864
          %1868 = vset.pattern.permute.xlu0 0
          %1869 = vperm.xlu0 %1868, %v1835
          %v1870 = vpop.permute.xlu0 %1869
          %1873 = vset.pattern.permute.xlu0 0
          %1874 = vperm.xlu0 %1873, %v1836
          %v1875 = vpop.permute.xlu0 %1874
          %1878 = vset.pattern.permute.xlu0 0
          %1879 = vperm.xlu0 %1878, %v1837
          %v1880 = vpop.permute.xlu0 %1879
          %1883 = vset.pattern.permute.xlu0 0
          %1884 = vperm.xlu0 %1883, %v1838
          %v1885 = vpop.permute.xlu0 %1884
          %1888 = vset.pattern.permute.xlu0 0
          %1889 = vperm.xlu0 %1888, %v1839
          %v1890 = vpop.permute.xlu0 %1889
          %1893 = vset.pattern.permute.xlu0 0
          %1894 = vperm.xlu0 %1893, %v1840
          %v1895 = vpop.permute.xlu0 %1894
          %1898 = vset.pattern.permute.xlu0 0
          %1899 = vperm.xlu0 %1898, %v1841
          %v1900 = vpop.permute.xlu0 %1899
          %1903 = vset.pattern.permute.xlu0 0
          %1904 = vperm.xlu0 %1903, %v1842
          %v1905 = vpop.permute.xlu0 %1904
          %1908 = vset.pattern.permute.xlu0 0
          %1909 = vperm.xlu0 %1908, %v1843
          %v1910 = vpop.permute.xlu0 %1909
          %1913 = vset.pattern.permute.xlu0 0
          %1914 = vperm.xlu0 %1913, %v1844
          %v1915 = vpop.permute.xlu0 %1914
          %1918 = vset.pattern.permute.xlu0 0
          %1919 = vperm.xlu0 %1918, %v1845
          %v1920 = vpop.permute.xlu0 %1919
          %1923 = vset.pattern.permute.xlu0 0
          %1924 = vperm.xlu0 %1923, %v1846
          %v1925 = vpop.permute.xlu0 %1924
          %1927 = vmatpush.msra.mxu0 %v1814
          %1928 = vmatpush.msra.mxu0 %v1813
          %1929 = vmatpush.msra.mxu0 %v1812
          %1930 = vmatpush.msra.mxu0 %v1811
          %1931 = vmatpush.msra.mxu0 %v1810
          %1932 = vmatpush.msra.mxu0 %v1809
          %1933 = vmatpush.msra.mxu0 %v1808
          %1934 = vmatpush.msra.mxu0 %v1807
          %1935 = vmatpush.msra.mxu0 %v1806
          %1936 = vmatpush.msra.mxu0 %v1805
          %1937 = vmatpush.msra.mxu0 %v1804
          %1938 = vmatpush.msra.mxu0 %v1803
          %1939 = vmatpush.msra.mxu0 %v1802
          %1940 = vmatpush.msra.mxu0 %v1801
          %1941 = vmatpush.msra.mxu0 %v1800
          %1942 = vmatpush.msra.mxu0 %v1799
          %1943 = vmatmul.f32.gmra.mxu0 %v1815
          %v1944 = vpop.f32.mrf.mxu0
          %v1945 = vadd.f32 %v1850, %v1944
          %1946 = vmatmul.f32.gmra.mxu0 %v1816
          %v1947 = vpop.f32.mrf.mxu0
          %v1948 = vadd.f32 %v1855, %v1947
          %1949 = vmatmul.f32.gmra.mxu0 %v1817
          %v1950 = vpop.f32.mrf.mxu0
          %v1951 = vadd.f32 %v1860, %v1950
          %1952 = vmatmul.f32.gmra.mxu0 %v1818
          %v1953 = vpop.f32.mrf.mxu0
          %v1954 = vadd.f32 %v1865, %v1953
          %1955 = vmatmul.f32.gmra.mxu0 %v1819
          %v1956 = vpop.f32.mrf.mxu0
          %v1957 = vadd.f32 %v1870, %v1956
          %1958 = vmatmul.f32.gmra.mxu0 %v1820
          %v1959 = vpop.f32.mrf.mxu0
          %v1960 = vadd.f32 %v1875, %v1959
          %1961 = vmatmul.f32.gmra.mxu0 %v1821
          %v1962 = vpop.f32.mrf.mxu0
          %v1963 = vadd.f32 %v1880, %v1962
          %1964 = vmatmul.f32.gmra.mxu0 %v1822
          %v1965 = vpop.f32.mrf.mxu0
          %v1966 = vadd.f32 %v1885, %v1965
          %1967 = vmatmul.f32.gmra.mxu0 %v1823
          %v1968 = vpop.f32.mrf.mxu0
          %v1969 = vadd.f32 %v1890, %v1968
          %1970 = vmatmul.f32.gmra.mxu0 %v1824
          %v1971 = vpop.f32.mrf.mxu0
          %v1972 = vadd.f32 %v1895, %v1971
          %1973 = vmatmul.f32.gmra.mxu0 %v1825
          %v1974 = vpop.f32.mrf.mxu0
          %v1975 = vadd.f32 %v1900, %v1974
          %1976 = vmatmul.f32.gmra.mxu0 %v1826
          %v1977 = vpop.f32.mrf.mxu0
          %v1978 = vadd.f32 %v1905, %v1977
          %1979 = vmatmul.f32.gmra.mxu0 %v1827
          %v1980 = vpop.f32.mrf.mxu0
          %v1981 = vadd.f32 %v1910, %v1980
          %1982 = vmatmul.f32.gmra.mxu0 %v1828
          %v1983 = vpop.f32.mrf.mxu0
          %v1984 = vadd.f32 %v1915, %v1983
          %1985 = vmatmul.f32.gmra.mxu0 %v1829
          %v1986 = vpop.f32.mrf.mxu0
          %v1987 = vadd.f32 %v1920, %v1986
          %1988 = vmatmul.f32.gmra.mxu0 %v1830
          %v1989 = vpop.f32.mrf.mxu0
          %v1990 = vadd.f32 %v1925, %v1989
          %1991 = vdwg.mxu0
          %vm1992 = vcmp.ge.f32.partialorder %v1945, 0.0
          %vm1993 = vcmp.ge.f32.partialorder %v1948, 0.0
          %vm1994 = vcmp.ge.f32.partialorder %v1951, 0.0
          %vm1995 = vcmp.ge.f32.partialorder %v1954, 0.0
          %vm1996 = vcmp.ge.f32.partialorder %v1957, 0.0
          %vm1997 = vcmp.ge.f32.partialorder %v1960, 0.0
          %vm1998 = vcmp.ge.f32.partialorder %v1963, 0.0
          %vm1999 = vcmp.ge.f32.partialorder %v1966, 0.0
          %vm2000 = vcmp.ge.f32.partialorder %v1969, 0.0
          %vm2001 = vcmp.ge.f32.partialorder %v1972, 0.0
          %vm2002 = vcmp.ge.f32.partialorder %v1975, 0.0
          %vm2003 = vcmp.ge.f32.partialorder %v1978, 0.0
          %vm2004 = vcmp.ge.f32.partialorder %v1981, 0.0
          %vm2005 = vcmp.ge.f32.partialorder %v1984, 0.0
          %vm2006 = vcmp.ge.f32.partialorder %v1987, 0.0
          %vm2007 = vcmp.ge.f32.partialorder %v1990, 0.0
          %v2008 = vmul.f32 %v1945, 0.01
          %v2009 = vmul.f32 %v1948, 0.01
          %v2010 = vmul.f32 %v1951, 0.01
          %v2011 = vmul.f32 %v1954, 0.01
          %v2012 = vmul.f32 %v1957, 0.01
          %v2013 = vmul.f32 %v1960, 0.01
          %v2014 = vmul.f32 %v1963, 0.01
          %v2015 = vmul.f32 %v1966, 0.01
          %v2016 = vmul.f32 %v1969, 0.01
          %v2017 = vmul.f32 %v1972, 0.01
          %v2018 = vmul.f32 %v1975, 0.01
          %v2019 = vmul.f32 %v1978, 0.01
          %v2020 = vmul.f32 %v1981, 0.01
          %v2021 = vmul.f32 %v1984, 0.01
          %v2022 = vmul.f32 %v1987, 0.01
          %v2023 = vmul.f32 %v1990, 0.01
          %v2024 = vsel %vm1992, %v1945, %v2008
          %v2025 = vsel %vm1993, %v1948, %v2009
          %v2026 = vsel %vm1994, %v1951, %v2010
          %v2027 = vsel %vm1995, %v1954, %v2011
          %v2028 = vsel %vm1996, %v1957, %v2012
          %v2029 = vsel %vm1997, %v1960, %v2013
          %v2030 = vsel %vm1998, %v1963, %v2014
          %v2031 = vsel %vm1999, %v1966, %v2015
          %v2032 = vsel %vm2000, %v1969, %v2016
          %v2033 = vsel %vm2001, %v1972, %v2017
          %v2034 = vsel %vm2002, %v1975, %v2018
          %v2035 = vsel %vm2003, %v1978, %v2019
          %v2036 = vsel %vm2004, %v1981, %v2020
          %v2037 = vsel %vm2005, %v1984, %v2021
          %v2038 = vsel %vm2006, %v1987, %v2022
          %v2039 = vsel %vm2007, %v1990, %v2023
          %v2040 = vld [vmem:[#allocation16] sm:$0x7]
          %v2041 = vld [vmem:[#allocation17] sm:$0x7]
          %2043 = vset.pattern.permute.xlu0 0
          %2044 = vperm.xlu0 %2043, %v2041
          %v2045 = vpop.permute.xlu0 %2044
          %2047 = vmatpush.msra.mxu0 %v2039
          %2048 = vmatpush.msra.mxu0 %v2038
          %2049 = vmatpush.msra.mxu0 %v2037
          %2050 = vmatpush.msra.mxu0 %v2036
          %2051 = vmatpush.msra.mxu0 %v2035
          %2052 = vmatpush.msra.mxu0 %v2034
          %2053 = vmatpush.msra.mxu0 %v2033
          %2054 = vmatpush.msra.mxu0 %v2032
          %2055 = vmatpush.msra.mxu0 %v2031
          %2056 = vmatpush.msra.mxu0 %v2030
          %2057 = vmatpush.msra.mxu0 %v2029
          %2058 = vmatpush.msra.mxu0 %v2028
          %2059 = vmatpush.msra.mxu0 %v2027
          %2060 = vmatpush.msra.mxu0 %v2026
          %2061 = vmatpush.msra.mxu0 %v2025
          %2062 = vmatpush.msra.mxu0 %v2024
          %2063 = vmatmul.f32.gmra.mxu0 %v2040
          %v2064 = vpop.f32.mrf.mxu0
          %v2065 = vadd.f32 %v2045, %v2064
          %2066 = vdwg.mxu0
          %v2067 = vadd.f32 %v2065, %v1538
          %2068 = vst [vmem:[%s888] sm:$0x7] %v2067
          %v2069 = vld [vmem:[#allocation19] sm:$0xff]
          %v2070 = vld [vmem:[#allocation19 + $0x8] sm:$0xff]
          %v2071 = vld [vmem:[#allocation19 + $0x10] sm:$0xff]
          %v2072 = vld [vmem:[#allocation19 + $0x18] sm:$0xff]
          %v2073 = vld [vmem:[#allocation19 + $0x20] sm:$0xff]
          %v2074 = vld [vmem:[#allocation19 + $0x28] sm:$0xff]
          %v2075 = vld [vmem:[#allocation19 + $0x30] sm:$0xff]
          %v2076 = vld [vmem:[#allocation19 + $0x38] sm:$0xff]
          %v2077 = vld [vmem:[#allocation19 + $0x40] sm:$0xff]
          %v2078 = vld [vmem:[#allocation19 + $0x48] sm:$0xff]
          %v2079 = vld [vmem:[#allocation19 + $0x50] sm:$0xff]
          %v2080 = vld [vmem:[#allocation19 + $0x58] sm:$0xff]
          %v2081 = vld [vmem:[#allocation19 + $0x60] sm:$0xff]
          %v2082 = vld [vmem:[#allocation19 + $0x68] sm:$0xff]
          %v2083 = vld [vmem:[#allocation19 + $0x70] sm:$0xff]
          %v2084 = vld [vmem:[#allocation19 + $0x78] sm:$0xff]
          %v2085 = vld [vmem:[#allocation19 + $0x80] sm:$0xff]
          %v2086 = vld [vmem:[#allocation19 + $0x88] sm:$0xff]
          %v2087 = vld [vmem:[#allocation19 + $0x90] sm:$0xff]
          %v2088 = vld [vmem:[#allocation19 + $0x98] sm:$0xff]
          %v2089 = vld [vmem:[#allocation19 + $0xa0] sm:$0xff]
          %v2090 = vld [vmem:[#allocation19 + $0xa8] sm:$0xff]
          %v2091 = vld [vmem:[#allocation19 + $0xb0] sm:$0xff]
          %v2092 = vld [vmem:[#allocation19 + $0xb8] sm:$0xff]
          %v2093 = vld [vmem:[#allocation19 + $0xc0] sm:$0xff]
          %v2094 = vld [vmem:[#allocation19 + $0xc8] sm:$0xff]
          %v2095 = vld [vmem:[#allocation19 + $0xd0] sm:$0xff]
          %v2096 = vld [vmem:[#allocation19 + $0xd8] sm:$0xff]
          %v2097 = vld [vmem:[#allocation19 + $0xe0] sm:$0xff]
          %v2098 = vld [vmem:[#allocation19 + $0xe8] sm:$0xff]
          %v2099 = vld [vmem:[#allocation19 + $0xf0] sm:$0xff]
          %v2100 = vld [vmem:[#allocation19 + $0xf8] sm:$0xff]
          %v2101 = vld [vmem:[#allocation19 + $0x100] sm:$0xff]
          %v2102 = vld [vmem:[#allocation19 + $0x108] sm:$0xff]
          %v2103 = vld [vmem:[#allocation19 + $0x110] sm:$0xff]
          %v2104 = vld [vmem:[#allocation19 + $0x118] sm:$0xff]
          %v2105 = vld [vmem:[#allocation19 + $0x120] sm:$0xff]
          %v2106 = vld [vmem:[#allocation19 + $0x128] sm:$0xff]
          %v2107 = vld [vmem:[#allocation19 + $0x130] sm:$0xff]
          %v2108 = vld [vmem:[#allocation19 + $0x138] sm:$0xff]
          %v2109 = vld [vmem:[#allocation19 + $0x140] sm:$0xff]
          %v2110 = vld [vmem:[#allocation19 + $0x148] sm:$0xff]
          %v2111 = vld [vmem:[#allocation19 + $0x150] sm:$0xff]
          %v2112 = vld [vmem:[#allocation19 + $0x158] sm:$0xff]
          %v2113 = vld [vmem:[#allocation19 + $0x160] sm:$0xff]
          %v2114 = vld [vmem:[#allocation19 + $0x168] sm:$0xff]
          %v2115 = vld [vmem:[#allocation19 + $0x170] sm:$0xff]
          %v2116 = vld [vmem:[#allocation19 + $0x178] sm:$0xff]
          %v2117 = vld [vmem:[#allocation19 + $0x180] sm:$0xff]
          %v2118 = vld [vmem:[#allocation19 + $0x188] sm:$0xff]
          %v2119 = vld [vmem:[#allocation19 + $0x190] sm:$0xff]
          %v2120 = vld [vmem:[#allocation19 + $0x198] sm:$0xff]
          %v2121 = vld [vmem:[#allocation19 + $0x1a0] sm:$0xff]
          %v2122 = vld [vmem:[#allocation19 + $0x1a8] sm:$0xff]
          %v2123 = vld [vmem:[#allocation19 + $0x1b0] sm:$0xff]
          %v2124 = vld [vmem:[#allocation19 + $0x1b8] sm:$0xff]
          %v2125 = vld [vmem:[#allocation19 + $0x1c0] sm:$0xff]
          %v2126 = vld [vmem:[#allocation19 + $0x1c8] sm:$0xff]
          %v2127 = vld [vmem:[#allocation19 + $0x1d0] sm:$0xff]
          %v2128 = vld [vmem:[#allocation19 + $0x1d8] sm:$0xff]
          %v2129 = vld [vmem:[#allocation19 + $0x1e0] sm:$0xff]
          %v2130 = vld [vmem:[#allocation19 + $0x1e8] sm:$0xff]
          %v2131 = vld [vmem:[#allocation19 + $0x1f0] sm:$0xff]
          %v2132 = vld [vmem:[#allocation19 + $0x1f8] sm:$0xff]
          %v2133 = vld [vmem:[#allocation20] sm:$0xf]
          %v2135 = vperm.slane %v2133, 0
          %v2136 = vperm.slane %v2133, 1
          %v2137 = vperm.slane %v2133, 2
          %v2138 = vperm.slane %v2133, 3
          %2143 = vmatpush.msra.mxu0 %v2129
          %2144 = vmatpush.msra.mxu0 %v2125
          %2145 = vmatpush.msra.mxu0 %v2121
          %2146 = vmatpush.msra.mxu0 %v2117
          %2147 = vmatpush.msra.mxu0 %v2113
          %2148 = vmatpush.msra.mxu0 %v2109
          %2149 = vmatpush.msra.mxu0 %v2105
          %2150 = vmatpush.msra.mxu0 %v2101
          %2151 = vmatpush.msra.mxu0 %v2097
          %2152 = vmatpush.msra.mxu0 %v2093
          %2153 = vmatpush.msra.mxu0 %v2089
          %2154 = vmatpush.msra.mxu0 %v2085
          %2155 = vmatpush.msra.mxu0 %v2081
          %2156 = vmatpush.msra.mxu0 %v2077
          %2157 = vmatpush.msra.mxu0 %v2073
          %2158 = vmatpush.msra.mxu0 %v2069
          %2159 = vmatmul.f32.gmra.mxu0 %v1537
          %v2160 = vpop.f32.mrf.mxu0
          %v2161 = vadd.f32 %v2135, %v2160
          %2162 = vdwg.mxu0
          %2163 = vmatpush.msra.mxu0 %v2130
          %2164 = vmatpush.msra.mxu0 %v2126
          %2165 = vmatpush.msra.mxu0 %v2122
          %2166 = vmatpush.msra.mxu0 %v2118
          %2167 = vmatpush.msra.mxu0 %v2114
          %2168 = vmatpush.msra.mxu0 %v2110
          %2169 = vmatpush.msra.mxu0 %v2106
          %2170 = vmatpush.msra.mxu0 %v2102
          %2171 = vmatpush.msra.mxu0 %v2098
          %2172 = vmatpush.msra.mxu0 %v2094
          %2173 = vmatpush.msra.mxu0 %v2090
          %2174 = vmatpush.msra.mxu0 %v2086
          %2175 = vmatpush.msra.mxu0 %v2082
          %2176 = vmatpush.msra.mxu0 %v2078
          %2177 = vmatpush.msra.mxu0 %v2074
          %2178 = vmatpush.msra.mxu0 %v2070
          %2179 = vmatmul.f32.gmra.mxu0 %v1537
          %v2180 = vpop.f32.mrf.mxu0
          %v2181 = vadd.f32 %v2136, %v2180
          %2182 = vdwg.mxu0
          %2183 = vmatpush.msra.mxu0 %v2131
          %2184 = vmatpush.msra.mxu0 %v2127
          %2185 = vmatpush.msra.mxu0 %v2123
          %2186 = vmatpush.msra.mxu0 %v2119
          %2187 = vmatpush.msra.mxu0 %v2115
          %2188 = vmatpush.msra.mxu0 %v2111
          %2189 = vmatpush.msra.mxu0 %v2107
          %2190 = vmatpush.msra.mxu0 %v2103
          %2191 = vmatpush.msra.mxu0 %v2099
          %2192 = vmatpush.msra.mxu0 %v2095
          %2193 = vmatpush.msra.mxu0 %v2091
          %2194 = vmatpush.msra.mxu0 %v2087
          %2195 = vmatpush.msra.mxu0 %v2083
          %2196 = vmatpush.msra.mxu0 %v2079
          %2197 = vmatpush.msra.mxu0 %v2075
          %2198 = vmatpush.msra.mxu0 %v2071
          %2199 = vmatmul.f32.gmra.mxu0 %v1537
          %v2200 = vpop.f32.mrf.mxu0
          %v2201 = vadd.f32 %v2137, %v2200
          %2202 = vdwg.mxu0
          %2203 = vmatpush.msra.mxu0 %v2132
          %2204 = vmatpush.msra.mxu0 %v2128
          %2205 = vmatpush.msra.mxu0 %v2124
          %2206 = vmatpush.msra.mxu0 %v2120
          %2207 = vmatpush.msra.mxu0 %v2116
          %2208 = vmatpush.msra.mxu0 %v2112
          %2209 = vmatpush.msra.mxu0 %v2108
          %2210 = vmatpush.msra.mxu0 %v2104
          %2211 = vmatpush.msra.mxu0 %v2100
          %2212 = vmatpush.msra.mxu0 %v2096
          %2213 = vmatpush.msra.mxu0 %v2092
          %2214 = vmatpush.msra.mxu0 %v2088
          %2215 = vmatpush.msra.mxu0 %v2084
          %2216 = vmatpush.msra.mxu0 %v2080
          %2217 = vmatpush.msra.mxu0 %v2076
          %2218 = vmatpush.msra.mxu0 %v2072
          %2219 = vmatmul.f32.gmra.mxu0 %v1537
          %v2220 = vpop.f32.mrf.mxu0
          %v2221 = vadd.f32 %v2138, %v2220
          %2222 = vdwg.mxu0
          %vm2223 = vcmp.ge.f32.partialorder %v2161, 0.0
          %vm2224 = vcmp.ge.f32.partialorder %v2181, 0.0
          %vm2225 = vcmp.ge.f32.partialorder %v2201, 0.0
          %vm2226 = vcmp.ge.f32.partialorder %v2221, 0.0
          %v2227 = vmul.f32 %v2161, 0.01
          %v2228 = vmul.f32 %v2181, 0.01
          %v2229 = vmul.f32 %v2201, 0.01
          %v2230 = vmul.f32 %v2221, 0.01
          %v2231 = vsel %vm2223, %v2161, %v2227
          %v2232 = vsel %vm2224, %v2181, %v2228
          %v2233 = vsel %vm2225, %v2201, %v2229
          %v2234 = vsel %vm2226, %v2221, %v2230
          %v2235 = vld [vmem:[#allocation22] sm:$0xff]
          %v2236 = vld [vmem:[#allocation22 + $0x8] sm:$0xff]
          %v2237 = vld [vmem:[#allocation22 + $0x10] sm:$0xff]
          %v2238 = vld [vmem:[#allocation22 + $0x18] sm:$0xff]
          %v2239 = vld [vmem:[#allocation22 + $0x20] sm:$0xff]
          %v2240 = vld [vmem:[#allocation22 + $0x28] sm:$0xff]
          %v2241 = vld [vmem:[#allocation22 + $0x30] sm:$0xff]
          %v2242 = vld [vmem:[#allocation22 + $0x38] sm:$0xff]
          %v2243 = vld [vmem:[#allocation22 + $0x40] sm:$0xff]
          %v2244 = vld [vmem:[#allocation22 + $0x48] sm:$0xff]
          %v2245 = vld [vmem:[#allocation22 + $0x50] sm:$0xff]
          %v2246 = vld [vmem:[#allocation22 + $0x58] sm:$0xff]
          %v2247 = vld [vmem:[#allocation22 + $0x60] sm:$0xff]
          %v2248 = vld [vmem:[#allocation22 + $0x68] sm:$0xff]
          %v2249 = vld [vmem:[#allocation22 + $0x70] sm:$0xff]
          %v2250 = vld [vmem:[#allocation22 + $0x78] sm:$0xff]
          %v2251 = vld [vmem:[#allocation22 + $0x80] sm:$0xff]
          %v2252 = vld [vmem:[#allocation22 + $0x88] sm:$0xff]
          %v2253 = vld [vmem:[#allocation22 + $0x90] sm:$0xff]
          %v2254 = vld [vmem:[#allocation22 + $0x98] sm:$0xff]
          %v2255 = vld [vmem:[#allocation22 + $0xa0] sm:$0xff]
          %v2256 = vld [vmem:[#allocation22 + $0xa8] sm:$0xff]
          %v2257 = vld [vmem:[#allocation22 + $0xb0] sm:$0xff]
          %v2258 = vld [vmem:[#allocation22 + $0xb8] sm:$0xff]
          %v2259 = vld [vmem:[#allocation22 + $0xc0] sm:$0xff]
          %v2260 = vld [vmem:[#allocation22 + $0xc8] sm:$0xff]
          %v2261 = vld [vmem:[#allocation22 + $0xd0] sm:$0xff]
          %v2262 = vld [vmem:[#allocation22 + $0xd8] sm:$0xff]
          %v2263 = vld [vmem:[#allocation22 + $0xe0] sm:$0xff]
          %v2264 = vld [vmem:[#allocation22 + $0xe8] sm:$0xff]
          %v2265 = vld [vmem:[#allocation22 + $0xf0] sm:$0xff]
          %v2266 = vld [vmem:[#allocation22 + $0xf8] sm:$0xff]
          %v2267 = vld [vmem:[#allocation22 + $0x100] sm:$0xff]
          %v2268 = vld [vmem:[#allocation22 + $0x108] sm:$0xff]
          %v2269 = vld [vmem:[#allocation22 + $0x110] sm:$0xff]
          %v2270 = vld [vmem:[#allocation22 + $0x118] sm:$0xff]
          %v2271 = vld [vmem:[#allocation22 + $0x120] sm:$0xff]
          %v2272 = vld [vmem:[#allocation22 + $0x128] sm:$0xff]
          %v2273 = vld [vmem:[#allocation22 + $0x130] sm:$0xff]
          %v2274 = vld [vmem:[#allocation22 + $0x138] sm:$0xff]
          %v2275 = vld [vmem:[#allocation22 + $0x140] sm:$0xff]
          %v2276 = vld [vmem:[#allocation22 + $0x148] sm:$0xff]
          %v2277 = vld [vmem:[#allocation22 + $0x150] sm:$0xff]
          %v2278 = vld [vmem:[#allocation22 + $0x158] sm:$0xff]
          %v2279 = vld [vmem:[#allocation22 + $0x160] sm:$0xff]
          %v2280 = vld [vmem:[#allocation22 + $0x168] sm:$0xff]
          %v2281 = vld [vmem:[#allocation22 + $0x170] sm:$0xff]
          %v2282 = vld [vmem:[#allocation22 + $0x178] sm:$0xff]
          %v2283 = vld [vmem:[#allocation22 + $0x180] sm:$0xff]
          %v2284 = vld [vmem:[#allocation22 + $0x188] sm:$0xff]
          %v2285 = vld [vmem:[#allocation22 + $0x190] sm:$0xff]
          %v2286 = vld [vmem:[#allocation22 + $0x198] sm:$0xff]
          %v2287 = vld [vmem:[#allocation22 + $0x1a0] sm:$0xff]
          %v2288 = vld [vmem:[#allocation22 + $0x1a8] sm:$0xff]
          %v2289 = vld [vmem:[#allocation22 + $0x1b0] sm:$0xff]
          %v2290 = vld [vmem:[#allocation22 + $0x1b8] sm:$0xff]
          %v2291 = vld [vmem:[#allocation22 + $0x1c0] sm:$0xff]
          %v2292 = vld [vmem:[#allocation22 + $0x1c8] sm:$0xff]
          %v2293 = vld [vmem:[#allocation22 + $0x1d0] sm:$0xff]
          %v2294 = vld [vmem:[#allocation22 + $0x1d8] sm:$0xff]
          %v2295 = vld [vmem:[#allocation22 + $0x1e0] sm:$0xff]
          %v2296 = vld [vmem:[#allocation22 + $0x1e8] sm:$0xff]
          %v2297 = vld [vmem:[#allocation22 + $0x1f0] sm:$0xff]
          %v2298 = vld [vmem:[#allocation22 + $0x1f8] sm:$0xff]
          %v2299 = vld [vmem:[#allocation22 + $0x200] sm:$0xff]
          %v2300 = vld [vmem:[#allocation22 + $0x208] sm:$0xff]
          %v2301 = vld [vmem:[#allocation22 + $0x210] sm:$0xff]
          %v2302 = vld [vmem:[#allocation22 + $0x218] sm:$0xff]
          %v2303 = vld [vmem:[#allocation22 + $0x220] sm:$0xff]
          %v2304 = vld [vmem:[#allocation22 + $0x228] sm:$0xff]
          %v2305 = vld [vmem:[#allocation22 + $0x230] sm:$0xff]
          %v2306 = vld [vmem:[#allocation22 + $0x238] sm:$0xff]
          %v2307 = vld [vmem:[#allocation22 + $0x240] sm:$0xff]
          %v2308 = vld [vmem:[#allocation22 + $0x248] sm:$0xff]
          %v2309 = vld [vmem:[#allocation22 + $0x250] sm:$0xff]
          %v2310 = vld [vmem:[#allocation22 + $0x258] sm:$0xff]
          %v2311 = vld [vmem:[#allocation22 + $0x260] sm:$0xff]
          %v2312 = vld [vmem:[#allocation22 + $0x268] sm:$0xff]
          %v2313 = vld [vmem:[#allocation22 + $0x270] sm:$0xff]
          %v2314 = vld [vmem:[#allocation22 + $0x278] sm:$0xff]
          %v2315 = vld [vmem:[#allocation22 + $0x280] sm:$0xff]
          %v2316 = vld [vmem:[#allocation22 + $0x288] sm:$0xff]
          %v2317 = vld [vmem:[#allocation22 + $0x290] sm:$0xff]
          %v2318 = vld [vmem:[#allocation22 + $0x298] sm:$0xff]
          %v2319 = vld [vmem:[#allocation22 + $0x2a0] sm:$0xff]
          %v2320 = vld [vmem:[#allocation22 + $0x2a8] sm:$0xff]
          %v2321 = vld [vmem:[#allocation22 + $0x2b0] sm:$0xff]
          %v2322 = vld [vmem:[#allocation22 + $0x2b8] sm:$0xff]
          %v2323 = vld [vmem:[#allocation22 + $0x2c0] sm:$0xff]
          %v2324 = vld [vmem:[#allocation22 + $0x2c8] sm:$0xff]
          %v2325 = vld [vmem:[#allocation22 + $0x2d0] sm:$0xff]
          %v2326 = vld [vmem:[#allocation22 + $0x2d8] sm:$0xff]
          %v2327 = vld [vmem:[#allocation22 + $0x2e0] sm:$0xff]
          %v2328 = vld [vmem:[#allocation22 + $0x2e8] sm:$0xff]
          %v2329 = vld [vmem:[#allocation22 + $0x2f0] sm:$0xff]
          %v2330 = vld [vmem:[#allocation22 + $0x2f8] sm:$0xff]
          %v2331 = vld [vmem:[#allocation22 + $0x300] sm:$0xff]
          %v2332 = vld [vmem:[#allocation22 + $0x308] sm:$0xff]
          %v2333 = vld [vmem:[#allocation22 + $0x310] sm:$0xff]
          %v2334 = vld [vmem:[#allocation22 + $0x318] sm:$0xff]
          %v2335 = vld [vmem:[#allocation22 + $0x320] sm:$0xff]
          %v2336 = vld [vmem:[#allocation22 + $0x328] sm:$0xff]
          %v2337 = vld [vmem:[#allocation22 + $0x330] sm:$0xff]
          %v2338 = vld [vmem:[#allocation22 + $0x338] sm:$0xff]
          %v2339 = vld [vmem:[#allocation22 + $0x340] sm:$0xff]
          %v2340 = vld [vmem:[#allocation22 + $0x348] sm:$0xff]
          %v2341 = vld [vmem:[#allocation22 + $0x350] sm:$0xff]
          %v2342 = vld [vmem:[#allocation22 + $0x358] sm:$0xff]
          %v2343 = vld [vmem:[#allocation22 + $0x360] sm:$0xff]
          %v2344 = vld [vmem:[#allocation22 + $0x368] sm:$0xff]
          %v2345 = vld [vmem:[#allocation22 + $0x370] sm:$0xff]
          %v2346 = vld [vmem:[#allocation22 + $0x378] sm:$0xff]
          %v2347 = vld [vmem:[#allocation22 + $0x380] sm:$0xff]
          %v2348 = vld [vmem:[#allocation22 + $0x388] sm:$0xff]
          %v2349 = vld [vmem:[#allocation22 + $0x390] sm:$0xff]
          %v2350 = vld [vmem:[#allocation22 + $0x398] sm:$0xff]
          %v2351 = vld [vmem:[#allocation22 + $0x3a0] sm:$0xff]
          %v2352 = vld [vmem:[#allocation22 + $0x3a8] sm:$0xff]
          %v2353 = vld [vmem:[#allocation22 + $0x3b0] sm:$0xff]
          %v2354 = vld [vmem:[#allocation22 + $0x3b8] sm:$0xff]
          %v2355 = vld [vmem:[#allocation22 + $0x3c0] sm:$0xff]
          %v2356 = vld [vmem:[#allocation22 + $0x3c8] sm:$0xff]
          %v2357 = vld [vmem:[#allocation22 + $0x3d0] sm:$0xff]
          %v2358 = vld [vmem:[#allocation22 + $0x3d8] sm:$0xff]
          %v2359 = vld [vmem:[#allocation22 + $0x3e0] sm:$0xff]
          %v2360 = vld [vmem:[#allocation22 + $0x3e8] sm:$0xff]
          %v2361 = vld [vmem:[#allocation22 + $0x3f0] sm:$0xff]
          %v2362 = vld [vmem:[#allocation22 + $0x3f8] sm:$0xff]
          %v2363 = vld [vmem:[#allocation22 + $0x400] sm:$0xff]
          %v2364 = vld [vmem:[#allocation22 + $0x408] sm:$0xff]
          %v2365 = vld [vmem:[#allocation22 + $0x410] sm:$0xff]
          %v2366 = vld [vmem:[#allocation22 + $0x418] sm:$0xff]
          %v2367 = vld [vmem:[#allocation22 + $0x420] sm:$0xff]
          %v2368 = vld [vmem:[#allocation22 + $0x428] sm:$0xff]
          %v2369 = vld [vmem:[#allocation22 + $0x430] sm:$0xff]
          %v2370 = vld [vmem:[#allocation22 + $0x438] sm:$0xff]
          %v2371 = vld [vmem:[#allocation22 + $0x440] sm:$0xff]
          %v2372 = vld [vmem:[#allocation22 + $0x448] sm:$0xff]
          %v2373 = vld [vmem:[#allocation22 + $0x450] sm:$0xff]
          %v2374 = vld [vmem:[#allocation22 + $0x458] sm:$0xff]
          %v2375 = vld [vmem:[#allocation22 + $0x460] sm:$0xff]
          %v2376 = vld [vmem:[#allocation22 + $0x468] sm:$0xff]
          %v2377 = vld [vmem:[#allocation22 + $0x470] sm:$0xff]
          %v2378 = vld [vmem:[#allocation22 + $0x478] sm:$0xff]
          %v2379 = vld [vmem:[#allocation22 + $0x480] sm:$0xff]
          %v2380 = vld [vmem:[#allocation22 + $0x488] sm:$0xff]
          %v2381 = vld [vmem:[#allocation22 + $0x490] sm:$0xff]
          %v2382 = vld [vmem:[#allocation22 + $0x498] sm:$0xff]
          %v2383 = vld [vmem:[#allocation22 + $0x4a0] sm:$0xff]
          %v2384 = vld [vmem:[#allocation22 + $0x4a8] sm:$0xff]
          %v2385 = vld [vmem:[#allocation22 + $0x4b0] sm:$0xff]
          %v2386 = vld [vmem:[#allocation22 + $0x4b8] sm:$0xff]
          %v2387 = vld [vmem:[#allocation22 + $0x4c0] sm:$0xff]
          %v2388 = vld [vmem:[#allocation22 + $0x4c8] sm:$0xff]
          %v2389 = vld [vmem:[#allocation22 + $0x4d0] sm:$0xff]
          %v2390 = vld [vmem:[#allocation22 + $0x4d8] sm:$0xff]
          %v2391 = vld [vmem:[#allocation22 + $0x4e0] sm:$0xff]
          %v2392 = vld [vmem:[#allocation22 + $0x4e8] sm:$0xff]
          %v2393 = vld [vmem:[#allocation22 + $0x4f0] sm:$0xff]
          %v2394 = vld [vmem:[#allocation22 + $0x4f8] sm:$0xff]
          %v2395 = vld [vmem:[#allocation22 + $0x500] sm:$0xff]
          %v2396 = vld [vmem:[#allocation22 + $0x508] sm:$0xff]
          %v2397 = vld [vmem:[#allocation22 + $0x510] sm:$0xff]
          %v2398 = vld [vmem:[#allocation22 + $0x518] sm:$0xff]
          %v2399 = vld [vmem:[#allocation22 + $0x520] sm:$0xff]
          %v2400 = vld [vmem:[#allocation22 + $0x528] sm:$0xff]
          %v2401 = vld [vmem:[#allocation22 + $0x530] sm:$0xff]
          %v2402 = vld [vmem:[#allocation22 + $0x538] sm:$0xff]
          %v2403 = vld [vmem:[#allocation22 + $0x540] sm:$0xff]
          %v2404 = vld [vmem:[#allocation22 + $0x548] sm:$0xff]
          %v2405 = vld [vmem:[#allocation22 + $0x550] sm:$0xff]
          %v2406 = vld [vmem:[#allocation22 + $0x558] sm:$0xff]
          %v2407 = vld [vmem:[#allocation22 + $0x560] sm:$0xff]
          %v2408 = vld [vmem:[#allocation22 + $0x568] sm:$0xff]
          %v2409 = vld [vmem:[#allocation22 + $0x570] sm:$0xff]
          %v2410 = vld [vmem:[#allocation22 + $0x578] sm:$0xff]
          %v2411 = vld [vmem:[#allocation22 + $0x580] sm:$0xff]
          %v2412 = vld [vmem:[#allocation22 + $0x588] sm:$0xff]
          %v2413 = vld [vmem:[#allocation22 + $0x590] sm:$0xff]
          %v2414 = vld [vmem:[#allocation22 + $0x598] sm:$0xff]
          %v2415 = vld [vmem:[#allocation22 + $0x5a0] sm:$0xff]
          %v2416 = vld [vmem:[#allocation22 + $0x5a8] sm:$0xff]
          %v2417 = vld [vmem:[#allocation22 + $0x5b0] sm:$0xff]
          %v2418 = vld [vmem:[#allocation22 + $0x5b8] sm:$0xff]
          %v2419 = vld [vmem:[#allocation22 + $0x5c0] sm:$0xff]
          %v2420 = vld [vmem:[#allocation22 + $0x5c8] sm:$0xff]
          %v2421 = vld [vmem:[#allocation22 + $0x5d0] sm:$0xff]
          %v2422 = vld [vmem:[#allocation22 + $0x5d8] sm:$0xff]
          %v2423 = vld [vmem:[#allocation22 + $0x5e0] sm:$0xff]
          %v2424 = vld [vmem:[#allocation22 + $0x5e8] sm:$0xff]
          %v2425 = vld [vmem:[#allocation22 + $0x5f0] sm:$0xff]
          %v2426 = vld [vmem:[#allocation22 + $0x5f8] sm:$0xff]
          %v2427 = vld [vmem:[#allocation22 + $0x600] sm:$0xff]
          %v2428 = vld [vmem:[#allocation22 + $0x608] sm:$0xff]
          %v2429 = vld [vmem:[#allocation22 + $0x610] sm:$0xff]
          %v2430 = vld [vmem:[#allocation22 + $0x618] sm:$0xff]
          %v2431 = vld [vmem:[#allocation22 + $0x620] sm:$0xff]
          %v2432 = vld [vmem:[#allocation22 + $0x628] sm:$0xff]
          %v2433 = vld [vmem:[#allocation22 + $0x630] sm:$0xff]
          %v2434 = vld [vmem:[#allocation22 + $0x638] sm:$0xff]
          %v2435 = vld [vmem:[#allocation22 + $0x640] sm:$0xff]
          %v2436 = vld [vmem:[#allocation22 + $0x648] sm:$0xff]
          %v2437 = vld [vmem:[#allocation22 + $0x650] sm:$0xff]
          %v2438 = vld [vmem:[#allocation22 + $0x658] sm:$0xff]
          %v2439 = vld [vmem:[#allocation22 + $0x660] sm:$0xff]
          %v2440 = vld [vmem:[#allocation22 + $0x668] sm:$0xff]
          %v2441 = vld [vmem:[#allocation22 + $0x670] sm:$0xff]
          %v2442 = vld [vmem:[#allocation22 + $0x678] sm:$0xff]
          %v2443 = vld [vmem:[#allocation22 + $0x680] sm:$0xff]
          %v2444 = vld [vmem:[#allocation22 + $0x688] sm:$0xff]
          %v2445 = vld [vmem:[#allocation22 + $0x690] sm:$0xff]
          %v2446 = vld [vmem:[#allocation22 + $0x698] sm:$0xff]
          %v2447 = vld [vmem:[#allocation22 + $0x6a0] sm:$0xff]
          %v2448 = vld [vmem:[#allocation22 + $0x6a8] sm:$0xff]
          %v2449 = vld [vmem:[#allocation22 + $0x6b0] sm:$0xff]
          %v2450 = vld [vmem:[#allocation22 + $0x6b8] sm:$0xff]
          %v2451 = vld [vmem:[#allocation22 + $0x6c0] sm:$0xff]
          %v2452 = vld [vmem:[#allocation22 + $0x6c8] sm:$0xff]
          %v2453 = vld [vmem:[#allocation22 + $0x6d0] sm:$0xff]
          %v2454 = vld [vmem:[#allocation22 + $0x6d8] sm:$0xff]
          %v2455 = vld [vmem:[#allocation22 + $0x6e0] sm:$0xff]
          %v2456 = vld [vmem:[#allocation22 + $0x6e8] sm:$0xff]
          %v2457 = vld [vmem:[#allocation22 + $0x6f0] sm:$0xff]
          %v2458 = vld [vmem:[#allocation22 + $0x6f8] sm:$0xff]
          %v2459 = vld [vmem:[#allocation22 + $0x700] sm:$0xff]
          %v2460 = vld [vmem:[#allocation22 + $0x708] sm:$0xff]
          %v2461 = vld [vmem:[#allocation22 + $0x710] sm:$0xff]
          %v2462 = vld [vmem:[#allocation22 + $0x718] sm:$0xff]
          %v2463 = vld [vmem:[#allocation22 + $0x720] sm:$0xff]
          %v2464 = vld [vmem:[#allocation22 + $0x728] sm:$0xff]
          %v2465 = vld [vmem:[#allocation22 + $0x730] sm:$0xff]
          %v2466 = vld [vmem:[#allocation22 + $0x738] sm:$0xff]
          %v2467 = vld [vmem:[#allocation22 + $0x740] sm:$0xff]
          %v2468 = vld [vmem:[#allocation22 + $0x748] sm:$0xff]
          %v2469 = vld [vmem:[#allocation22 + $0x750] sm:$0xff]
          %v2470 = vld [vmem:[#allocation22 + $0x758] sm:$0xff]
          %v2471 = vld [vmem:[#allocation22 + $0x760] sm:$0xff]
          %v2472 = vld [vmem:[#allocation22 + $0x768] sm:$0xff]
          %v2473 = vld [vmem:[#allocation22 + $0x770] sm:$0xff]
          %v2474 = vld [vmem:[#allocation22 + $0x778] sm:$0xff]
          %v2475 = vld [vmem:[#allocation22 + $0x780] sm:$0xff]
          %v2476 = vld [vmem:[#allocation22 + $0x788] sm:$0xff]
          %v2477 = vld [vmem:[#allocation22 + $0x790] sm:$0xff]
          %v2478 = vld [vmem:[#allocation22 + $0x798] sm:$0xff]
          %v2479 = vld [vmem:[#allocation22 + $0x7a0] sm:$0xff]
          %v2480 = vld [vmem:[#allocation22 + $0x7a8] sm:$0xff]
          %v2481 = vld [vmem:[#allocation22 + $0x7b0] sm:$0xff]
          %v2482 = vld [vmem:[#allocation22 + $0x7b8] sm:$0xff]
          %v2483 = vld [vmem:[#allocation22 + $0x7c0] sm:$0xff]
          %v2484 = vld [vmem:[#allocation22 + $0x7c8] sm:$0xff]
          %v2485 = vld [vmem:[#allocation22 + $0x7d0] sm:$0xff]
          %v2486 = vld [vmem:[#allocation22 + $0x7d8] sm:$0xff]
          %v2487 = vld [vmem:[#allocation22 + $0x7e0] sm:$0xff]
          %v2488 = vld [vmem:[#allocation22 + $0x7e8] sm:$0xff]
          %v2489 = vld [vmem:[#allocation22 + $0x7f0] sm:$0xff]
          %v2490 = vld [vmem:[#allocation22 + $0x7f8] sm:$0xff]
          %v2491 = vld [vmem:[#allocation22 + $0x800] sm:$0xff]
          %v2492 = vld [vmem:[#allocation22 + $0x808] sm:$0xff]
          %v2493 = vld [vmem:[#allocation22 + $0x810] sm:$0xff]
          %v2494 = vld [vmem:[#allocation22 + $0x818] sm:$0xff]
          %v2495 = vld [vmem:[#allocation22 + $0x820] sm:$0xff]
          %v2496 = vld [vmem:[#allocation22 + $0x828] sm:$0xff]
          %v2497 = vld [vmem:[#allocation22 + $0x830] sm:$0xff]
          %v2498 = vld [vmem:[#allocation22 + $0x838] sm:$0xff]
          %v2499 = vld [vmem:[#allocation22 + $0x840] sm:$0xff]
          %v2500 = vld [vmem:[#allocation22 + $0x848] sm:$0xff]
          %v2501 = vld [vmem:[#allocation22 + $0x850] sm:$0xff]
          %v2502 = vld [vmem:[#allocation22 + $0x858] sm:$0xff]
          %v2503 = vld [vmem:[#allocation22 + $0x860] sm:$0xff]
          %v2504 = vld [vmem:[#allocation22 + $0x868] sm:$0xff]
          %v2505 = vld [vmem:[#allocation22 + $0x870] sm:$0xff]
          %v2506 = vld [vmem:[#allocation22 + $0x878] sm:$0xff]
          %v2507 = vld [vmem:[#allocation22 + $0x880] sm:$0xff]
          %v2508 = vld [vmem:[#allocation22 + $0x888] sm:$0xff]
          %v2509 = vld [vmem:[#allocation22 + $0x890] sm:$0xff]
          %v2510 = vld [vmem:[#allocation22 + $0x898] sm:$0xff]
          %v2511 = vld [vmem:[#allocation22 + $0x8a0] sm:$0xff]
          %v2512 = vld [vmem:[#allocation22 + $0x8a8] sm:$0xff]
          %v2513 = vld [vmem:[#allocation22 + $0x8b0] sm:$0xff]
          %v2514 = vld [vmem:[#allocation22 + $0x8b8] sm:$0xff]
          %v2515 = vld [vmem:[#allocation22 + $0x8c0] sm:$0xff]
          %v2516 = vld [vmem:[#allocation22 + $0x8c8] sm:$0xff]
          %v2517 = vld [vmem:[#allocation22 + $0x8d0] sm:$0xff]
          %v2518 = vld [vmem:[#allocation22 + $0x8d8] sm:$0xff]
          %v2519 = vld [vmem:[#allocation22 + $0x8e0] sm:$0xff]
          %v2520 = vld [vmem:[#allocation22 + $0x8e8] sm:$0xff]
          %v2521 = vld [vmem:[#allocation22 + $0x8f0] sm:$0xff]
          %v2522 = vld [vmem:[#allocation22 + $0x8f8] sm:$0xff]
          %v2523 = vld [vmem:[#allocation22 + $0x900] sm:$0xff]
          %v2524 = vld [vmem:[#allocation22 + $0x908] sm:$0xff]
          %v2525 = vld [vmem:[#allocation22 + $0x910] sm:$0xff]
          %v2526 = vld [vmem:[#allocation22 + $0x918] sm:$0xff]
          %v2527 = vld [vmem:[#allocation22 + $0x920] sm:$0xff]
          %v2528 = vld [vmem:[#allocation22 + $0x928] sm:$0xff]
          %v2529 = vld [vmem:[#allocation22 + $0x930] sm:$0xff]
          %v2530 = vld [vmem:[#allocation22 + $0x938] sm:$0xff]
          %v2531 = vld [vmem:[#allocation22 + $0x940] sm:$0xff]
          %v2532 = vld [vmem:[#allocation22 + $0x948] sm:$0xff]
          %v2533 = vld [vmem:[#allocation22 + $0x950] sm:$0xff]
          %v2534 = vld [vmem:[#allocation22 + $0x958] sm:$0xff]
          %v2535 = vld [vmem:[#allocation22 + $0x960] sm:$0xff]
          %v2536 = vld [vmem:[#allocation22 + $0x968] sm:$0xff]
          %v2537 = vld [vmem:[#allocation22 + $0x970] sm:$0xff]
          %v2538 = vld [vmem:[#allocation22 + $0x978] sm:$0xff]
          %v2539 = vld [vmem:[#allocation22 + $0x980] sm:$0xff]
          %v2540 = vld [vmem:[#allocation22 + $0x988] sm:$0xff]
          %v2541 = vld [vmem:[#allocation22 + $0x990] sm:$0xff]
          %v2542 = vld [vmem:[#allocation22 + $0x998] sm:$0xff]
          %v2543 = vld [vmem:[#allocation22 + $0x9a0] sm:$0xff]
          %v2544 = vld [vmem:[#allocation22 + $0x9a8] sm:$0xff]
          %v2545 = vld [vmem:[#allocation22 + $0x9b0] sm:$0xff]
          %v2546 = vld [vmem:[#allocation22 + $0x9b8] sm:$0xff]
          %v2547 = vld [vmem:[#allocation22 + $0x9c0] sm:$0xff]
          %v2548 = vld [vmem:[#allocation22 + $0x9c8] sm:$0xff]
          %v2549 = vld [vmem:[#allocation22 + $0x9d0] sm:$0xff]
          %v2550 = vld [vmem:[#allocation22 + $0x9d8] sm:$0xff]
          %v2551 = vld [vmem:[#allocation22 + $0x9e0] sm:$0xff]
          %v2552 = vld [vmem:[#allocation22 + $0x9e8] sm:$0xff]
          %v2553 = vld [vmem:[#allocation22 + $0x9f0] sm:$0xff]
          %v2554 = vld [vmem:[#allocation22 + $0x9f8] sm:$0xff]
          %v2555 = vld [vmem:[#allocation22 + $0xa00] sm:$0xff]
          %v2556 = vld [vmem:[#allocation22 + $0xa08] sm:$0xff]
          %v2557 = vld [vmem:[#allocation22 + $0xa10] sm:$0xff]
          %v2558 = vld [vmem:[#allocation22 + $0xa18] sm:$0xff]
          %v2559 = vld [vmem:[#allocation22 + $0xa20] sm:$0xff]
          %v2560 = vld [vmem:[#allocation22 + $0xa28] sm:$0xff]
          %v2561 = vld [vmem:[#allocation22 + $0xa30] sm:$0xff]
          %v2562 = vld [vmem:[#allocation22 + $0xa38] sm:$0xff]
          %v2563 = vld [vmem:[#allocation22 + $0xa40] sm:$0xff]
          %v2564 = vld [vmem:[#allocation22 + $0xa48] sm:$0xff]
          %v2565 = vld [vmem:[#allocation22 + $0xa50] sm:$0xff]
          %v2566 = vld [vmem:[#allocation22 + $0xa58] sm:$0xff]
          %v2567 = vld [vmem:[#allocation22 + $0xa60] sm:$0xff]
          %v2568 = vld [vmem:[#allocation22 + $0xa68] sm:$0xff]
          %v2569 = vld [vmem:[#allocation22 + $0xa70] sm:$0xff]
          %v2570 = vld [vmem:[#allocation22 + $0xa78] sm:$0xff]
          %v2571 = vld [vmem:[#allocation22 + $0xa80] sm:$0xff]
          %v2572 = vld [vmem:[#allocation22 + $0xa88] sm:$0xff]
          %v2573 = vld [vmem:[#allocation22 + $0xa90] sm:$0xff]
          %v2574 = vld [vmem:[#allocation22 + $0xa98] sm:$0xff]
          %v2575 = vld [vmem:[#allocation22 + $0xaa0] sm:$0xff]
          %v2576 = vld [vmem:[#allocation22 + $0xaa8] sm:$0xff]
          %v2577 = vld [vmem:[#allocation22 + $0xab0] sm:$0xff]
          %v2578 = vld [vmem:[#allocation22 + $0xab8] sm:$0xff]
          %v2579 = vld [vmem:[#allocation22 + $0xac0] sm:$0xff]
          %v2580 = vld [vmem:[#allocation22 + $0xac8] sm:$0xff]
          %v2581 = vld [vmem:[#allocation22 + $0xad0] sm:$0xff]
          %v2582 = vld [vmem:[#allocation22 + $0xad8] sm:$0xff]
          %v2583 = vld [vmem:[#allocation22 + $0xae0] sm:$0xff]
          %v2584 = vld [vmem:[#allocation22 + $0xae8] sm:$0xff]
          %v2585 = vld [vmem:[#allocation22 + $0xaf0] sm:$0xff]
          %v2586 = vld [vmem:[#allocation22 + $0xaf8] sm:$0xff]
          %v2587 = vld [vmem:[#allocation22 + $0xb00] sm:$0xff]
          %v2588 = vld [vmem:[#allocation22 + $0xb08] sm:$0xff]
          %v2589 = vld [vmem:[#allocation22 + $0xb10] sm:$0xff]
          %v2590 = vld [vmem:[#allocation22 + $0xb18] sm:$0xff]
          %v2591 = vld [vmem:[#allocation22 + $0xb20] sm:$0xff]
          %v2592 = vld [vmem:[#allocation22 + $0xb28] sm:$0xff]
          %v2593 = vld [vmem:[#allocation22 + $0xb30] sm:$0xff]
          %v2594 = vld [vmem:[#allocation22 + $0xb38] sm:$0xff]
          %v2595 = vld [vmem:[#allocation22 + $0xb40] sm:$0xff]
          %v2596 = vld [vmem:[#allocation22 + $0xb48] sm:$0xff]
          %v2597 = vld [vmem:[#allocation22 + $0xb50] sm:$0xff]
          %v2598 = vld [vmem:[#allocation22 + $0xb58] sm:$0xff]
          %v2599 = vld [vmem:[#allocation22 + $0xb60] sm:$0xff]
          %v2600 = vld [vmem:[#allocation22 + $0xb68] sm:$0xff]
          %v2601 = vld [vmem:[#allocation22 + $0xb70] sm:$0xff]
          %v2602 = vld [vmem:[#allocation22 + $0xb78] sm:$0xff]
          %v2603 = vld [vmem:[#allocation22 + $0xb80] sm:$0xff]
          %v2604 = vld [vmem:[#allocation22 + $0xb88] sm:$0xff]
          %v2605 = vld [vmem:[#allocation22 + $0xb90] sm:$0xff]
          %v2606 = vld [vmem:[#allocation22 + $0xb98] sm:$0xff]
          %v2607 = vld [vmem:[#allocation22 + $0xba0] sm:$0xff]
          %v2608 = vld [vmem:[#allocation22 + $0xba8] sm:$0xff]
          %v2609 = vld [vmem:[#allocation22 + $0xbb0] sm:$0xff]
          %v2610 = vld [vmem:[#allocation22 + $0xbb8] sm:$0xff]
          %v2611 = vld [vmem:[#allocation22 + $0xbc0] sm:$0xff]
          %v2612 = vld [vmem:[#allocation22 + $0xbc8] sm:$0xff]
          %v2613 = vld [vmem:[#allocation22 + $0xbd0] sm:$0xff]
          %v2614 = vld [vmem:[#allocation22 + $0xbd8] sm:$0xff]
          %v2615 = vld [vmem:[#allocation22 + $0xbe0] sm:$0xff]
          %v2616 = vld [vmem:[#allocation22 + $0xbe8] sm:$0xff]
          %v2617 = vld [vmem:[#allocation22 + $0xbf0] sm:$0xff]
          %v2618 = vld [vmem:[#allocation22 + $0xbf8] sm:$0xff]
          %v2619 = vld [vmem:[#allocation22 + $0xc00] sm:$0xff]
          %v2620 = vld [vmem:[#allocation22 + $0xc08] sm:$0xff]
          %v2621 = vld [vmem:[#allocation22 + $0xc10] sm:$0xff]
          %v2622 = vld [vmem:[#allocation22 + $0xc18] sm:$0xff]
          %v2623 = vld [vmem:[#allocation22 + $0xc20] sm:$0xff]
          %v2624 = vld [vmem:[#allocation22 + $0xc28] sm:$0xff]
          %v2625 = vld [vmem:[#allocation22 + $0xc30] sm:$0xff]
          %v2626 = vld [vmem:[#allocation22 + $0xc38] sm:$0xff]
          %v2627 = vld [vmem:[#allocation22 + $0xc40] sm:$0xff]
          %v2628 = vld [vmem:[#allocation22 + $0xc48] sm:$0xff]
          %v2629 = vld [vmem:[#allocation22 + $0xc50] sm:$0xff]
          %v2630 = vld [vmem:[#allocation22 + $0xc58] sm:$0xff]
          %v2631 = vld [vmem:[#allocation22 + $0xc60] sm:$0xff]
          %v2632 = vld [vmem:[#allocation22 + $0xc68] sm:$0xff]
          %v2633 = vld [vmem:[#allocation22 + $0xc70] sm:$0xff]
          %v2634 = vld [vmem:[#allocation22 + $0xc78] sm:$0xff]
          %v2635 = vld [vmem:[#allocation22 + $0xc80] sm:$0xff]
          %v2636 = vld [vmem:[#allocation22 + $0xc88] sm:$0xff]
          %v2637 = vld [vmem:[#allocation22 + $0xc90] sm:$0xff]
          %v2638 = vld [vmem:[#allocation22 + $0xc98] sm:$0xff]
          %v2639 = vld [vmem:[#allocation22 + $0xca0] sm:$0xff]
          %v2640 = vld [vmem:[#allocation22 + $0xca8] sm:$0xff]
          %v2641 = vld [vmem:[#allocation22 + $0xcb0] sm:$0xff]
          %v2642 = vld [vmem:[#allocation22 + $0xcb8] sm:$0xff]
          %v2643 = vld [vmem:[#allocation22 + $0xcc0] sm:$0xff]
          %v2644 = vld [vmem:[#allocation22 + $0xcc8] sm:$0xff]
          %v2645 = vld [vmem:[#allocation22 + $0xcd0] sm:$0xff]
          %v2646 = vld [vmem:[#allocation22 + $0xcd8] sm:$0xff]
          %v2647 = vld [vmem:[#allocation22 + $0xce0] sm:$0xff]
          %v2648 = vld [vmem:[#allocation22 + $0xce8] sm:$0xff]
          %v2649 = vld [vmem:[#allocation22 + $0xcf0] sm:$0xff]
          %v2650 = vld [vmem:[#allocation22 + $0xcf8] sm:$0xff]
          %v2651 = vld [vmem:[#allocation22 + $0xd00] sm:$0xff]
          %v2652 = vld [vmem:[#allocation22 + $0xd08] sm:$0xff]
          %v2653 = vld [vmem:[#allocation22 + $0xd10] sm:$0xff]
          %v2654 = vld [vmem:[#allocation22 + $0xd18] sm:$0xff]
          %v2655 = vld [vmem:[#allocation22 + $0xd20] sm:$0xff]
          %v2656 = vld [vmem:[#allocation22 + $0xd28] sm:$0xff]
          %v2657 = vld [vmem:[#allocation22 + $0xd30] sm:$0xff]
          %v2658 = vld [vmem:[#allocation22 + $0xd38] sm:$0xff]
          %v2659 = vld [vmem:[#allocation22 + $0xd40] sm:$0xff]
          %v2660 = vld [vmem:[#allocation22 + $0xd48] sm:$0xff]
          %v2661 = vld [vmem:[#allocation22 + $0xd50] sm:$0xff]
          %v2662 = vld [vmem:[#allocation22 + $0xd58] sm:$0xff]
          %v2663 = vld [vmem:[#allocation22 + $0xd60] sm:$0xff]
          %v2664 = vld [vmem:[#allocation22 + $0xd68] sm:$0xff]
          %v2665 = vld [vmem:[#allocation22 + $0xd70] sm:$0xff]
          %v2666 = vld [vmem:[#allocation22 + $0xd78] sm:$0xff]
          %v2667 = vld [vmem:[#allocation22 + $0xd80] sm:$0xff]
          %v2668 = vld [vmem:[#allocation22 + $0xd88] sm:$0xff]
          %v2669 = vld [vmem:[#allocation22 + $0xd90] sm:$0xff]
          %v2670 = vld [vmem:[#allocation22 + $0xd98] sm:$0xff]
          %v2671 = vld [vmem:[#allocation22 + $0xda0] sm:$0xff]
          %v2672 = vld [vmem:[#allocation22 + $0xda8] sm:$0xff]
          %v2673 = vld [vmem:[#allocation22 + $0xdb0] sm:$0xff]
          %v2674 = vld [vmem:[#allocation22 + $0xdb8] sm:$0xff]
          %v2675 = vld [vmem:[#allocation22 + $0xdc0] sm:$0xff]
          %v2676 = vld [vmem:[#allocation22 + $0xdc8] sm:$0xff]
          %v2677 = vld [vmem:[#allocation22 + $0xdd0] sm:$0xff]
          %v2678 = vld [vmem:[#allocation22 + $0xdd8] sm:$0xff]
          %v2679 = vld [vmem:[#allocation22 + $0xde0] sm:$0xff]
          %v2680 = vld [vmem:[#allocation22 + $0xde8] sm:$0xff]
          %v2681 = vld [vmem:[#allocation22 + $0xdf0] sm:$0xff]
          %v2682 = vld [vmem:[#allocation22 + $0xdf8] sm:$0xff]
          %v2683 = vld [vmem:[#allocation22 + $0xe00] sm:$0xff]
          %v2684 = vld [vmem:[#allocation22 + $0xe08] sm:$0xff]
          %v2685 = vld [vmem:[#allocation22 + $0xe10] sm:$0xff]
          %v2686 = vld [vmem:[#allocation22 + $0xe18] sm:$0xff]
          %v2687 = vld [vmem:[#allocation22 + $0xe20] sm:$0xff]
          %v2688 = vld [vmem:[#allocation22 + $0xe28] sm:$0xff]
          %v2689 = vld [vmem:[#allocation22 + $0xe30] sm:$0xff]
          %v2690 = vld [vmem:[#allocation22 + $0xe38] sm:$0xff]
          %v2691 = vld [vmem:[#allocation22 + $0xe40] sm:$0xff]
          %v2692 = vld [vmem:[#allocation22 + $0xe48] sm:$0xff]
          %v2693 = vld [vmem:[#allocation22 + $0xe50] sm:$0xff]
          %v2694 = vld [vmem:[#allocation22 + $0xe58] sm:$0xff]
          %v2695 = vld [vmem:[#allocation22 + $0xe60] sm:$0xff]
          %v2696 = vld [vmem:[#allocation22 + $0xe68] sm:$0xff]
          %v2697 = vld [vmem:[#allocation22 + $0xe70] sm:$0xff]
          %v2698 = vld [vmem:[#allocation22 + $0xe78] sm:$0xff]
          %v2699 = vld [vmem:[#allocation22 + $0xe80] sm:$0xff]
          %v2700 = vld [vmem:[#allocation22 + $0xe88] sm:$0xff]
          %v2701 = vld [vmem:[#allocation22 + $0xe90] sm:$0xff]
          %v2702 = vld [vmem:[#allocation22 + $0xe98] sm:$0xff]
          %v2703 = vld [vmem:[#allocation22 + $0xea0] sm:$0xff]
          %v2704 = vld [vmem:[#allocation22 + $0xea8] sm:$0xff]
          %v2705 = vld [vmem:[#allocation22 + $0xeb0] sm:$0xff]
          %v2706 = vld [vmem:[#allocation22 + $0xeb8] sm:$0xff]
          %v2707 = vld [vmem:[#allocation22 + $0xec0] sm:$0xff]
          %v2708 = vld [vmem:[#allocation22 + $0xec8] sm:$0xff]
          %v2709 = vld [vmem:[#allocation22 + $0xed0] sm:$0xff]
          %v2710 = vld [vmem:[#allocation22 + $0xed8] sm:$0xff]
          %v2711 = vld [vmem:[#allocation22 + $0xee0] sm:$0xff]
          %v2712 = vld [vmem:[#allocation22 + $0xee8] sm:$0xff]
          %v2713 = vld [vmem:[#allocation22 + $0xef0] sm:$0xff]
          %v2714 = vld [vmem:[#allocation22 + $0xef8] sm:$0xff]
          %v2715 = vld [vmem:[#allocation22 + $0xf00] sm:$0xff]
          %v2716 = vld [vmem:[#allocation22 + $0xf08] sm:$0xff]
          %v2717 = vld [vmem:[#allocation22 + $0xf10] sm:$0xff]
          %v2718 = vld [vmem:[#allocation22 + $0xf18] sm:$0xff]
          %v2719 = vld [vmem:[#allocation22 + $0xf20] sm:$0xff]
          %v2720 = vld [vmem:[#allocation22 + $0xf28] sm:$0xff]
          %v2721 = vld [vmem:[#allocation22 + $0xf30] sm:$0xff]
          %v2722 = vld [vmem:[#allocation22 + $0xf38] sm:$0xff]
          %v2723 = vld [vmem:[#allocation22 + $0xf40] sm:$0xff]
          %v2724 = vld [vmem:[#allocation22 + $0xf48] sm:$0xff]
          %v2725 = vld [vmem:[#allocation22 + $0xf50] sm:$0xff]
          %v2726 = vld [vmem:[#allocation22 + $0xf58] sm:$0xff]
          %v2727 = vld [vmem:[#allocation22 + $0xf60] sm:$0xff]
          %v2728 = vld [vmem:[#allocation22 + $0xf68] sm:$0xff]
          %v2729 = vld [vmem:[#allocation22 + $0xf70] sm:$0xff]
          %v2730 = vld [vmem:[#allocation22 + $0xf78] sm:$0xff]
          %v2731 = vld [vmem:[#allocation22 + $0xf80] sm:$0xff]
          %v2732 = vld [vmem:[#allocation22 + $0xf88] sm:$0xff]
          %v2733 = vld [vmem:[#allocation22 + $0xf90] sm:$0xff]
          %v2734 = vld [vmem:[#allocation22 + $0xf98] sm:$0xff]
          %v2735 = vld [vmem:[#allocation22 + $0xfa0] sm:$0xff]
          %v2736 = vld [vmem:[#allocation22 + $0xfa8] sm:$0xff]
          %v2737 = vld [vmem:[#allocation22 + $0xfb0] sm:$0xff]
          %v2738 = vld [vmem:[#allocation22 + $0xfb8] sm:$0xff]
          %v2739 = vld [vmem:[#allocation22 + $0xfc0] sm:$0xff]
          %v2740 = vld [vmem:[#allocation22 + $0xfc8] sm:$0xff]
          %v2741 = vld [vmem:[#allocation22 + $0xfd0] sm:$0xff]
          %v2742 = vld [vmem:[#allocation22 + $0xfd8] sm:$0xff]
          %v2743 = vld [vmem:[#allocation22 + $0xfe0] sm:$0xff]
          %v2744 = vld [vmem:[#allocation22 + $0xfe8] sm:$0xff]
          %v2745 = vld [vmem:[#allocation22 + $0xff0] sm:$0xff]
          %v2746 = vld [vmem:[#allocation22 + $0xff8] sm:$0xff]
          %v2747 = vld [vmem:[#allocation23] sm:$0xff]
          %v2749 = vperm.slane %v2747, 0
          %v2750 = vperm.slane %v2747, 1
          %v2751 = vperm.slane %v2747, 2
          %v2752 = vperm.slane %v2747, 3
          %v2753 = vperm.slane %v2747, 4
          %v2754 = vperm.slane %v2747, 5
          %v2755 = vperm.slane %v2747, 6
          %v2756 = vperm.slane %v2747, 7
          %2765 = vmatpush.msra.mxu0 %v2355
          %2766 = vmatpush.msra.mxu0 %v2347
          %2767 = vmatpush.msra.mxu0 %v2339
          %2768 = vmatpush.msra.mxu0 %v2331
          %2769 = vmatpush.msra.mxu0 %v2323
          %2770 = vmatpush.msra.mxu0 %v2315
          %2771 = vmatpush.msra.mxu0 %v2307
          %2772 = vmatpush.msra.mxu0 %v2299
          %2773 = vmatpush.msra.mxu0 %v2291
          %2774 = vmatpush.msra.mxu0 %v2283
          %2775 = vmatpush.msra.mxu0 %v2275
          %2776 = vmatpush.msra.mxu0 %v2267
          %2777 = vmatpush.msra.mxu0 %v2259
          %2778 = vmatpush.msra.mxu0 %v2251
          %2779 = vmatpush.msra.mxu0 %v2243
          %2780 = vmatpush.msra.mxu0 %v2235
          %2781 = vmatmul.f32.gmra.mxu0 %v2231
          %v2782 = vpop.f32.mrf.mxu0
          %v2783 = vadd.f32 %v2749, %v2782
          %2784 = vdwg.mxu0
          %2785 = vmatpush.msra.mxu0 %v2483
          %2786 = vmatpush.msra.mxu0 %v2475
          %2787 = vmatpush.msra.mxu0 %v2467
          %2788 = vmatpush.msra.mxu0 %v2459
          %2789 = vmatpush.msra.mxu0 %v2451
          %2790 = vmatpush.msra.mxu0 %v2443
          %2791 = vmatpush.msra.mxu0 %v2435
          %2792 = vmatpush.msra.mxu0 %v2427
          %2793 = vmatpush.msra.mxu0 %v2419
          %2794 = vmatpush.msra.mxu0 %v2411
          %2795 = vmatpush.msra.mxu0 %v2403
          %2796 = vmatpush.msra.mxu0 %v2395
          %2797 = vmatpush.msra.mxu0 %v2387
          %2798 = vmatpush.msra.mxu0 %v2379
          %2799 = vmatpush.msra.mxu0 %v2371
          %2800 = vmatpush.msra.mxu0 %v2363
          %2801 = vmatmul.f32.gmra.mxu0 %v2232
          %v2802 = vpop.f32.mrf.mxu0
          %v2803 = vadd.f32 %v2783, %v2802
          %2804 = vdwg.mxu0
          %2805 = vmatpush.msra.mxu0 %v2611
          %2806 = vmatpush.msra.mxu0 %v2603
          %2807 = vmatpush.msra.mxu0 %v2595
          %2808 = vmatpush.msra.mxu0 %v2587
          %2809 = vmatpush.msra.mxu0 %v2579
          %2810 = vmatpush.msra.mxu0 %v2571
          %2811 = vmatpush.msra.mxu0 %v2563
          %2812 = vmatpush.msra.mxu0 %v2555
          %2813 = vmatpush.msra.mxu0 %v2547
          %2814 = vmatpush.msra.mxu0 %v2539
          %2815 = vmatpush.msra.mxu0 %v2531
          %2816 = vmatpush.msra.mxu0 %v2523
          %2817 = vmatpush.msra.mxu0 %v2515
          %2818 = vmatpush.msra.mxu0 %v2507
          %2819 = vmatpush.msra.mxu0 %v2499
          %2820 = vmatpush.msra.mxu0 %v2491
          %2821 = vmatmul.f32.gmra.mxu0 %v2233
          %v2822 = vpop.f32.mrf.mxu0
          %v2823 = vadd.f32 %v2803, %v2822
          %2824 = vdwg.mxu0
          %2825 = vmatpush.msra.mxu0 %v2739
          %2826 = vmatpush.msra.mxu0 %v2731
          %2827 = vmatpush.msra.mxu0 %v2723
          %2828 = vmatpush.msra.mxu0 %v2715
          %2829 = vmatpush.msra.mxu0 %v2707
          %2830 = vmatpush.msra.mxu0 %v2699
          %2831 = vmatpush.msra.mxu0 %v2691
          %2832 = vmatpush.msra.mxu0 %v2683
          %2833 = vmatpush.msra.mxu0 %v2675
          %2834 = vmatpush.msra.mxu0 %v2667
          %2835 = vmatpush.msra.mxu0 %v2659
          %2836 = vmatpush.msra.mxu0 %v2651
          %2837 = vmatpush.msra.mxu0 %v2643
          %2838 = vmatpush.msra.mxu0 %v2635
          %2839 = vmatpush.msra.mxu0 %v2627
          %2840 = vmatpush.msra.mxu0 %v2619
          %2841 = vmatmul.f32.gmra.mxu0 %v2234
          %v2842 = vpop.f32.mrf.mxu0
          %v2843 = vadd.f32 %v2823, %v2842
          %2844 = vdwg.mxu0
          %2845 = vmatpush.msra.mxu0 %v2356
          %2846 = vmatpush.msra.mxu0 %v2348
          %2847 = vmatpush.msra.mxu0 %v2340
          %2848 = vmatpush.msra.mxu0 %v2332
          %2849 = vmatpush.msra.mxu0 %v2324
          %2850 = vmatpush.msra.mxu0 %v2316
          %2851 = vmatpush.msra.mxu0 %v2308
          %2852 = vmatpush.msra.mxu0 %v2300
          %2853 = vmatpush.msra.mxu0 %v2292
          %2854 = vmatpush.msra.mxu0 %v2284
          %2855 = vmatpush.msra.mxu0 %v2276
          %2856 = vmatpush.msra.mxu0 %v2268
          %2857 = vmatpush.msra.mxu0 %v2260
          %2858 = vmatpush.msra.mxu0 %v2252
          %2859 = vmatpush.msra.mxu0 %v2244
          %2860 = vmatpush.msra.mxu0 %v2236
          %2861 = vmatmul.f32.gmra.mxu0 %v2231
          %v2862 = vpop.f32.mrf.mxu0
          %v2863 = vadd.f32 %v2750, %v2862
          %2864 = vdwg.mxu0
          %2865 = vmatpush.msra.mxu0 %v2484
          %2866 = vmatpush.msra.mxu0 %v2476
          %2867 = vmatpush.msra.mxu0 %v2468
          %2868 = vmatpush.msra.mxu0 %v2460
          %2869 = vmatpush.msra.mxu0 %v2452
          %2870 = vmatpush.msra.mxu0 %v2444
          %2871 = vmatpush.msra.mxu0 %v2436
          %2872 = vmatpush.msra.mxu0 %v2428
          %2873 = vmatpush.msra.mxu0 %v2420
          %2874 = vmatpush.msra.mxu0 %v2412
          %2875 = vmatpush.msra.mxu0 %v2404
          %2876 = vmatpush.msra.mxu0 %v2396
          %2877 = vmatpush.msra.mxu0 %v2388
          %2878 = vmatpush.msra.mxu0 %v2380
          %2879 = vmatpush.msra.mxu0 %v2372
          %2880 = vmatpush.msra.mxu0 %v2364
          %2881 = vmatmul.f32.gmra.mxu0 %v2232
          %v2882 = vpop.f32.mrf.mxu0
          %v2883 = vadd.f32 %v2863, %v2882
          %2884 = vdwg.mxu0
          %2885 = vmatpush.msra.mxu0 %v2612
          %2886 = vmatpush.msra.mxu0 %v2604
          %2887 = vmatpush.msra.mxu0 %v2596
          %2888 = vmatpush.msra.mxu0 %v2588
          %2889 = vmatpush.msra.mxu0 %v2580
          %2890 = vmatpush.msra.mxu0 %v2572
          %2891 = vmatpush.msra.mxu0 %v2564
          %2892 = vmatpush.msra.mxu0 %v2556
          %2893 = vmatpush.msra.mxu0 %v2548
          %2894 = vmatpush.msra.mxu0 %v2540
          %2895 = vmatpush.msra.mxu0 %v2532
          %2896 = vmatpush.msra.mxu0 %v2524
          %2897 = vmatpush.msra.mxu0 %v2516
          %2898 = vmatpush.msra.mxu0 %v2508
          %2899 = vmatpush.msra.mxu0 %v2500
          %2900 = vmatpush.msra.mxu0 %v2492
          %2901 = vmatmul.f32.gmra.mxu0 %v2233
          %v2902 = vpop.f32.mrf.mxu0
          %v2903 = vadd.f32 %v2883, %v2902
          %2904 = vdwg.mxu0
          %2905 = vmatpush.msra.mxu0 %v2740
          %2906 = vmatpush.msra.mxu0 %v2732
          %2907 = vmatpush.msra.mxu0 %v2724
          %2908 = vmatpush.msra.mxu0 %v2716
          %2909 = vmatpush.msra.mxu0 %v2708
          %2910 = vmatpush.msra.mxu0 %v2700
          %2911 = vmatpush.msra.mxu0 %v2692
          %2912 = vmatpush.msra.mxu0 %v2684
          %2913 = vmatpush.msra.mxu0 %v2676
          %2914 = vmatpush.msra.mxu0 %v2668
          %2915 = vmatpush.msra.mxu0 %v2660
          %2916 = vmatpush.msra.mxu0 %v2652
          %2917 = vmatpush.msra.mxu0 %v2644
          %2918 = vmatpush.msra.mxu0 %v2636
          %2919 = vmatpush.msra.mxu0 %v2628
          %2920 = vmatpush.msra.mxu0 %v2620
          %2921 = vmatmul.f32.gmra.mxu0 %v2234
          %v2922 = vpop.f32.mrf.mxu0
          %v2923 = vadd.f32 %v2903, %v2922
          %2924 = vdwg.mxu0
          %2925 = vmatpush.msra.mxu0 %v2357
          %2926 = vmatpush.msra.mxu0 %v2349
          %2927 = vmatpush.msra.mxu0 %v2341
          %2928 = vmatpush.msra.mxu0 %v2333
          %2929 = vmatpush.msra.mxu0 %v2325
          %2930 = vmatpush.msra.mxu0 %v2317
          %2931 = vmatpush.msra.mxu0 %v2309
          %2932 = vmatpush.msra.mxu0 %v2301
          %2933 = vmatpush.msra.mxu0 %v2293
          %2934 = vmatpush.msra.mxu0 %v2285
          %2935 = vmatpush.msra.mxu0 %v2277
          %2936 = vmatpush.msra.mxu0 %v2269
          %2937 = vmatpush.msra.mxu0 %v2261
          %2938 = vmatpush.msra.mxu0 %v2253
          %2939 = vmatpush.msra.mxu0 %v2245
          %2940 = vmatpush.msra.mxu0 %v2237
          %2941 = vmatmul.f32.gmra.mxu0 %v2231
          %v2942 = vpop.f32.mrf.mxu0
          %v2943 = vadd.f32 %v2751, %v2942
          %2944 = vdwg.mxu0
          %2945 = vmatpush.msra.mxu0 %v2485
          %2946 = vmatpush.msra.mxu0 %v2477
          %2947 = vmatpush.msra.mxu0 %v2469
          %2948 = vmatpush.msra.mxu0 %v2461
          %2949 = vmatpush.msra.mxu0 %v2453
          %2950 = vmatpush.msra.mxu0 %v2445
          %2951 = vmatpush.msra.mxu0 %v2437
          %2952 = vmatpush.msra.mxu0 %v2429
          %2953 = vmatpush.msra.mxu0 %v2421
          %2954 = vmatpush.msra.mxu0 %v2413
          %2955 = vmatpush.msra.mxu0 %v2405
          %2956 = vmatpush.msra.mxu0 %v2397
          %2957 = vmatpush.msra.mxu0 %v2389
          %2958 = vmatpush.msra.mxu0 %v2381
          %2959 = vmatpush.msra.mxu0 %v2373
          %2960 = vmatpush.msra.mxu0 %v2365
          %2961 = vmatmul.f32.gmra.mxu0 %v2232
          %v2962 = vpop.f32.mrf.mxu0
          %v2963 = vadd.f32 %v2943, %v2962
          %2964 = vdwg.mxu0
          %2965 = vmatpush.msra.mxu0 %v2613
          %2966 = vmatpush.msra.mxu0 %v2605
          %2967 = vmatpush.msra.mxu0 %v2597
          %2968 = vmatpush.msra.mxu0 %v2589
          %2969 = vmatpush.msra.mxu0 %v2581
          %2970 = vmatpush.msra.mxu0 %v2573
          %2971 = vmatpush.msra.mxu0 %v2565
          %2972 = vmatpush.msra.mxu0 %v2557
          %2973 = vmatpush.msra.mxu0 %v2549
          %2974 = vmatpush.msra.mxu0 %v2541
          %2975 = vmatpush.msra.mxu0 %v2533
          %2976 = vmatpush.msra.mxu0 %v2525
          %2977 = vmatpush.msra.mxu0 %v2517
          %2978 = vmatpush.msra.mxu0 %v2509
          %2979 = vmatpush.msra.mxu0 %v2501
          %2980 = vmatpush.msra.mxu0 %v2493
          %2981 = vmatmul.f32.gmra.mxu0 %v2233
          %v2982 = vpop.f32.mrf.mxu0
          %v2983 = vadd.f32 %v2963, %v2982
          %2984 = vdwg.mxu0
          %2985 = vmatpush.msra.mxu0 %v2741
          %2986 = vmatpush.msra.mxu0 %v2733
          %2987 = vmatpush.msra.mxu0 %v2725
          %2988 = vmatpush.msra.mxu0 %v2717
          %2989 = vmatpush.msra.mxu0 %v2709
          %2990 = vmatpush.msra.mxu0 %v2701
          %2991 = vmatpush.msra.mxu0 %v2693
          %2992 = vmatpush.msra.mxu0 %v2685
          %2993 = vmatpush.msra.mxu0 %v2677
          %2994 = vmatpush.msra.mxu0 %v2669
          %2995 = vmatpush.msra.mxu0 %v2661
          %2996 = vmatpush.msra.mxu0 %v2653
          %2997 = vmatpush.msra.mxu0 %v2645
          %2998 = vmatpush.msra.mxu0 %v2637
          %2999 = vmatpush.msra.mxu0 %v2629
          %3000 = vmatpush.msra.mxu0 %v2621
          %3001 = vmatmul.f32.gmra.mxu0 %v2234
          %v3002 = vpop.f32.mrf.mxu0
          %v3003 = vadd.f32 %v2983, %v3002
          %3004 = vdwg.mxu0
          %3005 = vmatpush.msra.mxu0 %v2358
          %3006 = vmatpush.msra.mxu0 %v2350
          %3007 = vmatpush.msra.mxu0 %v2342
          %3008 = vmatpush.msra.mxu0 %v2334
          %3009 = vmatpush.msra.mxu0 %v2326
          %3010 = vmatpush.msra.mxu0 %v2318
          %3011 = vmatpush.msra.mxu0 %v2310
          %3012 = vmatpush.msra.mxu0 %v2302
          %3013 = vmatpush.msra.mxu0 %v2294
          %3014 = vmatpush.msra.mxu0 %v2286
          %3015 = vmatpush.msra.mxu0 %v2278
          %3016 = vmatpush.msra.mxu0 %v2270
          %3017 = vmatpush.msra.mxu0 %v2262
          %3018 = vmatpush.msra.mxu0 %v2254
          %3019 = vmatpush.msra.mxu0 %v2246
          %3020 = vmatpush.msra.mxu0 %v2238
          %3021 = vmatmul.f32.gmra.mxu0 %v2231
          %v3022 = vpop.f32.mrf.mxu0
          %v3023 = vadd.f32 %v2752, %v3022
          %3024 = vdwg.mxu0
          %3025 = vmatpush.msra.mxu0 %v2486
          %3026 = vmatpush.msra.mxu0 %v2478
          %3027 = vmatpush.msra.mxu0 %v2470
          %3028 = vmatpush.msra.mxu0 %v2462
          %3029 = vmatpush.msra.mxu0 %v2454
          %3030 = vmatpush.msra.mxu0 %v2446
          %3031 = vmatpush.msra.mxu0 %v2438
          %3032 = vmatpush.msra.mxu0 %v2430
          %3033 = vmatpush.msra.mxu0 %v2422
          %3034 = vmatpush.msra.mxu0 %v2414
          %3035 = vmatpush.msra.mxu0 %v2406
          %3036 = vmatpush.msra.mxu0 %v2398
          %3037 = vmatpush.msra.mxu0 %v2390
          %3038 = vmatpush.msra.mxu0 %v2382
          %3039 = vmatpush.msra.mxu0 %v2374
          %3040 = vmatpush.msra.mxu0 %v2366
          %3041 = vmatmul.f32.gmra.mxu0 %v2232
          %v3042 = vpop.f32.mrf.mxu0
          %v3043 = vadd.f32 %v3023, %v3042
          %3044 = vdwg.mxu0
          %3045 = vmatpush.msra.mxu0 %v2614
          %3046 = vmatpush.msra.mxu0 %v2606
          %3047 = vmatpush.msra.mxu0 %v2598
          %3048 = vmatpush.msra.mxu0 %v2590
          %3049 = vmatpush.msra.mxu0 %v2582
          %3050 = vmatpush.msra.mxu0 %v2574
          %3051 = vmatpush.msra.mxu0 %v2566
          %3052 = vmatpush.msra.mxu0 %v2558
          %3053 = vmatpush.msra.mxu0 %v2550
          %3054 = vmatpush.msra.mxu0 %v2542
          %3055 = vmatpush.msra.mxu0 %v2534
          %3056 = vmatpush.msra.mxu0 %v2526
          %3057 = vmatpush.msra.mxu0 %v2518
          %3058 = vmatpush.msra.mxu0 %v2510
          %3059 = vmatpush.msra.mxu0 %v2502
          %3060 = vmatpush.msra.mxu0 %v2494
          %3061 = vmatmul.f32.gmra.mxu0 %v2233
          %v3062 = vpop.f32.mrf.mxu0
          %v3063 = vadd.f32 %v3043, %v3062
          %3064 = vdwg.mxu0
          %3065 = vmatpush.msra.mxu0 %v2742
          %3066 = vmatpush.msra.mxu0 %v2734
          %3067 = vmatpush.msra.mxu0 %v2726
          %3068 = vmatpush.msra.mxu0 %v2718
          %3069 = vmatpush.msra.mxu0 %v2710
          %3070 = vmatpush.msra.mxu0 %v2702
          %3071 = vmatpush.msra.mxu0 %v2694
          %3072 = vmatpush.msra.mxu0 %v2686
          %3073 = vmatpush.msra.mxu0 %v2678
          %3074 = vmatpush.msra.mxu0 %v2670
          %3075 = vmatpush.msra.mxu0 %v2662
          %3076 = vmatpush.msra.mxu0 %v2654
          %3077 = vmatpush.msra.mxu0 %v2646
          %3078 = vmatpush.msra.mxu0 %v2638
          %3079 = vmatpush.msra.mxu0 %v2630
          %3080 = vmatpush.msra.mxu0 %v2622
          %3081 = vmatmul.f32.gmra.mxu0 %v2234
          %v3082 = vpop.f32.mrf.mxu0
          %v3083 = vadd.f32 %v3063, %v3082
          %3084 = vdwg.mxu0
          %3085 = vmatpush.msra.mxu0 %v2359
          %3086 = vmatpush.msra.mxu0 %v2351
          %3087 = vmatpush.msra.mxu0 %v2343
          %3088 = vmatpush.msra.mxu0 %v2335
          %3089 = vmatpush.msra.mxu0 %v2327
          %3090 = vmatpush.msra.mxu0 %v2319
          %3091 = vmatpush.msra.mxu0 %v2311
          %3092 = vmatpush.msra.mxu0 %v2303
          %3093 = vmatpush.msra.mxu0 %v2295
          %3094 = vmatpush.msra.mxu0 %v2287
          %3095 = vmatpush.msra.mxu0 %v2279
          %3096 = vmatpush.msra.mxu0 %v2271
          %3097 = vmatpush.msra.mxu0 %v2263
          %3098 = vmatpush.msra.mxu0 %v2255
          %3099 = vmatpush.msra.mxu0 %v2247
          %3100 = vmatpush.msra.mxu0 %v2239
          %3101 = vmatmul.f32.gmra.mxu0 %v2231
          %v3102 = vpop.f32.mrf.mxu0
          %v3103 = vadd.f32 %v2753, %v3102
          %3104 = vdwg.mxu0
          %3105 = vmatpush.msra.mxu0 %v2487
          %3106 = vmatpush.msra.mxu0 %v2479
          %3107 = vmatpush.msra.mxu0 %v2471
          %3108 = vmatpush.msra.mxu0 %v2463
          %3109 = vmatpush.msra.mxu0 %v2455
          %3110 = vmatpush.msra.mxu0 %v2447
          %3111 = vmatpush.msra.mxu0 %v2439
          %3112 = vmatpush.msra.mxu0 %v2431
          %3113 = vmatpush.msra.mxu0 %v2423
          %3114 = vmatpush.msra.mxu0 %v2415
          %3115 = vmatpush.msra.mxu0 %v2407
          %3116 = vmatpush.msra.mxu0 %v2399
          %3117 = vmatpush.msra.mxu0 %v2391
          %3118 = vmatpush.msra.mxu0 %v2383
          %3119 = vmatpush.msra.mxu0 %v2375
          %3120 = vmatpush.msra.mxu0 %v2367
          %3121 = vmatmul.f32.gmra.mxu0 %v2232
          %v3122 = vpop.f32.mrf.mxu0
          %v3123 = vadd.f32 %v3103, %v3122
          %3124 = vdwg.mxu0
          %3125 = vmatpush.msra.mxu0 %v2615
          %3126 = vmatpush.msra.mxu0 %v2607
          %3127 = vmatpush.msra.mxu0 %v2599
          %3128 = vmatpush.msra.mxu0 %v2591
          %3129 = vmatpush.msra.mxu0 %v2583
          %3130 = vmatpush.msra.mxu0 %v2575
          %3131 = vmatpush.msra.mxu0 %v2567
          %3132 = vmatpush.msra.mxu0 %v2559
          %3133 = vmatpush.msra.mxu0 %v2551
          %3134 = vmatpush.msra.mxu0 %v2543
          %3135 = vmatpush.msra.mxu0 %v2535
          %3136 = vmatpush.msra.mxu0 %v2527
          %3137 = vmatpush.msra.mxu0 %v2519
          %3138 = vmatpush.msra.mxu0 %v2511
          %3139 = vmatpush.msra.mxu0 %v2503
          %3140 = vmatpush.msra.mxu0 %v2495
          %3141 = vmatmul.f32.gmra.mxu0 %v2233
          %v3142 = vpop.f32.mrf.mxu0
          %v3143 = vadd.f32 %v3123, %v3142
          %3144 = vdwg.mxu0
          %3145 = vmatpush.msra.mxu0 %v2743
          %3146 = vmatpush.msra.mxu0 %v2735
          %3147 = vmatpush.msra.mxu0 %v2727
          %3148 = vmatpush.msra.mxu0 %v2719
          %3149 = vmatpush.msra.mxu0 %v2711
          %3150 = vmatpush.msra.mxu0 %v2703
          %3151 = vmatpush.msra.mxu0 %v2695
          %3152 = vmatpush.msra.mxu0 %v2687
          %3153 = vmatpush.msra.mxu0 %v2679
          %3154 = vmatpush.msra.mxu0 %v2671
          %3155 = vmatpush.msra.mxu0 %v2663
          %3156 = vmatpush.msra.mxu0 %v2655
          %3157 = vmatpush.msra.mxu0 %v2647
          %3158 = vmatpush.msra.mxu0 %v2639
          %3159 = vmatpush.msra.mxu0 %v2631
          %3160 = vmatpush.msra.mxu0 %v2623
          %3161 = vmatmul.f32.gmra.mxu0 %v2234
          %v3162 = vpop.f32.mrf.mxu0
          %v3163 = vadd.f32 %v3143, %v3162
          %3164 = vdwg.mxu0
          %3165 = vmatpush.msra.mxu0 %v2360
          %3166 = vmatpush.msra.mxu0 %v2352
          %3167 = vmatpush.msra.mxu0 %v2344
          %3168 = vmatpush.msra.mxu0 %v2336
          %3169 = vmatpush.msra.mxu0 %v2328
          %3170 = vmatpush.msra.mxu0 %v2320
          %3171 = vmatpush.msra.mxu0 %v2312
          %3172 = vmatpush.msra.mxu0 %v2304
          %3173 = vmatpush.msra.mxu0 %v2296
          %3174 = vmatpush.msra.mxu0 %v2288
          %3175 = vmatpush.msra.mxu0 %v2280
          %3176 = vmatpush.msra.mxu0 %v2272
          %3177 = vmatpush.msra.mxu0 %v2264
          %3178 = vmatpush.msra.mxu0 %v2256
          %3179 = vmatpush.msra.mxu0 %v2248
          %3180 = vmatpush.msra.mxu0 %v2240
          %3181 = vmatmul.f32.gmra.mxu0 %v2231
          %v3182 = vpop.f32.mrf.mxu0
          %v3183 = vadd.f32 %v2754, %v3182
          %3184 = vdwg.mxu0
          %3185 = vmatpush.msra.mxu0 %v2488
          %3186 = vmatpush.msra.mxu0 %v2480
          %3187 = vmatpush.msra.mxu0 %v2472
          %3188 = vmatpush.msra.mxu0 %v2464
          %3189 = vmatpush.msra.mxu0 %v2456
          %3190 = vmatpush.msra.mxu0 %v2448
          %3191 = vmatpush.msra.mxu0 %v2440
          %3192 = vmatpush.msra.mxu0 %v2432
          %3193 = vmatpush.msra.mxu0 %v2424
          %3194 = vmatpush.msra.mxu0 %v2416
          %3195 = vmatpush.msra.mxu0 %v2408
          %3196 = vmatpush.msra.mxu0 %v2400
          %3197 = vmatpush.msra.mxu0 %v2392
          %3198 = vmatpush.msra.mxu0 %v2384
          %3199 = vmatpush.msra.mxu0 %v2376
          %3200 = vmatpush.msra.mxu0 %v2368
          %3201 = vmatmul.f32.gmra.mxu0 %v2232
          %v3202 = vpop.f32.mrf.mxu0
          %v3203 = vadd.f32 %v3183, %v3202
          %3204 = vdwg.mxu0
          %3205 = vmatpush.msra.mxu0 %v2616
          %3206 = vmatpush.msra.mxu0 %v2608
          %3207 = vmatpush.msra.mxu0 %v2600
          %3208 = vmatpush.msra.mxu0 %v2592
          %3209 = vmatpush.msra.mxu0 %v2584
          %3210 = vmatpush.msra.mxu0 %v2576
          %3211 = vmatpush.msra.mxu0 %v2568
          %3212 = vmatpush.msra.mxu0 %v2560
          %3213 = vmatpush.msra.mxu0 %v2552
          %3214 = vmatpush.msra.mxu0 %v2544
          %3215 = vmatpush.msra.mxu0 %v2536
          %3216 = vmatpush.msra.mxu0 %v2528
          %3217 = vmatpush.msra.mxu0 %v2520
          %3218 = vmatpush.msra.mxu0 %v2512
          %3219 = vmatpush.msra.mxu0 %v2504
          %3220 = vmatpush.msra.mxu0 %v2496
          %3221 = vmatmul.f32.gmra.mxu0 %v2233
          %v3222 = vpop.f32.mrf.mxu0
          %v3223 = vadd.f32 %v3203, %v3222
          %3224 = vdwg.mxu0
          %3225 = vmatpush.msra.mxu0 %v2744
          %3226 = vmatpush.msra.mxu0 %v2736
          %3227 = vmatpush.msra.mxu0 %v2728
          %3228 = vmatpush.msra.mxu0 %v2720
          %3229 = vmatpush.msra.mxu0 %v2712
          %3230 = vmatpush.msra.mxu0 %v2704
          %3231 = vmatpush.msra.mxu0 %v2696
          %3232 = vmatpush.msra.mxu0 %v2688
          %3233 = vmatpush.msra.mxu0 %v2680
          %3234 = vmatpush.msra.mxu0 %v2672
          %3235 = vmatpush.msra.mxu0 %v2664
          %3236 = vmatpush.msra.mxu0 %v2656
          %3237 = vmatpush.msra.mxu0 %v2648
          %3238 = vmatpush.msra.mxu0 %v2640
          %3239 = vmatpush.msra.mxu0 %v2632
          %3240 = vmatpush.msra.mxu0 %v2624
          %3241 = vmatmul.f32.gmra.mxu0 %v2234
          %v3242 = vpop.f32.mrf.mxu0
          %v3243 = vadd.f32 %v3223, %v3242
          %3244 = vdwg.mxu0
          %3245 = vmatpush.msra.mxu0 %v2361
          %3246 = vmatpush.msra.mxu0 %v2353
          %3247 = vmatpush.msra.mxu0 %v2345
          %3248 = vmatpush.msra.mxu0 %v2337
          %3249 = vmatpush.msra.mxu0 %v2329
          %3250 = vmatpush.msra.mxu0 %v2321
          %3251 = vmatpush.msra.mxu0 %v2313
          %3252 = vmatpush.msra.mxu0 %v2305
          %3253 = vmatpush.msra.mxu0 %v2297
          %3254 = vmatpush.msra.mxu0 %v2289
          %3255 = vmatpush.msra.mxu0 %v2281
          %3256 = vmatpush.msra.mxu0 %v2273
          %3257 = vmatpush.msra.mxu0 %v2265
          %3258 = vmatpush.msra.mxu0 %v2257
          %3259 = vmatpush.msra.mxu0 %v2249
          %3260 = vmatpush.msra.mxu0 %v2241
          %3261 = vmatmul.f32.gmra.mxu0 %v2231
          %v3262 = vpop.f32.mrf.mxu0
          %v3263 = vadd.f32 %v2755, %v3262
          %3264 = vdwg.mxu0
          %3265 = vmatpush.msra.mxu0 %v2489
          %3266 = vmatpush.msra.mxu0 %v2481
          %3267 = vmatpush.msra.mxu0 %v2473
          %3268 = vmatpush.msra.mxu0 %v2465
          %3269 = vmatpush.msra.mxu0 %v2457
          %3270 = vmatpush.msra.mxu0 %v2449
          %3271 = vmatpush.msra.mxu0 %v2441
          %3272 = vmatpush.msra.mxu0 %v2433
          %3273 = vmatpush.msra.mxu0 %v2425
          %3274 = vmatpush.msra.mxu0 %v2417
          %3275 = vmatpush.msra.mxu0 %v2409
          %3276 = vmatpush.msra.mxu0 %v2401
          %3277 = vmatpush.msra.mxu0 %v2393
          %3278 = vmatpush.msra.mxu0 %v2385
          %3279 = vmatpush.msra.mxu0 %v2377
          %3280 = vmatpush.msra.mxu0 %v2369
          %3281 = vmatmul.f32.gmra.mxu0 %v2232
          %v3282 = vpop.f32.mrf.mxu0
          %v3283 = vadd.f32 %v3263, %v3282
          %3284 = vdwg.mxu0
          %3285 = vmatpush.msra.mxu0 %v2617
          %3286 = vmatpush.msra.mxu0 %v2609
          %3287 = vmatpush.msra.mxu0 %v2601
          %3288 = vmatpush.msra.mxu0 %v2593
          %3289 = vmatpush.msra.mxu0 %v2585
          %3290 = vmatpush.msra.mxu0 %v2577
          %3291 = vmatpush.msra.mxu0 %v2569
          %3292 = vmatpush.msra.mxu0 %v2561
          %3293 = vmatpush.msra.mxu0 %v2553
          %3294 = vmatpush.msra.mxu0 %v2545
          %3295 = vmatpush.msra.mxu0 %v2537
          %3296 = vmatpush.msra.mxu0 %v2529
          %3297 = vmatpush.msra.mxu0 %v2521
          %3298 = vmatpush.msra.mxu0 %v2513
          %3299 = vmatpush.msra.mxu0 %v2505
          %3300 = vmatpush.msra.mxu0 %v2497
          %3301 = vmatmul.f32.gmra.mxu0 %v2233
          %v3302 = vpop.f32.mrf.mxu0
          %v3303 = vadd.f32 %v3283, %v3302
          %3304 = vdwg.mxu0
          %3305 = vmatpush.msra.mxu0 %v2745
          %3306 = vmatpush.msra.mxu0 %v2737
          %3307 = vmatpush.msra.mxu0 %v2729
          %3308 = vmatpush.msra.mxu0 %v2721
          %3309 = vmatpush.msra.mxu0 %v2713
          %3310 = vmatpush.msra.mxu0 %v2705
          %3311 = vmatpush.msra.mxu0 %v2697
          %3312 = vmatpush.msra.mxu0 %v2689
          %3313 = vmatpush.msra.mxu0 %v2681
          %3314 = vmatpush.msra.mxu0 %v2673
          %3315 = vmatpush.msra.mxu0 %v2665
          %3316 = vmatpush.msra.mxu0 %v2657
          %3317 = vmatpush.msra.mxu0 %v2649
          %3318 = vmatpush.msra.mxu0 %v2641
          %3319 = vmatpush.msra.mxu0 %v2633
          %3320 = vmatpush.msra.mxu0 %v2625
          %3321 = vmatmul.f32.gmra.mxu0 %v2234
          %v3322 = vpop.f32.mrf.mxu0
          %v3323 = vadd.f32 %v3303, %v3322
          %3324 = vdwg.mxu0
          %3325 = vmatpush.msra.mxu0 %v2362
          %3326 = vmatpush.msra.mxu0 %v2354
          %3327 = vmatpush.msra.mxu0 %v2346
          %3328 = vmatpush.msra.mxu0 %v2338
          %3329 = vmatpush.msra.mxu0 %v2330
          %3330 = vmatpush.msra.mxu0 %v2322
          %3331 = vmatpush.msra.mxu0 %v2314
          %3332 = vmatpush.msra.mxu0 %v2306
          %3333 = vmatpush.msra.mxu0 %v2298
          %3334 = vmatpush.msra.mxu0 %v2290
          %3335 = vmatpush.msra.mxu0 %v2282
          %3336 = vmatpush.msra.mxu0 %v2274
          %3337 = vmatpush.msra.mxu0 %v2266
          %3338 = vmatpush.msra.mxu0 %v2258
          %3339 = vmatpush.msra.mxu0 %v2250
          %3340 = vmatpush.msra.mxu0 %v2242
          %3341 = vmatmul.f32.gmra.mxu0 %v2231
          %v3342 = vpop.f32.mrf.mxu0
          %v3343 = vadd.f32 %v2756, %v3342
          %3344 = vdwg.mxu0
          %3345 = vmatpush.msra.mxu0 %v2490
          %3346 = vmatpush.msra.mxu0 %v2482
          %3347 = vmatpush.msra.mxu0 %v2474
          %3348 = vmatpush.msra.mxu0 %v2466
          %3349 = vmatpush.msra.mxu0 %v2458
          %3350 = vmatpush.msra.mxu0 %v2450
          %3351 = vmatpush.msra.mxu0 %v2442
          %3352 = vmatpush.msra.mxu0 %v2434
          %3353 = vmatpush.msra.mxu0 %v2426
          %3354 = vmatpush.msra.mxu0 %v2418
          %3355 = vmatpush.msra.mxu0 %v2410
          %3356 = vmatpush.msra.mxu0 %v2402
          %3357 = vmatpush.msra.mxu0 %v2394
          %3358 = vmatpush.msra.mxu0 %v2386
          %3359 = vmatpush.msra.mxu0 %v2378
          %3360 = vmatpush.msra.mxu0 %v2370
          %3361 = vmatmul.f32.gmra.mxu0 %v2232
          %v3362 = vpop.f32.mrf.mxu0
          %v3363 = vadd.f32 %v3343, %v3362
          %3364 = vdwg.mxu0
          %3365 = vmatpush.msra.mxu0 %v2618
          %3366 = vmatpush.msra.mxu0 %v2610
          %3367 = vmatpush.msra.mxu0 %v2602
          %3368 = vmatpush.msra.mxu0 %v2594
          %3369 = vmatpush.msra.mxu0 %v2586
          %3370 = vmatpush.msra.mxu0 %v2578
          %3371 = vmatpush.msra.mxu0 %v2570
          %3372 = vmatpush.msra.mxu0 %v2562
          %3373 = vmatpush.msra.mxu0 %v2554
          %3374 = vmatpush.msra.mxu0 %v2546
          %3375 = vmatpush.msra.mxu0 %v2538
          %3376 = vmatpush.msra.mxu0 %v2530
          %3377 = vmatpush.msra.mxu0 %v2522
          %3378 = vmatpush.msra.mxu0 %v2514
          %3379 = vmatpush.msra.mxu0 %v2506
          %3380 = vmatpush.msra.mxu0 %v2498
          %3381 = vmatmul.f32.gmra.mxu0 %v2233
          %v3382 = vpop.f32.mrf.mxu0
          %v3383 = vadd.f32 %v3363, %v3382
          %3384 = vdwg.mxu0
          %3385 = vmatpush.msra.mxu0 %v2746
          %3386 = vmatpush.msra.mxu0 %v2738
          %3387 = vmatpush.msra.mxu0 %v2730
          %3388 = vmatpush.msra.mxu0 %v2722
          %3389 = vmatpush.msra.mxu0 %v2714
          %3390 = vmatpush.msra.mxu0 %v2706
          %3391 = vmatpush.msra.mxu0 %v2698
          %3392 = vmatpush.msra.mxu0 %v2690
          %3393 = vmatpush.msra.mxu0 %v2682
          %3394 = vmatpush.msra.mxu0 %v2674
          %3395 = vmatpush.msra.mxu0 %v2666
          %3396 = vmatpush.msra.mxu0 %v2658
          %3397 = vmatpush.msra.mxu0 %v2650
          %3398 = vmatpush.msra.mxu0 %v2642
          %3399 = vmatpush.msra.mxu0 %v2634
          %3400 = vmatpush.msra.mxu0 %v2626
          %3401 = vmatmul.f32.gmra.mxu0 %v2234
          %v3402 = vpop.f32.mrf.mxu0
          %v3403 = vadd.f32 %v3383, %v3402
          %3404 = vdwg.mxu0
          %vm3405 = vcmp.ge.f32.partialorder %v2843, 0.0
          %vm3406 = vcmp.ge.f32.partialorder %v2923, 0.0
          %vm3407 = vcmp.ge.f32.partialorder %v3003, 0.0
          %vm3408 = vcmp.ge.f32.partialorder %v3083, 0.0
          %vm3409 = vcmp.ge.f32.partialorder %v3163, 0.0
          %vm3410 = vcmp.ge.f32.partialorder %v3243, 0.0
          %vm3411 = vcmp.ge.f32.partialorder %v3323, 0.0
          %vm3412 = vcmp.ge.f32.partialorder %v3403, 0.0
          %v3413 = vmul.f32 %v2843, 0.01
          %v3414 = vmul.f32 %v2923, 0.01
          %v3415 = vmul.f32 %v3003, 0.01
          %v3416 = vmul.f32 %v3083, 0.01
          %v3417 = vmul.f32 %v3163, 0.01
          %v3418 = vmul.f32 %v3243, 0.01
          %v3419 = vmul.f32 %v3323, 0.01
          %v3420 = vmul.f32 %v3403, 0.01
          %v3421 = vsel %vm3405, %v2843, %v3413
          %v3422 = vsel %vm3406, %v2923, %v3414
          %v3423 = vsel %vm3407, %v3003, %v3415
          %v3424 = vsel %vm3408, %v3083, %v3416
          %v3425 = vsel %vm3409, %v3163, %v3417
          %v3426 = vsel %vm3410, %v3243, %v3418
          %v3427 = vsel %vm3411, %v3323, %v3419
          %v3428 = vsel %vm3412, %v3403, %v3420
          %v3429 = vld [vmem:[#allocation25] sm:$0xff]
          %v3430 = vld [vmem:[#allocation25 + $0x8] sm:$0xff]
          %v3431 = vld [vmem:[#allocation25 + $0x10] sm:$0xff]
          %v3432 = vld [vmem:[#allocation25 + $0x18] sm:$0xff]
          %v3433 = vld [vmem:[#allocation25 + $0x20] sm:$0xff]
          %v3434 = vld [vmem:[#allocation25 + $0x28] sm:$0xff]
          %v3435 = vld [vmem:[#allocation25 + $0x30] sm:$0xff]
          %v3436 = vld [vmem:[#allocation25 + $0x38] sm:$0xff]
          %v3437 = vld [vmem:[#allocation25 + $0x40] sm:$0xff]
          %v3438 = vld [vmem:[#allocation25 + $0x48] sm:$0xff]
          %v3439 = vld [vmem:[#allocation25 + $0x50] sm:$0xff]
          %v3440 = vld [vmem:[#allocation25 + $0x58] sm:$0xff]
          %v3441 = vld [vmem:[#allocation25 + $0x60] sm:$0xff]
          %v3442 = vld [vmem:[#allocation25 + $0x68] sm:$0xff]
          %v3443 = vld [vmem:[#allocation25 + $0x70] sm:$0xff]
          %v3444 = vld [vmem:[#allocation25 + $0x78] sm:$0xff]
          %v3445 = vld [vmem:[#allocation25 + $0x80] sm:$0xff]
          %v3446 = vld [vmem:[#allocation25 + $0x88] sm:$0xff]
          %v3447 = vld [vmem:[#allocation25 + $0x90] sm:$0xff]
          %v3448 = vld [vmem:[#allocation25 + $0x98] sm:$0xff]
          %v3449 = vld [vmem:[#allocation25 + $0xa0] sm:$0xff]
          %v3450 = vld [vmem:[#allocation25 + $0xa8] sm:$0xff]
          %v3451 = vld [vmem:[#allocation25 + $0xb0] sm:$0xff]
          %v3452 = vld [vmem:[#allocation25 + $0xb8] sm:$0xff]
          %v3453 = vld [vmem:[#allocation25 + $0xc0] sm:$0xff]
          %v3454 = vld [vmem:[#allocation25 + $0xc8] sm:$0xff]
          %v3455 = vld [vmem:[#allocation25 + $0xd0] sm:$0xff]
          %v3456 = vld [vmem:[#allocation25 + $0xd8] sm:$0xff]
          %v3457 = vld [vmem:[#allocation25 + $0xe0] sm:$0xff]
          %v3458 = vld [vmem:[#allocation25 + $0xe8] sm:$0xff]
          %v3459 = vld [vmem:[#allocation25 + $0xf0] sm:$0xff]
          %v3460 = vld [vmem:[#allocation25 + $0xf8] sm:$0xff]
          %v3461 = vld [vmem:[#allocation25 + $0x100] sm:$0xff]
          %v3462 = vld [vmem:[#allocation25 + $0x108] sm:$0xff]
          %v3463 = vld [vmem:[#allocation25 + $0x110] sm:$0xff]
          %v3464 = vld [vmem:[#allocation25 + $0x118] sm:$0xff]
          %v3465 = vld [vmem:[#allocation25 + $0x120] sm:$0xff]
          %v3466 = vld [vmem:[#allocation25 + $0x128] sm:$0xff]
          %v3467 = vld [vmem:[#allocation25 + $0x130] sm:$0xff]
          %v3468 = vld [vmem:[#allocation25 + $0x138] sm:$0xff]
          %v3469 = vld [vmem:[#allocation25 + $0x140] sm:$0xff]
          %v3470 = vld [vmem:[#allocation25 + $0x148] sm:$0xff]
          %v3471 = vld [vmem:[#allocation25 + $0x150] sm:$0xff]
          %v3472 = vld [vmem:[#allocation25 + $0x158] sm:$0xff]
          %v3473 = vld [vmem:[#allocation25 + $0x160] sm:$0xff]
          %v3474 = vld [vmem:[#allocation25 + $0x168] sm:$0xff]
          %v3475 = vld [vmem:[#allocation25 + $0x170] sm:$0xff]
          %v3476 = vld [vmem:[#allocation25 + $0x178] sm:$0xff]
          %v3477 = vld [vmem:[#allocation25 + $0x180] sm:$0xff]
          %v3478 = vld [vmem:[#allocation25 + $0x188] sm:$0xff]
          %v3479 = vld [vmem:[#allocation25 + $0x190] sm:$0xff]
          %v3480 = vld [vmem:[#allocation25 + $0x198] sm:$0xff]
          %v3481 = vld [vmem:[#allocation25 + $0x1a0] sm:$0xff]
          %v3482 = vld [vmem:[#allocation25 + $0x1a8] sm:$0xff]
          %v3483 = vld [vmem:[#allocation25 + $0x1b0] sm:$0xff]
          %v3484 = vld [vmem:[#allocation25 + $0x1b8] sm:$0xff]
          %v3485 = vld [vmem:[#allocation25 + $0x1c0] sm:$0xff]
          %v3486 = vld [vmem:[#allocation25 + $0x1c8] sm:$0xff]
          %v3487 = vld [vmem:[#allocation25 + $0x1d0] sm:$0xff]
          %v3488 = vld [vmem:[#allocation25 + $0x1d8] sm:$0xff]
          %v3489 = vld [vmem:[#allocation25 + $0x1e0] sm:$0xff]
          %v3490 = vld [vmem:[#allocation25 + $0x1e8] sm:$0xff]
          %v3491 = vld [vmem:[#allocation25 + $0x1f0] sm:$0xff]
          %v3492 = vld [vmem:[#allocation25 + $0x1f8] sm:$0xff]
          %v3493 = vld [vmem:[#allocation25 + $0x200] sm:$0xff]
          %v3494 = vld [vmem:[#allocation25 + $0x208] sm:$0xff]
          %v3495 = vld [vmem:[#allocation25 + $0x210] sm:$0xff]
          %v3496 = vld [vmem:[#allocation25 + $0x218] sm:$0xff]
          %v3497 = vld [vmem:[#allocation25 + $0x220] sm:$0xff]
          %v3498 = vld [vmem:[#allocation25 + $0x228] sm:$0xff]
          %v3499 = vld [vmem:[#allocation25 + $0x230] sm:$0xff]
          %v3500 = vld [vmem:[#allocation25 + $0x238] sm:$0xff]
          %v3501 = vld [vmem:[#allocation25 + $0x240] sm:$0xff]
          %v3502 = vld [vmem:[#allocation25 + $0x248] sm:$0xff]
          %v3503 = vld [vmem:[#allocation25 + $0x250] sm:$0xff]
          %v3504 = vld [vmem:[#allocation25 + $0x258] sm:$0xff]
          %v3505 = vld [vmem:[#allocation25 + $0x260] sm:$0xff]
          %v3506 = vld [vmem:[#allocation25 + $0x268] sm:$0xff]
          %v3507 = vld [vmem:[#allocation25 + $0x270] sm:$0xff]
          %v3508 = vld [vmem:[#allocation25 + $0x278] sm:$0xff]
          %v3509 = vld [vmem:[#allocation25 + $0x280] sm:$0xff]
          %v3510 = vld [vmem:[#allocation25 + $0x288] sm:$0xff]
          %v3511 = vld [vmem:[#allocation25 + $0x290] sm:$0xff]
          %v3512 = vld [vmem:[#allocation25 + $0x298] sm:$0xff]
          %v3513 = vld [vmem:[#allocation25 + $0x2a0] sm:$0xff]
          %v3514 = vld [vmem:[#allocation25 + $0x2a8] sm:$0xff]
          %v3515 = vld [vmem:[#allocation25 + $0x2b0] sm:$0xff]
          %v3516 = vld [vmem:[#allocation25 + $0x2b8] sm:$0xff]
          %v3517 = vld [vmem:[#allocation25 + $0x2c0] sm:$0xff]
          %v3518 = vld [vmem:[#allocation25 + $0x2c8] sm:$0xff]
          %v3519 = vld [vmem:[#allocation25 + $0x2d0] sm:$0xff]
          %v3520 = vld [vmem:[#allocation25 + $0x2d8] sm:$0xff]
          %v3521 = vld [vmem:[#allocation25 + $0x2e0] sm:$0xff]
          %v3522 = vld [vmem:[#allocation25 + $0x2e8] sm:$0xff]
          %v3523 = vld [vmem:[#allocation25 + $0x2f0] sm:$0xff]
          %v3524 = vld [vmem:[#allocation25 + $0x2f8] sm:$0xff]
          %v3525 = vld [vmem:[#allocation25 + $0x300] sm:$0xff]
          %v3526 = vld [vmem:[#allocation25 + $0x308] sm:$0xff]
          %v3527 = vld [vmem:[#allocation25 + $0x310] sm:$0xff]
          %v3528 = vld [vmem:[#allocation25 + $0x318] sm:$0xff]
          %v3529 = vld [vmem:[#allocation25 + $0x320] sm:$0xff]
          %v3530 = vld [vmem:[#allocation25 + $0x328] sm:$0xff]
          %v3531 = vld [vmem:[#allocation25 + $0x330] sm:$0xff]
          %v3532 = vld [vmem:[#allocation25 + $0x338] sm:$0xff]
          %v3533 = vld [vmem:[#allocation25 + $0x340] sm:$0xff]
          %v3534 = vld [vmem:[#allocation25 + $0x348] sm:$0xff]
          %v3535 = vld [vmem:[#allocation25 + $0x350] sm:$0xff]
          %v3536 = vld [vmem:[#allocation25 + $0x358] sm:$0xff]
          %v3537 = vld [vmem:[#allocation25 + $0x360] sm:$0xff]
          %v3538 = vld [vmem:[#allocation25 + $0x368] sm:$0xff]
          %v3539 = vld [vmem:[#allocation25 + $0x370] sm:$0xff]
          %v3540 = vld [vmem:[#allocation25 + $0x378] sm:$0xff]
          %v3541 = vld [vmem:[#allocation25 + $0x380] sm:$0xff]
          %v3542 = vld [vmem:[#allocation25 + $0x388] sm:$0xff]
          %v3543 = vld [vmem:[#allocation25 + $0x390] sm:$0xff]
          %v3544 = vld [vmem:[#allocation25 + $0x398] sm:$0xff]
          %v3545 = vld [vmem:[#allocation25 + $0x3a0] sm:$0xff]
          %v3546 = vld [vmem:[#allocation25 + $0x3a8] sm:$0xff]
          %v3547 = vld [vmem:[#allocation25 + $0x3b0] sm:$0xff]
          %v3548 = vld [vmem:[#allocation25 + $0x3b8] sm:$0xff]
          %v3549 = vld [vmem:[#allocation25 + $0x3c0] sm:$0xff]
          %v3550 = vld [vmem:[#allocation25 + $0x3c8] sm:$0xff]
          %v3551 = vld [vmem:[#allocation25 + $0x3d0] sm:$0xff]
          %v3552 = vld [vmem:[#allocation25 + $0x3d8] sm:$0xff]
          %v3553 = vld [vmem:[#allocation25 + $0x3e0] sm:$0xff]
          %v3554 = vld [vmem:[#allocation25 + $0x3e8] sm:$0xff]
          %v3555 = vld [vmem:[#allocation25 + $0x3f0] sm:$0xff]
          %v3556 = vld [vmem:[#allocation25 + $0x3f8] sm:$0xff]
          %v3557 = vld [vmem:[#allocation25 + $0x400] sm:$0xff]
          %v3558 = vld [vmem:[#allocation25 + $0x408] sm:$0xff]
          %v3559 = vld [vmem:[#allocation25 + $0x410] sm:$0xff]
          %v3560 = vld [vmem:[#allocation25 + $0x418] sm:$0xff]
          %v3561 = vld [vmem:[#allocation25 + $0x420] sm:$0xff]
          %v3562 = vld [vmem:[#allocation25 + $0x428] sm:$0xff]
          %v3563 = vld [vmem:[#allocation25 + $0x430] sm:$0xff]
          %v3564 = vld [vmem:[#allocation25 + $0x438] sm:$0xff]
          %v3565 = vld [vmem:[#allocation25 + $0x440] sm:$0xff]
          %v3566 = vld [vmem:[#allocation25 + $0x448] sm:$0xff]
          %v3567 = vld [vmem:[#allocation25 + $0x450] sm:$0xff]
          %v3568 = vld [vmem:[#allocation25 + $0x458] sm:$0xff]
          %v3569 = vld [vmem:[#allocation25 + $0x460] sm:$0xff]
          %v3570 = vld [vmem:[#allocation25 + $0x468] sm:$0xff]
          %v3571 = vld [vmem:[#allocation25 + $0x470] sm:$0xff]
          %v3572 = vld [vmem:[#allocation25 + $0x478] sm:$0xff]
          %v3573 = vld [vmem:[#allocation25 + $0x480] sm:$0xff]
          %v3574 = vld [vmem:[#allocation25 + $0x488] sm:$0xff]
          %v3575 = vld [vmem:[#allocation25 + $0x490] sm:$0xff]
          %v3576 = vld [vmem:[#allocation25 + $0x498] sm:$0xff]
          %v3577 = vld [vmem:[#allocation25 + $0x4a0] sm:$0xff]
          %v3578 = vld [vmem:[#allocation25 + $0x4a8] sm:$0xff]
          %v3579 = vld [vmem:[#allocation25 + $0x4b0] sm:$0xff]
          %v3580 = vld [vmem:[#allocation25 + $0x4b8] sm:$0xff]
          %v3581 = vld [vmem:[#allocation25 + $0x4c0] sm:$0xff]
          %v3582 = vld [vmem:[#allocation25 + $0x4c8] sm:$0xff]
          %v3583 = vld [vmem:[#allocation25 + $0x4d0] sm:$0xff]
          %v3584 = vld [vmem:[#allocation25 + $0x4d8] sm:$0xff]
          %v3585 = vld [vmem:[#allocation25 + $0x4e0] sm:$0xff]
          %v3586 = vld [vmem:[#allocation25 + $0x4e8] sm:$0xff]
          %v3587 = vld [vmem:[#allocation25 + $0x4f0] sm:$0xff]
          %v3588 = vld [vmem:[#allocation25 + $0x4f8] sm:$0xff]
          %v3589 = vld [vmem:[#allocation25 + $0x500] sm:$0xff]
          %v3590 = vld [vmem:[#allocation25 + $0x508] sm:$0xff]
          %v3591 = vld [vmem:[#allocation25 + $0x510] sm:$0xff]
          %v3592 = vld [vmem:[#allocation25 + $0x518] sm:$0xff]
          %v3593 = vld [vmem:[#allocation25 + $0x520] sm:$0xff]
          %v3594 = vld [vmem:[#allocation25 + $0x528] sm:$0xff]
          %v3595 = vld [vmem:[#allocation25 + $0x530] sm:$0xff]
          %v3596 = vld [vmem:[#allocation25 + $0x538] sm:$0xff]
          %v3597 = vld [vmem:[#allocation25 + $0x540] sm:$0xff]
          %v3598 = vld [vmem:[#allocation25 + $0x548] sm:$0xff]
          %v3599 = vld [vmem:[#allocation25 + $0x550] sm:$0xff]
          %v3600 = vld [vmem:[#allocation25 + $0x558] sm:$0xff]
          %v3601 = vld [vmem:[#allocation25 + $0x560] sm:$0xff]
          %v3602 = vld [vmem:[#allocation25 + $0x568] sm:$0xff]
          %v3603 = vld [vmem:[#allocation25 + $0x570] sm:$0xff]
          %v3604 = vld [vmem:[#allocation25 + $0x578] sm:$0xff]
          %v3605 = vld [vmem:[#allocation25 + $0x580] sm:$0xff]
          %v3606 = vld [vmem:[#allocation25 + $0x588] sm:$0xff]
          %v3607 = vld [vmem:[#allocation25 + $0x590] sm:$0xff]
          %v3608 = vld [vmem:[#allocation25 + $0x598] sm:$0xff]
          %v3609 = vld [vmem:[#allocation25 + $0x5a0] sm:$0xff]
          %v3610 = vld [vmem:[#allocation25 + $0x5a8] sm:$0xff]
          %v3611 = vld [vmem:[#allocation25 + $0x5b0] sm:$0xff]
          %v3612 = vld [vmem:[#allocation25 + $0x5b8] sm:$0xff]
          %v3613 = vld [vmem:[#allocation25 + $0x5c0] sm:$0xff]
          %v3614 = vld [vmem:[#allocation25 + $0x5c8] sm:$0xff]
          %v3615 = vld [vmem:[#allocation25 + $0x5d0] sm:$0xff]
          %v3616 = vld [vmem:[#allocation25 + $0x5d8] sm:$0xff]
          %v3617 = vld [vmem:[#allocation25 + $0x5e0] sm:$0xff]
          %v3618 = vld [vmem:[#allocation25 + $0x5e8] sm:$0xff]
          %v3619 = vld [vmem:[#allocation25 + $0x5f0] sm:$0xff]
          %v3620 = vld [vmem:[#allocation25 + $0x5f8] sm:$0xff]
          %v3621 = vld [vmem:[#allocation25 + $0x600] sm:$0xff]
          %v3622 = vld [vmem:[#allocation25 + $0x608] sm:$0xff]
          %v3623 = vld [vmem:[#allocation25 + $0x610] sm:$0xff]
          %v3624 = vld [vmem:[#allocation25 + $0x618] sm:$0xff]
          %v3625 = vld [vmem:[#allocation25 + $0x620] sm:$0xff]
          %v3626 = vld [vmem:[#allocation25 + $0x628] sm:$0xff]
          %v3627 = vld [vmem:[#allocation25 + $0x630] sm:$0xff]
          %v3628 = vld [vmem:[#allocation25 + $0x638] sm:$0xff]
          %v3629 = vld [vmem:[#allocation25 + $0x640] sm:$0xff]
          %v3630 = vld [vmem:[#allocation25 + $0x648] sm:$0xff]
          %v3631 = vld [vmem:[#allocation25 + $0x650] sm:$0xff]
          %v3632 = vld [vmem:[#allocation25 + $0x658] sm:$0xff]
          %v3633 = vld [vmem:[#allocation25 + $0x660] sm:$0xff]
          %v3634 = vld [vmem:[#allocation25 + $0x668] sm:$0xff]
          %v3635 = vld [vmem:[#allocation25 + $0x670] sm:$0xff]
          %v3636 = vld [vmem:[#allocation25 + $0x678] sm:$0xff]
          %v3637 = vld [vmem:[#allocation25 + $0x680] sm:$0xff]
          %v3638 = vld [vmem:[#allocation25 + $0x688] sm:$0xff]
          %v3639 = vld [vmem:[#allocation25 + $0x690] sm:$0xff]
          %v3640 = vld [vmem:[#allocation25 + $0x698] sm:$0xff]
          %v3641 = vld [vmem:[#allocation25 + $0x6a0] sm:$0xff]
          %v3642 = vld [vmem:[#allocation25 + $0x6a8] sm:$0xff]
          %v3643 = vld [vmem:[#allocation25 + $0x6b0] sm:$0xff]
          %v3644 = vld [vmem:[#allocation25 + $0x6b8] sm:$0xff]
          %v3645 = vld [vmem:[#allocation25 + $0x6c0] sm:$0xff]
          %v3646 = vld [vmem:[#allocation25 + $0x6c8] sm:$0xff]
          %v3647 = vld [vmem:[#allocation25 + $0x6d0] sm:$0xff]
          %v3648 = vld [vmem:[#allocation25 + $0x6d8] sm:$0xff]
          %v3649 = vld [vmem:[#allocation25 + $0x6e0] sm:$0xff]
          %v3650 = vld [vmem:[#allocation25 + $0x6e8] sm:$0xff]
          %v3651 = vld [vmem:[#allocation25 + $0x6f0] sm:$0xff]
          %v3652 = vld [vmem:[#allocation25 + $0x6f8] sm:$0xff]
          %v3653 = vld [vmem:[#allocation25 + $0x700] sm:$0xff]
          %v3654 = vld [vmem:[#allocation25 + $0x708] sm:$0xff]
          %v3655 = vld [vmem:[#allocation25 + $0x710] sm:$0xff]
          %v3656 = vld [vmem:[#allocation25 + $0x718] sm:$0xff]
          %v3657 = vld [vmem:[#allocation25 + $0x720] sm:$0xff]
          %v3658 = vld [vmem:[#allocation25 + $0x728] sm:$0xff]
          %v3659 = vld [vmem:[#allocation25 + $0x730] sm:$0xff]
          %v3660 = vld [vmem:[#allocation25 + $0x738] sm:$0xff]
          %v3661 = vld [vmem:[#allocation25 + $0x740] sm:$0xff]
          %v3662 = vld [vmem:[#allocation25 + $0x748] sm:$0xff]
          %v3663 = vld [vmem:[#allocation25 + $0x750] sm:$0xff]
          %v3664 = vld [vmem:[#allocation25 + $0x758] sm:$0xff]
          %v3665 = vld [vmem:[#allocation25 + $0x760] sm:$0xff]
          %v3666 = vld [vmem:[#allocation25 + $0x768] sm:$0xff]
          %v3667 = vld [vmem:[#allocation25 + $0x770] sm:$0xff]
          %v3668 = vld [vmem:[#allocation25 + $0x778] sm:$0xff]
          %v3669 = vld [vmem:[#allocation25 + $0x780] sm:$0xff]
          %v3670 = vld [vmem:[#allocation25 + $0x788] sm:$0xff]
          %v3671 = vld [vmem:[#allocation25 + $0x790] sm:$0xff]
          %v3672 = vld [vmem:[#allocation25 + $0x798] sm:$0xff]
          %v3673 = vld [vmem:[#allocation25 + $0x7a0] sm:$0xff]
          %v3674 = vld [vmem:[#allocation25 + $0x7a8] sm:$0xff]
          %v3675 = vld [vmem:[#allocation25 + $0x7b0] sm:$0xff]
          %v3676 = vld [vmem:[#allocation25 + $0x7b8] sm:$0xff]
          %v3677 = vld [vmem:[#allocation25 + $0x7c0] sm:$0xff]
          %v3678 = vld [vmem:[#allocation25 + $0x7c8] sm:$0xff]
          %v3679 = vld [vmem:[#allocation25 + $0x7d0] sm:$0xff]
          %v3680 = vld [vmem:[#allocation25 + $0x7d8] sm:$0xff]
          %v3681 = vld [vmem:[#allocation25 + $0x7e0] sm:$0xff]
          %v3682 = vld [vmem:[#allocation25 + $0x7e8] sm:$0xff]
          %v3683 = vld [vmem:[#allocation25 + $0x7f0] sm:$0xff]
          %v3684 = vld [vmem:[#allocation25 + $0x7f8] sm:$0xff]
          %v3685 = vld [vmem:[#allocation25 + $0x800] sm:$0xff]
          %v3686 = vld [vmem:[#allocation25 + $0x808] sm:$0xff]
          %v3687 = vld [vmem:[#allocation25 + $0x810] sm:$0xff]
          %v3688 = vld [vmem:[#allocation25 + $0x818] sm:$0xff]
          %v3689 = vld [vmem:[#allocation25 + $0x820] sm:$0xff]
          %v3690 = vld [vmem:[#allocation25 + $0x828] sm:$0xff]
          %v3691 = vld [vmem:[#allocation25 + $0x830] sm:$0xff]
          %v3692 = vld [vmem:[#allocation25 + $0x838] sm:$0xff]
          %v3693 = vld [vmem:[#allocation25 + $0x840] sm:$0xff]
          %v3694 = vld [vmem:[#allocation25 + $0x848] sm:$0xff]
          %v3695 = vld [vmem:[#allocation25 + $0x850] sm:$0xff]
          %v3696 = vld [vmem:[#allocation25 + $0x858] sm:$0xff]
          %v3697 = vld [vmem:[#allocation25 + $0x860] sm:$0xff]
          %v3698 = vld [vmem:[#allocation25 + $0x868] sm:$0xff]
          %v3699 = vld [vmem:[#allocation25 + $0x870] sm:$0xff]
          %v3700 = vld [vmem:[#allocation25 + $0x878] sm:$0xff]
          %v3701 = vld [vmem:[#allocation25 + $0x880] sm:$0xff]
          %v3702 = vld [vmem:[#allocation25 + $0x888] sm:$0xff]
          %v3703 = vld [vmem:[#allocation25 + $0x890] sm:$0xff]
          %v3704 = vld [vmem:[#allocation25 + $0x898] sm:$0xff]
          %v3705 = vld [vmem:[#allocation25 + $0x8a0] sm:$0xff]
          %v3706 = vld [vmem:[#allocation25 + $0x8a8] sm:$0xff]
          %v3707 = vld [vmem:[#allocation25 + $0x8b0] sm:$0xff]
          %v3708 = vld [vmem:[#allocation25 + $0x8b8] sm:$0xff]
          %v3709 = vld [vmem:[#allocation25 + $0x8c0] sm:$0xff]
          %v3710 = vld [vmem:[#allocation25 + $0x8c8] sm:$0xff]
          %v3711 = vld [vmem:[#allocation25 + $0x8d0] sm:$0xff]
          %v3712 = vld [vmem:[#allocation25 + $0x8d8] sm:$0xff]
          %v3713 = vld [vmem:[#allocation25 + $0x8e0] sm:$0xff]
          %v3714 = vld [vmem:[#allocation25 + $0x8e8] sm:$0xff]
          %v3715 = vld [vmem:[#allocation25 + $0x8f0] sm:$0xff]
          %v3716 = vld [vmem:[#allocation25 + $0x8f8] sm:$0xff]
          %v3717 = vld [vmem:[#allocation25 + $0x900] sm:$0xff]
          %v3718 = vld [vmem:[#allocation25 + $0x908] sm:$0xff]
          %v3719 = vld [vmem:[#allocation25 + $0x910] sm:$0xff]
          %v3720 = vld [vmem:[#allocation25 + $0x918] sm:$0xff]
          %v3721 = vld [vmem:[#allocation25 + $0x920] sm:$0xff]
          %v3722 = vld [vmem:[#allocation25 + $0x928] sm:$0xff]
          %v3723 = vld [vmem:[#allocation25 + $0x930] sm:$0xff]
          %v3724 = vld [vmem:[#allocation25 + $0x938] sm:$0xff]
          %v3725 = vld [vmem:[#allocation25 + $0x940] sm:$0xff]
          %v3726 = vld [vmem:[#allocation25 + $0x948] sm:$0xff]
          %v3727 = vld [vmem:[#allocation25 + $0x950] sm:$0xff]
          %v3728 = vld [vmem:[#allocation25 + $0x958] sm:$0xff]
          %v3729 = vld [vmem:[#allocation25 + $0x960] sm:$0xff]
          %v3730 = vld [vmem:[#allocation25 + $0x968] sm:$0xff]
          %v3731 = vld [vmem:[#allocation25 + $0x970] sm:$0xff]
          %v3732 = vld [vmem:[#allocation25 + $0x978] sm:$0xff]
          %v3733 = vld [vmem:[#allocation25 + $0x980] sm:$0xff]
          %v3734 = vld [vmem:[#allocation25 + $0x988] sm:$0xff]
          %v3735 = vld [vmem:[#allocation25 + $0x990] sm:$0xff]
          %v3736 = vld [vmem:[#allocation25 + $0x998] sm:$0xff]
          %v3737 = vld [vmem:[#allocation25 + $0x9a0] sm:$0xff]
          %v3738 = vld [vmem:[#allocation25 + $0x9a8] sm:$0xff]
          %v3739 = vld [vmem:[#allocation25 + $0x9b0] sm:$0xff]
          %v3740 = vld [vmem:[#allocation25 + $0x9b8] sm:$0xff]
          %v3741 = vld [vmem:[#allocation25 + $0x9c0] sm:$0xff]
          %v3742 = vld [vmem:[#allocation25 + $0x9c8] sm:$0xff]
          %v3743 = vld [vmem:[#allocation25 + $0x9d0] sm:$0xff]
          %v3744 = vld [vmem:[#allocation25 + $0x9d8] sm:$0xff]
          %v3745 = vld [vmem:[#allocation25 + $0x9e0] sm:$0xff]
          %v3746 = vld [vmem:[#allocation25 + $0x9e8] sm:$0xff]
          %v3747 = vld [vmem:[#allocation25 + $0x9f0] sm:$0xff]
          %v3748 = vld [vmem:[#allocation25 + $0x9f8] sm:$0xff]
          %v3749 = vld [vmem:[#allocation25 + $0xa00] sm:$0xff]
          %v3750 = vld [vmem:[#allocation25 + $0xa08] sm:$0xff]
          %v3751 = vld [vmem:[#allocation25 + $0xa10] sm:$0xff]
          %v3752 = vld [vmem:[#allocation25 + $0xa18] sm:$0xff]
          %v3753 = vld [vmem:[#allocation25 + $0xa20] sm:$0xff]
          %v3754 = vld [vmem:[#allocation25 + $0xa28] sm:$0xff]
          %v3755 = vld [vmem:[#allocation25 + $0xa30] sm:$0xff]
          %v3756 = vld [vmem:[#allocation25 + $0xa38] sm:$0xff]
          %v3757 = vld [vmem:[#allocation25 + $0xa40] sm:$0xff]
          %v3758 = vld [vmem:[#allocation25 + $0xa48] sm:$0xff]
          %v3759 = vld [vmem:[#allocation25 + $0xa50] sm:$0xff]
          %v3760 = vld [vmem:[#allocation25 + $0xa58] sm:$0xff]
          %v3761 = vld [vmem:[#allocation25 + $0xa60] sm:$0xff]
          %v3762 = vld [vmem:[#allocation25 + $0xa68] sm:$0xff]
          %v3763 = vld [vmem:[#allocation25 + $0xa70] sm:$0xff]
          %v3764 = vld [vmem:[#allocation25 + $0xa78] sm:$0xff]
          %v3765 = vld [vmem:[#allocation25 + $0xa80] sm:$0xff]
          %v3766 = vld [vmem:[#allocation25 + $0xa88] sm:$0xff]
          %v3767 = vld [vmem:[#allocation25 + $0xa90] sm:$0xff]
          %v3768 = vld [vmem:[#allocation25 + $0xa98] sm:$0xff]
          %v3769 = vld [vmem:[#allocation25 + $0xaa0] sm:$0xff]
          %v3770 = vld [vmem:[#allocation25 + $0xaa8] sm:$0xff]
          %v3771 = vld [vmem:[#allocation25 + $0xab0] sm:$0xff]
          %v3772 = vld [vmem:[#allocation25 + $0xab8] sm:$0xff]
          %v3773 = vld [vmem:[#allocation25 + $0xac0] sm:$0xff]
          %v3774 = vld [vmem:[#allocation25 + $0xac8] sm:$0xff]
          %v3775 = vld [vmem:[#allocation25 + $0xad0] sm:$0xff]
          %v3776 = vld [vmem:[#allocation25 + $0xad8] sm:$0xff]
          %v3777 = vld [vmem:[#allocation25 + $0xae0] sm:$0xff]
          %v3778 = vld [vmem:[#allocation25 + $0xae8] sm:$0xff]
          %v3779 = vld [vmem:[#allocation25 + $0xaf0] sm:$0xff]
          %v3780 = vld [vmem:[#allocation25 + $0xaf8] sm:$0xff]
          %v3781 = vld [vmem:[#allocation25 + $0xb00] sm:$0xff]
          %v3782 = vld [vmem:[#allocation25 + $0xb08] sm:$0xff]
          %v3783 = vld [vmem:[#allocation25 + $0xb10] sm:$0xff]
          %v3784 = vld [vmem:[#allocation25 + $0xb18] sm:$0xff]
          %v3785 = vld [vmem:[#allocation25 + $0xb20] sm:$0xff]
          %v3786 = vld [vmem:[#allocation25 + $0xb28] sm:$0xff]
          %v3787 = vld [vmem:[#allocation25 + $0xb30] sm:$0xff]
          %v3788 = vld [vmem:[#allocation25 + $0xb38] sm:$0xff]
          %v3789 = vld [vmem:[#allocation25 + $0xb40] sm:$0xff]
          %v3790 = vld [vmem:[#allocation25 + $0xb48] sm:$0xff]
          %v3791 = vld [vmem:[#allocation25 + $0xb50] sm:$0xff]
          %v3792 = vld [vmem:[#allocation25 + $0xb58] sm:$0xff]
          %v3793 = vld [vmem:[#allocation25 + $0xb60] sm:$0xff]
          %v3794 = vld [vmem:[#allocation25 + $0xb68] sm:$0xff]
          %v3795 = vld [vmem:[#allocation25 + $0xb70] sm:$0xff]
          %v3796 = vld [vmem:[#allocation25 + $0xb78] sm:$0xff]
          %v3797 = vld [vmem:[#allocation25 + $0xb80] sm:$0xff]
          %v3798 = vld [vmem:[#allocation25 + $0xb88] sm:$0xff]
          %v3799 = vld [vmem:[#allocation25 + $0xb90] sm:$0xff]
          %v3800 = vld [vmem:[#allocation25 + $0xb98] sm:$0xff]
          %v3801 = vld [vmem:[#allocation25 + $0xba0] sm:$0xff]
          %v3802 = vld [vmem:[#allocation25 + $0xba8] sm:$0xff]
          %v3803 = vld [vmem:[#allocation25 + $0xbb0] sm:$0xff]
          %v3804 = vld [vmem:[#allocation25 + $0xbb8] sm:$0xff]
          %v3805 = vld [vmem:[#allocation25 + $0xbc0] sm:$0xff]
          %v3806 = vld [vmem:[#allocation25 + $0xbc8] sm:$0xff]
          %v3807 = vld [vmem:[#allocation25 + $0xbd0] sm:$0xff]
          %v3808 = vld [vmem:[#allocation25 + $0xbd8] sm:$0xff]
          %v3809 = vld [vmem:[#allocation25 + $0xbe0] sm:$0xff]
          %v3810 = vld [vmem:[#allocation25 + $0xbe8] sm:$0xff]
          %v3811 = vld [vmem:[#allocation25 + $0xbf0] sm:$0xff]
          %v3812 = vld [vmem:[#allocation25 + $0xbf8] sm:$0xff]
          %v3813 = vld [vmem:[#allocation26] sm:$0x7]
          %v3815 = vperm.slane %v3813, 0
          %v3816 = vperm.slane %v3813, 1
          %v3817 = vperm.slane %v3813, 2
          %3821 = vmatpush.msra.mxu0 %v3474
          %3822 = vmatpush.msra.mxu0 %v3471
          %3823 = vmatpush.msra.mxu0 %v3468
          %3824 = vmatpush.msra.mxu0 %v3465
          %3825 = vmatpush.msra.mxu0 %v3462
          %3826 = vmatpush.msra.mxu0 %v3459
          %3827 = vmatpush.msra.mxu0 %v3456
          %3828 = vmatpush.msra.mxu0 %v3453
          %3829 = vmatpush.msra.mxu0 %v3450
          %3830 = vmatpush.msra.mxu0 %v3447
          %3831 = vmatpush.msra.mxu0 %v3444
          %3832 = vmatpush.msra.mxu0 %v3441
          %3833 = vmatpush.msra.mxu0 %v3438
          %3834 = vmatpush.msra.mxu0 %v3435
          %3835 = vmatpush.msra.mxu0 %v3432
          %3836 = vmatpush.msra.mxu0 %v3429
          %3837 = vmatmul.f32.gmra.mxu0 %v3421
          %v3838 = vpop.f32.mrf.mxu0
          %v3839 = vadd.f32 %v3815, %v3838
          %3840 = vdwg.mxu0
          %3841 = vmatpush.msra.mxu0 %v3522
          %3842 = vmatpush.msra.mxu0 %v3519
          %3843 = vmatpush.msra.mxu0 %v3516
          %3844 = vmatpush.msra.mxu0 %v3513
          %3845 = vmatpush.msra.mxu0 %v3510
          %3846 = vmatpush.msra.mxu0 %v3507
          %3847 = vmatpush.msra.mxu0 %v3504
          %3848 = vmatpush.msra.mxu0 %v3501
          %3849 = vmatpush.msra.mxu0 %v3498
          %3850 = vmatpush.msra.mxu0 %v3495
          %3851 = vmatpush.msra.mxu0 %v3492
          %3852 = vmatpush.msra.mxu0 %v3489
          %3853 = vmatpush.msra.mxu0 %v3486
          %3854 = vmatpush.msra.mxu0 %v3483
          %3855 = vmatpush.msra.mxu0 %v3480
          %3856 = vmatpush.msra.mxu0 %v3477
          %3857 = vmatmul.f32.gmra.mxu0 %v3422
          %v3858 = vpop.f32.mrf.mxu0
          %v3859 = vadd.f32 %v3839, %v3858
          %3860 = vdwg.mxu0
          %3861 = vmatpush.msra.mxu0 %v3570
          %3862 = vmatpush.msra.mxu0 %v3567
          %3863 = vmatpush.msra.mxu0 %v3564
          %3864 = vmatpush.msra.mxu0 %v3561
          %3865 = vmatpush.msra.mxu0 %v3558
          %3866 = vmatpush.msra.mxu0 %v3555
          %3867 = vmatpush.msra.mxu0 %v3552
          %3868 = vmatpush.msra.mxu0 %v3549
          %3869 = vmatpush.msra.mxu0 %v3546
          %3870 = vmatpush.msra.mxu0 %v3543
          %3871 = vmatpush.msra.mxu0 %v3540
          %3872 = vmatpush.msra.mxu0 %v3537
          %3873 = vmatpush.msra.mxu0 %v3534
          %3874 = vmatpush.msra.mxu0 %v3531
          %3875 = vmatpush.msra.mxu0 %v3528
          %3876 = vmatpush.msra.mxu0 %v3525
          %3877 = vmatmul.f32.gmra.mxu0 %v3423
          %v3878 = vpop.f32.mrf.mxu0
          %v3879 = vadd.f32 %v3859, %v3878
          %3880 = vdwg.mxu0
          %3881 = vmatpush.msra.mxu0 %v3618
          %3882 = vmatpush.msra.mxu0 %v3615
          %3883 = vmatpush.msra.mxu0 %v3612
          %3884 = vmatpush.msra.mxu0 %v3609
          %3885 = vmatpush.msra.mxu0 %v3606
          %3886 = vmatpush.msra.mxu0 %v3603
          %3887 = vmatpush.msra.mxu0 %v3600
          %3888 = vmatpush.msra.mxu0 %v3597
          %3889 = vmatpush.msra.mxu0 %v3594
          %3890 = vmatpush.msra.mxu0 %v3591
          %3891 = vmatpush.msra.mxu0 %v3588
          %3892 = vmatpush.msra.mxu0 %v3585
          %3893 = vmatpush.msra.mxu0 %v3582
          %3894 = vmatpush.msra.mxu0 %v3579
          %3895 = vmatpush.msra.mxu0 %v3576
          %3896 = vmatpush.msra.mxu0 %v3573
          %3897 = vmatmul.f32.gmra.mxu0 %v3424
          %v3898 = vpop.f32.mrf.mxu0
          %v3899 = vadd.f32 %v3879, %v3898
          %3900 = vdwg.mxu0
          %3901 = vmatpush.msra.mxu0 %v3666
          %3902 = vmatpush.msra.mxu0 %v3663
          %3903 = vmatpush.msra.mxu0 %v3660
          %3904 = vmatpush.msra.mxu0 %v3657
          %3905 = vmatpush.msra.mxu0 %v3654
          %3906 = vmatpush.msra.mxu0 %v3651
          %3907 = vmatpush.msra.mxu0 %v3648
          %3908 = vmatpush.msra.mxu0 %v3645
          %3909 = vmatpush.msra.mxu0 %v3642
          %3910 = vmatpush.msra.mxu0 %v3639
          %3911 = vmatpush.msra.mxu0 %v3636
          %3912 = vmatpush.msra.mxu0 %v3633
          %3913 = vmatpush.msra.mxu0 %v3630
          %3914 = vmatpush.msra.mxu0 %v3627
          %3915 = vmatpush.msra.mxu0 %v3624
          %3916 = vmatpush.msra.mxu0 %v3621
          %3917 = vmatmul.f32.gmra.mxu0 %v3425
          %v3918 = vpop.f32.mrf.mxu0
          %v3919 = vadd.f32 %v3899, %v3918
          %3920 = vdwg.mxu0
          %3921 = vmatpush.msra.mxu0 %v3714
          %3922 = vmatpush.msra.mxu0 %v3711
          %3923 = vmatpush.msra.mxu0 %v3708
          %3924 = vmatpush.msra.mxu0 %v3705
          %3925 = vmatpush.msra.mxu0 %v3702
          %3926 = vmatpush.msra.mxu0 %v3699
          %3927 = vmatpush.msra.mxu0 %v3696
          %3928 = vmatpush.msra.mxu0 %v3693
          %3929 = vmatpush.msra.mxu0 %v3690
          %3930 = vmatpush.msra.mxu0 %v3687
          %3931 = vmatpush.msra.mxu0 %v3684
          %3932 = vmatpush.msra.mxu0 %v3681
          %3933 = vmatpush.msra.mxu0 %v3678
          %3934 = vmatpush.msra.mxu0 %v3675
          %3935 = vmatpush.msra.mxu0 %v3672
          %3936 = vmatpush.msra.mxu0 %v3669
          %3937 = vmatmul.f32.gmra.mxu0 %v3426
          %v3938 = vpop.f32.mrf.mxu0
          %v3939 = vadd.f32 %v3919, %v3938
          %3940 = vdwg.mxu0
          %3941 = vmatpush.msra.mxu0 %v3762
          %3942 = vmatpush.msra.mxu0 %v3759
          %3943 = vmatpush.msra.mxu0 %v3756
          %3944 = vmatpush.msra.mxu0 %v3753
          %3945 = vmatpush.msra.mxu0 %v3750
          %3946 = vmatpush.msra.mxu0 %v3747
          %3947 = vmatpush.msra.mxu0 %v3744
          %3948 = vmatpush.msra.mxu0 %v3741
          %3949 = vmatpush.msra.mxu0 %v3738
          %3950 = vmatpush.msra.mxu0 %v3735
          %3951 = vmatpush.msra.mxu0 %v3732
          %3952 = vmatpush.msra.mxu0 %v3729
          %3953 = vmatpush.msra.mxu0 %v3726
          %3954 = vmatpush.msra.mxu0 %v3723
          %3955 = vmatpush.msra.mxu0 %v3720
          %3956 = vmatpush.msra.mxu0 %v3717
          %3957 = vmatmul.f32.gmra.mxu0 %v3427
          %v3958 = vpop.f32.mrf.mxu0
          %v3959 = vadd.f32 %v3939, %v3958
          %3960 = vdwg.mxu0
          %3961 = vmatpush.msra.mxu0 %v3810
          %3962 = vmatpush.msra.mxu0 %v3807
          %3963 = vmatpush.msra.mxu0 %v3804
          %3964 = vmatpush.msra.mxu0 %v3801
          %3965 = vmatpush.msra.mxu0 %v3798
          %3966 = vmatpush.msra.mxu0 %v3795
          %3967 = vmatpush.msra.mxu0 %v3792
          %3968 = vmatpush.msra.mxu0 %v3789
          %3969 = vmatpush.msra.mxu0 %v3786
          %3970 = vmatpush.msra.mxu0 %v3783
          %3971 = vmatpush.msra.mxu0 %v3780
          %3972 = vmatpush.msra.mxu0 %v3777
          %3973 = vmatpush.msra.mxu0 %v3774
          %3974 = vmatpush.msra.mxu0 %v3771
          %3975 = vmatpush.msra.mxu0 %v3768
          %3976 = vmatpush.msra.mxu0 %v3765
          %3977 = vmatmul.f32.gmra.mxu0 %v3428
          %v3978 = vpop.f32.mrf.mxu0
          %v3979 = vadd.f32 %v3959, %v3978
          %3980 = vdwg.mxu0
          %3981 = vmatpush.msra.mxu0 %v3475
          %3982 = vmatpush.msra.mxu0 %v3472
          %3983 = vmatpush.msra.mxu0 %v3469
          %3984 = vmatpush.msra.mxu0 %v3466
          %3985 = vmatpush.msra.mxu0 %v3463
          %3986 = vmatpush.msra.mxu0 %v3460
          %3987 = vmatpush.msra.mxu0 %v3457
          %3988 = vmatpush.msra.mxu0 %v3454
          %3989 = vmatpush.msra.mxu0 %v3451
          %3990 = vmatpush.msra.mxu0 %v3448
          %3991 = vmatpush.msra.mxu0 %v3445
          %3992 = vmatpush.msra.mxu0 %v3442
          %3993 = vmatpush.msra.mxu0 %v3439
          %3994 = vmatpush.msra.mxu0 %v3436
          %3995 = vmatpush.msra.mxu0 %v3433
          %3996 = vmatpush.msra.mxu0 %v3430
          %3997 = vmatmul.f32.gmra.mxu0 %v3421
          %v3998 = vpop.f32.mrf.mxu0
          %v3999 = vadd.f32 %v3816, %v3998
          %4000 = vdwg.mxu0
          %4001 = vmatpush.msra.mxu0 %v3523
          %4002 = vmatpush.msra.mxu0 %v3520
          %4003 = vmatpush.msra.mxu0 %v3517
          %4004 = vmatpush.msra.mxu0 %v3514
          %4005 = vmatpush.msra.mxu0 %v3511
          %4006 = vmatpush.msra.mxu0 %v3508
          %4007 = vmatpush.msra.mxu0 %v3505
          %4008 = vmatpush.msra.mxu0 %v3502
          %4009 = vmatpush.msra.mxu0 %v3499
          %4010 = vmatpush.msra.mxu0 %v3496
          %4011 = vmatpush.msra.mxu0 %v3493
          %4012 = vmatpush.msra.mxu0 %v3490
          %4013 = vmatpush.msra.mxu0 %v3487
          %4014 = vmatpush.msra.mxu0 %v3484
          %4015 = vmatpush.msra.mxu0 %v3481
          %4016 = vmatpush.msra.mxu0 %v3478
          %4017 = vmatmul.f32.gmra.mxu0 %v3422
          %v4018 = vpop.f32.mrf.mxu0
          %v4019 = vadd.f32 %v3999, %v4018
          %4020 = vdwg.mxu0
          %4021 = vmatpush.msra.mxu0 %v3571
          %4022 = vmatpush.msra.mxu0 %v3568
          %4023 = vmatpush.msra.mxu0 %v3565
          %4024 = vmatpush.msra.mxu0 %v3562
          %4025 = vmatpush.msra.mxu0 %v3559
          %4026 = vmatpush.msra.mxu0 %v3556
          %4027 = vmatpush.msra.mxu0 %v3553
          %4028 = vmatpush.msra.mxu0 %v3550
          %4029 = vmatpush.msra.mxu0 %v3547
          %4030 = vmatpush.msra.mxu0 %v3544
          %4031 = vmatpush.msra.mxu0 %v3541
          %4032 = vmatpush.msra.mxu0 %v3538
          %4033 = vmatpush.msra.mxu0 %v3535
          %4034 = vmatpush.msra.mxu0 %v3532
          %4035 = vmatpush.msra.mxu0 %v3529
          %4036 = vmatpush.msra.mxu0 %v3526
          %4037 = vmatmul.f32.gmra.mxu0 %v3423
          %v4038 = vpop.f32.mrf.mxu0
          %v4039 = vadd.f32 %v4019, %v4038
          %4040 = vdwg.mxu0
          %4041 = vmatpush.msra.mxu0 %v3619
          %4042 = vmatpush.msra.mxu0 %v3616
          %4043 = vmatpush.msra.mxu0 %v3613
          %4044 = vmatpush.msra.mxu0 %v3610
          %4045 = vmatpush.msra.mxu0 %v3607
          %4046 = vmatpush.msra.mxu0 %v3604
          %4047 = vmatpush.msra.mxu0 %v3601
          %4048 = vmatpush.msra.mxu0 %v3598
          %4049 = vmatpush.msra.mxu0 %v3595
          %4050 = vmatpush.msra.mxu0 %v3592
          %4051 = vmatpush.msra.mxu0 %v3589
          %4052 = vmatpush.msra.mxu0 %v3586
          %4053 = vmatpush.msra.mxu0 %v3583
          %4054 = vmatpush.msra.mxu0 %v3580
          %4055 = vmatpush.msra.mxu0 %v3577
          %4056 = vmatpush.msra.mxu0 %v3574
          %4057 = vmatmul.f32.gmra.mxu0 %v3424
          %v4058 = vpop.f32.mrf.mxu0
          %v4059 = vadd.f32 %v4039, %v4058
          %4060 = vdwg.mxu0
          %4061 = vmatpush.msra.mxu0 %v3667
          %4062 = vmatpush.msra.mxu0 %v3664
          %4063 = vmatpush.msra.mxu0 %v3661
          %4064 = vmatpush.msra.mxu0 %v3658
          %4065 = vmatpush.msra.mxu0 %v3655
          %4066 = vmatpush.msra.mxu0 %v3652
          %4067 = vmatpush.msra.mxu0 %v3649
          %4068 = vmatpush.msra.mxu0 %v3646
          %4069 = vmatpush.msra.mxu0 %v3643
          %4070 = vmatpush.msra.mxu0 %v3640
          %4071 = vmatpush.msra.mxu0 %v3637
          %4072 = vmatpush.msra.mxu0 %v3634
          %4073 = vmatpush.msra.mxu0 %v3631
          %4074 = vmatpush.msra.mxu0 %v3628
          %4075 = vmatpush.msra.mxu0 %v3625
          %4076 = vmatpush.msra.mxu0 %v3622
          %4077 = vmatmul.f32.gmra.mxu0 %v3425
          %v4078 = vpop.f32.mrf.mxu0
          %v4079 = vadd.f32 %v4059, %v4078
          %4080 = vdwg.mxu0
          %4081 = vmatpush.msra.mxu0 %v3715
          %4082 = vmatpush.msra.mxu0 %v3712
          %4083 = vmatpush.msra.mxu0 %v3709
          %4084 = vmatpush.msra.mxu0 %v3706
          %4085 = vmatpush.msra.mxu0 %v3703
          %4086 = vmatpush.msra.mxu0 %v3700
          %4087 = vmatpush.msra.mxu0 %v3697
          %4088 = vmatpush.msra.mxu0 %v3694
          %4089 = vmatpush.msra.mxu0 %v3691
          %4090 = vmatpush.msra.mxu0 %v3688
          %4091 = vmatpush.msra.mxu0 %v3685
          %4092 = vmatpush.msra.mxu0 %v3682
          %4093 = vmatpush.msra.mxu0 %v3679
          %4094 = vmatpush.msra.mxu0 %v3676
          %4095 = vmatpush.msra.mxu0 %v3673
          %4096 = vmatpush.msra.mxu0 %v3670
          %4097 = vmatmul.f32.gmra.mxu0 %v3426
          %v4098 = vpop.f32.mrf.mxu0
          %v4099 = vadd.f32 %v4079, %v4098
          %4100 = vdwg.mxu0
          %4101 = vmatpush.msra.mxu0 %v3763
          %4102 = vmatpush.msra.mxu0 %v3760
          %4103 = vmatpush.msra.mxu0 %v3757
          %4104 = vmatpush.msra.mxu0 %v3754
          %4105 = vmatpush.msra.mxu0 %v3751
          %4106 = vmatpush.msra.mxu0 %v3748
          %4107 = vmatpush.msra.mxu0 %v3745
          %4108 = vmatpush.msra.mxu0 %v3742
          %4109 = vmatpush.msra.mxu0 %v3739
          %4110 = vmatpush.msra.mxu0 %v3736
          %4111 = vmatpush.msra.mxu0 %v3733
          %4112 = vmatpush.msra.mxu0 %v3730
          %4113 = vmatpush.msra.mxu0 %v3727
          %4114 = vmatpush.msra.mxu0 %v3724
          %4115 = vmatpush.msra.mxu0 %v3721
          %4116 = vmatpush.msra.mxu0 %v3718
          %4117 = vmatmul.f32.gmra.mxu0 %v3427
          %v4118 = vpop.f32.mrf.mxu0
          %v4119 = vadd.f32 %v4099, %v4118
          %4120 = vdwg.mxu0
          %4121 = vmatpush.msra.mxu0 %v3811
          %4122 = vmatpush.msra.mxu0 %v3808
          %4123 = vmatpush.msra.mxu0 %v3805
          %4124 = vmatpush.msra.mxu0 %v3802
          %4125 = vmatpush.msra.mxu0 %v3799
          %4126 = vmatpush.msra.mxu0 %v3796
          %4127 = vmatpush.msra.mxu0 %v3793
          %4128 = vmatpush.msra.mxu0 %v3790
          %4129 = vmatpush.msra.mxu0 %v3787
          %4130 = vmatpush.msra.mxu0 %v3784
          %4131 = vmatpush.msra.mxu0 %v3781
          %4132 = vmatpush.msra.mxu0 %v3778
          %4133 = vmatpush.msra.mxu0 %v3775
          %4134 = vmatpush.msra.mxu0 %v3772
          %4135 = vmatpush.msra.mxu0 %v3769
          %4136 = vmatpush.msra.mxu0 %v3766
          %4137 = vmatmul.f32.gmra.mxu0 %v3428
          %v4138 = vpop.f32.mrf.mxu0
          %v4139 = vadd.f32 %v4119, %v4138
          %4140 = vdwg.mxu0
          %4141 = vmatpush.msra.mxu0 %v3476
          %4142 = vmatpush.msra.mxu0 %v3473
          %4143 = vmatpush.msra.mxu0 %v3470
          %4144 = vmatpush.msra.mxu0 %v3467
          %4145 = vmatpush.msra.mxu0 %v3464
          %4146 = vmatpush.msra.mxu0 %v3461
          %4147 = vmatpush.msra.mxu0 %v3458
          %4148 = vmatpush.msra.mxu0 %v3455
          %4149 = vmatpush.msra.mxu0 %v3452
          %4150 = vmatpush.msra.mxu0 %v3449
          %4151 = vmatpush.msra.mxu0 %v3446
          %4152 = vmatpush.msra.mxu0 %v3443
          %4153 = vmatpush.msra.mxu0 %v3440
          %4154 = vmatpush.msra.mxu0 %v3437
          %4155 = vmatpush.msra.mxu0 %v3434
          %4156 = vmatpush.msra.mxu0 %v3431
          %4157 = vmatmul.f32.gmra.mxu0 %v3421
          %v4158 = vpop.f32.mrf.mxu0
          %v4159 = vadd.f32 %v3817, %v4158
          %4160 = vdwg.mxu0
          %4161 = vmatpush.msra.mxu0 %v3524
          %4162 = vmatpush.msra.mxu0 %v3521
          %4163 = vmatpush.msra.mxu0 %v3518
          %4164 = vmatpush.msra.mxu0 %v3515
          %4165 = vmatpush.msra.mxu0 %v3512
          %4166 = vmatpush.msra.mxu0 %v3509
          %4167 = vmatpush.msra.mxu0 %v3506
          %4168 = vmatpush.msra.mxu0 %v3503
          %4169 = vmatpush.msra.mxu0 %v3500
          %4170 = vmatpush.msra.mxu0 %v3497
          %4171 = vmatpush.msra.mxu0 %v3494
          %4172 = vmatpush.msra.mxu0 %v3491
          %4173 = vmatpush.msra.mxu0 %v3488
          %4174 = vmatpush.msra.mxu0 %v3485
          %4175 = vmatpush.msra.mxu0 %v3482
          %4176 = vmatpush.msra.mxu0 %v3479
          %4177 = vmatmul.f32.gmra.mxu0 %v3422
          %v4178 = vpop.f32.mrf.mxu0
          %v4179 = vadd.f32 %v4159, %v4178
          %4180 = vdwg.mxu0
          %4181 = vmatpush.msra.mxu0 %v3572
          %4182 = vmatpush.msra.mxu0 %v3569
          %4183 = vmatpush.msra.mxu0 %v3566
          %4184 = vmatpush.msra.mxu0 %v3563
          %4185 = vmatpush.msra.mxu0 %v3560
          %4186 = vmatpush.msra.mxu0 %v3557
          %4187 = vmatpush.msra.mxu0 %v3554
          %4188 = vmatpush.msra.mxu0 %v3551
          %4189 = vmatpush.msra.mxu0 %v3548
          %4190 = vmatpush.msra.mxu0 %v3545
          %4191 = vmatpush.msra.mxu0 %v3542
          %4192 = vmatpush.msra.mxu0 %v3539
          %4193 = vmatpush.msra.mxu0 %v3536
          %4194 = vmatpush.msra.mxu0 %v3533
          %4195 = vmatpush.msra.mxu0 %v3530
          %4196 = vmatpush.msra.mxu0 %v3527
          %4197 = vmatmul.f32.gmra.mxu0 %v3423
          %v4198 = vpop.f32.mrf.mxu0
          %v4199 = vadd.f32 %v4179, %v4198
          %4200 = vdwg.mxu0
          %4201 = vmatpush.msra.mxu0 %v3620
          %4202 = vmatpush.msra.mxu0 %v3617
          %4203 = vmatpush.msra.mxu0 %v3614
          %4204 = vmatpush.msra.mxu0 %v3611
          %4205 = vmatpush.msra.mxu0 %v3608
          %4206 = vmatpush.msra.mxu0 %v3605
          %4207 = vmatpush.msra.mxu0 %v3602
          %4208 = vmatpush.msra.mxu0 %v3599
          %4209 = vmatpush.msra.mxu0 %v3596
          %4210 = vmatpush.msra.mxu0 %v3593
          %4211 = vmatpush.msra.mxu0 %v3590
          %4212 = vmatpush.msra.mxu0 %v3587
          %4213 = vmatpush.msra.mxu0 %v3584
          %4214 = vmatpush.msra.mxu0 %v3581
          %4215 = vmatpush.msra.mxu0 %v3578
          %4216 = vmatpush.msra.mxu0 %v3575
          %4217 = vmatmul.f32.gmra.mxu0 %v3424
          %v4218 = vpop.f32.mrf.mxu0
          %v4219 = vadd.f32 %v4199, %v4218
          %4220 = vdwg.mxu0
          %4221 = vmatpush.msra.mxu0 %v3668
          %4222 = vmatpush.msra.mxu0 %v3665
          %4223 = vmatpush.msra.mxu0 %v3662
          %4224 = vmatpush.msra.mxu0 %v3659
          %4225 = vmatpush.msra.mxu0 %v3656
          %4226 = vmatpush.msra.mxu0 %v3653
          %4227 = vmatpush.msra.mxu0 %v3650
          %4228 = vmatpush.msra.mxu0 %v3647
          %4229 = vmatpush.msra.mxu0 %v3644
          %4230 = vmatpush.msra.mxu0 %v3641
          %4231 = vmatpush.msra.mxu0 %v3638
          %4232 = vmatpush.msra.mxu0 %v3635
          %4233 = vmatpush.msra.mxu0 %v3632
          %4234 = vmatpush.msra.mxu0 %v3629
          %4235 = vmatpush.msra.mxu0 %v3626
          %4236 = vmatpush.msra.mxu0 %v3623
          %4237 = vmatmul.f32.gmra.mxu0 %v3425
          %v4238 = vpop.f32.mrf.mxu0
          %v4239 = vadd.f32 %v4219, %v4238
          %4240 = vdwg.mxu0
          %4241 = vmatpush.msra.mxu0 %v3716
          %4242 = vmatpush.msra.mxu0 %v3713
          %4243 = vmatpush.msra.mxu0 %v3710
          %4244 = vmatpush.msra.mxu0 %v3707
          %4245 = vmatpush.msra.mxu0 %v3704
          %4246 = vmatpush.msra.mxu0 %v3701
          %4247 = vmatpush.msra.mxu0 %v3698
          %4248 = vmatpush.msra.mxu0 %v3695
          %4249 = vmatpush.msra.mxu0 %v3692
          %4250 = vmatpush.msra.mxu0 %v3689
          %4251 = vmatpush.msra.mxu0 %v3686
          %4252 = vmatpush.msra.mxu0 %v3683
          %4253 = vmatpush.msra.mxu0 %v3680
          %4254 = vmatpush.msra.mxu0 %v3677
          %4255 = vmatpush.msra.mxu0 %v3674
          %4256 = vmatpush.msra.mxu0 %v3671
          %4257 = vmatmul.f32.gmra.mxu0 %v3426
          %v4258 = vpop.f32.mrf.mxu0
          %v4259 = vadd.f32 %v4239, %v4258
          %4260 = vdwg.mxu0
          %4261 = vmatpush.msra.mxu0 %v3764
          %4262 = vmatpush.msra.mxu0 %v3761
          %4263 = vmatpush.msra.mxu0 %v3758
          %4264 = vmatpush.msra.mxu0 %v3755
          %4265 = vmatpush.msra.mxu0 %v3752
          %4266 = vmatpush.msra.mxu0 %v3749
          %4267 = vmatpush.msra.mxu0 %v3746
          %4268 = vmatpush.msra.mxu0 %v3743
          %4269 = vmatpush.msra.mxu0 %v3740
          %4270 = vmatpush.msra.mxu0 %v3737
          %4271 = vmatpush.msra.mxu0 %v3734
          %4272 = vmatpush.msra.mxu0 %v3731
          %4273 = vmatpush.msra.mxu0 %v3728
          %4274 = vmatpush.msra.mxu0 %v3725
          %4275 = vmatpush.msra.mxu0 %v3722
          %4276 = vmatpush.msra.mxu0 %v3719
          %4277 = vmatmul.f32.gmra.mxu0 %v3427
          %v4278 = vpop.f32.mrf.mxu0
          %v4279 = vadd.f32 %v4259, %v4278
          %4280 = vdwg.mxu0
          %4281 = vmatpush.msra.mxu0 %v3812
          %4282 = vmatpush.msra.mxu0 %v3809
          %4283 = vmatpush.msra.mxu0 %v3806
          %4284 = vmatpush.msra.mxu0 %v3803
          %4285 = vmatpush.msra.mxu0 %v3800
          %4286 = vmatpush.msra.mxu0 %v3797
          %4287 = vmatpush.msra.mxu0 %v3794
          %4288 = vmatpush.msra.mxu0 %v3791
          %4289 = vmatpush.msra.mxu0 %v3788
          %4290 = vmatpush.msra.mxu0 %v3785
          %4291 = vmatpush.msra.mxu0 %v3782
          %4292 = vmatpush.msra.mxu0 %v3779
          %4293 = vmatpush.msra.mxu0 %v3776
          %4294 = vmatpush.msra.mxu0 %v3773
          %4295 = vmatpush.msra.mxu0 %v3770
          %4296 = vmatpush.msra.mxu0 %v3767
          %4297 = vmatmul.f32.gmra.mxu0 %v3428
          %v4298 = vpop.f32.mrf.mxu0
          %v4299 = vadd.f32 %v4279, %v4298
          %4300 = vdwg.mxu0
          %v4301 = vadd.f32 %v3979, %v2067
          %4302 = vst [vmem:[%s892] sm:$0x1] %v4301
          %v4304 = vrot.slane %v2067, 1
          %v4306 = vadd.f32 %v4139, %v4304
          %4307 = vst [vmem:[%s892 + $0x1] sm:$0x1] %v4306
          %v4308 = vrot.slane %v2067, 2
          %v4310 = vadd.f32 %v4299, %v4308
          %4311 = vst [vmem:[%s892 + $0x2] sm:$0x1] %v4310
        $region164: #{fixed_source_deformer_forward.2} parent=91 // pred_fallthru
          _
        %p4312 = scmp.lt.s32.totalorder %s44, 1
        %s4313 = scalar_select %p4312, %s44, 1
        %s4314 = smul.addr %s4313, 4
        %s4315 = scalar_lea.vmem %s18, %s4314
        %p4316 = scmp.lt.s32.totalorder %s44, 1
        %s4317 = scalar_select %p4316, %s44, 1
        %s4318 = smul.addr %s4317, 4
        %s4319 = scalar_lea.vmem %s19, %s4318
        // Predicated region
        $region165: #{fixed_source_deformer_forward.2} parent=91 // pred_check
          %p4320 = pneg %p455
        $region166: #{fixed_source_deformer_forward.2} parent=91 // pred_check_branch
          %4322 = sbr.rel (%p4320) target = $region168
        $region167: #{fixed_source_deformer_forward.2} parent=91 // pred_region
          _
        $region168: #{fixed_source_deformer_forward.2} parent=91 // pred_fallthru
          _
        // Predicated region
        $region169: #{fixed_source_deformer_forward.2} parent=91 // pred_check
          %p4323 = pneg %p481
        $region170: #{fixed_source_deformer_forward.2} parent=91 // pred_check_branch
          %4325 = sbr.rel (%p4323) target = $region172
        $region171: #{fixed_source_deformer_forward.2} parent=91 // pred_region
          _
        $region172: #{fixed_source_deformer_forward.2} parent=91 // pred_fallthru
          _
      $region92: #{fixed_source_deformer_forward.2} parent=5 // pred_fallthru
        _
      %p4326 = scmp.le.s32.totalorder 2, %s35
      // Predicated region
      $region173: #{fixed_source_deformer_forward.2} parent=5 // pred_check
        %p4327 = pneg %p4326
      $region174: #{fixed_source_deformer_forward.2} parent=5 // pred_check_branch
        %4329 = sbr.rel (%p4327) target = $region176
      $region175: #{fixed_source_deformer_forward.2} parent=5 // pred_region
        %s4330 = ssub.s32 %s35, 2
        // Predicated region
        $region177: #{fixed_source_deformer_forward.2} parent=175 // pred_check
          %p4331 = pneg %p461
        $region178: #{fixed_source_deformer_forward.2} parent=175 // pred_check_branch
          %4333 = sbr.rel (%p4331) target = $region180
        $region179: #{fixed_source_deformer_forward.2} parent=175 // pred_region
          %p4334 = scmp.lt.s32.totalorder %s46, 1
          %s4335 = scalar_select %p4334, %s46, 1
          %s4336 = smul.addr %s4335, 4
          %s4337 = scalar_lea.vmem %s18, %s4336
        $region180: #{fixed_source_deformer_forward.2} parent=175 // pred_fallthru
          _
        // Predicated region
        $region181: #{fixed_source_deformer_forward.2} parent=175 // pred_check
          %p4338 = pneg %p487
        $region182: #{fixed_source_deformer_forward.2} parent=175 // pred_check_branch
          %4340 = sbr.rel (%p4338) target = $region184
        $region183: #{fixed_source_deformer_forward.2} parent=175 // pred_region
          %p4341 = scmp.lt.s32.totalorder %s46, 1
          %s4342 = scalar_select %p4341, %s46, 1
          %s4343 = smul.addr %s4342, 4
          %s4344 = scalar_lea.vmem %s19, %s4343
        $region184: #{fixed_source_deformer_forward.2} parent=175 // pred_fallthru
          _
      $region176: #{fixed_source_deformer_forward.2} parent=5 // pred_fallthru
        _
    $region6: #{fixed_source_deformer_forward.2} parent=1 // loop_footer
      %s39 = sadd.s32 1, %s35
    $region7: #{fixed_source_deformer_forward.2} parent=1 // loop_footer_branch
      %34 = sbr.rel target = $region3
    $region8: #{fixed_source_deformer_forward.2} parent=1 // loop_exit
      _
    %4345 = vsyncpa [#allocation4], 1
    %s4346 = scalar_lea.sflag [#allocation4], 1
    %4347 = vsyncpa %s4346, 1
    %4348 = vsyncpa [#allocation6], 1
    %4349 = vsyncpa [#allocation9], 1
    %4350 = vsyncpa [#allocation12], 1
    %4351 = vsyncpa [#allocation15], 1
    %4352 = vsyncpa [#allocation18], 1
    %4353 = vsyncpa [#allocation21], 1
    %4354 = vsyncpa [#allocation24], 1
    %4355 = vsyncpa [#allocation27], 1

</llo_original>
